<compile_context>
chip_gen: v7x
topology: tpu7x:2x2x1
jax: 0.10.0
libtpu: 0.0.40
codegen_flags: <defaults>
</compile_context>

<pallas_src>
import functools

import numpy as np
import jax
import jax.numpy as jnp
from jax import lax
from jax.experimental import pallas as pl
from jax.experimental.pallas import tpu as pltpu

BN_EPS = 1e-3  # torchvision BasicConv2d BatchNorm eps

# VMEM accounting: keep explicitly-accounted buffers under ~22 MB and raise the
# scoped limit to 40 MB (v7x physical VMEM is 64 MiB, v5e/v6e have 128 MiB).
VMEM_BUDGET = 22 * 1024 * 1024
VMEM_LIMIT = 40 * 1024 * 1024
MAX_TM = 4096


def _round_up(x, m):
    return ((x + m - 1) // m) * m


def _pick_mm_tm(m, k, n):
    """Budget-driven M tile for the fused matmul kernel (multiple of 16)."""
    fixed = 2 * k * n * 2 + 2 * n * 4            # double-buffered weights + bias
    per_row = 2 * k * 2 + 2 * n * 2 + n * 4      # A (db bf16) + out (db bf16) + f32 acc
    tm = max((VMEM_BUDGET - fixed) // max(per_row, 1), 16)
    tm = (tm // 16) * 16
    tm = min(tm, MAX_TM, _round_up(m, 16))
    return max(tm, 16)


def _pick_spatial_tm(m_img, cin, cout, taps, halo):
    """Budget-driven M tile for the flat-shift spatial conv kernel."""
    fixed = 2 * taps * cin * cout * 2 + 2 * cout * 4 + 2 * halo * cin * 2
    per_row = 2 * cin * 2 + 2 * cout * 2 + cout * 4
    tm = max((VMEM_BUDGET - fixed) // max(per_row, 1), 16)
    tm = (tm // 16) * 16
    tm = min(tm, MAX_TM, _round_up(m_img, 16))
    return max(tm, 16)


# ----------------------------------------------------------------------------
# Pallas kernel 1: fused matmul + bias + ReLU (full K, full N, grid over M)
# Used for all 1x1 convs (incl. fused branch heads) and stride-2 convs via im2col.
# ----------------------------------------------------------------------------
def _mm_bias_relu_kernel(a_ref, w_ref, b_ref, o_ref):
    acc = jnp.dot(a_ref[...], w_ref[...], preferred_element_type=jnp.float32)
    o_ref[...] = jnp.maximum(acc + b_ref[...], 0.0).astype(o_ref.dtype)


@jax.jit
def _matmul_bias_relu(a, w, bias):
    """relu(a @ w + bias); a/w bf16, bias f32 (1, N); cdiv grid, masked edge block."""
    M, K = a.shape
    N = w.shape[1]
    tm = _pick_mm_tm(M, K, N)
    return pl.pallas_call(
        _mm_bias_relu_kernel,
        out_shape=jax.ShapeDtypeStruct((M, N), jnp.bfloat16),
        grid=(pl.cdiv(M, tm),),
        in_specs=[
            pl.BlockSpec((tm, K), lambda i: (i, 0)),
            pl.BlockSpec((K, N), lambda i: (0, 0)),
            pl.BlockSpec((1, N), lambda i: (0, 0)),
        ],
        out_specs=pl.BlockSpec((tm, N), lambda i: (i, 0)),
        compiler_params=pltpu.CompilerParams(
            dimension_semantics=("parallel",),
            vmem_limit_bytes=VMEM_LIMIT),
    )(a, w, bias)


# ----------------------------------------------------------------------------
# Pallas kernel 2: stride-1 spatial conv via flat row-shift taps (no HBM im2col).
# x_flat is the zero-padded activation flattened to (B * rows_per_img, Cin); for
# stride 1, tap (i, j) of the conv is a constant row shift of i*Wp + j.  The kernel
# DMAs a (TM + halo, Cin) window per step (double buffered across grid steps) and
# accumulates one (TM, Cin) @ (Cin, Cout) MXU matmul per tap into a value accumulator.
# ----------------------------------------------------------------------------
def _make_spatial_kernel(tap_offsets, tm, tm_in, mb, rows_per_img):
    def kernel(x_hbm, w_ref, b_ref, o_ref, buf_ref, sem_ref):
        step = pl.program_id(0)
        nsteps = pl.num_programs(0)
        slot = lax.rem(step, 2)
        nxt = 1 - slot

        def src_for(s):
            b = s // mb
            j = s - b * mb
            return x_hbm.at[pl.ds(b * rows_per_img + j * tm, tm_in)]

        @pl.when(step == 0)
        def _prime():
            pltpu.make_async_copy(src_for(step), buf_ref.at[slot],
                                  sem_ref.at[slot]).start()

        # Wait on exactly the descriptor that was started for this step's window
        # (issued either by the prime above or by the previous step's prefetch).
        pltpu.make_async_copy(src_for(step), buf_ref.at[slot],
                              sem_ref.at[slot]).wait()

        # Prefetch next step's window while we compute on the current one.
        @pl.when(step + 1 < nsteps)
        def _prefetch():
            pltpu.make_async_copy(src_for(step + 1), buf_ref.at[nxt],
                                  sem_ref.at[nxt]).start()

        acc = None
        for t, off in enumerate(tap_offsets):
            a = buf_ref[slot, pl.ds(off, tm), :]
            d = jnp.dot(a, w_ref[t], preferred_element_type=jnp.float32)
            acc = d if acc is None else acc + d
        o_ref[...] = jnp.maximum(acc + b_ref[...], 0.0).astype(o_ref.dtype)

    return kernel


@functools.partial(jax.jit, static_argnums=(3, 4, 5, 6))
def _spatial_conv(x, w_taps, bias, kh, kw, ph, pw):
    """Stride-1 conv + bias + ReLU.  x NHWC bf16, w_taps (kh*kw, Cin, Cout) bf16."""
    B, H, W, C = x.shape
    T, _, cout = w_taps.shape
    Wp = W + 2 * pw
    Ho = H + 2 * ph - kh + 1
    Wo = Wp - kw + 1
    halo = (kh - 1) * Wp + (kw - 1)
    m_img = Ho * Wp                      # valid output rows per image (before W crop)

    tm = _pick_spatial_tm(m_img, C, cout, T, halo)
    mb = pl.cdiv(m_img, tm)
    tm_in = tm + halo

    # Extra zero rows at the bottom of H so every DMA window stays in bounds.
    rows_needed = (mb - 1) * tm + tm_in
    hpe = max(H + 2 * ph, -(-rows_needed // Wp))
    eh = hpe - (H + 2 * ph)
    rows_per_img = hpe * Wp

    xp = jnp.pad(x, ((0, 0), (ph, ph + eh), (pw, pw), (0, 0)))
    x_flat = xp.reshape(B * rows_per_img, C)
    tap_offsets = tuple(i * Wp + j for i in range(kh) for j in range(kw))

    out = pl.pallas_call(
        _make_spatial_kernel(tap_offsets, tm, tm_in, mb, rows_per_img),
        out_shape=jax.ShapeDtypeStruct((B * mb * tm, cout), jnp.bfloat16),
        grid=(B * mb,),
        in_specs=[
            pl.BlockSpec(memory_space=pl.ANY),            # raw HBM ref, manual DMA
            pl.BlockSpec((T, C, cout), lambda s: (0, 0, 0)),
            pl.BlockSpec((1, cout), lambda s: (0, 0)),
        ],
        out_specs=pl.BlockSpec((tm, cout), lambda s: (s, 0)),
        scratch_shapes=[
            pltpu.VMEM((2, tm_in, C), jnp.bfloat16),
            pltpu.SemaphoreType.DMA((2,)),
        ],
        compiler_params=pltpu.CompilerParams(
            dimension_semantics=("arbitrary",),           # DMA chain across steps
            vmem_limit_bytes=VMEM_LIMIT),
    )(x_flat, w_taps, bias)

    # Single reshape + slice crop (no per-batch Python slicing loop).
    out = out.reshape(B, mb * tm, cout)[:, :m_img, :]
    return out.reshape(B, Ho, Wp, cout)[:, :, :Wo, :]


# ----------------------------------------------------------------------------
# Pallas kernel 3: global average pool (AdaptiveAvgPool2d((1,1)))
# ----------------------------------------------------------------------------
def _gap_kernel(x_ref, o_ref):
    o_ref[...] = jnp.mean(x_ref[...].astype(jnp.float32), axis=1, keepdims=True)


@jax.jit
def global_avg_pool(x):
    B, H, W, C = x.shape
    xr = x.reshape(B, H * W, C)
    out = pl.pallas_call(
        _gap_kernel,
        out_shape=jax.ShapeDtypeStruct((B, 1, C), jnp.float32),
        grid=(B,),
        in_specs=[pl.BlockSpec((1, H * W, C), lambda b: (b, 0, 0))],
        out_specs=pl.BlockSpec((1, 1, C), lambda b: (b, 0, 0)),
        compiler_params=pltpu.CompilerParams(
            dimension_semantics=("parallel",)),
    )(xr)
    return out.reshape(B, 1, 1, C)


# ----------------------------------------------------------------------------
# BasicConv2d dispatch (conv + folded BN + ReLU)
# ----------------------------------------------------------------------------
def conv_bn_relu(x, p):
    kh, kw = p["kernel"]
    sh, sw = p["stride"]
    ph, pw = p["padding"]
    w = p["w"]          # (kh*kw, cin, cout) bf16, BN scale folded in
    bias = p["bias"]    # (1, cout) f32
    cout = w.shape[-1]
    B, H, W, C = x.shape

    if kh == 1 and kw == 1 and sh == 1 and sw == 1 and ph == 0 and pw == 0:
        out = _matmul_bias_relu(x.reshape(B * H * W, C), w[0], bias)
        return out.reshape(B, H, W, cout)

    if sh == 1 and sw == 1:
        return _spatial_conv(x, w, bias, kh, kw, ph, pw)

    # Stride-2 convs (5 layers only): small bf16 im2col + fused matmul.
    if ph or pw:
        x = jnp.pad(x, ((0, 0), (ph, ph), (pw, pw), (0, 0)))
    B, H, W, C = x.shape
    Ho = (H - kh) // sh + 1
    Wo = (W - kw) // sw + 1
    cols = [x[:, i:i + sh * Ho:sh, j:j + sw * Wo:sw, :]
            for i in range(kh) for j in range(kw)]
    patches = jnp.concatenate(cols, axis=-1).reshape(B * Ho * Wo, kh * kw * C)
    out = _matmul_bias_relu(patches, w.reshape(kh * kw * C, cout), bias)
    return out.reshape(B, Ho, Wo, cout)


def _fused_1x1(x, heads):
    """Fused same-input 1x1 branch heads: one matmul, sliced per branch."""
    B, H, W, C = x.shape
    out = _matmul_bias_relu(x.reshape(B * H * W, C), heads["w"], heads["bias"])
    res, off = [], 0
    for s in heads["splits"]:
        res.append(out[:, off:off + s].reshape(B, H, W, s))
        off += s
    return res


# ----------------------------------------------------------------------------
# Pooling glue (plain JAX)
# ----------------------------------------------------------------------------
def max_pool(x, k, s, p):
    return lax.reduce_window(
        x, jnp.array(-jnp.inf, x.dtype), lax.max,
        (1, k, k, 1), (1, s, s, 1), ((0, 0), (p, p), (p, p), (0, 0)))


@functools.lru_cache(maxsize=None)
def _inv_count_3x3(h, w):
    """Static 1/count mask for avg_pool2d(3, 1, 1, count_include_pad=False)."""
    p = np.zeros((h + 2, w + 2), np.float32)
    p[1:h + 1, 1:w + 1] = 1.0
    cnt = sum(p[i:i + h, j:j + w] for i in range(3) for j in range(3))
    return np.asarray(1.0 / cnt, np.float32)


def avg_pool3x3_s1_p1(x):
    # F.avg_pool2d(x, 3, stride=1, padding=1, count_include_pad=False)
    B, H, W, C = x.shape
    inv = jnp.asarray(_inv_count_3x3(H, W)).reshape(1, H, W, 1)
    s = lax.reduce_window(x.astype(jnp.float32), 0.0, lax.add,
                          (1, 3, 3, 1), (1, 1, 1, 1),
                          ((0, 0), (1, 1), (1, 1), (0, 0)))
    return (s * inv).astype(x.dtype)


# ----------------------------------------------------------------------------
# Deterministic parameter construction (synthetic weights, shapes per torchvision)
# ----------------------------------------------------------------------------
class _KeyGen:
    def __init__(self, key):
        self._key = key

    def __call__(self):
        self._key, sub = jax.random.split(self._key)
        return sub


def _basic_conv(kg, cin, cout, kernel, stride=1, padding=0):
    kernel = (kernel, kernel) if isinstance(kernel, int) else kernel
    stride = (stride, stride) if isinstance(stride, int) else stride
    padding = (padding, padding) if isinstance(padding, int) else padding
    kh, kw = kernel
    fan_in = cin * kh * kw
    w = jax.random.normal(kg(), (kh, kw, cin, cout), jnp.float32) * (2.0 / fan_in) ** 0.5
    gamma = 1.0 + 0.05 * jax.random.normal(kg(), (cout,), jnp.float32)
    beta = 0.05 * jax.random.normal(kg(), (cout,), jnp.float32)
    mean = 0.05 * jax.random.normal(kg(), (cout,), jnp.float32)
    var = jnp.abs(1.0 + 0.05 * jax.random.normal(kg(), (cout,), jnp.float32))
    scale = gamma / jnp.sqrt(var + BN_EPS)                 # BN folded into affine
    bias = (beta - mean * scale).reshape(1, cout)          # stays f32
    w_folded = (w * scale).reshape(kh * kw, cin, cout).astype(jnp.bfloat16)
    return dict(w=w_folded, bias=bias, kernel=kernel, stride=stride, padding=padding)


def _fuse_heads(p, names):
    """Concat the folded 1x1 weights/biases of same-input branches along Cout."""
    w = jnp.concatenate([p[n]["w"][0] for n in names], axis=-1)      # (cin, sum_cout)
    bias = jnp.concatenate([p[n]["bias"] for n in names], axis=-1)   # (1, sum_cout)
    splits = tuple(int(p[n]["w"].shape[-1]) for n in names)
    return dict(w=w, bias=bias, splits=splits)


def _make_inception_a(kg, cin, pool_features):
    p = dict(
        branch1x1=_basic_conv(kg, cin, 64, 1),
        branch5x5_1=_basic_conv(kg, cin, 48, 1),
        branch5x5_2=_basic_conv(kg, 48, 64, 5, padding=2),
        branch3x3dbl_1=_basic_conv(kg, cin, 64, 1),
        branch3x3dbl_2=_basic_conv(kg, 64, 96, 3, padding=1),
        branch3x3dbl_3=_basic_conv(kg, 96, 96, 3, padding=1),
        branch_pool=_basic_conv(kg, cin, pool_features, 1),
    )
    p["heads"] = _fuse_heads(p, ("branch1x1", "branch5x5_1", "branch3x3dbl_1"))
    return p


def _make_inception_b(kg, cin):
    return dict(
        branch3x3=_basic_conv(kg, cin, 384, 3, stride=2),
        branch3x3dbl_1=_basic_conv(kg, cin, 64, 1),
        branch3x3dbl_2=_basic_conv(kg, 64, 96, 3, padding=1),
        branch3x3dbl_3=_basic_conv(kg, 96, 96, 3, stride=2),
    )


def _make_inception_c(kg, cin, c7):
    p = dict(
        branch1x1=_basic_conv(kg, cin, 192, 1),
        branch7x7_1=_basic_conv(kg, cin, c7, 1),
        branch7x7_2=_basic_conv(kg, c7, c7, (1, 7), padding=(0, 3)),
        branch7x7_3=_basic_conv(kg, c7, 192, (7, 1), padding=(3, 0)),
        branch7x7dbl_1=_basic_conv(kg, cin, c7, 1),
        branch7x7dbl_2=_basic_conv(kg, c7, c7, (7, 1), padding=(3, 0)),
        branch7x7dbl_3=_basic_conv(kg, c7, c7, (1, 7), padding=(0, 3)),
        branch7x7dbl_4=_basic_conv(kg, c7, c7, (7, 1), padding=(3, 0)),
        branch7x7dbl_5=_basic_conv(kg, c7, 192, (1, 7), padding=(0, 3)),
        branch_pool=_basic_conv(kg, cin, 192, 1),
    )
    p["heads"] = _fuse_heads(p, ("branch1x1", "branch7x7_1", "branch7x7dbl_1"))
    return p


def _make_inception_d(kg, cin):
    p = dict(
        branch3x3_1=_basic_conv(kg, cin, 192, 1),
        branch3x3_2=_basic_conv(kg, 192, 320, 3, stride=2),
        branch7x7x3_1=_basic_conv(kg, cin, 192, 1),
        branch7x7x3_2=_basic_conv(kg, 192, 192, (1, 7), padding=(0, 3)),
        branch7x7x3_3=_basic_conv(kg, 192, 192, (7, 1), padding=(3, 0)),
        branch7x7x3_4=_basic_conv(kg, 192, 192, 3, stride=2),
    )
    p["heads"] = _fuse_heads(p, ("branch3x3_1", "branch7x7x3_1"))
    return p


def _make_inception_e(kg, cin):
    p = dict(
        branch1x1=_basic_conv(kg, cin, 320, 1),
        branch3x3_1=_basic_conv(kg, cin, 384, 1),
        branch3x3_2a=_basic_conv(kg, 384, 384, (1, 3), padding=(0, 1)),
        branch3x3_2b=_basic_conv(kg, 384, 384, (3, 1), padding=(1, 0)),
        branch3x3dbl_1=_basic_conv(kg, cin, 448, 1),
        branch3x3dbl_2=_basic_conv(kg, 448, 384, 3, padding=1),
        branch3x3dbl_3a=_basic_conv(kg, 384, 384, (1, 3), padding=(0, 1)),
        branch3x3dbl_3b=_basic_conv(kg, 384, 384, (3, 1), padding=(1, 0)),
        branch_pool=_basic_conv(kg, cin, 192, 1),
    )
    p["heads"] = _fuse_heads(p, ("branch1x1", "branch3x3_1", "branch3x3dbl_1"))
    return p


# ----------------------------------------------------------------------------
# Inception block forwards (FID-patched variants, NHWC)
# ----------------------------------------------------------------------------
def _apply_inception_a(x, p):  # FIDInceptionA
    b1, b5, b3 = _fused_1x1(x, p["heads"])
    b5 = conv_bn_relu(b5, p["branch5x5_2"])
    b3 = conv_bn_relu(b3, p["branch3x3dbl_2"])
    b3 = conv_bn_relu(b3, p["branch3x3dbl_3"])
    bp = conv_bn_relu(avg_pool3x3_s1_p1(x), p["branch_pool"])
    return jnp.concatenate([b1, b5, b3, bp], axis=-1)


def _apply_inception_b(x, p):  # Mixed_6a
    b3 = conv_bn_relu(x, p["branch3x3"])
    bd = conv_bn_relu(x, p["branch3x3dbl_1"])
    bd = conv_bn_relu(bd, p["branch3x3dbl_2"])
    bd = conv_bn_relu(bd, p["branch3x3dbl_3"])
    bp = max_pool(x, 3, 2, 0)
    return jnp.concatenate([b3, bd, bp], axis=-1)


def _apply_inception_c(x, p):  # FIDInceptionC
    b1, b7, bd = _fused_1x1(x, p["heads"])
    b7 = conv_bn_relu(b7, p["branch7x7_2"])
    b7 = conv_bn_relu(b7, p["branch7x7_3"])
    for name in ("branch7x7dbl_2", "branch7x7dbl_3", "branch7x7dbl_4", "branch7x7dbl_5"):
        bd = conv_bn_relu(bd, p[name])
    bp = conv_bn_relu(avg_pool3x3_s1_p1(x), p["branch_pool"])
    return jnp.concatenate([b1, b7, bd, bp], axis=-1)


def _apply_inception_d(x, p):  # Mixed_7a
    b3, b7 = _fused_1x1(x, p["heads"])
    b3 = conv_bn_relu(b3, p["branch3x3_2"])
    b7 = conv_bn_relu(b7, p["branch7x7x3_2"])
    b7 = conv_bn_relu(b7, p["branch7x7x3_3"])
    b7 = conv_bn_relu(b7, p["branch7x7x3_4"])
    bp = max_pool(x, 3, 2, 0)
    return jnp.concatenate([b3, b7, bp], axis=-1)


def _apply_inception_e(x, p, pool_kind):  # FIDInceptionE_1 ('avg') / FIDInceptionE_2 ('max')
    b1, b3, bd = _fused_1x1(x, p["heads"])
    b3 = jnp.concatenate([conv_bn_relu(b3, p["branch3x3_2a"]),
                          conv_bn_relu(b3, p["branch3x3_2b"])], axis=-1)
    bd = conv_bn_relu(bd, p["branch3x3dbl_2"])
    bd = jnp.concatenate([conv_bn_relu(bd, p["branch3x3dbl_3a"]),
                          conv_bn_relu(bd, p["branch3x3dbl_3b"])], axis=-1)
    bp = avg_pool3x3_s1_p1(x) if pool_kind == "avg" else max_pool(x, 3, 1, 1)
    bp = conv_bn_relu(bp, p["branch_pool"])
    return jnp.concatenate([b1, b3, bd, bp], axis=-1)


# ----------------------------------------------------------------------------
# InceptionV3 (FID feature extractor) wrapper
# ----------------------------------------------------------------------------
class InceptionV3Pallas:
    DEFAULT_BLOCK_INDEX = 3
    BLOCK_INDEX_BY_DIM = {64: 0, 192: 1, 768: 2, 2048: 3}

    def __init__(self, key, output_blocks=(DEFAULT_BLOCK_INDEX,),
                 resize_input=True, normalize_input=True):
        self.resize_input = resize_input
        self.normalize_input = normalize_input
        self.output_blocks = sorted(output_blocks)
        self.last_needed_block = max(output_blocks)
        assert self.last_needed_block <= 3, "Last possible output block index is 3"
        kg = _KeyGen(key)
        p = {}
        p["Conv2d_1a_3x3"] = _basic_conv(kg, 3, 32, 3, stride=2)
        p["Conv2d_2a_3x3"] = _basic_conv(kg, 32, 32, 3)
        p["Conv2d_2b_3x3"] = _basic_conv(kg, 32, 64, 3, padding=1)
        if self.last_needed_block >= 1:
            p["Conv2d_3b_1x1"] = _basic_conv(kg, 64, 80, 1)
            p["Conv2d_4a_3x3"] = _basic_conv(kg, 80, 192, 3)
        if self.last_needed_block >= 2:
            p["Mixed_5b"] = _make_inception_a(kg, 192, 32)
            p["Mixed_5c"] = _make_inception_a(kg, 256, 64)
            p["Mixed_5d"] = _make_inception_a(kg, 288, 64)
            p["Mixed_6a"] = _make_inception_b(kg, 288)
            p["Mixed_6b"] = _make_inception_c(kg, 768, 128)
            p["Mixed_6c"] = _make_inception_c(kg, 768, 160)
            p["Mixed_6d"] = _make_inception_c(kg, 768, 160)
            p["Mixed_6e"] = _make_inception_c(kg, 768, 192)
        if self.last_needed_block >= 3:
            p["Mixed_7a"] = _make_inception_d(kg, 768)
            p["Mixed_7b"] = _make_inception_e(kg, 1280)
            p["Mixed_7c"] = _make_inception_e(kg, 2048)
        self.params = p

    def __call__(self, inp):
        """inp: (B, 3, H, W) NCHW, values in (0, 1).  Returns list of NCHW features."""
        p = self.params
        x = jnp.transpose(inp.astype(jnp.float32), (0, 2, 3, 1))  # NCHW -> NHWC
        if self.resize_input:
            B, H, W, C = x.shape
            # F.interpolate(size=(299,299), mode='bilinear', align_corners=False)
            # TODO(synk): jax.image.resize matches torch half-pixel bilinear for
            # upsampling; antialias behavior on downscaling differs from torch.
            x = jax.image.resize(x, (B, 299, 299, C), method="bilinear")
        if self.normalize_input:
            x = 2.0 * x - 1.0
        x = x.astype(jnp.bfloat16)  # bf16 activations throughout, f32 accumulation

        outs = []

        def emit(t, idx):
            if idx in self.output_blocks:
                outs.append(jnp.transpose(t.astype(jnp.float32), (0, 3, 1, 2)))

        # ---- block 0 ----
        x = conv_bn_relu(x, p["Conv2d_1a_3x3"])
        x = conv_bn_relu(x, p["Conv2d_2a_3x3"])
        x = conv_bn_relu(x, p["Conv2d_2b_3x3"])
        x = max_pool(x, 3, 2, 0)
        emit(x, 0)
        if self.last_needed_block == 0:
            return outs
        # ---- block 1 ----
        x = conv_bn_relu(x, p["Conv2d_3b_1x1"])
        x = conv_bn_relu(x, p["Conv2d_4a_3x3"])
        x = max_pool(x, 3, 2, 0)
        emit(x, 1)
        if self.last_needed_block == 1:
            return outs
        # ---- block 2 ----
        x = _apply_inception_a(x, p["Mixed_5b"])
        x = _apply_inception_a(x, p["Mixed_5c"])
        x = _apply_inception_a(x, p["Mixed_5d"])
        x = _apply_inception_b(x, p["Mixed_6a"])
        x = _apply_inception_c(x, p["Mixed_6b"])
        x = _apply_inception_c(x, p["Mixed_6c"])
        x = _apply_inception_c(x, p["Mixed_6d"])
        x = _apply_inception_c(x, p["Mixed_6e"])
        emit(x, 2)
        if self.last_needed_block == 2:
            return outs
        # ---- block 3 ----
        x = _apply_inception_d(x, p["Mixed_7a"])
        x = _apply_inception_e(x, p["Mixed_7b"], "avg")
        x = _apply_inception_e(x, p["Mixed_7c"], "max")
        x = global_avg_pool(x)          # Pallas reduction kernel (f32 output)
        emit(x, 3)
        return outs


if __name__ == "__main__":
    key = jax.random.PRNGKey(0)
    pkey, xkey = jax.random.split(key)
    # Default configuration: output_blocks=(3,), resize_input=True, normalize_input=True.
    model = InceptionV3Pallas(pkey)
    # Small NCHW input in (0, 1); forward resizes it to 299x299 internally.
    x = jax.random.uniform(xkey, (2, 3, 16, 16), dtype=jnp.float32)
    feats = model(x)
    feats = [jax.block_until_ready(f) for f in feats]
    assert len(feats) == 1
    assert feats[0].shape == (2, 2048, 1, 1), feats[0].shape
    assert bool(jnp.all(jnp.isfinite(feats[0])))
    print("KERNEL_OK")
</pallas_src>

<mosaic_0001>
module attributes {stable_mosaic.version = 11 : i64} {
  func.func @_mm_bias_relu_kernel(%arg0: i32, %arg1: memref<4096x27xbf16, #tpu.memory_space<vmem>>, %arg2: memref<27x32xbf16, #tpu.memory_space<vmem>>, %arg3: memref<1x32xf32, #tpu.memory_space<vmem>>, %arg4: memref<4096x32xbf16, #tpu.memory_space<vmem>>) attributes {dimension_semantics = [#tpu.dimension_semantics<parallel>], iteration_bounds = array<i64: 11>, scalar_prefetch = 0 : i64, scratch_operands = 0 : i64, tpu.core_type = #tpu.core_type<tc>, window_params = [{transform_indices = @transform_0, window_bounds = array<i64: 4096, 27>}, {pipeline_mode = #tpu.pipeline_mode<synchronous>, transform_indices = @transform_1, window_bounds = array<i64: 27, 32>}, {pipeline_mode = #tpu.pipeline_mode<synchronous>, transform_indices = @transform_2, window_bounds = array<i64: 1, 32>}, {transform_indices = @transform_3, window_bounds = array<i64: 4096, 32>}]} {
    %c0 = arith.constant 0 : index
    %c0_0 = arith.constant 0 : index
    %0 = vector.load %arg1[%c0, %c0_0] : memref<4096x27xbf16, #tpu.memory_space<vmem>>, vector<4096x27xbf16>
    %c0_1 = arith.constant 0 : index
    %c0_2 = arith.constant 0 : index
    %1 = vector.load %arg2[%c0_1, %c0_2] : memref<27x32xbf16, #tpu.memory_space<vmem>>, vector<27x32xbf16>
    %cst = arith.constant dense<0.000000e+00> : vector<4096x32xf32>
    %2 = tpu.matmul %0, %1, %cst {dimension_numbers = #tpu.dot_dimension_numbers<[1], [0], [0], [1], [0, 0, 1, 1], [], []>} : vector<4096x27xbf16>, vector<27x32xbf16>, vector<4096x32xf32> -> vector<4096x32xf32>
    %c0_3 = arith.constant 0 : index
    %c0_4 = arith.constant 0 : index
    %3 = vector.load %arg3[%c0_3, %c0_4] : memref<1x32xf32, #tpu.memory_space<vmem>>, vector<1x32xf32>
    %4 = vector.broadcast %3 : vector<1x32xf32> to vector<4096x32xf32>
    %5 = arith.addf %2, %4 : vector<4096x32xf32>
    %cst_5 = arith.constant 0.000000e+00 : f32
    %6 = vector.broadcast %cst_5 : f32 to vector<4096x32xf32>
    %7 = arith.maximumf %5, %6 : vector<4096x32xf32>
    %8 = arith.truncf %7 : vector<4096x32xf32> to vector<4096x32xbf16>
    %c0_6 = arith.constant 0 : index
    %c0_7 = arith.constant 0 : index
    %9 = vector.load %arg4[%c0_6, %c0_7] : memref<4096x32xbf16, #tpu.memory_space<vmem>>, vector<4096x32xbf16>
    tpu.vector_store %arg4[%c0_6, %c0_7], %8 {strides = array<i32>} : memref<4096x32xbf16, #tpu.memory_space<vmem>>, vector<4096x32xbf16>,
    return
  }
  func.func @transform_0(%arg0: i32) -> (i32, i32) {
    %c0_i32 = arith.constant 0 : i32
    %c0_i32_0 = arith.constant 0 : i32
    return %arg0, %c0_i32 : i32, i32
  }
  func.func @transform_1(%arg0: i32) -> (i32, i32) {
    %c0_i32 = arith.constant 0 : i32
    %c0_i32_0 = arith.constant 0 : i32
    %c0_i32_1 = arith.constant 0 : i32
    return %c0_i32, %c0_i32_0 : i32, i32
  }
  func.func @transform_2(%arg0: i32) -> (i32, i32) {
    %c0_i32 = arith.constant 0 : i32
    %c0_i32_0 = arith.constant 0 : i32
    %c0_i32_1 = arith.constant 0 : i32
    return %c0_i32, %c0_i32_0 : i32, i32
  }
  func.func @transform_3(%arg0: i32) -> (i32, i32) {
    %c0_i32 = arith.constant 0 : i32
    %c0_i32_0 = arith.constant 0 : i32
    return %arg0, %c0_i32 : i32, i32
  }
}

</mosaic_0001>

<llo_original>
// kernel: _matmul_bias_relu.1
$region0: #{_matmul_bias_relu.1}
  #allocation0 [shape = 'u32[]', space=smem, size = 0x4, offset = 0x4, fixed_abs, tag = 'smem constant byte address 0x4 - core index']
  #allocation1 [shape = 'u32[144,128]{1,0:T(1,128)}', space=vmem, size = 0x12000, scoped, tag = 'internal scratch']
  %s0 = inlined_call_operand.vmem [shape: bf16[44402,27], index: 0, kind: input, shape index: {}]
  %s1 = inlined_call_operand.vmem [shape: bf16[27,32], index: 1, kind: input, shape index: {}]
  %s2 = inlined_call_operand.vmem [shape: f32[1,32], index: 2, kind: input, shape index: {}]
  %s3 = inlined_call_operand.vmem [shape: bf16[44402,32], index: 3, kind: output, shape index: {}]
  %s4 = sld [smem:[#allocation0]]
  $region89: #{_matmul_bias_relu.1} parent=0
    _
  %s6 = ssub.s32 1, %s4
  %s7 = scalar_select 0, %s6, %s4
  $region1: #{_matmul_bias_relu.1} parent=0
    #allocation2 [shape = 'u8[2097152]{0}', space=vmem, size = 0x200000, scoped, tag = 'output window, operand 0']
    loop: start=0, step=1, limit=13
    $region2: #{_matmul_bias_relu.1} parent=1 // loop_pre_header
      _
    $region3: #{_matmul_bias_relu.1} parent=1 // loop_header
      %s9 = sphi 0, %s13
      %p10 = scmp.ge.s32.totalorder %s9, 13
      %s19 = sphi 0, %s21
      %s22 = sphi 0, %s19
      %s23 = sphi 0, %s22
      %s39 = sphi 0, %s23
      %s43 = sphi 0, %s43
      %s45 = sphi 0, %s43
      %s46 = sphi 0, %s45
      %s60 = sphi 0, %s46
      %s64 = sphi 0, %s64
      %s66 = sphi 0, %s64
      %s67 = sphi 0, %s66
      %s81 = sphi 0, %s67
      %s87 = sphi 0, %s89
      %s90 = sphi 0, %s87
      %s91 = sphi 0, %s90
      %s107 = sphi 0, %s91
    $region4: #{_matmul_bias_relu.1} parent=1 // loop_header_branch
      %12 = sbr.rel (%p10) target = $region8
    $region5: #{_matmul_bias_relu.1} parent=1 // loop_body
      %s14 = ssub.s32 %s9, 1
      %s15 = ssub.s32 %s9, 2
      %s16 = sadd.s32 %s9, 1
      %s17 = ssub.s32 %s9, %s16
      %p18 = scmp.eq.s32.totalorder %s17, 0
      %s20 = sadd.s32 %s19, 1
      %s21 = scalar_select %p18, %s19, %s20
      %p24 = pneg %p18
      %p25 = scmp.eq.s32.totalorder %s9, 10
      %p26 = por %p24, %p25
      %p27 = scmp.ne.s32.totalorder %s19, %s22
      %p28 = scmp.eq.s32.totalorder %s9, 0
      %p29 = por %p27, %p28
      %p30 = scmp.ne.s32.totalorder %s19, %s22
      %p31 = scmp.eq.s32.totalorder %s14, 10
      %p32 = por %p30, %p31
      %p33 = scmp.ne.s32.totalorder %s22, %s23
      %p34 = scmp.eq.s32.totalorder %s14, 0
      %p35 = por %p33, %p34
      %p36 = scmp.ne.s32.totalorder %s22, %s23
      %p37 = scmp.eq.s32.totalorder %s15, 10
      %p38 = por %p36, %p37
      %p40 = scmp.ne.s32.totalorder %s23, %s39
      %p41 = scmp.eq.s32.totalorder %s15, 0
      %p42 = por %p40, %p41
      %s44 = sadd.s32 %s43, 1
      %p47 = scmp.eq.s32.totalorder %s9, 10
      %p48 = scmp.ne.s32.totalorder %s43, %s45
      %p49 = scmp.eq.s32.totalorder %s9, 0
      %p50 = por %p48, %p49
      %p51 = scmp.ne.s32.totalorder %s43, %s45
      %p52 = scmp.eq.s32.totalorder %s14, 10
      %p53 = por %p51, %p52
      %p54 = scmp.ne.s32.totalorder %s45, %s46
      %p55 = scmp.eq.s32.totalorder %s14, 0
      %p56 = por %p54, %p55
      %p57 = scmp.ne.s32.totalorder %s45, %s46
      %p58 = scmp.eq.s32.totalorder %s15, 10
      %p59 = por %p57, %p58
      %p61 = scmp.ne.s32.totalorder %s46, %s60
      %p62 = scmp.eq.s32.totalorder %s15, 0
      %p63 = por %p61, %p62
      %s65 = sadd.s32 %s64, 1
      %p68 = scmp.eq.s32.totalorder %s9, 10
      %p69 = scmp.ne.s32.totalorder %s64, %s66
      %p70 = scmp.eq.s32.totalorder %s9, 0
      %p71 = por %p69, %p70
      %p72 = scmp.ne.s32.totalorder %s64, %s66
      %p73 = scmp.eq.s32.totalorder %s14, 10
      %p74 = por %p72, %p73
      %p75 = scmp.ne.s32.totalorder %s66, %s67
      %p76 = scmp.eq.s32.totalorder %s14, 0
      %p77 = por %p75, %p76
      %p78 = scmp.ne.s32.totalorder %s66, %s67
      %p79 = scmp.eq.s32.totalorder %s15, 10
      %p80 = por %p78, %p79
      %p82 = scmp.ne.s32.totalorder %s67, %s81
      %p83 = scmp.eq.s32.totalorder %s15, 0
      %p84 = por %p82, %p83
      %s85 = ssub.s32 %s9, %s16
      %p86 = scmp.eq.s32.totalorder %s85, 0
      %s88 = sadd.s32 %s87, 1
      %s89 = scalar_select %p86, %s87, %s88
      %p92 = pneg %p86
      %p93 = scmp.eq.s32.totalorder %s9, 10
      %p94 = por %p92, %p93
      %p95 = scmp.ne.s32.totalorder %s87, %s90
      %p96 = scmp.eq.s32.totalorder %s9, 0
      %p97 = por %p95, %p96
      %p98 = scmp.ne.s32.totalorder %s87, %s90
      %p99 = scmp.eq.s32.totalorder %s14, 10
      %p100 = por %p98, %p99
      %p101 = scmp.ne.s32.totalorder %s90, %s91
      %p102 = scmp.eq.s32.totalorder %s14, 0
      %p103 = por %p101, %p102
      %p104 = scmp.ne.s32.totalorder %s90, %s91
      %p105 = scmp.eq.s32.totalorder %s15, 10
      %p106 = por %p104, %p105
      %p108 = scmp.ne.s32.totalorder %s91, %s107
      %p109 = scmp.eq.s32.totalorder %s15, 0
      %p110 = por %p108, %p109
      %p111 = scmp.le.s32.totalorder 1, %s9
      %p112 = scmp.lt.s32.totalorder %s9, 12
      %p113 = pnand %p111, %p112
      %p114 = pneg %p113
      // Predicated region
      $region9: #{_matmul_bias_relu.1} parent=5 // pred_check
        _
      $region10: #{_matmul_bias_relu.1} parent=5 // pred_check_branch
        %116 = sbr.rel (%p113) target = $region12
      $region11: #{_matmul_bias_relu.1} parent=5 // pred_region
        %s117 = ssub.s32 %s9, 1
        // Predicated region
        $region13: #{_matmul_bias_relu.1} parent=11 // pred_check
          %p118 = pneg %p56
        $region14: #{_matmul_bias_relu.1} parent=11 // pred_check_branch
          %120 = sbr.rel (%p118) target = $region16
        $region15: #{_matmul_bias_relu.1} parent=11 // pred_region
          _
        $region16: #{_matmul_bias_relu.1} parent=11 // pred_fallthru
          _
        // Predicated region
        $region17: #{_matmul_bias_relu.1} parent=11 // pred_check
          %p121 = pneg %p77
        $region18: #{_matmul_bias_relu.1} parent=11 // pred_check_branch
          %123 = sbr.rel (%p121) target = $region20
        $region19: #{_matmul_bias_relu.1} parent=11 // pred_region
          _
        $region20: #{_matmul_bias_relu.1} parent=11 // pred_fallthru
          _
      $region12: #{_matmul_bias_relu.1} parent=5 // pred_fallthru
        _
      %p124 = scmp.lt.s32.totalorder %s9, 11
      // Predicated region
      $region21: #{_matmul_bias_relu.1} parent=5 // pred_check
        %p125 = pneg %p124
      $region22: #{_matmul_bias_relu.1} parent=5 // pred_check_branch
        %127 = sbr.rel (%p125) target = $region24
      $region23: #{_matmul_bias_relu.1} parent=5 // pred_region
        // Predicated region
        $region25: #{_matmul_bias_relu.1} parent=23 // pred_check
          %p128 = pneg %p29
        $region26: #{_matmul_bias_relu.1} parent=23 // pred_check_branch
          %130 = sbr.rel (%p128) target = $region28
        $region27: #{_matmul_bias_relu.1} parent=23 // pred_region
          %s131 = smul.u32 512, %s9
          %s132 = ssub.s32 5551, %s131
          %p133 = scmp.lt.s32.totalorder %s132, 512
          %s134 = scalar_select %p133, %s132, 512
          %s135 = smul.u32 64, %s134
          %p136 = scmp.lt.s32.totalorder %s131, 5550
          %s137 = scalar_select %p136, %s131, 5550
          %s138 = smul.addr %s137, 4
          %s139 = scalar_lea.vmem %s0, %s138
          %s140 = smul.u32 512, %s9
          %s141 = ssub.s32 5551, %s140
          %p142 = scmp.lt.s32.totalorder %s141, 512
          %s143 = scalar_select %p142, %s141, 512
          %s144 = smul.u32 64, %s143
        $region28: #{_matmul_bias_relu.1} parent=23 // pred_fallthru
          _
      $region24: #{_matmul_bias_relu.1} parent=5 // pred_fallthru
        _
      %p145 = scmp.le.s32.totalorder 1, %s9
      %p146 = scmp.lt.s32.totalorder %s9, 12
      %p147 = pnand %p145, %p146
      %p148 = pneg %p147
      // Predicated region
      $region29: #{_matmul_bias_relu.1} parent=5 // pred_check
        _
      $region30: #{_matmul_bias_relu.1} parent=5 // pred_check_branch
        %150 = sbr.rel (%p147) target = $region32
      $region31: #{_matmul_bias_relu.1} parent=5 // pred_region
        %s151 = ssub.s32 %s9, 1
        %s152 = smul.u32 512, %s14
        %s153 = ssub.s32 5551, %s152
        %p154 = scmp.lt.s32.totalorder %s153, 512
        %s155 = scalar_select %p154, %s153, 512
        %s156 = smul.u32 64, %s155
        %p157 = scmp.lt.s32.totalorder %s152, 5550
        %s158 = scalar_select %p157, %s152, 5550
        %s159 = smul.addr %s158, 4
        %s160 = scalar_lea.vmem %s0, %s159
        %p161 = pneg %p35
        %p162 = pneg %p32
        %p163 = pneg %p56
        %p164 = pneg %p53
        %p165 = pneg %p77
        %p166 = pneg %p74
        %p167 = pneg %p103
        %p168 = pneg %p100
        %s169 = sand.u32 %s90, 1
        %s170 = sand.u32 %s90, 1
        %s171 = smul.addr %s170, 2048
        %s172 = scalar_lea.vmem [#allocation2], %s171
        %s173 = smul.u32 512, %s14
        %s174 = ssub.s32 5551, %s173
        %p175 = scmp.lt.s32.totalorder %s174, 512
        %s176 = scalar_select %p175, %s174, 512
        %s177 = smul.u32 64, %s176
        %p178 = scmp.lt.s32.totalorder %s173, 5550
        %s179 = scalar_select %p178, %s173, 5550
        %s180 = smul.addr %s179, 4
        %s181 = scalar_lea.vmem %s0, %s180
        %s182 = smul.u32 512, %s14
        %s183 = ssub.s32 5551, %s182
        %p184 = scmp.lt.s32.totalorder %s183, 512
        %s185 = scalar_select %p184, %s183, 512
        %s186 = smul.u32 64, %s185
        %s187 = smul.u32 512, %s14
        %s188 = ssub.s32 5551, %s187
        %p189 = scmp.lt.s32.totalorder %s188, 512
        %s190 = scalar_select %p189, %s188, 512
        %s191 = smul.u32 64, %s190
        %v193 = vld [vmem:[%s181] sm:$0xf]
        %v194 = vld [vmem:[%s181 + $0x4] sm:$0xf]
        %v195 = vld [vmem:[%s181 + $0x8] sm:$0xf]
        %v196 = vld [vmem:[%s181 + $0xc] sm:$0xf]
        %v197 = vld [vmem:[%s181 + $0x10] sm:$0xf]
        %v198 = vld [vmem:[%s181 + $0x14] sm:$0xf]
        %v199 = vld [vmem:[%s181 + $0x18] sm:$0xf]
        %v200 = vld [vmem:[%s181 + $0x1c] sm:$0xf]
        %v201 = vld [vmem:[%s181 + $0x20] sm:$0xf]
        %v202 = vld [vmem:[%s181 + $0x24] sm:$0xf]
        %v203 = vld [vmem:[%s181 + $0x28] sm:$0xf]
        %v204 = vld [vmem:[%s181 + $0x2c] sm:$0xf]
        %v205 = vld [vmem:[%s181 + $0x30] sm:$0xf]
        %v206 = vld [vmem:[%s181 + $0x34] sm:$0xf]
        %v207 = vld [vmem:[%s181 + $0x38] sm:$0xf]
        %v208 = vld [vmem:[%s181 + $0x3c] sm:$0xf]
        %v209 = vld [vmem:[%s181 + $0x40] sm:$0xf]
        %v210 = vld [vmem:[%s181 + $0x44] sm:$0xf]
        %v211 = vld [vmem:[%s181 + $0x48] sm:$0xf]
        %v212 = vld [vmem:[%s181 + $0x4c] sm:$0xf]
        %v213 = vld [vmem:[%s181 + $0x50] sm:$0xf]
        %v214 = vld [vmem:[%s181 + $0x54] sm:$0xf]
        %v215 = vld [vmem:[%s181 + $0x58] sm:$0xf]
        %v216 = vld [vmem:[%s181 + $0x5c] sm:$0xf]
        %v217 = vld [vmem:[%s181 + $0x60] sm:$0xf]
        %v218 = vld [vmem:[%s181 + $0x64] sm:$0xf]
        %v219 = vld [vmem:[%s181 + $0x68] sm:$0xf]
        %v220 = vld [vmem:[%s181 + $0x6c] sm:$0xf]
        %v221 = vld [vmem:[%s181 + $0x70] sm:$0xf]
        %v222 = vld [vmem:[%s181 + $0x74] sm:$0xf]
        %v223 = vld [vmem:[%s181 + $0x78] sm:$0xf]
        %v224 = vld [vmem:[%s181 + $0x7c] sm:$0xf]
        %v225 = vld [vmem:[%s181 + $0x80] sm:$0xf]
        %v226 = vld [vmem:[%s181 + $0x84] sm:$0xf]
        %v227 = vld [vmem:[%s181 + $0x88] sm:$0xf]
        %v228 = vld [vmem:[%s181 + $0x8c] sm:$0xf]
        %v229 = vld [vmem:[%s181 + $0x90] sm:$0xf]
        %v230 = vld [vmem:[%s181 + $0x94] sm:$0xf]
        %v231 = vld [vmem:[%s181 + $0x98] sm:$0xf]
        %v232 = vld [vmem:[%s181 + $0x9c] sm:$0xf]
        %v233 = vld [vmem:[%s181 + $0xa0] sm:$0xf]
        %v234 = vld [vmem:[%s181 + $0xa4] sm:$0xf]
        %v235 = vld [vmem:[%s181 + $0xa8] sm:$0xf]
        %v236 = vld [vmem:[%s181 + $0xac] sm:$0xf]
        %v237 = vld [vmem:[%s181 + $0xb0] sm:$0xf]
        %v238 = vld [vmem:[%s181 + $0xb4] sm:$0xf]
        %v239 = vld [vmem:[%s181 + $0xb8] sm:$0xf]
        %v240 = vld [vmem:[%s181 + $0xbc] sm:$0xf]
        %v241 = vld [vmem:[%s181 + $0xc0] sm:$0xf]
        %v242 = vld [vmem:[%s181 + $0xc4] sm:$0xf]
        %v243 = vld [vmem:[%s181 + $0xc8] sm:$0xf]
        %v244 = vld [vmem:[%s181 + $0xcc] sm:$0xf]
        %v245 = vld [vmem:[%s181 + $0xd0] sm:$0xf]
        %v246 = vld [vmem:[%s181 + $0xd4] sm:$0xf]
        %v247 = vld [vmem:[%s181 + $0xd8] sm:$0xf]
        %v248 = vld [vmem:[%s181 + $0xdc] sm:$0xf]
        %v249 = vld [vmem:[%s181 + $0xe0] sm:$0xf]
        %v250 = vld [vmem:[%s181 + $0xe4] sm:$0xf]
        %v251 = vld [vmem:[%s181 + $0xe8] sm:$0xf]
        %v252 = vld [vmem:[%s181 + $0xec] sm:$0xf]
        %v253 = vld [vmem:[%s181 + $0xf0] sm:$0xf]
        %v254 = vld [vmem:[%s181 + $0xf4] sm:$0xf]
        %v255 = vld [vmem:[%s181 + $0xf8] sm:$0xf]
        %v256 = vld [vmem:[%s181 + $0xfc] sm:$0xf]
        %v257 = vld [vmem:[%s181 + $0x100] sm:$0xf]
        %v258 = vld [vmem:[%s181 + $0x104] sm:$0xf]
        %v259 = vld [vmem:[%s181 + $0x108] sm:$0xf]
        %v260 = vld [vmem:[%s181 + $0x10c] sm:$0xf]
        %v261 = vld [vmem:[%s181 + $0x110] sm:$0xf]
        %v262 = vld [vmem:[%s181 + $0x114] sm:$0xf]
        %v263 = vld [vmem:[%s181 + $0x118] sm:$0xf]
        %v264 = vld [vmem:[%s181 + $0x11c] sm:$0xf]
        %v265 = vld [vmem:[%s181 + $0x120] sm:$0xf]
        %v266 = vld [vmem:[%s181 + $0x124] sm:$0xf]
        %v267 = vld [vmem:[%s181 + $0x128] sm:$0xf]
        %v268 = vld [vmem:[%s181 + $0x12c] sm:$0xf]
        %v269 = vld [vmem:[%s181 + $0x130] sm:$0xf]
        %v270 = vld [vmem:[%s181 + $0x134] sm:$0xf]
        %v271 = vld [vmem:[%s181 + $0x138] sm:$0xf]
        %v272 = vld [vmem:[%s181 + $0x13c] sm:$0xf]
        %v273 = vld [vmem:[%s181 + $0x140] sm:$0xf]
        %v274 = vld [vmem:[%s181 + $0x144] sm:$0xf]
        %v275 = vld [vmem:[%s181 + $0x148] sm:$0xf]
        %v276 = vld [vmem:[%s181 + $0x14c] sm:$0xf]
        %v277 = vld [vmem:[%s181 + $0x150] sm:$0xf]
        %v278 = vld [vmem:[%s181 + $0x154] sm:$0xf]
        %v279 = vld [vmem:[%s181 + $0x158] sm:$0xf]
        %v280 = vld [vmem:[%s181 + $0x15c] sm:$0xf]
        %v281 = vld [vmem:[%s181 + $0x160] sm:$0xf]
        %v282 = vld [vmem:[%s181 + $0x164] sm:$0xf]
        %v283 = vld [vmem:[%s181 + $0x168] sm:$0xf]
        %v284 = vld [vmem:[%s181 + $0x16c] sm:$0xf]
        %v285 = vld [vmem:[%s181 + $0x170] sm:$0xf]
        %v286 = vld [vmem:[%s181 + $0x174] sm:$0xf]
        %v287 = vld [vmem:[%s181 + $0x178] sm:$0xf]
        %v288 = vld [vmem:[%s181 + $0x17c] sm:$0xf]
        %v289 = vld [vmem:[%s181 + $0x180] sm:$0xf]
        %v290 = vld [vmem:[%s181 + $0x184] sm:$0xf]
        %v291 = vld [vmem:[%s181 + $0x188] sm:$0xf]
        %v292 = vld [vmem:[%s181 + $0x18c] sm:$0xf]
        %v293 = vld [vmem:[%s181 + $0x190] sm:$0xf]
        %v294 = vld [vmem:[%s181 + $0x194] sm:$0xf]
        %v295 = vld [vmem:[%s181 + $0x198] sm:$0xf]
        %v296 = vld [vmem:[%s181 + $0x19c] sm:$0xf]
        %v297 = vld [vmem:[%s181 + $0x1a0] sm:$0xf]
        %v298 = vld [vmem:[%s181 + $0x1a4] sm:$0xf]
        %v299 = vld [vmem:[%s181 + $0x1a8] sm:$0xf]
        %v300 = vld [vmem:[%s181 + $0x1ac] sm:$0xf]
        %v301 = vld [vmem:[%s181 + $0x1b0] sm:$0xf]
        %v302 = vld [vmem:[%s181 + $0x1b4] sm:$0xf]
        %v303 = vld [vmem:[%s181 + $0x1b8] sm:$0xf]
        %v304 = vld [vmem:[%s181 + $0x1bc] sm:$0xf]
        %v305 = vld [vmem:[%s181 + $0x1c0] sm:$0xf]
        %v306 = vld [vmem:[%s181 + $0x1c4] sm:$0xf]
        %v307 = vld [vmem:[%s181 + $0x1c8] sm:$0xf]
        %v308 = vld [vmem:[%s181 + $0x1cc] sm:$0xf]
        %v309 = vld [vmem:[%s181 + $0x1d0] sm:$0xf]
        %v310 = vld [vmem:[%s181 + $0x1d4] sm:$0xf]
        %v311 = vld [vmem:[%s181 + $0x1d8] sm:$0xf]
        %v312 = vld [vmem:[%s181 + $0x1dc] sm:$0xf]
        %v313 = vld [vmem:[%s181 + $0x1e0] sm:$0xf]
        %v314 = vld [vmem:[%s181 + $0x1e4] sm:$0xf]
        %v315 = vld [vmem:[%s181 + $0x1e8] sm:$0xf]
        %v316 = vld [vmem:[%s181 + $0x1ec] sm:$0xf]
        %v317 = vld [vmem:[%s181 + $0x1f0] sm:$0xf]
        %v318 = vld [vmem:[%s181 + $0x1f4] sm:$0xf]
        %v319 = vld [vmem:[%s181 + $0x1f8] sm:$0xf]
        %v320 = vld [vmem:[%s181 + $0x1fc] sm:$0xf]
        %v321 = vld [vmem:[%s181 + $0x200] sm:$0xf]
        %v322 = vld [vmem:[%s181 + $0x204] sm:$0xf]
        %v323 = vld [vmem:[%s181 + $0x208] sm:$0xf]
        %v324 = vld [vmem:[%s181 + $0x20c] sm:$0xf]
        %v325 = vld [vmem:[%s181 + $0x210] sm:$0xf]
        %v326 = vld [vmem:[%s181 + $0x214] sm:$0xf]
        %v327 = vld [vmem:[%s181 + $0x218] sm:$0xf]
        %v328 = vld [vmem:[%s181 + $0x21c] sm:$0xf]
        %v329 = vld [vmem:[%s181 + $0x220] sm:$0xf]
        %v330 = vld [vmem:[%s181 + $0x224] sm:$0xf]
        %v331 = vld [vmem:[%s181 + $0x228] sm:$0xf]
        %v332 = vld [vmem:[%s181 + $0x22c] sm:$0xf]
        %v333 = vld [vmem:[%s181 + $0x230] sm:$0xf]
        %v334 = vld [vmem:[%s181 + $0x234] sm:$0xf]
        %v335 = vld [vmem:[%s181 + $0x238] sm:$0xf]
        %v336 = vld [vmem:[%s181 + $0x23c] sm:$0xf]
        %v337 = vld [vmem:[%s181 + $0x240] sm:$0xf]
        %v338 = vld [vmem:[%s181 + $0x244] sm:$0xf]
        %v339 = vld [vmem:[%s181 + $0x248] sm:$0xf]
        %v340 = vld [vmem:[%s181 + $0x24c] sm:$0xf]
        %v341 = vld [vmem:[%s181 + $0x250] sm:$0xf]
        %v342 = vld [vmem:[%s181 + $0x254] sm:$0xf]
        %v343 = vld [vmem:[%s181 + $0x258] sm:$0xf]
        %v344 = vld [vmem:[%s181 + $0x25c] sm:$0xf]
        %v345 = vld [vmem:[%s181 + $0x260] sm:$0xf]
        %v346 = vld [vmem:[%s181 + $0x264] sm:$0xf]
        %v347 = vld [vmem:[%s181 + $0x268] sm:$0xf]
        %v348 = vld [vmem:[%s181 + $0x26c] sm:$0xf]
        %v349 = vld [vmem:[%s181 + $0x270] sm:$0xf]
        %v350 = vld [vmem:[%s181 + $0x274] sm:$0xf]
        %v351 = vld [vmem:[%s181 + $0x278] sm:$0xf]
        %v352 = vld [vmem:[%s181 + $0x27c] sm:$0xf]
        %v353 = vld [vmem:[%s181 + $0x280] sm:$0xf]
        %v354 = vld [vmem:[%s181 + $0x284] sm:$0xf]
        %v355 = vld [vmem:[%s181 + $0x288] sm:$0xf]
        %v356 = vld [vmem:[%s181 + $0x28c] sm:$0xf]
        %v357 = vld [vmem:[%s181 + $0x290] sm:$0xf]
        %v358 = vld [vmem:[%s181 + $0x294] sm:$0xf]
        %v359 = vld [vmem:[%s181 + $0x298] sm:$0xf]
        %v360 = vld [vmem:[%s181 + $0x29c] sm:$0xf]
        %v361 = vld [vmem:[%s181 + $0x2a0] sm:$0xf]
        %v362 = vld [vmem:[%s181 + $0x2a4] sm:$0xf]
        %v363 = vld [vmem:[%s181 + $0x2a8] sm:$0xf]
        %v364 = vld [vmem:[%s181 + $0x2ac] sm:$0xf]
        %v365 = vld [vmem:[%s181 + $0x2b0] sm:$0xf]
        %v366 = vld [vmem:[%s181 + $0x2b4] sm:$0xf]
        %v367 = vld [vmem:[%s181 + $0x2b8] sm:$0xf]
        %v368 = vld [vmem:[%s181 + $0x2bc] sm:$0xf]
        %v369 = vld [vmem:[%s181 + $0x2c0] sm:$0xf]
        %v370 = vld [vmem:[%s181 + $0x2c4] sm:$0xf]
        %v371 = vld [vmem:[%s181 + $0x2c8] sm:$0xf]
        %v372 = vld [vmem:[%s181 + $0x2cc] sm:$0xf]
        %v373 = vld [vmem:[%s181 + $0x2d0] sm:$0xf]
        %v374 = vld [vmem:[%s181 + $0x2d4] sm:$0xf]
        %v375 = vld [vmem:[%s181 + $0x2d8] sm:$0xf]
        %v376 = vld [vmem:[%s181 + $0x2dc] sm:$0xf]
        %v377 = vld [vmem:[%s181 + $0x2e0] sm:$0xf]
        %v378 = vld [vmem:[%s181 + $0x2e4] sm:$0xf]
        %v379 = vld [vmem:[%s181 + $0x2e8] sm:$0xf]
        %v380 = vld [vmem:[%s181 + $0x2ec] sm:$0xf]
        %v381 = vld [vmem:[%s181 + $0x2f0] sm:$0xf]
        %v382 = vld [vmem:[%s181 + $0x2f4] sm:$0xf]
        %v383 = vld [vmem:[%s181 + $0x2f8] sm:$0xf]
        %v384 = vld [vmem:[%s181 + $0x2fc] sm:$0xf]
        %v385 = vld [vmem:[%s181 + $0x300] sm:$0xf]
        %v386 = vld [vmem:[%s181 + $0x304] sm:$0xf]
        %v387 = vld [vmem:[%s181 + $0x308] sm:$0xf]
        %v388 = vld [vmem:[%s181 + $0x30c] sm:$0xf]
        %v389 = vld [vmem:[%s181 + $0x310] sm:$0xf]
        %v390 = vld [vmem:[%s181 + $0x314] sm:$0xf]
        %v391 = vld [vmem:[%s181 + $0x318] sm:$0xf]
        %v392 = vld [vmem:[%s181 + $0x31c] sm:$0xf]
        %v393 = vld [vmem:[%s181 + $0x320] sm:$0xf]
        %v394 = vld [vmem:[%s181 + $0x324] sm:$0xf]
        %v395 = vld [vmem:[%s181 + $0x328] sm:$0xf]
        %v396 = vld [vmem:[%s181 + $0x32c] sm:$0xf]
        %v397 = vld [vmem:[%s181 + $0x330] sm:$0xf]
        %v398 = vld [vmem:[%s181 + $0x334] sm:$0xf]
        %v399 = vld [vmem:[%s181 + $0x338] sm:$0xf]
        %v400 = vld [vmem:[%s181 + $0x33c] sm:$0xf]
        %v401 = vld [vmem:[%s181 + $0x340] sm:$0xf]
        %v402 = vld [vmem:[%s181 + $0x344] sm:$0xf]
        %v403 = vld [vmem:[%s181 + $0x348] sm:$0xf]
        %v404 = vld [vmem:[%s181 + $0x34c] sm:$0xf]
        %v405 = vld [vmem:[%s181 + $0x350] sm:$0xf]
        %v406 = vld [vmem:[%s181 + $0x354] sm:$0xf]
        %v407 = vld [vmem:[%s181 + $0x358] sm:$0xf]
        %v408 = vld [vmem:[%s181 + $0x35c] sm:$0xf]
        %v409 = vld [vmem:[%s181 + $0x360] sm:$0xf]
        %v410 = vld [vmem:[%s181 + $0x364] sm:$0xf]
        %v411 = vld [vmem:[%s181 + $0x368] sm:$0xf]
        %v412 = vld [vmem:[%s181 + $0x36c] sm:$0xf]
        %v413 = vld [vmem:[%s181 + $0x370] sm:$0xf]
        %v414 = vld [vmem:[%s181 + $0x374] sm:$0xf]
        %v415 = vld [vmem:[%s181 + $0x378] sm:$0xf]
        %v416 = vld [vmem:[%s181 + $0x37c] sm:$0xf]
        %v417 = vld [vmem:[%s181 + $0x380] sm:$0xf]
        %v418 = vld [vmem:[%s181 + $0x384] sm:$0xf]
        %v419 = vld [vmem:[%s181 + $0x388] sm:$0xf]
        %v420 = vld [vmem:[%s181 + $0x38c] sm:$0xf]
        %v421 = vld [vmem:[%s181 + $0x390] sm:$0xf]
        %v422 = vld [vmem:[%s181 + $0x394] sm:$0xf]
        %v423 = vld [vmem:[%s181 + $0x398] sm:$0xf]
        %v424 = vld [vmem:[%s181 + $0x39c] sm:$0xf]
        %v425 = vld [vmem:[%s181 + $0x3a0] sm:$0xf]
        %v426 = vld [vmem:[%s181 + $0x3a4] sm:$0xf]
        %v427 = vld [vmem:[%s181 + $0x3a8] sm:$0xf]
        %v428 = vld [vmem:[%s181 + $0x3ac] sm:$0xf]
        %v429 = vld [vmem:[%s181 + $0x3b0] sm:$0xf]
        %v430 = vld [vmem:[%s181 + $0x3b4] sm:$0xf]
        %v431 = vld [vmem:[%s181 + $0x3b8] sm:$0xf]
        %v432 = vld [vmem:[%s181 + $0x3bc] sm:$0xf]
        %v433 = vld [vmem:[%s181 + $0x3c0] sm:$0xf]
        %v434 = vld [vmem:[%s181 + $0x3c4] sm:$0xf]
        %v435 = vld [vmem:[%s181 + $0x3c8] sm:$0xf]
        %v436 = vld [vmem:[%s181 + $0x3cc] sm:$0xf]
        %v437 = vld [vmem:[%s181 + $0x3d0] sm:$0xf]
        %v438 = vld [vmem:[%s181 + $0x3d4] sm:$0xf]
        %v439 = vld [vmem:[%s181 + $0x3d8] sm:$0xf]
        %v440 = vld [vmem:[%s181 + $0x3dc] sm:$0xf]
        %v441 = vld [vmem:[%s181 + $0x3e0] sm:$0xf]
        %v442 = vld [vmem:[%s181 + $0x3e4] sm:$0xf]
        %v443 = vld [vmem:[%s181 + $0x3e8] sm:$0xf]
        %v444 = vld [vmem:[%s181 + $0x3ec] sm:$0xf]
        %v445 = vld [vmem:[%s181 + $0x3f0] sm:$0xf]
        %v446 = vld [vmem:[%s181 + $0x3f4] sm:$0xf]
        %v447 = vld [vmem:[%s181 + $0x3f8] sm:$0xf]
        %v448 = vld [vmem:[%s181 + $0x3fc] sm:$0xf]
        %v449 = vld [vmem:[%s181 + $0x400] sm:$0xf]
        %v450 = vld [vmem:[%s181 + $0x404] sm:$0xf]
        %v451 = vld [vmem:[%s181 + $0x408] sm:$0xf]
        %v452 = vld [vmem:[%s181 + $0x40c] sm:$0xf]
        %v453 = vld [vmem:[%s181 + $0x410] sm:$0xf]
        %v454 = vld [vmem:[%s181 + $0x414] sm:$0xf]
        %v455 = vld [vmem:[%s181 + $0x418] sm:$0xf]
        %v456 = vld [vmem:[%s181 + $0x41c] sm:$0xf]
        %v457 = vld [vmem:[%s181 + $0x420] sm:$0xf]
        %v458 = vld [vmem:[%s181 + $0x424] sm:$0xf]
        %v459 = vld [vmem:[%s181 + $0x428] sm:$0xf]
        %v460 = vld [vmem:[%s181 + $0x42c] sm:$0xf]
        %v461 = vld [vmem:[%s181 + $0x430] sm:$0xf]
        %v462 = vld [vmem:[%s181 + $0x434] sm:$0xf]
        %v463 = vld [vmem:[%s181 + $0x438] sm:$0xf]
        %v464 = vld [vmem:[%s181 + $0x43c] sm:$0xf]
        %v465 = vld [vmem:[%s181 + $0x440] sm:$0xf]
        %v466 = vld [vmem:[%s181 + $0x444] sm:$0xf]
        %v467 = vld [vmem:[%s181 + $0x448] sm:$0xf]
        %v468 = vld [vmem:[%s181 + $0x44c] sm:$0xf]
        %v469 = vld [vmem:[%s181 + $0x450] sm:$0xf]
        %v470 = vld [vmem:[%s181 + $0x454] sm:$0xf]
        %v471 = vld [vmem:[%s181 + $0x458] sm:$0xf]
        %v472 = vld [vmem:[%s181 + $0x45c] sm:$0xf]
        %v473 = vld [vmem:[%s181 + $0x460] sm:$0xf]
        %v474 = vld [vmem:[%s181 + $0x464] sm:$0xf]
        %v475 = vld [vmem:[%s181 + $0x468] sm:$0xf]
        %v476 = vld [vmem:[%s181 + $0x46c] sm:$0xf]
        %v477 = vld [vmem:[%s181 + $0x470] sm:$0xf]
        %v478 = vld [vmem:[%s181 + $0x474] sm:$0xf]
        %v479 = vld [vmem:[%s181 + $0x478] sm:$0xf]
        %v480 = vld [vmem:[%s181 + $0x47c] sm:$0xf]
        %v481 = vld [vmem:[%s181 + $0x480] sm:$0xf]
        %v482 = vld [vmem:[%s181 + $0x484] sm:$0xf]
        %v483 = vld [vmem:[%s181 + $0x488] sm:$0xf]
        %v484 = vld [vmem:[%s181 + $0x48c] sm:$0xf]
        %v485 = vld [vmem:[%s181 + $0x490] sm:$0xf]
        %v486 = vld [vmem:[%s181 + $0x494] sm:$0xf]
        %v487 = vld [vmem:[%s181 + $0x498] sm:$0xf]
        %v488 = vld [vmem:[%s181 + $0x49c] sm:$0xf]
        %v489 = vld [vmem:[%s181 + $0x4a0] sm:$0xf]
        %v490 = vld [vmem:[%s181 + $0x4a4] sm:$0xf]
        %v491 = vld [vmem:[%s181 + $0x4a8] sm:$0xf]
        %v492 = vld [vmem:[%s181 + $0x4ac] sm:$0xf]
        %v493 = vld [vmem:[%s181 + $0x4b0] sm:$0xf]
        %v494 = vld [vmem:[%s181 + $0x4b4] sm:$0xf]
        %v495 = vld [vmem:[%s181 + $0x4b8] sm:$0xf]
        %v496 = vld [vmem:[%s181 + $0x4bc] sm:$0xf]
        %v497 = vld [vmem:[%s181 + $0x4c0] sm:$0xf]
        %v498 = vld [vmem:[%s181 + $0x4c4] sm:$0xf]
        %v499 = vld [vmem:[%s181 + $0x4c8] sm:$0xf]
        %v500 = vld [vmem:[%s181 + $0x4cc] sm:$0xf]
        %v501 = vld [vmem:[%s181 + $0x4d0] sm:$0xf]
        %v502 = vld [vmem:[%s181 + $0x4d4] sm:$0xf]
        %v503 = vld [vmem:[%s181 + $0x4d8] sm:$0xf]
        %v504 = vld [vmem:[%s181 + $0x4dc] sm:$0xf]
        %v505 = vld [vmem:[%s181 + $0x4e0] sm:$0xf]
        %v506 = vld [vmem:[%s181 + $0x4e4] sm:$0xf]
        %v507 = vld [vmem:[%s181 + $0x4e8] sm:$0xf]
        %v508 = vld [vmem:[%s181 + $0x4ec] sm:$0xf]
        %v509 = vld [vmem:[%s181 + $0x4f0] sm:$0xf]
        %v510 = vld [vmem:[%s181 + $0x4f4] sm:$0xf]
        %v511 = vld [vmem:[%s181 + $0x4f8] sm:$0xf]
        %v512 = vld [vmem:[%s181 + $0x4fc] sm:$0xf]
        %v513 = vld [vmem:[%s181 + $0x500] sm:$0xf]
        %v514 = vld [vmem:[%s181 + $0x504] sm:$0xf]
        %v515 = vld [vmem:[%s181 + $0x508] sm:$0xf]
        %v516 = vld [vmem:[%s181 + $0x50c] sm:$0xf]
        %v517 = vld [vmem:[%s181 + $0x510] sm:$0xf]
        %v518 = vld [vmem:[%s181 + $0x514] sm:$0xf]
        %v519 = vld [vmem:[%s181 + $0x518] sm:$0xf]
        %v520 = vld [vmem:[%s181 + $0x51c] sm:$0xf]
        %v521 = vld [vmem:[%s181 + $0x520] sm:$0xf]
        %v522 = vld [vmem:[%s181 + $0x524] sm:$0xf]
        %v523 = vld [vmem:[%s181 + $0x528] sm:$0xf]
        %v524 = vld [vmem:[%s181 + $0x52c] sm:$0xf]
        %v525 = vld [vmem:[%s181 + $0x530] sm:$0xf]
        %v526 = vld [vmem:[%s181 + $0x534] sm:$0xf]
        %v527 = vld [vmem:[%s181 + $0x538] sm:$0xf]
        %v528 = vld [vmem:[%s181 + $0x53c] sm:$0xf]
        %v529 = vld [vmem:[%s181 + $0x540] sm:$0xf]
        %v530 = vld [vmem:[%s181 + $0x544] sm:$0xf]
        %v531 = vld [vmem:[%s181 + $0x548] sm:$0xf]
        %v532 = vld [vmem:[%s181 + $0x54c] sm:$0xf]
        %v533 = vld [vmem:[%s181 + $0x550] sm:$0xf]
        %v534 = vld [vmem:[%s181 + $0x554] sm:$0xf]
        %v535 = vld [vmem:[%s181 + $0x558] sm:$0xf]
        %v536 = vld [vmem:[%s181 + $0x55c] sm:$0xf]
        %v537 = vld [vmem:[%s181 + $0x560] sm:$0xf]
        %v538 = vld [vmem:[%s181 + $0x564] sm:$0xf]
        %v539 = vld [vmem:[%s181 + $0x568] sm:$0xf]
        %v540 = vld [vmem:[%s181 + $0x56c] sm:$0xf]
        %v541 = vld [vmem:[%s181 + $0x570] sm:$0xf]
        %v542 = vld [vmem:[%s181 + $0x574] sm:$0xf]
        %v543 = vld [vmem:[%s181 + $0x578] sm:$0xf]
        %v544 = vld [vmem:[%s181 + $0x57c] sm:$0xf]
        %v545 = vld [vmem:[%s181 + $0x580] sm:$0xf]
        %v546 = vld [vmem:[%s181 + $0x584] sm:$0xf]
        %v547 = vld [vmem:[%s181 + $0x588] sm:$0xf]
        %v548 = vld [vmem:[%s181 + $0x58c] sm:$0xf]
        %v549 = vld [vmem:[%s181 + $0x590] sm:$0xf]
        %v550 = vld [vmem:[%s181 + $0x594] sm:$0xf]
        %v551 = vld [vmem:[%s181 + $0x598] sm:$0xf]
        %v552 = vld [vmem:[%s181 + $0x59c] sm:$0xf]
        %v553 = vld [vmem:[%s181 + $0x5a0] sm:$0xf]
        %v554 = vld [vmem:[%s181 + $0x5a4] sm:$0xf]
        %v555 = vld [vmem:[%s181 + $0x5a8] sm:$0xf]
        %v556 = vld [vmem:[%s181 + $0x5ac] sm:$0xf]
        %v557 = vld [vmem:[%s181 + $0x5b0] sm:$0xf]
        %v558 = vld [vmem:[%s181 + $0x5b4] sm:$0xf]
        %v559 = vld [vmem:[%s181 + $0x5b8] sm:$0xf]
        %v560 = vld [vmem:[%s181 + $0x5bc] sm:$0xf]
        %v561 = vld [vmem:[%s181 + $0x5c0] sm:$0xf]
        %v562 = vld [vmem:[%s181 + $0x5c4] sm:$0xf]
        %v563 = vld [vmem:[%s181 + $0x5c8] sm:$0xf]
        %v564 = vld [vmem:[%s181 + $0x5cc] sm:$0xf]
        %v565 = vld [vmem:[%s181 + $0x5d0] sm:$0xf]
        %v566 = vld [vmem:[%s181 + $0x5d4] sm:$0xf]
        %v567 = vld [vmem:[%s181 + $0x5d8] sm:$0xf]
        %v568 = vld [vmem:[%s181 + $0x5dc] sm:$0xf]
        %v569 = vld [vmem:[%s181 + $0x5e0] sm:$0xf]
        %v570 = vld [vmem:[%s181 + $0x5e4] sm:$0xf]
        %v571 = vld [vmem:[%s181 + $0x5e8] sm:$0xf]
        %v572 = vld [vmem:[%s181 + $0x5ec] sm:$0xf]
        %v573 = vld [vmem:[%s181 + $0x5f0] sm:$0xf]
        %v574 = vld [vmem:[%s181 + $0x5f4] sm:$0xf]
        %v575 = vld [vmem:[%s181 + $0x5f8] sm:$0xf]
        %v576 = vld [vmem:[%s181 + $0x5fc] sm:$0xf]
        %v577 = vld [vmem:[%s181 + $0x600] sm:$0xf]
        %v578 = vld [vmem:[%s181 + $0x604] sm:$0xf]
        %v579 = vld [vmem:[%s181 + $0x608] sm:$0xf]
        %v580 = vld [vmem:[%s181 + $0x60c] sm:$0xf]
        %v581 = vld [vmem:[%s181 + $0x610] sm:$0xf]
        %v582 = vld [vmem:[%s181 + $0x614] sm:$0xf]
        %v583 = vld [vmem:[%s181 + $0x618] sm:$0xf]
        %v584 = vld [vmem:[%s181 + $0x61c] sm:$0xf]
        %v585 = vld [vmem:[%s181 + $0x620] sm:$0xf]
        %v586 = vld [vmem:[%s181 + $0x624] sm:$0xf]
        %v587 = vld [vmem:[%s181 + $0x628] sm:$0xf]
        %v588 = vld [vmem:[%s181 + $0x62c] sm:$0xf]
        %v589 = vld [vmem:[%s181 + $0x630] sm:$0xf]
        %v590 = vld [vmem:[%s181 + $0x634] sm:$0xf]
        %v591 = vld [vmem:[%s181 + $0x638] sm:$0xf]
        %v592 = vld [vmem:[%s181 + $0x63c] sm:$0xf]
        %v593 = vld [vmem:[%s181 + $0x640] sm:$0xf]
        %v594 = vld [vmem:[%s181 + $0x644] sm:$0xf]
        %v595 = vld [vmem:[%s181 + $0x648] sm:$0xf]
        %v596 = vld [vmem:[%s181 + $0x64c] sm:$0xf]
        %v597 = vld [vmem:[%s181 + $0x650] sm:$0xf]
        %v598 = vld [vmem:[%s181 + $0x654] sm:$0xf]
        %v599 = vld [vmem:[%s181 + $0x658] sm:$0xf]
        %v600 = vld [vmem:[%s181 + $0x65c] sm:$0xf]
        %v601 = vld [vmem:[%s181 + $0x660] sm:$0xf]
        %v602 = vld [vmem:[%s181 + $0x664] sm:$0xf]
        %v603 = vld [vmem:[%s181 + $0x668] sm:$0xf]
        %v604 = vld [vmem:[%s181 + $0x66c] sm:$0xf]
        %v605 = vld [vmem:[%s181 + $0x670] sm:$0xf]
        %v606 = vld [vmem:[%s181 + $0x674] sm:$0xf]
        %v607 = vld [vmem:[%s181 + $0x678] sm:$0xf]
        %v608 = vld [vmem:[%s181 + $0x67c] sm:$0xf]
        %v609 = vld [vmem:[%s181 + $0x680] sm:$0xf]
        %v610 = vld [vmem:[%s181 + $0x684] sm:$0xf]
        %v611 = vld [vmem:[%s181 + $0x688] sm:$0xf]
        %v612 = vld [vmem:[%s181 + $0x68c] sm:$0xf]
        %v613 = vld [vmem:[%s181 + $0x690] sm:$0xf]
        %v614 = vld [vmem:[%s181 + $0x694] sm:$0xf]
        %v615 = vld [vmem:[%s181 + $0x698] sm:$0xf]
        %v616 = vld [vmem:[%s181 + $0x69c] sm:$0xf]
        %v617 = vld [vmem:[%s181 + $0x6a0] sm:$0xf]
        %v618 = vld [vmem:[%s181 + $0x6a4] sm:$0xf]
        %v619 = vld [vmem:[%s181 + $0x6a8] sm:$0xf]
        %v620 = vld [vmem:[%s181 + $0x6ac] sm:$0xf]
        %v621 = vld [vmem:[%s181 + $0x6b0] sm:$0xf]
        %v622 = vld [vmem:[%s181 + $0x6b4] sm:$0xf]
        %v623 = vld [vmem:[%s181 + $0x6b8] sm:$0xf]
        %v624 = vld [vmem:[%s181 + $0x6bc] sm:$0xf]
        %v625 = vld [vmem:[%s181 + $0x6c0] sm:$0xf]
        %v626 = vld [vmem:[%s181 + $0x6c4] sm:$0xf]
        %v627 = vld [vmem:[%s181 + $0x6c8] sm:$0xf]
        %v628 = vld [vmem:[%s181 + $0x6cc] sm:$0xf]
        %v629 = vld [vmem:[%s181 + $0x6d0] sm:$0xf]
        %v630 = vld [vmem:[%s181 + $0x6d4] sm:$0xf]
        %v631 = vld [vmem:[%s181 + $0x6d8] sm:$0xf]
        %v632 = vld [vmem:[%s181 + $0x6dc] sm:$0xf]
        %v633 = vld [vmem:[%s181 + $0x6e0] sm:$0xf]
        %v634 = vld [vmem:[%s181 + $0x6e4] sm:$0xf]
        %v635 = vld [vmem:[%s181 + $0x6e8] sm:$0xf]
        %v636 = vld [vmem:[%s181 + $0x6ec] sm:$0xf]
        %v637 = vld [vmem:[%s181 + $0x6f0] sm:$0xf]
        %v638 = vld [vmem:[%s181 + $0x6f4] sm:$0xf]
        %v639 = vld [vmem:[%s181 + $0x6f8] sm:$0xf]
        %v640 = vld [vmem:[%s181 + $0x6fc] sm:$0xf]
        %v641 = vld [vmem:[%s181 + $0x700] sm:$0xf]
        %v642 = vld [vmem:[%s181 + $0x704] sm:$0xf]
        %v643 = vld [vmem:[%s181 + $0x708] sm:$0xf]
        %v644 = vld [vmem:[%s181 + $0x70c] sm:$0xf]
        %v645 = vld [vmem:[%s181 + $0x710] sm:$0xf]
        %v646 = vld [vmem:[%s181 + $0x714] sm:$0xf]
        %v647 = vld [vmem:[%s181 + $0x718] sm:$0xf]
        %v648 = vld [vmem:[%s181 + $0x71c] sm:$0xf]
        %v649 = vld [vmem:[%s181 + $0x720] sm:$0xf]
        %v650 = vld [vmem:[%s181 + $0x724] sm:$0xf]
        %v651 = vld [vmem:[%s181 + $0x728] sm:$0xf]
        %v652 = vld [vmem:[%s181 + $0x72c] sm:$0xf]
        %v653 = vld [vmem:[%s181 + $0x730] sm:$0xf]
        %v654 = vld [vmem:[%s181 + $0x734] sm:$0xf]
        %v655 = vld [vmem:[%s181 + $0x738] sm:$0xf]
        %v656 = vld [vmem:[%s181 + $0x73c] sm:$0xf]
        %v657 = vld [vmem:[%s181 + $0x740] sm:$0xf]
        %v658 = vld [vmem:[%s181 + $0x744] sm:$0xf]
        %v659 = vld [vmem:[%s181 + $0x748] sm:$0xf]
        %v660 = vld [vmem:[%s181 + $0x74c] sm:$0xf]
        %v661 = vld [vmem:[%s181 + $0x750] sm:$0xf]
        %v662 = vld [vmem:[%s181 + $0x754] sm:$0xf]
        %v663 = vld [vmem:[%s181 + $0x758] sm:$0xf]
        %v664 = vld [vmem:[%s181 + $0x75c] sm:$0xf]
        %v665 = vld [vmem:[%s181 + $0x760] sm:$0xf]
        %v666 = vld [vmem:[%s181 + $0x764] sm:$0xf]
        %v667 = vld [vmem:[%s181 + $0x768] sm:$0xf]
        %v668 = vld [vmem:[%s181 + $0x76c] sm:$0xf]
        %v669 = vld [vmem:[%s181 + $0x770] sm:$0xf]
        %v670 = vld [vmem:[%s181 + $0x774] sm:$0xf]
        %v671 = vld [vmem:[%s181 + $0x778] sm:$0xf]
        %v672 = vld [vmem:[%s181 + $0x77c] sm:$0xf]
        %v673 = vld [vmem:[%s181 + $0x780] sm:$0xf]
        %v674 = vld [vmem:[%s181 + $0x784] sm:$0xf]
        %v675 = vld [vmem:[%s181 + $0x788] sm:$0xf]
        %v676 = vld [vmem:[%s181 + $0x78c] sm:$0xf]
        %v677 = vld [vmem:[%s181 + $0x790] sm:$0xf]
        %v678 = vld [vmem:[%s181 + $0x794] sm:$0xf]
        %v679 = vld [vmem:[%s181 + $0x798] sm:$0xf]
        %v680 = vld [vmem:[%s181 + $0x79c] sm:$0xf]
        %v681 = vld [vmem:[%s181 + $0x7a0] sm:$0xf]
        %v682 = vld [vmem:[%s181 + $0x7a4] sm:$0xf]
        %v683 = vld [vmem:[%s181 + $0x7a8] sm:$0xf]
        %v684 = vld [vmem:[%s181 + $0x7ac] sm:$0xf]
        %v685 = vld [vmem:[%s181 + $0x7b0] sm:$0xf]
        %v686 = vld [vmem:[%s181 + $0x7b4] sm:$0xf]
        %v687 = vld [vmem:[%s181 + $0x7b8] sm:$0xf]
        %v688 = vld [vmem:[%s181 + $0x7bc] sm:$0xf]
        %v689 = vld [vmem:[%s181 + $0x7c0] sm:$0xf]
        %v690 = vld [vmem:[%s181 + $0x7c4] sm:$0xf]
        %v691 = vld [vmem:[%s181 + $0x7c8] sm:$0xf]
        %v692 = vld [vmem:[%s181 + $0x7cc] sm:$0xf]
        %v693 = vld [vmem:[%s181 + $0x7d0] sm:$0xf]
        %v694 = vld [vmem:[%s181 + $0x7d4] sm:$0xf]
        %v695 = vld [vmem:[%s181 + $0x7d8] sm:$0xf]
        %v696 = vld [vmem:[%s181 + $0x7dc] sm:$0xf]
        %v697 = vld [vmem:[%s181 + $0x7e0] sm:$0xf]
        %v698 = vld [vmem:[%s181 + $0x7e4] sm:$0xf]
        %v699 = vld [vmem:[%s181 + $0x7e8] sm:$0xf]
        %v700 = vld [vmem:[%s181 + $0x7ec] sm:$0xf]
        %v701 = vld [vmem:[%s181 + $0x7f0] sm:$0xf]
        %v702 = vld [vmem:[%s181 + $0x7f4] sm:$0xf]
        %v703 = vld [vmem:[%s181 + $0x7f8] sm:$0xf]
        %v704 = vld [vmem:[%s181 + $0x7fc] sm:$0xf]
        %v705 = vld [vmem:[%s1] sm:$0xf]
        %v706 = vld [vmem:[%s1 + $0x4] sm:$0xf]
        %v707 = vld [vmem:[%s1 + $0x8] sm:$0xf]
        %v708 = vld [vmem:[%s1 + $0xc] sm:$0x3]
        %v709 = vld [vmem:[%s2] sm:$0x1]
        %v711 = vlaneseq
        %v712 = vshrl.u32 %v711, 7
        %v713 = vsub.s32 0, %v712
        %v714 = vrot.slane %v709, %v713
        %v1228 = vunpack.c.l.b16 %v193
        %v1229 = vunpack.c.l.b16 %v194
        %v1230 = vunpack.c.l.b16 %v195
        %v1231 = vunpack.c.l.b16 %v196
        %v1232 = vunpack.c.l.b16 %v197
        %v1233 = vunpack.c.l.b16 %v198
        %v1234 = vunpack.c.l.b16 %v199
        %v1235 = vunpack.c.l.b16 %v200
        %v1236 = vunpack.c.l.b16 %v201
        %v1237 = vunpack.c.l.b16 %v202
        %v1238 = vunpack.c.l.b16 %v203
        %v1239 = vunpack.c.l.b16 %v204
        %v1240 = vunpack.c.l.b16 %v205
        %v1241 = vunpack.c.l.b16 %v206
        %v1242 = vunpack.c.l.b16 %v207
        %v1243 = vunpack.c.l.b16 %v208
        %v1244 = vunpack.c.l.b16 %v209
        %v1245 = vunpack.c.l.b16 %v210
        %v1246 = vunpack.c.l.b16 %v211
        %v1247 = vunpack.c.l.b16 %v212
        %v1248 = vunpack.c.l.b16 %v213
        %v1249 = vunpack.c.l.b16 %v214
        %v1250 = vunpack.c.l.b16 %v215
        %v1251 = vunpack.c.l.b16 %v216
        %v1252 = vunpack.c.l.b16 %v217
        %v1253 = vunpack.c.l.b16 %v218
        %v1254 = vunpack.c.l.b16 %v219
        %v1255 = vunpack.c.l.b16 %v220
        %v1256 = vunpack.c.l.b16 %v221
        %v1257 = vunpack.c.l.b16 %v222
        %v1258 = vunpack.c.l.b16 %v223
        %v1259 = vunpack.c.l.b16 %v224
        %v1260 = vunpack.c.l.b16 %v225
        %v1261 = vunpack.c.l.b16 %v226
        %v1262 = vunpack.c.l.b16 %v227
        %v1263 = vunpack.c.l.b16 %v228
        %v1264 = vunpack.c.l.b16 %v229
        %v1265 = vunpack.c.l.b16 %v230
        %v1266 = vunpack.c.l.b16 %v231
        %v1267 = vunpack.c.l.b16 %v232
        %v1268 = vunpack.c.l.b16 %v233
        %v1269 = vunpack.c.l.b16 %v234
        %v1270 = vunpack.c.l.b16 %v235
        %v1271 = vunpack.c.l.b16 %v236
        %v1272 = vunpack.c.l.b16 %v237
        %v1273 = vunpack.c.l.b16 %v238
        %v1274 = vunpack.c.l.b16 %v239
        %v1275 = vunpack.c.l.b16 %v240
        %v1276 = vunpack.c.l.b16 %v241
        %v1277 = vunpack.c.l.b16 %v242
        %v1278 = vunpack.c.l.b16 %v243
        %v1279 = vunpack.c.l.b16 %v244
        %v1280 = vunpack.c.l.b16 %v245
        %v1281 = vunpack.c.l.b16 %v246
        %v1282 = vunpack.c.l.b16 %v247
        %v1283 = vunpack.c.l.b16 %v248
        %v1284 = vunpack.c.l.b16 %v249
        %v1285 = vunpack.c.l.b16 %v250
        %v1286 = vunpack.c.l.b16 %v251
        %v1287 = vunpack.c.l.b16 %v252
        %v1288 = vunpack.c.l.b16 %v253
        %v1289 = vunpack.c.l.b16 %v254
        %v1290 = vunpack.c.l.b16 %v255
        %v1291 = vunpack.c.l.b16 %v256
        %v1292 = vunpack.c.l.b16 %v257
        %v1293 = vunpack.c.l.b16 %v258
        %v1294 = vunpack.c.l.b16 %v259
        %v1295 = vunpack.c.l.b16 %v260
        %v1296 = vunpack.c.l.b16 %v261
        %v1297 = vunpack.c.l.b16 %v262
        %v1298 = vunpack.c.l.b16 %v263
        %v1299 = vunpack.c.l.b16 %v264
        %v1300 = vunpack.c.l.b16 %v265
        %v1301 = vunpack.c.l.b16 %v266
        %v1302 = vunpack.c.l.b16 %v267
        %v1303 = vunpack.c.l.b16 %v268
        %v1304 = vunpack.c.l.b16 %v269
        %v1305 = vunpack.c.l.b16 %v270
        %v1306 = vunpack.c.l.b16 %v271
        %v1307 = vunpack.c.l.b16 %v272
        %v1308 = vunpack.c.l.b16 %v273
        %v1309 = vunpack.c.l.b16 %v274
        %v1310 = vunpack.c.l.b16 %v275
        %v1311 = vunpack.c.l.b16 %v276
        %v1312 = vunpack.c.l.b16 %v277
        %v1313 = vunpack.c.l.b16 %v278
        %v1314 = vunpack.c.l.b16 %v279
        %v1315 = vunpack.c.l.b16 %v280
        %v1316 = vunpack.c.l.b16 %v281
        %v1317 = vunpack.c.l.b16 %v282
        %v1318 = vunpack.c.l.b16 %v283
        %v1319 = vunpack.c.l.b16 %v284
        %v1320 = vunpack.c.l.b16 %v285
        %v1321 = vunpack.c.l.b16 %v286
        %v1322 = vunpack.c.l.b16 %v287
        %v1323 = vunpack.c.l.b16 %v288
        %v1324 = vunpack.c.l.b16 %v289
        %v1325 = vunpack.c.l.b16 %v290
        %v1326 = vunpack.c.l.b16 %v291
        %v1327 = vunpack.c.l.b16 %v292
        %v1328 = vunpack.c.l.b16 %v293
        %v1329 = vunpack.c.l.b16 %v294
        %v1330 = vunpack.c.l.b16 %v295
        %v1331 = vunpack.c.l.b16 %v296
        %v1332 = vunpack.c.l.b16 %v297
        %v1333 = vunpack.c.l.b16 %v298
        %v1334 = vunpack.c.l.b16 %v299
        %v1335 = vunpack.c.l.b16 %v300
        %v1336 = vunpack.c.l.b16 %v301
        %v1337 = vunpack.c.l.b16 %v302
        %v1338 = vunpack.c.l.b16 %v303
        %v1339 = vunpack.c.l.b16 %v304
        %v1340 = vunpack.c.l.b16 %v305
        %v1341 = vunpack.c.l.b16 %v306
        %v1342 = vunpack.c.l.b16 %v307
        %v1343 = vunpack.c.l.b16 %v308
        %v1344 = vunpack.c.l.b16 %v309
        %v1345 = vunpack.c.l.b16 %v310
        %v1346 = vunpack.c.l.b16 %v311
        %v1347 = vunpack.c.l.b16 %v312
        %v1348 = vunpack.c.l.b16 %v313
        %v1349 = vunpack.c.l.b16 %v314
        %v1350 = vunpack.c.l.b16 %v315
        %v1351 = vunpack.c.l.b16 %v316
        %v1352 = vunpack.c.l.b16 %v317
        %v1353 = vunpack.c.l.b16 %v318
        %v1354 = vunpack.c.l.b16 %v319
        %v1355 = vunpack.c.l.b16 %v320
        %v1356 = vunpack.c.l.b16 %v321
        %v1357 = vunpack.c.l.b16 %v322
        %v1358 = vunpack.c.l.b16 %v323
        %v1359 = vunpack.c.l.b16 %v324
        %v1360 = vunpack.c.l.b16 %v325
        %v1361 = vunpack.c.l.b16 %v326
        %v1362 = vunpack.c.l.b16 %v327
        %v1363 = vunpack.c.l.b16 %v328
        %v1364 = vunpack.c.l.b16 %v329
        %v1365 = vunpack.c.l.b16 %v330
        %v1366 = vunpack.c.l.b16 %v331
        %v1367 = vunpack.c.l.b16 %v332
        %v1368 = vunpack.c.l.b16 %v333
        %v1369 = vunpack.c.l.b16 %v334
        %v1370 = vunpack.c.l.b16 %v335
        %v1371 = vunpack.c.l.b16 %v336
        %v1372 = vunpack.c.l.b16 %v337
        %v1373 = vunpack.c.l.b16 %v338
        %v1374 = vunpack.c.l.b16 %v339
        %v1375 = vunpack.c.l.b16 %v340
        %v1376 = vunpack.c.l.b16 %v341
        %v1377 = vunpack.c.l.b16 %v342
        %v1378 = vunpack.c.l.b16 %v343
        %v1379 = vunpack.c.l.b16 %v344
        %v1380 = vunpack.c.l.b16 %v345
        %v1381 = vunpack.c.l.b16 %v346
        %v1382 = vunpack.c.l.b16 %v347
        %v1383 = vunpack.c.l.b16 %v348
        %v1384 = vunpack.c.l.b16 %v349
        %v1385 = vunpack.c.l.b16 %v350
        %v1386 = vunpack.c.l.b16 %v351
        %v1387 = vunpack.c.l.b16 %v352
        %v1388 = vunpack.c.l.b16 %v353
        %v1389 = vunpack.c.l.b16 %v354
        %v1390 = vunpack.c.l.b16 %v355
        %v1391 = vunpack.c.l.b16 %v356
        %v1392 = vunpack.c.l.b16 %v357
        %v1393 = vunpack.c.l.b16 %v358
        %v1394 = vunpack.c.l.b16 %v359
        %v1395 = vunpack.c.l.b16 %v360
        %v1396 = vunpack.c.l.b16 %v361
        %v1397 = vunpack.c.l.b16 %v362
        %v1398 = vunpack.c.l.b16 %v363
        %v1399 = vunpack.c.l.b16 %v364
        %v1400 = vunpack.c.l.b16 %v365
        %v1401 = vunpack.c.l.b16 %v366
        %v1402 = vunpack.c.l.b16 %v367
        %v1403 = vunpack.c.l.b16 %v368
        %v1404 = vunpack.c.l.b16 %v369
        %v1405 = vunpack.c.l.b16 %v370
        %v1406 = vunpack.c.l.b16 %v371
        %v1407 = vunpack.c.l.b16 %v372
        %v1408 = vunpack.c.l.b16 %v373
        %v1409 = vunpack.c.l.b16 %v374
        %v1410 = vunpack.c.l.b16 %v375
        %v1411 = vunpack.c.l.b16 %v376
        %v1412 = vunpack.c.l.b16 %v377
        %v1413 = vunpack.c.l.b16 %v378
        %v1414 = vunpack.c.l.b16 %v379
        %v1415 = vunpack.c.l.b16 %v380
        %v1416 = vunpack.c.l.b16 %v381
        %v1417 = vunpack.c.l.b16 %v382
        %v1418 = vunpack.c.l.b16 %v383
        %v1419 = vunpack.c.l.b16 %v384
        %v1420 = vunpack.c.l.b16 %v385
        %v1421 = vunpack.c.l.b16 %v386
        %v1422 = vunpack.c.l.b16 %v387
        %v1423 = vunpack.c.l.b16 %v388
        %v1424 = vunpack.c.l.b16 %v389
        %v1425 = vunpack.c.l.b16 %v390
        %v1426 = vunpack.c.l.b16 %v391
        %v1427 = vunpack.c.l.b16 %v392
        %v1428 = vunpack.c.l.b16 %v393
        %v1429 = vunpack.c.l.b16 %v394
        %v1430 = vunpack.c.l.b16 %v395
        %v1431 = vunpack.c.l.b16 %v396
        %v1432 = vunpack.c.l.b16 %v397
        %v1433 = vunpack.c.l.b16 %v398
        %v1434 = vunpack.c.l.b16 %v399
        %v1435 = vunpack.c.l.b16 %v400
        %v1436 = vunpack.c.l.b16 %v401
        %v1437 = vunpack.c.l.b16 %v402
        %v1438 = vunpack.c.l.b16 %v403
        %v1439 = vunpack.c.l.b16 %v404
        %v1440 = vunpack.c.l.b16 %v405
        %v1441 = vunpack.c.l.b16 %v406
        %v1442 = vunpack.c.l.b16 %v407
        %v1443 = vunpack.c.l.b16 %v408
        %v1444 = vunpack.c.l.b16 %v409
        %v1445 = vunpack.c.l.b16 %v410
        %v1446 = vunpack.c.l.b16 %v411
        %v1447 = vunpack.c.l.b16 %v412
        %v1448 = vunpack.c.l.b16 %v413
        %v1449 = vunpack.c.l.b16 %v414
        %v1450 = vunpack.c.l.b16 %v415
        %v1451 = vunpack.c.l.b16 %v416
        %v1452 = vunpack.c.l.b16 %v417
        %v1453 = vunpack.c.l.b16 %v418
        %v1454 = vunpack.c.l.b16 %v419
        %v1455 = vunpack.c.l.b16 %v420
        %v1456 = vunpack.c.l.b16 %v421
        %v1457 = vunpack.c.l.b16 %v422
        %v1458 = vunpack.c.l.b16 %v423
        %v1459 = vunpack.c.l.b16 %v424
        %v1460 = vunpack.c.l.b16 %v425
        %v1461 = vunpack.c.l.b16 %v426
        %v1462 = vunpack.c.l.b16 %v427
        %v1463 = vunpack.c.l.b16 %v428
        %v1464 = vunpack.c.l.b16 %v429
        %v1465 = vunpack.c.l.b16 %v430
        %v1466 = vunpack.c.l.b16 %v431
        %v1467 = vunpack.c.l.b16 %v432
        %v1468 = vunpack.c.l.b16 %v433
        %v1469 = vunpack.c.l.b16 %v434
        %v1470 = vunpack.c.l.b16 %v435
        %v1471 = vunpack.c.l.b16 %v436
        %v1472 = vunpack.c.l.b16 %v437
        %v1473 = vunpack.c.l.b16 %v438
        %v1474 = vunpack.c.l.b16 %v439
        %v1475 = vunpack.c.l.b16 %v440
        %v1476 = vunpack.c.l.b16 %v441
        %v1477 = vunpack.c.l.b16 %v442
        %v1478 = vunpack.c.l.b16 %v443
        %v1479 = vunpack.c.l.b16 %v444
        %v1480 = vunpack.c.l.b16 %v445
        %v1481 = vunpack.c.l.b16 %v446
        %v1482 = vunpack.c.l.b16 %v447
        %v1483 = vunpack.c.l.b16 %v448
        %v1484 = vunpack.c.l.b16 %v449
        %v1485 = vunpack.c.l.b16 %v450
        %v1486 = vunpack.c.l.b16 %v451
        %v1487 = vunpack.c.l.b16 %v452
        %v1488 = vunpack.c.l.b16 %v453
        %v1489 = vunpack.c.l.b16 %v454
        %v1490 = vunpack.c.l.b16 %v455
        %v1491 = vunpack.c.l.b16 %v456
        %v1492 = vunpack.c.l.b16 %v457
        %v1493 = vunpack.c.l.b16 %v458
        %v1494 = vunpack.c.l.b16 %v459
        %v1495 = vunpack.c.l.b16 %v460
        %v1496 = vunpack.c.l.b16 %v461
        %v1497 = vunpack.c.l.b16 %v462
        %v1498 = vunpack.c.l.b16 %v463
        %v1499 = vunpack.c.l.b16 %v464
        %v1500 = vunpack.c.l.b16 %v465
        %v1501 = vunpack.c.l.b16 %v466
        %v1502 = vunpack.c.l.b16 %v467
        %v1503 = vunpack.c.l.b16 %v468
        %v1504 = vunpack.c.l.b16 %v469
        %v1505 = vunpack.c.l.b16 %v470
        %v1506 = vunpack.c.l.b16 %v471
        %v1507 = vunpack.c.l.b16 %v472
        %v1508 = vunpack.c.l.b16 %v473
        %v1509 = vunpack.c.l.b16 %v474
        %v1510 = vunpack.c.l.b16 %v475
        %v1511 = vunpack.c.l.b16 %v476
        %v1512 = vunpack.c.l.b16 %v477
        %v1513 = vunpack.c.l.b16 %v478
        %v1514 = vunpack.c.l.b16 %v479
        %v1515 = vunpack.c.l.b16 %v480
        %v1516 = vunpack.c.l.b16 %v481
        %v1517 = vunpack.c.l.b16 %v482
        %v1518 = vunpack.c.l.b16 %v483
        %v1519 = vunpack.c.l.b16 %v484
        %v1520 = vunpack.c.l.b16 %v485
        %v1521 = vunpack.c.l.b16 %v486
        %v1522 = vunpack.c.l.b16 %v487
        %v1523 = vunpack.c.l.b16 %v488
        %v1524 = vunpack.c.l.b16 %v489
        %v1525 = vunpack.c.l.b16 %v490
        %v1526 = vunpack.c.l.b16 %v491
        %v1527 = vunpack.c.l.b16 %v492
        %v1528 = vunpack.c.l.b16 %v493
        %v1529 = vunpack.c.l.b16 %v494
        %v1530 = vunpack.c.l.b16 %v495
        %v1531 = vunpack.c.l.b16 %v496
        %v1532 = vunpack.c.l.b16 %v497
        %v1533 = vunpack.c.l.b16 %v498
        %v1534 = vunpack.c.l.b16 %v499
        %v1535 = vunpack.c.l.b16 %v500
        %v1536 = vunpack.c.l.b16 %v501
        %v1537 = vunpack.c.l.b16 %v502
        %v1538 = vunpack.c.l.b16 %v503
        %v1539 = vunpack.c.l.b16 %v504
        %v1540 = vunpack.c.l.b16 %v505
        %v1541 = vunpack.c.l.b16 %v506
        %v1542 = vunpack.c.l.b16 %v507
        %v1543 = vunpack.c.l.b16 %v508
        %v1544 = vunpack.c.l.b16 %v509
        %v1545 = vunpack.c.l.b16 %v510
        %v1546 = vunpack.c.l.b16 %v511
        %v1547 = vunpack.c.l.b16 %v512
        %v1548 = vunpack.c.l.b16 %v513
        %v1549 = vunpack.c.l.b16 %v514
        %v1550 = vunpack.c.l.b16 %v515
        %v1551 = vunpack.c.l.b16 %v516
        %v1552 = vunpack.c.l.b16 %v517
        %v1553 = vunpack.c.l.b16 %v518
        %v1554 = vunpack.c.l.b16 %v519
        %v1555 = vunpack.c.l.b16 %v520
        %v1556 = vunpack.c.l.b16 %v521
        %v1557 = vunpack.c.l.b16 %v522
        %v1558 = vunpack.c.l.b16 %v523
        %v1559 = vunpack.c.l.b16 %v524
        %v1560 = vunpack.c.l.b16 %v525
        %v1561 = vunpack.c.l.b16 %v526
        %v1562 = vunpack.c.l.b16 %v527
        %v1563 = vunpack.c.l.b16 %v528
        %v1564 = vunpack.c.l.b16 %v529
        %v1565 = vunpack.c.l.b16 %v530
        %v1566 = vunpack.c.l.b16 %v531
        %v1567 = vunpack.c.l.b16 %v532
        %v1568 = vunpack.c.l.b16 %v533
        %v1569 = vunpack.c.l.b16 %v534
        %v1570 = vunpack.c.l.b16 %v535
        %v1571 = vunpack.c.l.b16 %v536
        %v1572 = vunpack.c.l.b16 %v537
        %v1573 = vunpack.c.l.b16 %v538
        %v1574 = vunpack.c.l.b16 %v539
        %v1575 = vunpack.c.l.b16 %v540
        %v1576 = vunpack.c.l.b16 %v541
        %v1577 = vunpack.c.l.b16 %v542
        %v1578 = vunpack.c.l.b16 %v543
        %v1579 = vunpack.c.l.b16 %v544
        %v1580 = vunpack.c.l.b16 %v545
        %v1581 = vunpack.c.l.b16 %v546
        %v1582 = vunpack.c.l.b16 %v547
        %v1583 = vunpack.c.l.b16 %v548
        %v1584 = vunpack.c.l.b16 %v549
        %v1585 = vunpack.c.l.b16 %v550
        %v1586 = vunpack.c.l.b16 %v551
        %v1587 = vunpack.c.l.b16 %v552
        %v1588 = vunpack.c.l.b16 %v553
        %v1589 = vunpack.c.l.b16 %v554
        %v1590 = vunpack.c.l.b16 %v555
        %v1591 = vunpack.c.l.b16 %v556
        %v1592 = vunpack.c.l.b16 %v557
        %v1593 = vunpack.c.l.b16 %v558
        %v1594 = vunpack.c.l.b16 %v559
        %v1595 = vunpack.c.l.b16 %v560
        %v1596 = vunpack.c.l.b16 %v561
        %v1597 = vunpack.c.l.b16 %v562
        %v1598 = vunpack.c.l.b16 %v563
        %v1599 = vunpack.c.l.b16 %v564
        %v1600 = vunpack.c.l.b16 %v565
        %v1601 = vunpack.c.l.b16 %v566
        %v1602 = vunpack.c.l.b16 %v567
        %v1603 = vunpack.c.l.b16 %v568
        %v1604 = vunpack.c.l.b16 %v569
        %v1605 = vunpack.c.l.b16 %v570
        %v1606 = vunpack.c.l.b16 %v571
        %v1607 = vunpack.c.l.b16 %v572
        %v1608 = vunpack.c.l.b16 %v573
        %v1609 = vunpack.c.l.b16 %v574
        %v1610 = vunpack.c.l.b16 %v575
        %v1611 = vunpack.c.l.b16 %v576
        %v1612 = vunpack.c.l.b16 %v577
        %v1613 = vunpack.c.l.b16 %v578
        %v1614 = vunpack.c.l.b16 %v579
        %v1615 = vunpack.c.l.b16 %v580
        %v1616 = vunpack.c.l.b16 %v581
        %v1617 = vunpack.c.l.b16 %v582
        %v1618 = vunpack.c.l.b16 %v583
        %v1619 = vunpack.c.l.b16 %v584
        %v1620 = vunpack.c.l.b16 %v585
        %v1621 = vunpack.c.l.b16 %v586
        %v1622 = vunpack.c.l.b16 %v587
        %v1623 = vunpack.c.l.b16 %v588
        %v1624 = vunpack.c.l.b16 %v589
        %v1625 = vunpack.c.l.b16 %v590
        %v1626 = vunpack.c.l.b16 %v591
        %v1627 = vunpack.c.l.b16 %v592
        %v1628 = vunpack.c.l.b16 %v593
        %v1629 = vunpack.c.l.b16 %v594
        %v1630 = vunpack.c.l.b16 %v595
        %v1631 = vunpack.c.l.b16 %v596
        %v1632 = vunpack.c.l.b16 %v597
        %v1633 = vunpack.c.l.b16 %v598
        %v1634 = vunpack.c.l.b16 %v599
        %v1635 = vunpack.c.l.b16 %v600
        %v1636 = vunpack.c.l.b16 %v601
        %v1637 = vunpack.c.l.b16 %v602
        %v1638 = vunpack.c.l.b16 %v603
        %v1639 = vunpack.c.l.b16 %v604
        %v1640 = vunpack.c.l.b16 %v605
        %v1641 = vunpack.c.l.b16 %v606
        %v1642 = vunpack.c.l.b16 %v607
        %v1643 = vunpack.c.l.b16 %v608
        %v1644 = vunpack.c.l.b16 %v609
        %v1645 = vunpack.c.l.b16 %v610
        %v1646 = vunpack.c.l.b16 %v611
        %v1647 = vunpack.c.l.b16 %v612
        %v1648 = vunpack.c.l.b16 %v613
        %v1649 = vunpack.c.l.b16 %v614
        %v1650 = vunpack.c.l.b16 %v615
        %v1651 = vunpack.c.l.b16 %v616
        %v1652 = vunpack.c.l.b16 %v617
        %v1653 = vunpack.c.l.b16 %v618
        %v1654 = vunpack.c.l.b16 %v619
        %v1655 = vunpack.c.l.b16 %v620
        %v1656 = vunpack.c.l.b16 %v621
        %v1657 = vunpack.c.l.b16 %v622
        %v1658 = vunpack.c.l.b16 %v623
        %v1659 = vunpack.c.l.b16 %v624
        %v1660 = vunpack.c.l.b16 %v625
        %v1661 = vunpack.c.l.b16 %v626
        %v1662 = vunpack.c.l.b16 %v627
        %v1663 = vunpack.c.l.b16 %v628
        %v1664 = vunpack.c.l.b16 %v629
        %v1665 = vunpack.c.l.b16 %v630
        %v1666 = vunpack.c.l.b16 %v631
        %v1667 = vunpack.c.l.b16 %v632
        %v1668 = vunpack.c.l.b16 %v633
        %v1669 = vunpack.c.l.b16 %v634
        %v1670 = vunpack.c.l.b16 %v635
        %v1671 = vunpack.c.l.b16 %v636
        %v1672 = vunpack.c.l.b16 %v637
        %v1673 = vunpack.c.l.b16 %v638
        %v1674 = vunpack.c.l.b16 %v639
        %v1675 = vunpack.c.l.b16 %v640
        %v1676 = vunpack.c.l.b16 %v641
        %v1677 = vunpack.c.l.b16 %v642
        %v1678 = vunpack.c.l.b16 %v643
        %v1679 = vunpack.c.l.b16 %v644
        %v1680 = vunpack.c.l.b16 %v645
        %v1681 = vunpack.c.l.b16 %v646
        %v1682 = vunpack.c.l.b16 %v647
        %v1683 = vunpack.c.l.b16 %v648
        %v1684 = vunpack.c.l.b16 %v649
        %v1685 = vunpack.c.l.b16 %v650
        %v1686 = vunpack.c.l.b16 %v651
        %v1687 = vunpack.c.l.b16 %v652
        %v1688 = vunpack.c.l.b16 %v653
        %v1689 = vunpack.c.l.b16 %v654
        %v1690 = vunpack.c.l.b16 %v655
        %v1691 = vunpack.c.l.b16 %v656
        %v1692 = vunpack.c.l.b16 %v657
        %v1693 = vunpack.c.l.b16 %v658
        %v1694 = vunpack.c.l.b16 %v659
        %v1695 = vunpack.c.l.b16 %v660
        %v1696 = vunpack.c.l.b16 %v661
        %v1697 = vunpack.c.l.b16 %v662
        %v1698 = vunpack.c.l.b16 %v663
        %v1699 = vunpack.c.l.b16 %v664
        %v1700 = vunpack.c.l.b16 %v665
        %v1701 = vunpack.c.l.b16 %v666
        %v1702 = vunpack.c.l.b16 %v667
        %v1703 = vunpack.c.l.b16 %v668
        %v1704 = vunpack.c.l.b16 %v669
        %v1705 = vunpack.c.l.b16 %v670
        %v1706 = vunpack.c.l.b16 %v671
        %v1707 = vunpack.c.l.b16 %v672
        %v1708 = vunpack.c.l.b16 %v673
        %v1709 = vunpack.c.l.b16 %v674
        %v1710 = vunpack.c.l.b16 %v675
        %v1711 = vunpack.c.l.b16 %v676
        %v1712 = vunpack.c.l.b16 %v677
        %v1713 = vunpack.c.l.b16 %v678
        %v1714 = vunpack.c.l.b16 %v679
        %v1715 = vunpack.c.l.b16 %v680
        %v1716 = vunpack.c.l.b16 %v681
        %v1717 = vunpack.c.l.b16 %v682
        %v1718 = vunpack.c.l.b16 %v683
        %v1719 = vunpack.c.l.b16 %v684
        %v1720 = vunpack.c.l.b16 %v685
        %v1721 = vunpack.c.l.b16 %v686
        %v1722 = vunpack.c.l.b16 %v687
        %v1723 = vunpack.c.l.b16 %v688
        %v1724 = vunpack.c.l.b16 %v689
        %v1725 = vunpack.c.l.b16 %v690
        %v1726 = vunpack.c.l.b16 %v691
        %v1727 = vunpack.c.l.b16 %v692
        %v1728 = vunpack.c.l.b16 %v693
        %v1729 = vunpack.c.l.b16 %v694
        %v1730 = vunpack.c.l.b16 %v695
        %v1731 = vunpack.c.l.b16 %v696
        %v1732 = vunpack.c.l.b16 %v697
        %v1733 = vunpack.c.l.b16 %v698
        %v1734 = vunpack.c.l.b16 %v699
        %v1735 = vunpack.c.l.b16 %v700
        %v1736 = vunpack.c.l.b16 %v701
        %v1737 = vunpack.c.l.b16 %v702
        %v1738 = vunpack.c.l.b16 %v703
        %v1739 = vunpack.c.l.b16 %v704
        %v1740 = vpack.c.b16 %v1229, %v1228
        %v1741 = vpack.c.b16 %v1231, %v1230
        %v1742 = vpack.c.b16 %v1233, %v1232
        %v1743 = vpack.c.b16 %v1235, %v1234
        %v1744 = vpack.c.b16 %v1237, %v1236
        %v1745 = vpack.c.b16 %v1239, %v1238
        %v1746 = vpack.c.b16 %v1241, %v1240
        %v1747 = vpack.c.b16 %v1243, %v1242
        %v1748 = vpack.c.b16 %v1245, %v1244
        %v1749 = vpack.c.b16 %v1247, %v1246
        %v1750 = vpack.c.b16 %v1249, %v1248
        %v1751 = vpack.c.b16 %v1251, %v1250
        %v1752 = vpack.c.b16 %v1253, %v1252
        %v1753 = vpack.c.b16 %v1255, %v1254
        %v1754 = vpack.c.b16 %v1257, %v1256
        %v1755 = vpack.c.b16 %v1259, %v1258
        %v1756 = vpack.c.b16 %v1261, %v1260
        %v1757 = vpack.c.b16 %v1263, %v1262
        %v1758 = vpack.c.b16 %v1265, %v1264
        %v1759 = vpack.c.b16 %v1267, %v1266
        %v1760 = vpack.c.b16 %v1269, %v1268
        %v1761 = vpack.c.b16 %v1271, %v1270
        %v1762 = vpack.c.b16 %v1273, %v1272
        %v1763 = vpack.c.b16 %v1275, %v1274
        %v1764 = vpack.c.b16 %v1277, %v1276
        %v1765 = vpack.c.b16 %v1279, %v1278
        %v1766 = vpack.c.b16 %v1281, %v1280
        %v1767 = vpack.c.b16 %v1283, %v1282
        %v1768 = vpack.c.b16 %v1285, %v1284
        %v1769 = vpack.c.b16 %v1287, %v1286
        %v1770 = vpack.c.b16 %v1289, %v1288
        %v1771 = vpack.c.b16 %v1291, %v1290
        %v1772 = vpack.c.b16 %v1293, %v1292
        %v1773 = vpack.c.b16 %v1295, %v1294
        %v1774 = vpack.c.b16 %v1297, %v1296
        %v1775 = vpack.c.b16 %v1299, %v1298
        %v1776 = vpack.c.b16 %v1301, %v1300
        %v1777 = vpack.c.b16 %v1303, %v1302
        %v1778 = vpack.c.b16 %v1305, %v1304
        %v1779 = vpack.c.b16 %v1307, %v1306
        %v1780 = vpack.c.b16 %v1309, %v1308
        %v1781 = vpack.c.b16 %v1311, %v1310
        %v1782 = vpack.c.b16 %v1313, %v1312
        %v1783 = vpack.c.b16 %v1315, %v1314
        %v1784 = vpack.c.b16 %v1317, %v1316
        %v1785 = vpack.c.b16 %v1319, %v1318
        %v1786 = vpack.c.b16 %v1321, %v1320
        %v1787 = vpack.c.b16 %v1323, %v1322
        %v1788 = vpack.c.b16 %v1325, %v1324
        %v1789 = vpack.c.b16 %v1327, %v1326
        %v1790 = vpack.c.b16 %v1329, %v1328
        %v1791 = vpack.c.b16 %v1331, %v1330
        %v1792 = vpack.c.b16 %v1333, %v1332
        %v1793 = vpack.c.b16 %v1335, %v1334
        %v1794 = vpack.c.b16 %v1337, %v1336
        %v1795 = vpack.c.b16 %v1339, %v1338
        %v1796 = vpack.c.b16 %v1341, %v1340
        %v1797 = vpack.c.b16 %v1343, %v1342
        %v1798 = vpack.c.b16 %v1345, %v1344
        %v1799 = vpack.c.b16 %v1347, %v1346
        %v1800 = vpack.c.b16 %v1349, %v1348
        %v1801 = vpack.c.b16 %v1351, %v1350
        %v1802 = vpack.c.b16 %v1353, %v1352
        %v1803 = vpack.c.b16 %v1355, %v1354
        %v1804 = vpack.c.b16 %v1357, %v1356
        %v1805 = vpack.c.b16 %v1359, %v1358
        %v1806 = vpack.c.b16 %v1361, %v1360
        %v1807 = vpack.c.b16 %v1363, %v1362
        %v1808 = vpack.c.b16 %v1365, %v1364
        %v1809 = vpack.c.b16 %v1367, %v1366
        %v1810 = vpack.c.b16 %v1369, %v1368
        %v1811 = vpack.c.b16 %v1371, %v1370
        %v1812 = vpack.c.b16 %v1373, %v1372
        %v1813 = vpack.c.b16 %v1375, %v1374
        %v1814 = vpack.c.b16 %v1377, %v1376
        %v1815 = vpack.c.b16 %v1379, %v1378
        %v1816 = vpack.c.b16 %v1381, %v1380
        %v1817 = vpack.c.b16 %v1383, %v1382
        %v1818 = vpack.c.b16 %v1385, %v1384
        %v1819 = vpack.c.b16 %v1387, %v1386
        %v1820 = vpack.c.b16 %v1389, %v1388
        %v1821 = vpack.c.b16 %v1391, %v1390
        %v1822 = vpack.c.b16 %v1393, %v1392
        %v1823 = vpack.c.b16 %v1395, %v1394
        %v1824 = vpack.c.b16 %v1397, %v1396
        %v1825 = vpack.c.b16 %v1399, %v1398
        %v1826 = vpack.c.b16 %v1401, %v1400
        %v1827 = vpack.c.b16 %v1403, %v1402
        %v1828 = vpack.c.b16 %v1405, %v1404
        %v1829 = vpack.c.b16 %v1407, %v1406
        %v1830 = vpack.c.b16 %v1409, %v1408
        %v1831 = vpack.c.b16 %v1411, %v1410
        %v1832 = vpack.c.b16 %v1413, %v1412
        %v1833 = vpack.c.b16 %v1415, %v1414
        %v1834 = vpack.c.b16 %v1417, %v1416
        %v1835 = vpack.c.b16 %v1419, %v1418
        %v1836 = vpack.c.b16 %v1421, %v1420
        %v1837 = vpack.c.b16 %v1423, %v1422
        %v1838 = vpack.c.b16 %v1425, %v1424
        %v1839 = vpack.c.b16 %v1427, %v1426
        %v1840 = vpack.c.b16 %v1429, %v1428
        %v1841 = vpack.c.b16 %v1431, %v1430
        %v1842 = vpack.c.b16 %v1433, %v1432
        %v1843 = vpack.c.b16 %v1435, %v1434
        %v1844 = vpack.c.b16 %v1437, %v1436
        %v1845 = vpack.c.b16 %v1439, %v1438
        %v1846 = vpack.c.b16 %v1441, %v1440
        %v1847 = vpack.c.b16 %v1443, %v1442
        %v1848 = vpack.c.b16 %v1445, %v1444
        %v1849 = vpack.c.b16 %v1447, %v1446
        %v1850 = vpack.c.b16 %v1449, %v1448
        %v1851 = vpack.c.b16 %v1451, %v1450
        %v1852 = vpack.c.b16 %v1453, %v1452
        %v1853 = vpack.c.b16 %v1455, %v1454
        %v1854 = vpack.c.b16 %v1457, %v1456
        %v1855 = vpack.c.b16 %v1459, %v1458
        %v1856 = vpack.c.b16 %v1461, %v1460
        %v1857 = vpack.c.b16 %v1463, %v1462
        %v1858 = vpack.c.b16 %v1465, %v1464
        %v1859 = vpack.c.b16 %v1467, %v1466
        %v1860 = vpack.c.b16 %v1469, %v1468
        %v1861 = vpack.c.b16 %v1471, %v1470
        %v1862 = vpack.c.b16 %v1473, %v1472
        %v1863 = vpack.c.b16 %v1475, %v1474
        %v1864 = vpack.c.b16 %v1477, %v1476
        %v1865 = vpack.c.b16 %v1479, %v1478
        %v1866 = vpack.c.b16 %v1481, %v1480
        %v1867 = vpack.c.b16 %v1483, %v1482
        %v1868 = vpack.c.b16 %v1485, %v1484
        %v1869 = vpack.c.b16 %v1487, %v1486
        %v1870 = vpack.c.b16 %v1489, %v1488
        %v1871 = vpack.c.b16 %v1491, %v1490
        %v1872 = vpack.c.b16 %v1493, %v1492
        %v1873 = vpack.c.b16 %v1495, %v1494
        %v1874 = vpack.c.b16 %v1497, %v1496
        %v1875 = vpack.c.b16 %v1499, %v1498
        %v1876 = vpack.c.b16 %v1501, %v1500
        %v1877 = vpack.c.b16 %v1503, %v1502
        %v1878 = vpack.c.b16 %v1505, %v1504
        %v1879 = vpack.c.b16 %v1507, %v1506
        %v1880 = vpack.c.b16 %v1509, %v1508
        %v1881 = vpack.c.b16 %v1511, %v1510
        %v1882 = vpack.c.b16 %v1513, %v1512
        %v1883 = vpack.c.b16 %v1515, %v1514
        %v1884 = vpack.c.b16 %v1517, %v1516
        %v1885 = vpack.c.b16 %v1519, %v1518
        %v1886 = vpack.c.b16 %v1521, %v1520
        %v1887 = vpack.c.b16 %v1523, %v1522
        %v1888 = vpack.c.b16 %v1525, %v1524
        %v1889 = vpack.c.b16 %v1527, %v1526
        %v1890 = vpack.c.b16 %v1529, %v1528
        %v1891 = vpack.c.b16 %v1531, %v1530
        %v1892 = vpack.c.b16 %v1533, %v1532
        %v1893 = vpack.c.b16 %v1535, %v1534
        %v1894 = vpack.c.b16 %v1537, %v1536
        %v1895 = vpack.c.b16 %v1539, %v1538
        %v1896 = vpack.c.b16 %v1541, %v1540
        %v1897 = vpack.c.b16 %v1543, %v1542
        %v1898 = vpack.c.b16 %v1545, %v1544
        %v1899 = vpack.c.b16 %v1547, %v1546
        %v1900 = vpack.c.b16 %v1549, %v1548
        %v1901 = vpack.c.b16 %v1551, %v1550
        %v1902 = vpack.c.b16 %v1553, %v1552
        %v1903 = vpack.c.b16 %v1555, %v1554
        %v1904 = vpack.c.b16 %v1557, %v1556
        %v1905 = vpack.c.b16 %v1559, %v1558
        %v1906 = vpack.c.b16 %v1561, %v1560
        %v1907 = vpack.c.b16 %v1563, %v1562
        %v1908 = vpack.c.b16 %v1565, %v1564
        %v1909 = vpack.c.b16 %v1567, %v1566
        %v1910 = vpack.c.b16 %v1569, %v1568
        %v1911 = vpack.c.b16 %v1571, %v1570
        %v1912 = vpack.c.b16 %v1573, %v1572
        %v1913 = vpack.c.b16 %v1575, %v1574
        %v1914 = vpack.c.b16 %v1577, %v1576
        %v1915 = vpack.c.b16 %v1579, %v1578
        %v1916 = vpack.c.b16 %v1581, %v1580
        %v1917 = vpack.c.b16 %v1583, %v1582
        %v1918 = vpack.c.b16 %v1585, %v1584
        %v1919 = vpack.c.b16 %v1587, %v1586
        %v1920 = vpack.c.b16 %v1589, %v1588
        %v1921 = vpack.c.b16 %v1591, %v1590
        %v1922 = vpack.c.b16 %v1593, %v1592
        %v1923 = vpack.c.b16 %v1595, %v1594
        %v1924 = vpack.c.b16 %v1597, %v1596
        %v1925 = vpack.c.b16 %v1599, %v1598
        %v1926 = vpack.c.b16 %v1601, %v1600
        %v1927 = vpack.c.b16 %v1603, %v1602
        %v1928 = vpack.c.b16 %v1605, %v1604
        %v1929 = vpack.c.b16 %v1607, %v1606
        %v1930 = vpack.c.b16 %v1609, %v1608
        %v1931 = vpack.c.b16 %v1611, %v1610
        %v1932 = vpack.c.b16 %v1613, %v1612
        %v1933 = vpack.c.b16 %v1615, %v1614
        %v1934 = vpack.c.b16 %v1617, %v1616
        %v1935 = vpack.c.b16 %v1619, %v1618
        %v1936 = vpack.c.b16 %v1621, %v1620
        %v1937 = vpack.c.b16 %v1623, %v1622
        %v1938 = vpack.c.b16 %v1625, %v1624
        %v1939 = vpack.c.b16 %v1627, %v1626
        %v1940 = vpack.c.b16 %v1629, %v1628
        %v1941 = vpack.c.b16 %v1631, %v1630
        %v1942 = vpack.c.b16 %v1633, %v1632
        %v1943 = vpack.c.b16 %v1635, %v1634
        %v1944 = vpack.c.b16 %v1637, %v1636
        %v1945 = vpack.c.b16 %v1639, %v1638
        %v1946 = vpack.c.b16 %v1641, %v1640
        %v1947 = vpack.c.b16 %v1643, %v1642
        %v1948 = vpack.c.b16 %v1645, %v1644
        %v1949 = vpack.c.b16 %v1647, %v1646
        %v1950 = vpack.c.b16 %v1649, %v1648
        %v1951 = vpack.c.b16 %v1651, %v1650
        %v1952 = vpack.c.b16 %v1653, %v1652
        %v1953 = vpack.c.b16 %v1655, %v1654
        %v1954 = vpack.c.b16 %v1657, %v1656
        %v1955 = vpack.c.b16 %v1659, %v1658
        %v1956 = vpack.c.b16 %v1661, %v1660
        %v1957 = vpack.c.b16 %v1663, %v1662
        %v1958 = vpack.c.b16 %v1665, %v1664
        %v1959 = vpack.c.b16 %v1667, %v1666
        %v1960 = vpack.c.b16 %v1669, %v1668
        %v1961 = vpack.c.b16 %v1671, %v1670
        %v1962 = vpack.c.b16 %v1673, %v1672
        %v1963 = vpack.c.b16 %v1675, %v1674
        %v1964 = vpack.c.b16 %v1677, %v1676
        %v1965 = vpack.c.b16 %v1679, %v1678
        %v1966 = vpack.c.b16 %v1681, %v1680
        %v1967 = vpack.c.b16 %v1683, %v1682
        %v1968 = vpack.c.b16 %v1685, %v1684
        %v1969 = vpack.c.b16 %v1687, %v1686
        %v1970 = vpack.c.b16 %v1689, %v1688
        %v1971 = vpack.c.b16 %v1691, %v1690
        %v1972 = vpack.c.b16 %v1693, %v1692
        %v1973 = vpack.c.b16 %v1695, %v1694
        %v1974 = vpack.c.b16 %v1697, %v1696
        %v1975 = vpack.c.b16 %v1699, %v1698
        %v1976 = vpack.c.b16 %v1701, %v1700
        %v1977 = vpack.c.b16 %v1703, %v1702
        %v1978 = vpack.c.b16 %v1705, %v1704
        %v1979 = vpack.c.b16 %v1707, %v1706
        %v1980 = vpack.c.b16 %v1709, %v1708
        %v1981 = vpack.c.b16 %v1711, %v1710
        %v1982 = vpack.c.b16 %v1713, %v1712
        %v1983 = vpack.c.b16 %v1715, %v1714
        %v1984 = vpack.c.b16 %v1717, %v1716
        %v1985 = vpack.c.b16 %v1719, %v1718
        %v1986 = vpack.c.b16 %v1721, %v1720
        %v1987 = vpack.c.b16 %v1723, %v1722
        %v1988 = vpack.c.b16 %v1725, %v1724
        %v1989 = vpack.c.b16 %v1727, %v1726
        %v1990 = vpack.c.b16 %v1729, %v1728
        %v1991 = vpack.c.b16 %v1731, %v1730
        %v1992 = vpack.c.b16 %v1733, %v1732
        %v1993 = vpack.c.b16 %v1735, %v1734
        %v1994 = vpack.c.b16 %v1737, %v1736
        %v1995 = vpack.c.b16 %v1739, %v1738
        %v2000 = vunpack.c.l.b16 %v705
        %v2001 = vunpack.c.l.b16 %v706
        %v2002 = vunpack.c.l.b16 %v707
        %v2003 = vunpack.c.l.b16 %v708
        %v2004 = vpack.c.b16 %v2001, %v2000
        %v2005 = vpack.c.b16 %v2003, %v2002
        %vm2007 = vcmask 220160
        %v2009 = vsel %vm2007, %v1740, 0
        %v2012 = vsel %vm2007, %v1741, 0
        %v2015 = vsel %vm2007, %v1742, 0
        %v2018 = vsel %vm2007, %v1743, 0
        %v2021 = vsel %vm2007, %v1744, 0
        %v2024 = vsel %vm2007, %v1745, 0
        %v2027 = vsel %vm2007, %v1746, 0
        %v2030 = vsel %vm2007, %v1747, 0
        %v2033 = vsel %vm2007, %v1748, 0
        %v2036 = vsel %vm2007, %v1749, 0
        %v2039 = vsel %vm2007, %v1750, 0
        %v2042 = vsel %vm2007, %v1751, 0
        %v2045 = vsel %vm2007, %v1752, 0
        %v2048 = vsel %vm2007, %v1753, 0
        %v2051 = vsel %vm2007, %v1754, 0
        %v2054 = vsel %vm2007, %v1755, 0
        %v2057 = vsel %vm2007, %v1756, 0
        %v2060 = vsel %vm2007, %v1757, 0
        %v2063 = vsel %vm2007, %v1758, 0
        %v2066 = vsel %vm2007, %v1759, 0
        %v2069 = vsel %vm2007, %v1760, 0
        %v2072 = vsel %vm2007, %v1761, 0
        %v2075 = vsel %vm2007, %v1762, 0
        %v2078 = vsel %vm2007, %v1763, 0
        %v2081 = vsel %vm2007, %v1764, 0
        %v2084 = vsel %vm2007, %v1765, 0
        %v2087 = vsel %vm2007, %v1766, 0
        %v2090 = vsel %vm2007, %v1767, 0
        %v2093 = vsel %vm2007, %v1768, 0
        %v2096 = vsel %vm2007, %v1769, 0
        %v2099 = vsel %vm2007, %v1770, 0
        %v2102 = vsel %vm2007, %v1771, 0
        %v2105 = vsel %vm2007, %v1772, 0
        %v2108 = vsel %vm2007, %v1773, 0
        %v2111 = vsel %vm2007, %v1774, 0
        %v2114 = vsel %vm2007, %v1775, 0
        %v2117 = vsel %vm2007, %v1776, 0
        %v2120 = vsel %vm2007, %v1777, 0
        %v2123 = vsel %vm2007, %v1778, 0
        %v2126 = vsel %vm2007, %v1779, 0
        %v2129 = vsel %vm2007, %v1780, 0
        %v2132 = vsel %vm2007, %v1781, 0
        %v2135 = vsel %vm2007, %v1782, 0
        %v2138 = vsel %vm2007, %v1783, 0
        %v2141 = vsel %vm2007, %v1784, 0
        %v2144 = vsel %vm2007, %v1785, 0
        %v2147 = vsel %vm2007, %v1786, 0
        %v2150 = vsel %vm2007, %v1787, 0
        %v2153 = vsel %vm2007, %v1788, 0
        %v2156 = vsel %vm2007, %v1789, 0
        %v2159 = vsel %vm2007, %v1790, 0
        %v2162 = vsel %vm2007, %v1791, 0
        %v2165 = vsel %vm2007, %v1792, 0
        %v2168 = vsel %vm2007, %v1793, 0
        %v2171 = vsel %vm2007, %v1794, 0
        %v2174 = vsel %vm2007, %v1795, 0
        %v2177 = vsel %vm2007, %v1796, 0
        %v2180 = vsel %vm2007, %v1797, 0
        %v2183 = vsel %vm2007, %v1798, 0
        %v2186 = vsel %vm2007, %v1799, 0
        %v2189 = vsel %vm2007, %v1800, 0
        %v2192 = vsel %vm2007, %v1801, 0
        %v2195 = vsel %vm2007, %v1802, 0
        %v2198 = vsel %vm2007, %v1803, 0
        %v2201 = vsel %vm2007, %v1804, 0
        %v2204 = vsel %vm2007, %v1805, 0
        %v2207 = vsel %vm2007, %v1806, 0
        %v2210 = vsel %vm2007, %v1807, 0
        %v2213 = vsel %vm2007, %v1808, 0
        %v2216 = vsel %vm2007, %v1809, 0
        %v2219 = vsel %vm2007, %v1810, 0
        %v2222 = vsel %vm2007, %v1811, 0
        %v2225 = vsel %vm2007, %v1812, 0
        %v2228 = vsel %vm2007, %v1813, 0
        %v2231 = vsel %vm2007, %v1814, 0
        %v2234 = vsel %vm2007, %v1815, 0
        %v2237 = vsel %vm2007, %v1816, 0
        %v2240 = vsel %vm2007, %v1817, 0
        %v2243 = vsel %vm2007, %v1818, 0
        %v2246 = vsel %vm2007, %v1819, 0
        %v2249 = vsel %vm2007, %v1820, 0
        %v2252 = vsel %vm2007, %v1821, 0
        %v2255 = vsel %vm2007, %v1822, 0
        %v2258 = vsel %vm2007, %v1823, 0
        %v2261 = vsel %vm2007, %v1824, 0
        %v2264 = vsel %vm2007, %v1825, 0
        %v2267 = vsel %vm2007, %v1826, 0
        %v2270 = vsel %vm2007, %v1827, 0
        %v2273 = vsel %vm2007, %v1828, 0
        %v2276 = vsel %vm2007, %v1829, 0
        %v2279 = vsel %vm2007, %v1830, 0
        %v2282 = vsel %vm2007, %v1831, 0
        %v2285 = vsel %vm2007, %v1832, 0
        %v2288 = vsel %vm2007, %v1833, 0
        %v2291 = vsel %vm2007, %v1834, 0
        %v2294 = vsel %vm2007, %v1835, 0
        %v2297 = vsel %vm2007, %v1836, 0
        %v2300 = vsel %vm2007, %v1837, 0
        %v2303 = vsel %vm2007, %v1838, 0
        %v2306 = vsel %vm2007, %v1839, 0
        %v2309 = vsel %vm2007, %v1840, 0
        %v2312 = vsel %vm2007, %v1841, 0
        %v2315 = vsel %vm2007, %v1842, 0
        %v2318 = vsel %vm2007, %v1843, 0
        %v2321 = vsel %vm2007, %v1844, 0
        %v2324 = vsel %vm2007, %v1845, 0
        %v2327 = vsel %vm2007, %v1846, 0
        %v2330 = vsel %vm2007, %v1847, 0
        %v2333 = vsel %vm2007, %v1848, 0
        %v2336 = vsel %vm2007, %v1849, 0
        %v2339 = vsel %vm2007, %v1850, 0
        %v2342 = vsel %vm2007, %v1851, 0
        %v2345 = vsel %vm2007, %v1852, 0
        %v2348 = vsel %vm2007, %v1853, 0
        %v2351 = vsel %vm2007, %v1854, 0
        %v2354 = vsel %vm2007, %v1855, 0
        %v2357 = vsel %vm2007, %v1856, 0
        %v2360 = vsel %vm2007, %v1857, 0
        %v2363 = vsel %vm2007, %v1858, 0
        %v2366 = vsel %vm2007, %v1859, 0
        %v2369 = vsel %vm2007, %v1860, 0
        %v2372 = vsel %vm2007, %v1861, 0
        %v2375 = vsel %vm2007, %v1862, 0
        %v2378 = vsel %vm2007, %v1863, 0
        %v2381 = vsel %vm2007, %v1864, 0
        %v2384 = vsel %vm2007, %v1865, 0
        %v2387 = vsel %vm2007, %v1866, 0
        %v2390 = vsel %vm2007, %v1867, 0
        %v2393 = vsel %vm2007, %v1868, 0
        %v2396 = vsel %vm2007, %v1869, 0
        %v2399 = vsel %vm2007, %v1870, 0
        %v2402 = vsel %vm2007, %v1871, 0
        %v2405 = vsel %vm2007, %v1872, 0
        %v2408 = vsel %vm2007, %v1873, 0
        %v2411 = vsel %vm2007, %v1874, 0
        %v2414 = vsel %vm2007, %v1875, 0
        %v2417 = vsel %vm2007, %v1876, 0
        %v2420 = vsel %vm2007, %v1877, 0
        %v2423 = vsel %vm2007, %v1878, 0
        %v2426 = vsel %vm2007, %v1879, 0
        %v2429 = vsel %vm2007, %v1880, 0
        %v2432 = vsel %vm2007, %v1881, 0
        %v2435 = vsel %vm2007, %v1882, 0
        %v2438 = vsel %vm2007, %v1883, 0
        %v2441 = vsel %vm2007, %v1884, 0
        %v2444 = vsel %vm2007, %v1885, 0
        %v2447 = vsel %vm2007, %v1886, 0
        %v2450 = vsel %vm2007, %v1887, 0
        %v2453 = vsel %vm2007, %v1888, 0
        %v2456 = vsel %vm2007, %v1889, 0
        %v2459 = vsel %vm2007, %v1890, 0
        %v2462 = vsel %vm2007, %v1891, 0
        %v2465 = vsel %vm2007, %v1892, 0
        %v2468 = vsel %vm2007, %v1893, 0
        %v2471 = vsel %vm2007, %v1894, 0
        %v2474 = vsel %vm2007, %v1895, 0
        %v2477 = vsel %vm2007, %v1896, 0
        %v2480 = vsel %vm2007, %v1897, 0
        %v2483 = vsel %vm2007, %v1898, 0
        %v2486 = vsel %vm2007, %v1899, 0
        %v2489 = vsel %vm2007, %v1900, 0
        %v2492 = vsel %vm2007, %v1901, 0
        %v2495 = vsel %vm2007, %v1902, 0
        %v2498 = vsel %vm2007, %v1903, 0
        %v2501 = vsel %vm2007, %v1904, 0
        %v2504 = vsel %vm2007, %v1905, 0
        %v2507 = vsel %vm2007, %v1906, 0
        %v2510 = vsel %vm2007, %v1907, 0
        %v2513 = vsel %vm2007, %v1908, 0
        %v2516 = vsel %vm2007, %v1909, 0
        %v2519 = vsel %vm2007, %v1910, 0
        %v2522 = vsel %vm2007, %v1911, 0
        %v2525 = vsel %vm2007, %v1912, 0
        %v2528 = vsel %vm2007, %v1913, 0
        %v2531 = vsel %vm2007, %v1914, 0
        %v2534 = vsel %vm2007, %v1915, 0
        %v2537 = vsel %vm2007, %v1916, 0
        %v2540 = vsel %vm2007, %v1917, 0
        %v2543 = vsel %vm2007, %v1918, 0
        %v2546 = vsel %vm2007, %v1919, 0
        %v2549 = vsel %vm2007, %v1920, 0
        %v2552 = vsel %vm2007, %v1921, 0
        %v2555 = vsel %vm2007, %v1922, 0
        %v2558 = vsel %vm2007, %v1923, 0
        %v2561 = vsel %vm2007, %v1924, 0
        %v2564 = vsel %vm2007, %v1925, 0
        %v2567 = vsel %vm2007, %v1926, 0
        %v2570 = vsel %vm2007, %v1927, 0
        %v2573 = vsel %vm2007, %v1928, 0
        %v2576 = vsel %vm2007, %v1929, 0
        %v2579 = vsel %vm2007, %v1930, 0
        %v2582 = vsel %vm2007, %v1931, 0
        %v2585 = vsel %vm2007, %v1932, 0
        %v2588 = vsel %vm2007, %v1933, 0
        %v2591 = vsel %vm2007, %v1934, 0
        %v2594 = vsel %vm2007, %v1935, 0
        %v2597 = vsel %vm2007, %v1936, 0
        %v2600 = vsel %vm2007, %v1937, 0
        %v2603 = vsel %vm2007, %v1938, 0
        %v2606 = vsel %vm2007, %v1939, 0
        %v2609 = vsel %vm2007, %v1940, 0
        %v2612 = vsel %vm2007, %v1941, 0
        %v2615 = vsel %vm2007, %v1942, 0
        %v2618 = vsel %vm2007, %v1943, 0
        %v2621 = vsel %vm2007, %v1944, 0
        %v2624 = vsel %vm2007, %v1945, 0
        %v2627 = vsel %vm2007, %v1946, 0
        %v2630 = vsel %vm2007, %v1947, 0
        %v2633 = vsel %vm2007, %v1948, 0
        %v2636 = vsel %vm2007, %v1949, 0
        %v2639 = vsel %vm2007, %v1950, 0
        %v2642 = vsel %vm2007, %v1951, 0
        %v2645 = vsel %vm2007, %v1952, 0
        %v2648 = vsel %vm2007, %v1953, 0
        %v2651 = vsel %vm2007, %v1954, 0
        %v2654 = vsel %vm2007, %v1955, 0
        %v2657 = vsel %vm2007, %v1956, 0
        %v2660 = vsel %vm2007, %v1957, 0
        %v2663 = vsel %vm2007, %v1958, 0
        %v2666 = vsel %vm2007, %v1959, 0
        %v2669 = vsel %vm2007, %v1960, 0
        %v2672 = vsel %vm2007, %v1961, 0
        %v2675 = vsel %vm2007, %v1962, 0
        %v2678 = vsel %vm2007, %v1963, 0
        %v2681 = vsel %vm2007, %v1964, 0
        %v2684 = vsel %vm2007, %v1965, 0
        %v2687 = vsel %vm2007, %v1966, 0
        %v2690 = vsel %vm2007, %v1967, 0
        %v2693 = vsel %vm2007, %v1968, 0
        %v2696 = vsel %vm2007, %v1969, 0
        %v2699 = vsel %vm2007, %v1970, 0
        %v2702 = vsel %vm2007, %v1971, 0
        %v2705 = vsel %vm2007, %v1972, 0
        %v2708 = vsel %vm2007, %v1973, 0
        %v2711 = vsel %vm2007, %v1974, 0
        %v2714 = vsel %vm2007, %v1975, 0
        %v2717 = vsel %vm2007, %v1976, 0
        %v2720 = vsel %vm2007, %v1977, 0
        %v2723 = vsel %vm2007, %v1978, 0
        %v2726 = vsel %vm2007, %v1979, 0
        %v2729 = vsel %vm2007, %v1980, 0
        %v2732 = vsel %vm2007, %v1981, 0
        %v2735 = vsel %vm2007, %v1982, 0
        %v2738 = vsel %vm2007, %v1983, 0
        %v2741 = vsel %vm2007, %v1984, 0
        %v2744 = vsel %vm2007, %v1985, 0
        %v2747 = vsel %vm2007, %v1986, 0
        %v2750 = vsel %vm2007, %v1987, 0
        %v2753 = vsel %vm2007, %v1988, 0
        %v2756 = vsel %vm2007, %v1989, 0
        %v2759 = vsel %vm2007, %v1990, 0
        %v2762 = vsel %vm2007, %v1991, 0
        %v2765 = vsel %vm2007, %v1992, 0
        %v2768 = vsel %vm2007, %v1993, 0
        %v2771 = vsel %vm2007, %v1994, 0
        %v2774 = vsel %vm2007, %v1995, 0
        %vm2776 = vcmask 1044480
        %vm2777 = vcmask 1045504
        %v2778 = vsel %vm2776, 4294967295, 65535
        %v2779 = vsel %vm2777, %v2778, 0
        %v2781 = vand.u32 %v2005, %v2779
        %2783 = vmatprep.subr.bf16.mxu0 0
        %2784 = vmatpush1.bf16.msra.mxu0 %v2004
        %2785 = vmatprep.subr.bf16.mxu0 0
        %2786 = vmatpush1.bf16.msra.mxu0 %v2781
        %2787 = vmatprep.subr.bf16.mxu0 0
        %2788 = vmatpush1.bf16.msra.mxu0 0
        %2789 = vmatprep.subr.bf16.mxu0 0
        %2790 = vmatpush1.bf16.msra.mxu0 0
        %2791 = vmatprep.subr.bf16.mxu0 0
        %2792 = vmatpush1.bf16.msra.mxu0 0
        %2793 = vmatprep.subr.bf16.mxu0 0
        %2794 = vmatpush1.bf16.msra.mxu0 0
        %2795 = vmatprep.subr.bf16.mxu0 0
        %2796 = vmatpush1.bf16.msra.mxu0 0
        %2797 = vmatprep.subr.bf16.mxu0 0
        %2798 = vmatpush1.bf16.msra.mxu0 0
        %2799 = vmatprep.subr.bf16.mxu0 0
        %2800 = vmatpush1.bf16.msra.mxu0 0
        %2801 = vmatprep.subr.bf16.mxu0 0
        %2802 = vmatpush1.bf16.msra.mxu0 0
        %2803 = vmatprep.subr.bf16.mxu0 0
        %2804 = vmatpush1.bf16.msra.mxu0 0
        %2805 = vmatprep.subr.bf16.mxu0 0
        %2806 = vmatpush1.bf16.msra.mxu0 0
        %2807 = vmatprep.subr.bf16.mxu0 0
        %2808 = vmatpush1.bf16.msra.mxu0 0
        %2809 = vmatprep.subr.bf16.mxu0 0
        %2810 = vmatpush1.bf16.msra.mxu0 0
        %2811 = vmatprep.subr.bf16.mxu0 0
        %2812 = vmatpush1.bf16.msra.mxu0 0
        %2813 = vmatprep.subr.bf16.mxu0 0
        %2814 = vmatpush1.bf16.msra.mxu0 0
        %2815 = vmatprep.mubr.bf16.mxu0 0
        %2816 = vmatmul.mubr.bf16.gmra.mrb[0].mxu0 %v2009
        %v2817 = vpop.f32.mrb[0].mxu0
        %v2818 = vadd.f32 %v714, %v2817
        %v2819 = vpop.f32.mrb[0].mxu0
        %v2820 = vpop.f32.mrb[0].mxu0
        %v2821 = vadd.f32 %v714, %v2820
        %v2822 = vpop.f32.mrb[0].mxu0
        %2823 = vmatprep.mubr.bf16.mxu0 0
        %2824 = vmatmul.mubr.bf16.gmra.mrb[0].mxu0 %v2012
        %v2825 = vpop.f32.mrb[0].mxu0
        %v2826 = vadd.f32 %v714, %v2825
        %v2827 = vpop.f32.mrb[0].mxu0
        %v2828 = vpop.f32.mrb[0].mxu0
        %v2829 = vadd.f32 %v714, %v2828
        %v2830 = vpop.f32.mrb[0].mxu0
        %2831 = vmatprep.mubr.bf16.mxu0 0
        %2832 = vmatmul.mubr.bf16.gmra.mrb[0].mxu0 %v2015
        %v2833 = vpop.f32.mrb[0].mxu0
        %v2834 = vadd.f32 %v714, %v2833
        %v2835 = vpop.f32.mrb[0].mxu0
        %v2836 = vpop.f32.mrb[0].mxu0
        %v2837 = vadd.f32 %v714, %v2836
        %v2838 = vpop.f32.mrb[0].mxu0
        %2839 = vmatprep.mubr.bf16.mxu0 0
        %2840 = vmatmul.mubr.bf16.gmra.mrb[0].mxu0 %v2018
        %v2841 = vpop.f32.mrb[0].mxu0
        %v2842 = vadd.f32 %v714, %v2841
        %v2843 = vpop.f32.mrb[0].mxu0
        %v2844 = vpop.f32.mrb[0].mxu0
        %v2845 = vadd.f32 %v714, %v2844
        %v2846 = vpop.f32.mrb[0].mxu0
        %2847 = vmatprep.mubr.bf16.mxu0 0
        %2848 = vmatmul.mubr.bf16.gmra.mrb[0].mxu0 %v2021
        %v2849 = vpop.f32.mrb[0].mxu0
        %v2850 = vadd.f32 %v714, %v2849
        %v2851 = vpop.f32.mrb[0].mxu0
        %v2852 = vpop.f32.mrb[0].mxu0
        %v2853 = vadd.f32 %v714, %v2852
        %v2854 = vpop.f32.mrb[0].mxu0
        %2855 = vmatprep.mubr.bf16.mxu0 0
        %2856 = vmatmul.mubr.bf16.gmra.mrb[0].mxu0 %v2024
        %v2857 = vpop.f32.mrb[0].mxu0
        %v2858 = vadd.f32 %v714, %v2857
        %v2859 = vpop.f32.mrb[0].mxu0
        %v2860 = vpop.f32.mrb[0].mxu0
        %v2861 = vadd.f32 %v714, %v2860
        %v2862 = vpop.f32.mrb[0].mxu0
        %2863 = vmatprep.mubr.bf16.mxu0 0
        %2864 = vmatmul.mubr.bf16.gmra.mrb[0].mxu0 %v2027
        %v2865 = vpop.f32.mrb[0].mxu0
        %v2866 = vadd.f32 %v714, %v2865
        %v2867 = vpop.f32.mrb[0].mxu0
        %v2868 = vpop.f32.mrb[0].mxu0
        %v2869 = vadd.f32 %v714, %v2868
        %v2870 = vpop.f32.mrb[0].mxu0
        %2871 = vmatprep.mubr.bf16.mxu0 0
        %2872 = vmatmul.mubr.bf16.gmra.mrb[0].mxu0 %v2030
        %v2873 = vpop.f32.mrb[0].mxu0
        %v2874 = vadd.f32 %v714, %v2873
        %v2875 = vpop.f32.mrb[0].mxu0
        %v2876 = vpop.f32.mrb[0].mxu0
        %v2877 = vadd.f32 %v714, %v2876
        %v2878 = vpop.f32.mrb[0].mxu0
        %2879 = vmatprep.mubr.bf16.mxu0 0
        %2880 = vmatmul.mubr.bf16.gmra.mrb[0].mxu0 %v2033
        %v2881 = vpop.f32.mrb[0].mxu0
        %v2882 = vadd.f32 %v714, %v2881
        %v2883 = vpop.f32.mrb[0].mxu0
        %v2884 = vpop.f32.mrb[0].mxu0
        %v2885 = vadd.f32 %v714, %v2884
        %v2886 = vpop.f32.mrb[0].mxu0
        %2887 = vmatprep.mubr.bf16.mxu0 0
        %2888 = vmatmul.mubr.bf16.gmra.mrb[0].mxu0 %v2036
        %v2889 = vpop.f32.mrb[0].mxu0
        %v2890 = vadd.f32 %v714, %v2889
        %v2891 = vpop.f32.mrb[0].mxu0
        %v2892 = vpop.f32.mrb[0].mxu0
        %v2893 = vadd.f32 %v714, %v2892
        %v2894 = vpop.f32.mrb[0].mxu0
        %2895 = vmatprep.mubr.bf16.mxu0 0
        %2896 = vmatmul.mubr.bf16.gmra.mrb[0].mxu0 %v2039
        %v2897 = vpop.f32.mrb[0].mxu0
        %v2898 = vadd.f32 %v714, %v2897
        %v2899 = vpop.f32.mrb[0].mxu0
        %v2900 = vpop.f32.mrb[0].mxu0
        %v2901 = vadd.f32 %v714, %v2900
        %v2902 = vpop.f32.mrb[0].mxu0
        %2903 = vmatprep.mubr.bf16.mxu0 0
        %2904 = vmatmul.mubr.bf16.gmra.mrb[0].mxu0 %v2042
        %v2905 = vpop.f32.mrb[0].mxu0
        %v2906 = vadd.f32 %v714, %v2905
        %v2907 = vpop.f32.mrb[0].mxu0
        %v2908 = vpop.f32.mrb[0].mxu0
        %v2909 = vadd.f32 %v714, %v2908
        %v2910 = vpop.f32.mrb[0].mxu0
        %2911 = vmatprep.mubr.bf16.mxu0 0
        %2912 = vmatmul.mubr.bf16.gmra.mrb[0].mxu0 %v2045
        %v2913 = vpop.f32.mrb[0].mxu0
        %v2914 = vadd.f32 %v714, %v2913
        %v2915 = vpop.f32.mrb[0].mxu0
        %v2916 = vpop.f32.mrb[0].mxu0
        %v2917 = vadd.f32 %v714, %v2916
        %v2918 = vpop.f32.mrb[0].mxu0
        %2919 = vmatprep.mubr.bf16.mxu0 0
        %2920 = vmatmul.mubr.bf16.gmra.mrb[0].mxu0 %v2048
        %v2921 = vpop.f32.mrb[0].mxu0
        %v2922 = vadd.f32 %v714, %v2921
        %v2923 = vpop.f32.mrb[0].mxu0
        %v2924 = vpop.f32.mrb[0].mxu0
        %v2925 = vadd.f32 %v714, %v2924
        %v2926 = vpop.f32.mrb[0].mxu0
        %2927 = vmatprep.mubr.bf16.mxu0 0
        %2928 = vmatmul.mubr.bf16.gmra.mrb[0].mxu0 %v2051
        %v2929 = vpop.f32.mrb[0].mxu0
        %v2930 = vadd.f32 %v714, %v2929
        %v2931 = vpop.f32.mrb[0].mxu0
        %v2932 = vpop.f32.mrb[0].mxu0
        %v2933 = vadd.f32 %v714, %v2932
        %v2934 = vpop.f32.mrb[0].mxu0
        %2935 = vmatprep.mubr.bf16.mxu0 0
        %2936 = vmatmul.mubr.bf16.gmra.mrb[0].mxu0 %v2054
        %v2937 = vpop.f32.mrb[0].mxu0
        %v2938 = vadd.f32 %v714, %v2937
        %v2939 = vpop.f32.mrb[0].mxu0
        %v2940 = vpop.f32.mrb[0].mxu0
        %v2941 = vadd.f32 %v714, %v2940
        %v2942 = vpop.f32.mrb[0].mxu0
        %2943 = vmatprep.mubr.bf16.mxu0 0
        %2944 = vmatmul.mubr.bf16.gmra.mrb[0].mxu0 %v2057
        %v2945 = vpop.f32.mrb[0].mxu0
        %v2946 = vadd.f32 %v714, %v2945
        %v2947 = vpop.f32.mrb[0].mxu0
        %v2948 = vpop.f32.mrb[0].mxu0
        %v2949 = vadd.f32 %v714, %v2948
        %v2950 = vpop.f32.mrb[0].mxu0
        %2951 = vmatprep.mubr.bf16.mxu0 0
        %2952 = vmatmul.mubr.bf16.gmra.mrb[0].mxu0 %v2060
        %v2953 = vpop.f32.mrb[0].mxu0
        %v2954 = vadd.f32 %v714, %v2953
        %v2955 = vpop.f32.mrb[0].mxu0
        %v2956 = vpop.f32.mrb[0].mxu0
        %v2957 = vadd.f32 %v714, %v2956
        %v2958 = vpop.f32.mrb[0].mxu0
        %2959 = vmatprep.mubr.bf16.mxu0 0
        %2960 = vmatmul.mubr.bf16.gmra.mrb[0].mxu0 %v2063
        %v2961 = vpop.f32.mrb[0].mxu0
        %v2962 = vadd.f32 %v714, %v2961
        %v2963 = vpop.f32.mrb[0].mxu0
        %v2964 = vpop.f32.mrb[0].mxu0
        %v2965 = vadd.f32 %v714, %v2964
        %v2966 = vpop.f32.mrb[0].mxu0
        %2967 = vmatprep.mubr.bf16.mxu0 0
        %2968 = vmatmul.mubr.bf16.gmra.mrb[0].mxu0 %v2066
        %v2969 = vpop.f32.mrb[0].mxu0
        %v2970 = vadd.f32 %v714, %v2969
        %v2971 = vpop.f32.mrb[0].mxu0
        %v2972 = vpop.f32.mrb[0].mxu0
        %v2973 = vadd.f32 %v714, %v2972
        %v2974 = vpop.f32.mrb[0].mxu0
        %2975 = vmatprep.mubr.bf16.mxu0 0
        %2976 = vmatmul.mubr.bf16.gmra.mrb[0].mxu0 %v2069
        %v2977 = vpop.f32.mrb[0].mxu0
        %v2978 = vadd.f32 %v714, %v2977
        %v2979 = vpop.f32.mrb[0].mxu0
        %v2980 = vpop.f32.mrb[0].mxu0
        %v2981 = vadd.f32 %v714, %v2980
        %v2982 = vpop.f32.mrb[0].mxu0
        %2983 = vmatprep.mubr.bf16.mxu0 0
        %2984 = vmatmul.mubr.bf16.gmra.mrb[0].mxu0 %v2072
        %v2985 = vpop.f32.mrb[0].mxu0
        %v2986 = vadd.f32 %v714, %v2985
        %v2987 = vpop.f32.mrb[0].mxu0
        %v2988 = vpop.f32.mrb[0].mxu0
        %v2989 = vadd.f32 %v714, %v2988
        %v2990 = vpop.f32.mrb[0].mxu0
        %2991 = vmatprep.mubr.bf16.mxu0 0
        %2992 = vmatmul.mubr.bf16.gmra.mrb[0].mxu0 %v2075
        %v2993 = vpop.f32.mrb[0].mxu0
        %v2994 = vadd.f32 %v714, %v2993
        %v2995 = vpop.f32.mrb[0].mxu0
        %v2996 = vpop.f32.mrb[0].mxu0
        %v2997 = vadd.f32 %v714, %v2996
        %v2998 = vpop.f32.mrb[0].mxu0
        %2999 = vmatprep.mubr.bf16.mxu0 0
        %3000 = vmatmul.mubr.bf16.gmra.mrb[0].mxu0 %v2078
        %v3001 = vpop.f32.mrb[0].mxu0
        %v3002 = vadd.f32 %v714, %v3001
        %v3003 = vpop.f32.mrb[0].mxu0
        %v3004 = vpop.f32.mrb[0].mxu0
        %v3005 = vadd.f32 %v714, %v3004
        %v3006 = vpop.f32.mrb[0].mxu0
        %3007 = vmatprep.mubr.bf16.mxu0 0
        %3008 = vmatmul.mubr.bf16.gmra.mrb[0].mxu0 %v2081
        %v3009 = vpop.f32.mrb[0].mxu0
        %v3010 = vadd.f32 %v714, %v3009
        %v3011 = vpop.f32.mrb[0].mxu0
        %v3012 = vpop.f32.mrb[0].mxu0
        %v3013 = vadd.f32 %v714, %v3012
        %v3014 = vpop.f32.mrb[0].mxu0
        %3015 = vmatprep.mubr.bf16.mxu0 0
        %3016 = vmatmul.mubr.bf16.gmra.mrb[0].mxu0 %v2084
        %v3017 = vpop.f32.mrb[0].mxu0
        %v3018 = vadd.f32 %v714, %v3017
        %v3019 = vpop.f32.mrb[0].mxu0
        %v3020 = vpop.f32.mrb[0].mxu0
        %v3021 = vadd.f32 %v714, %v3020
        %v3022 = vpop.f32.mrb[0].mxu0
        %3023 = vmatprep.mubr.bf16.mxu0 0
        %3024 = vmatmul.mubr.bf16.gmra.mrb[0].mxu0 %v2087
        %v3025 = vpop.f32.mrb[0].mxu0
        %v3026 = vadd.f32 %v714, %v3025
        %v3027 = vpop.f32.mrb[0].mxu0
        %v3028 = vpop.f32.mrb[0].mxu0
        %v3029 = vadd.f32 %v714, %v3028
        %v3030 = vpop.f32.mrb[0].mxu0
        %3031 = vmatprep.mubr.bf16.mxu0 0
        %3032 = vmatmul.mubr.bf16.gmra.mrb[0].mxu0 %v2090
        %v3033 = vpop.f32.mrb[0].mxu0
        %v3034 = vadd.f32 %v714, %v3033
        %v3035 = vpop.f32.mrb[0].mxu0
        %v3036 = vpop.f32.mrb[0].mxu0
        %v3037 = vadd.f32 %v714, %v3036
        %v3038 = vpop.f32.mrb[0].mxu0
        %3039 = vmatprep.mubr.bf16.mxu0 0
        %3040 = vmatmul.mubr.bf16.gmra.mrb[0].mxu0 %v2093
        %v3041 = vpop.f32.mrb[0].mxu0
        %v3042 = vadd.f32 %v714, %v3041
        %v3043 = vpop.f32.mrb[0].mxu0
        %v3044 = vpop.f32.mrb[0].mxu0
        %v3045 = vadd.f32 %v714, %v3044
        %v3046 = vpop.f32.mrb[0].mxu0
        %3047 = vmatprep.mubr.bf16.mxu0 0
        %3048 = vmatmul.mubr.bf16.gmra.mrb[0].mxu0 %v2096
        %v3049 = vpop.f32.mrb[0].mxu0
        %v3050 = vadd.f32 %v714, %v3049
        %v3051 = vpop.f32.mrb[0].mxu0
        %v3052 = vpop.f32.mrb[0].mxu0
        %v3053 = vadd.f32 %v714, %v3052
        %v3054 = vpop.f32.mrb[0].mxu0
        %3055 = vmatprep.mubr.bf16.mxu0 0
        %3056 = vmatmul.mubr.bf16.gmra.mrb[0].mxu0 %v2099
        %v3057 = vpop.f32.mrb[0].mxu0
        %v3058 = vadd.f32 %v714, %v3057
        %v3059 = vpop.f32.mrb[0].mxu0
        %v3060 = vpop.f32.mrb[0].mxu0
        %v3061 = vadd.f32 %v714, %v3060
        %v3062 = vpop.f32.mrb[0].mxu0
        %3063 = vmatprep.mubr.bf16.mxu0 0
        %3064 = vmatmul.mubr.bf16.gmra.mrb[0].mxu0 %v2102
        %v3065 = vpop.f32.mrb[0].mxu0
        %v3066 = vadd.f32 %v714, %v3065
        %v3067 = vpop.f32.mrb[0].mxu0
        %v3068 = vpop.f32.mrb[0].mxu0
        %v3069 = vadd.f32 %v714, %v3068
        %v3070 = vpop.f32.mrb[0].mxu0
        %3071 = vmatprep.mubr.bf16.mxu0 0
        %3072 = vmatmul.mubr.bf16.gmra.mrb[0].mxu0 %v2105
        %v3073 = vpop.f32.mrb[0].mxu0
        %v3074 = vadd.f32 %v714, %v3073
        %v3075 = vpop.f32.mrb[0].mxu0
        %v3076 = vpop.f32.mrb[0].mxu0
        %v3077 = vadd.f32 %v714, %v3076
        %v3078 = vpop.f32.mrb[0].mxu0
        %3079 = vmatprep.mubr.bf16.mxu0 0
        %3080 = vmatmul.mubr.bf16.gmra.mrb[0].mxu0 %v2108
        %v3081 = vpop.f32.mrb[0].mxu0
        %v3082 = vadd.f32 %v714, %v3081
        %v3083 = vpop.f32.mrb[0].mxu0
        %v3084 = vpop.f32.mrb[0].mxu0
        %v3085 = vadd.f32 %v714, %v3084
        %v3086 = vpop.f32.mrb[0].mxu0
        %3087 = vmatprep.mubr.bf16.mxu0 0
        %3088 = vmatmul.mubr.bf16.gmra.mrb[0].mxu0 %v2111
        %v3089 = vpop.f32.mrb[0].mxu0
        %v3090 = vadd.f32 %v714, %v3089
        %v3091 = vpop.f32.mrb[0].mxu0
        %v3092 = vpop.f32.mrb[0].mxu0
        %v3093 = vadd.f32 %v714, %v3092
        %v3094 = vpop.f32.mrb[0].mxu0
        %3095 = vmatprep.mubr.bf16.mxu0 0
        %3096 = vmatmul.mubr.bf16.gmra.mrb[0].mxu0 %v2114
        %v3097 = vpop.f32.mrb[0].mxu0
        %v3098 = vadd.f32 %v714, %v3097
        %v3099 = vpop.f32.mrb[0].mxu0
        %v3100 = vpop.f32.mrb[0].mxu0
        %v3101 = vadd.f32 %v714, %v3100
        %v3102 = vpop.f32.mrb[0].mxu0
        %3103 = vmatprep.mubr.bf16.mxu0 0
        %3104 = vmatmul.mubr.bf16.gmra.mrb[0].mxu0 %v2117
        %v3105 = vpop.f32.mrb[0].mxu0
        %v3106 = vadd.f32 %v714, %v3105
        %v3107 = vpop.f32.mrb[0].mxu0
        %v3108 = vpop.f32.mrb[0].mxu0
        %v3109 = vadd.f32 %v714, %v3108
        %v3110 = vpop.f32.mrb[0].mxu0
        %3111 = vmatprep.mubr.bf16.mxu0 0
        %3112 = vmatmul.mubr.bf16.gmra.mrb[0].mxu0 %v2120
        %v3113 = vpop.f32.mrb[0].mxu0
        %v3114 = vadd.f32 %v714, %v3113
        %v3115 = vpop.f32.mrb[0].mxu0
        %v3116 = vpop.f32.mrb[0].mxu0
        %v3117 = vadd.f32 %v714, %v3116
        %v3118 = vpop.f32.mrb[0].mxu0
        %3119 = vmatprep.mubr.bf16.mxu0 0
        %3120 = vmatmul.mubr.bf16.gmra.mrb[0].mxu0 %v2123
        %v3121 = vpop.f32.mrb[0].mxu0
        %v3122 = vadd.f32 %v714, %v3121
        %v3123 = vpop.f32.mrb[0].mxu0
        %v3124 = vpop.f32.mrb[0].mxu0
        %v3125 = vadd.f32 %v714, %v3124
        %v3126 = vpop.f32.mrb[0].mxu0
        %3127 = vmatprep.mubr.bf16.mxu0 0
        %3128 = vmatmul.mubr.bf16.gmra.mrb[0].mxu0 %v2126
        %v3129 = vpop.f32.mrb[0].mxu0
        %v3130 = vadd.f32 %v714, %v3129
        %v3131 = vpop.f32.mrb[0].mxu0
        %v3132 = vpop.f32.mrb[0].mxu0
        %v3133 = vadd.f32 %v714, %v3132
        %v3134 = vpop.f32.mrb[0].mxu0
        %3135 = vmatprep.mubr.bf16.mxu0 0
        %3136 = vmatmul.mubr.bf16.gmra.mrb[0].mxu0 %v2129
        %v3137 = vpop.f32.mrb[0].mxu0
        %v3138 = vadd.f32 %v714, %v3137
        %v3139 = vpop.f32.mrb[0].mxu0
        %v3140 = vpop.f32.mrb[0].mxu0
        %v3141 = vadd.f32 %v714, %v3140
        %v3142 = vpop.f32.mrb[0].mxu0
        %3143 = vmatprep.mubr.bf16.mxu0 0
        %3144 = vmatmul.mubr.bf16.gmra.mrb[0].mxu0 %v2132
        %v3145 = vpop.f32.mrb[0].mxu0
        %v3146 = vadd.f32 %v714, %v3145
        %v3147 = vpop.f32.mrb[0].mxu0
        %v3148 = vpop.f32.mrb[0].mxu0
        %v3149 = vadd.f32 %v714, %v3148
        %v3150 = vpop.f32.mrb[0].mxu0
        %3151 = vmatprep.mubr.bf16.mxu0 0
        %3152 = vmatmul.mubr.bf16.gmra.mrb[0].mxu0 %v2135
        %v3153 = vpop.f32.mrb[0].mxu0
        %v3154 = vadd.f32 %v714, %v3153
        %v3155 = vpop.f32.mrb[0].mxu0
        %v3156 = vpop.f32.mrb[0].mxu0
        %v3157 = vadd.f32 %v714, %v3156
        %v3158 = vpop.f32.mrb[0].mxu0
        %3159 = vmatprep.mubr.bf16.mxu0 0
        %3160 = vmatmul.mubr.bf16.gmra.mrb[0].mxu0 %v2138
        %v3161 = vpop.f32.mrb[0].mxu0
        %v3162 = vadd.f32 %v714, %v3161
        %v3163 = vpop.f32.mrb[0].mxu0
        %v3164 = vpop.f32.mrb[0].mxu0
        %v3165 = vadd.f32 %v714, %v3164
        %v3166 = vpop.f32.mrb[0].mxu0
        %3167 = vmatprep.mubr.bf16.mxu0 0
        %3168 = vmatmul.mubr.bf16.gmra.mrb[0].mxu0 %v2141
        %v3169 = vpop.f32.mrb[0].mxu0
        %v3170 = vadd.f32 %v714, %v3169
        %v3171 = vpop.f32.mrb[0].mxu0
        %v3172 = vpop.f32.mrb[0].mxu0
        %v3173 = vadd.f32 %v714, %v3172
        %v3174 = vpop.f32.mrb[0].mxu0
        %3175 = vmatprep.mubr.bf16.mxu0 0
        %3176 = vmatmul.mubr.bf16.gmra.mrb[0].mxu0 %v2144
        %v3177 = vpop.f32.mrb[0].mxu0
        %v3178 = vadd.f32 %v714, %v3177
        %v3179 = vpop.f32.mrb[0].mxu0
        %v3180 = vpop.f32.mrb[0].mxu0
        %v3181 = vadd.f32 %v714, %v3180
        %v3182 = vpop.f32.mrb[0].mxu0
        %3183 = vmatprep.mubr.bf16.mxu0 0
        %3184 = vmatmul.mubr.bf16.gmra.mrb[0].mxu0 %v2147
        %v3185 = vpop.f32.mrb[0].mxu0
        %v3186 = vadd.f32 %v714, %v3185
        %v3187 = vpop.f32.mrb[0].mxu0
        %v3188 = vpop.f32.mrb[0].mxu0
        %v3189 = vadd.f32 %v714, %v3188
        %v3190 = vpop.f32.mrb[0].mxu0
        %3191 = vmatprep.mubr.bf16.mxu0 0
        %3192 = vmatmul.mubr.bf16.gmra.mrb[0].mxu0 %v2150
        %v3193 = vpop.f32.mrb[0].mxu0
        %v3194 = vadd.f32 %v714, %v3193
        %v3195 = vpop.f32.mrb[0].mxu0
        %v3196 = vpop.f32.mrb[0].mxu0
        %v3197 = vadd.f32 %v714, %v3196
        %v3198 = vpop.f32.mrb[0].mxu0
        %3199 = vmatprep.mubr.bf16.mxu0 0
        %3200 = vmatmul.mubr.bf16.gmra.mrb[0].mxu0 %v2153
        %v3201 = vpop.f32.mrb[0].mxu0
        %v3202 = vadd.f32 %v714, %v3201
        %v3203 = vpop.f32.mrb[0].mxu0
        %v3204 = vpop.f32.mrb[0].mxu0
        %v3205 = vadd.f32 %v714, %v3204
        %v3206 = vpop.f32.mrb[0].mxu0
        %3207 = vmatprep.mubr.bf16.mxu0 0
        %3208 = vmatmul.mubr.bf16.gmra.mrb[0].mxu0 %v2156
        %v3209 = vpop.f32.mrb[0].mxu0
        %v3210 = vadd.f32 %v714, %v3209
        %v3211 = vpop.f32.mrb[0].mxu0
        %v3212 = vpop.f32.mrb[0].mxu0
        %v3213 = vadd.f32 %v714, %v3212
        %v3214 = vpop.f32.mrb[0].mxu0
        %3215 = vmatprep.mubr.bf16.mxu0 0
        %3216 = vmatmul.mubr.bf16.gmra.mrb[0].mxu0 %v2159
        %v3217 = vpop.f32.mrb[0].mxu0
        %v3218 = vadd.f32 %v714, %v3217
        %v3219 = vpop.f32.mrb[0].mxu0
        %v3220 = vpop.f32.mrb[0].mxu0
        %v3221 = vadd.f32 %v714, %v3220
        %v3222 = vpop.f32.mrb[0].mxu0
        %3223 = vmatprep.mubr.bf16.mxu0 0
        %3224 = vmatmul.mubr.bf16.gmra.mrb[0].mxu0 %v2162
        %v3225 = vpop.f32.mrb[0].mxu0
        %v3226 = vadd.f32 %v714, %v3225
        %v3227 = vpop.f32.mrb[0].mxu0
        %v3228 = vpop.f32.mrb[0].mxu0
        %v3229 = vadd.f32 %v714, %v3228
        %v3230 = vpop.f32.mrb[0].mxu0
        %3231 = vmatprep.mubr.bf16.mxu0 0
        %3232 = vmatmul.mubr.bf16.gmra.mrb[0].mxu0 %v2165
        %v3233 = vpop.f32.mrb[0].mxu0
        %v3234 = vadd.f32 %v714, %v3233
        %v3235 = vpop.f32.mrb[0].mxu0
        %v3236 = vpop.f32.mrb[0].mxu0
        %v3237 = vadd.f32 %v714, %v3236
        %v3238 = vpop.f32.mrb[0].mxu0
        %3239 = vmatprep.mubr.bf16.mxu0 0
        %3240 = vmatmul.mubr.bf16.gmra.mrb[0].mxu0 %v2168
        %v3241 = vpop.f32.mrb[0].mxu0
        %v3242 = vadd.f32 %v714, %v3241
        %v3243 = vpop.f32.mrb[0].mxu0
        %v3244 = vpop.f32.mrb[0].mxu0
        %v3245 = vadd.f32 %v714, %v3244
        %v3246 = vpop.f32.mrb[0].mxu0
        %3247 = vmatprep.mubr.bf16.mxu0 0
        %3248 = vmatmul.mubr.bf16.gmra.mrb[0].mxu0 %v2171
        %v3249 = vpop.f32.mrb[0].mxu0
        %v3250 = vadd.f32 %v714, %v3249
        %v3251 = vpop.f32.mrb[0].mxu0
        %v3252 = vpop.f32.mrb[0].mxu0
        %v3253 = vadd.f32 %v714, %v3252
        %v3254 = vpop.f32.mrb[0].mxu0
        %3255 = vmatprep.mubr.bf16.mxu0 0
        %3256 = vmatmul.mubr.bf16.gmra.mrb[0].mxu0 %v2174
        %v3257 = vpop.f32.mrb[0].mxu0
        %v3258 = vadd.f32 %v714, %v3257
        %v3259 = vpop.f32.mrb[0].mxu0
        %v3260 = vpop.f32.mrb[0].mxu0
        %v3261 = vadd.f32 %v714, %v3260
        %v3262 = vpop.f32.mrb[0].mxu0
        %3263 = vmatprep.mubr.bf16.mxu0 0
        %3264 = vmatmul.mubr.bf16.gmra.mrb[0].mxu0 %v2177
        %v3265 = vpop.f32.mrb[0].mxu0
        %v3266 = vadd.f32 %v714, %v3265
        %v3267 = vpop.f32.mrb[0].mxu0
        %v3268 = vpop.f32.mrb[0].mxu0
        %v3269 = vadd.f32 %v714, %v3268
        %v3270 = vpop.f32.mrb[0].mxu0
        %3271 = vmatprep.mubr.bf16.mxu0 0
        %3272 = vmatmul.mubr.bf16.gmra.mrb[0].mxu0 %v2180
        %v3273 = vpop.f32.mrb[0].mxu0
        %v3274 = vadd.f32 %v714, %v3273
        %v3275 = vpop.f32.mrb[0].mxu0
        %v3276 = vpop.f32.mrb[0].mxu0
        %v3277 = vadd.f32 %v714, %v3276
        %v3278 = vpop.f32.mrb[0].mxu0
        %3279 = vmatprep.mubr.bf16.mxu0 0
        %3280 = vmatmul.mubr.bf16.gmra.mrb[0].mxu0 %v2183
        %v3281 = vpop.f32.mrb[0].mxu0
        %v3282 = vadd.f32 %v714, %v3281
        %v3283 = vpop.f32.mrb[0].mxu0
        %v3284 = vpop.f32.mrb[0].mxu0
        %v3285 = vadd.f32 %v714, %v3284
        %v3286 = vpop.f32.mrb[0].mxu0
        %3287 = vmatprep.mubr.bf16.mxu0 0
        %3288 = vmatmul.mubr.bf16.gmra.mrb[0].mxu0 %v2186
        %v3289 = vpop.f32.mrb[0].mxu0
        %v3290 = vadd.f32 %v714, %v3289
        %v3291 = vpop.f32.mrb[0].mxu0
        %v3292 = vpop.f32.mrb[0].mxu0
        %v3293 = vadd.f32 %v714, %v3292
        %v3294 = vpop.f32.mrb[0].mxu0
        %3295 = vmatprep.mubr.bf16.mxu0 0
        %3296 = vmatmul.mubr.bf16.gmra.mrb[0].mxu0 %v2189
        %v3297 = vpop.f32.mrb[0].mxu0
        %v3298 = vadd.f32 %v714, %v3297
        %v3299 = vpop.f32.mrb[0].mxu0
        %v3300 = vpop.f32.mrb[0].mxu0
        %v3301 = vadd.f32 %v714, %v3300
        %v3302 = vpop.f32.mrb[0].mxu0
        %3303 = vmatprep.mubr.bf16.mxu0 0
        %3304 = vmatmul.mubr.bf16.gmra.mrb[0].mxu0 %v2192
        %v3305 = vpop.f32.mrb[0].mxu0
        %v3306 = vadd.f32 %v714, %v3305
        %v3307 = vpop.f32.mrb[0].mxu0
        %v3308 = vpop.f32.mrb[0].mxu0
        %v3309 = vadd.f32 %v714, %v3308
        %v3310 = vpop.f32.mrb[0].mxu0
        %3311 = vmatprep.mubr.bf16.mxu0 0
        %3312 = vmatmul.mubr.bf16.gmra.mrb[0].mxu0 %v2195
        %v3313 = vpop.f32.mrb[0].mxu0
        %v3314 = vadd.f32 %v714, %v3313
        %v3315 = vpop.f32.mrb[0].mxu0
        %v3316 = vpop.f32.mrb[0].mxu0
        %v3317 = vadd.f32 %v714, %v3316
        %v3318 = vpop.f32.mrb[0].mxu0
        %3319 = vmatprep.mubr.bf16.mxu0 0
        %3320 = vmatmul.mubr.bf16.gmra.mrb[0].mxu0 %v2198
        %v3321 = vpop.f32.mrb[0].mxu0
        %v3322 = vadd.f32 %v714, %v3321
        %v3323 = vpop.f32.mrb[0].mxu0
        %v3324 = vpop.f32.mrb[0].mxu0
        %v3325 = vadd.f32 %v714, %v3324
        %v3326 = vpop.f32.mrb[0].mxu0
        %3327 = vmatprep.mubr.bf16.mxu0 0
        %3328 = vmatmul.mubr.bf16.gmra.mrb[0].mxu0 %v2201
        %v3329 = vpop.f32.mrb[0].mxu0
        %v3330 = vadd.f32 %v714, %v3329
        %v3331 = vpop.f32.mrb[0].mxu0
        %v3332 = vpop.f32.mrb[0].mxu0
        %v3333 = vadd.f32 %v714, %v3332
        %v3334 = vpop.f32.mrb[0].mxu0
        %3335 = vmatprep.mubr.bf16.mxu0 0
        %3336 = vmatmul.mubr.bf16.gmra.mrb[0].mxu0 %v2204
        %v3337 = vpop.f32.mrb[0].mxu0
        %v3338 = vadd.f32 %v714, %v3337
        %v3339 = vpop.f32.mrb[0].mxu0
        %v3340 = vpop.f32.mrb[0].mxu0
        %v3341 = vadd.f32 %v714, %v3340
        %v3342 = vpop.f32.mrb[0].mxu0
        %3343 = vmatprep.mubr.bf16.mxu0 0
        %3344 = vmatmul.mubr.bf16.gmra.mrb[0].mxu0 %v2207
        %v3345 = vpop.f32.mrb[0].mxu0
        %v3346 = vadd.f32 %v714, %v3345
        %v3347 = vpop.f32.mrb[0].mxu0
        %v3348 = vpop.f32.mrb[0].mxu0
        %v3349 = vadd.f32 %v714, %v3348
        %v3350 = vpop.f32.mrb[0].mxu0
        %3351 = vmatprep.mubr.bf16.mxu0 0
        %3352 = vmatmul.mubr.bf16.gmra.mrb[0].mxu0 %v2210
        %v3353 = vpop.f32.mrb[0].mxu0
        %v3354 = vadd.f32 %v714, %v3353
        %v3355 = vpop.f32.mrb[0].mxu0
        %v3356 = vpop.f32.mrb[0].mxu0
        %v3357 = vadd.f32 %v714, %v3356
        %v3358 = vpop.f32.mrb[0].mxu0
        %3359 = vmatprep.mubr.bf16.mxu0 0
        %3360 = vmatmul.mubr.bf16.gmra.mrb[0].mxu0 %v2213
        %v3361 = vpop.f32.mrb[0].mxu0
        %v3362 = vadd.f32 %v714, %v3361
        %v3363 = vpop.f32.mrb[0].mxu0
        %v3364 = vpop.f32.mrb[0].mxu0
        %v3365 = vadd.f32 %v714, %v3364
        %v3366 = vpop.f32.mrb[0].mxu0
        %3367 = vmatprep.mubr.bf16.mxu0 0
        %3368 = vmatmul.mubr.bf16.gmra.mrb[0].mxu0 %v2216
        %v3369 = vpop.f32.mrb[0].mxu0
        %v3370 = vadd.f32 %v714, %v3369
        %v3371 = vpop.f32.mrb[0].mxu0
        %v3372 = vpop.f32.mrb[0].mxu0
        %v3373 = vadd.f32 %v714, %v3372
        %v3374 = vpop.f32.mrb[0].mxu0
        %3375 = vmatprep.mubr.bf16.mxu0 0
        %3376 = vmatmul.mubr.bf16.gmra.mrb[0].mxu0 %v2219
        %v3377 = vpop.f32.mrb[0].mxu0
        %v3378 = vadd.f32 %v714, %v3377
        %v3379 = vpop.f32.mrb[0].mxu0
        %v3380 = vpop.f32.mrb[0].mxu0
        %v3381 = vadd.f32 %v714, %v3380
        %v3382 = vpop.f32.mrb[0].mxu0
        %3383 = vmatprep.mubr.bf16.mxu0 0
        %3384 = vmatmul.mubr.bf16.gmra.mrb[0].mxu0 %v2222
        %v3385 = vpop.f32.mrb[0].mxu0
        %v3386 = vadd.f32 %v714, %v3385
        %v3387 = vpop.f32.mrb[0].mxu0
        %v3388 = vpop.f32.mrb[0].mxu0
        %v3389 = vadd.f32 %v714, %v3388
        %v3390 = vpop.f32.mrb[0].mxu0
        %3391 = vmatprep.mubr.bf16.mxu0 0
        %3392 = vmatmul.mubr.bf16.gmra.mrb[0].mxu0 %v2225
        %v3393 = vpop.f32.mrb[0].mxu0
        %v3394 = vadd.f32 %v714, %v3393
        %v3395 = vpop.f32.mrb[0].mxu0
        %v3396 = vpop.f32.mrb[0].mxu0
        %v3397 = vadd.f32 %v714, %v3396
        %v3398 = vpop.f32.mrb[0].mxu0
        %3399 = vmatprep.mubr.bf16.mxu0 0
        %3400 = vmatmul.mubr.bf16.gmra.mrb[0].mxu0 %v2228
        %v3401 = vpop.f32.mrb[0].mxu0
        %v3402 = vadd.f32 %v714, %v3401
        %v3403 = vpop.f32.mrb[0].mxu0
        %v3404 = vpop.f32.mrb[0].mxu0
        %v3405 = vadd.f32 %v714, %v3404
        %v3406 = vpop.f32.mrb[0].mxu0
        %3407 = vmatprep.mubr.bf16.mxu0 0
        %3408 = vmatmul.mubr.bf16.gmra.mrb[0].mxu0 %v2231
        %v3409 = vpop.f32.mrb[0].mxu0
        %v3410 = vadd.f32 %v714, %v3409
        %v3411 = vpop.f32.mrb[0].mxu0
        %v3412 = vpop.f32.mrb[0].mxu0
        %v3413 = vadd.f32 %v714, %v3412
        %v3414 = vpop.f32.mrb[0].mxu0
        %3415 = vmatprep.mubr.bf16.mxu0 0
        %3416 = vmatmul.mubr.bf16.gmra.mrb[0].mxu0 %v2234
        %v3417 = vpop.f32.mrb[0].mxu0
        %v3418 = vadd.f32 %v714, %v3417
        %v3419 = vpop.f32.mrb[0].mxu0
        %v3420 = vpop.f32.mrb[0].mxu0
        %v3421 = vadd.f32 %v714, %v3420
        %v3422 = vpop.f32.mrb[0].mxu0
        %3423 = vmatprep.mubr.bf16.mxu0 0
        %3424 = vmatmul.mubr.bf16.gmra.mrb[0].mxu0 %v2237
        %v3425 = vpop.f32.mrb[0].mxu0
        %v3426 = vadd.f32 %v714, %v3425
        %v3427 = vpop.f32.mrb[0].mxu0
        %v3428 = vpop.f32.mrb[0].mxu0
        %v3429 = vadd.f32 %v714, %v3428
        %v3430 = vpop.f32.mrb[0].mxu0
        %3431 = vmatprep.mubr.bf16.mxu0 0
        %3432 = vmatmul.mubr.bf16.gmra.mrb[0].mxu0 %v2240
        %v3433 = vpop.f32.mrb[0].mxu0
        %v3434 = vadd.f32 %v714, %v3433
        %v3435 = vpop.f32.mrb[0].mxu0
        %v3436 = vpop.f32.mrb[0].mxu0
        %v3437 = vadd.f32 %v714, %v3436
        %v3438 = vpop.f32.mrb[0].mxu0
        %3439 = vmatprep.mubr.bf16.mxu0 0
        %3440 = vmatmul.mubr.bf16.gmra.mrb[0].mxu0 %v2243
        %v3441 = vpop.f32.mrb[0].mxu0
        %v3442 = vadd.f32 %v714, %v3441
        %v3443 = vpop.f32.mrb[0].mxu0
        %v3444 = vpop.f32.mrb[0].mxu0
        %v3445 = vadd.f32 %v714, %v3444
        %v3446 = vpop.f32.mrb[0].mxu0
        %3447 = vmatprep.mubr.bf16.mxu0 0
        %3448 = vmatmul.mubr.bf16.gmra.mrb[0].mxu0 %v2246
        %v3449 = vpop.f32.mrb[0].mxu0
        %v3450 = vadd.f32 %v714, %v3449
        %v3451 = vpop.f32.mrb[0].mxu0
        %v3452 = vpop.f32.mrb[0].mxu0
        %v3453 = vadd.f32 %v714, %v3452
        %v3454 = vpop.f32.mrb[0].mxu0
        %3455 = vmatprep.mubr.bf16.mxu0 0
        %3456 = vmatmul.mubr.bf16.gmra.mrb[0].mxu0 %v2249
        %v3457 = vpop.f32.mrb[0].mxu0
        %v3458 = vadd.f32 %v714, %v3457
        %v3459 = vpop.f32.mrb[0].mxu0
        %v3460 = vpop.f32.mrb[0].mxu0
        %v3461 = vadd.f32 %v714, %v3460
        %v3462 = vpop.f32.mrb[0].mxu0
        %3463 = vmatprep.mubr.bf16.mxu0 0
        %3464 = vmatmul.mubr.bf16.gmra.mrb[0].mxu0 %v2252
        %v3465 = vpop.f32.mrb[0].mxu0
        %v3466 = vadd.f32 %v714, %v3465
        %v3467 = vpop.f32.mrb[0].mxu0
        %v3468 = vpop.f32.mrb[0].mxu0
        %v3469 = vadd.f32 %v714, %v3468
        %v3470 = vpop.f32.mrb[0].mxu0
        %3471 = vmatprep.mubr.bf16.mxu0 0
        %3472 = vmatmul.mubr.bf16.gmra.mrb[0].mxu0 %v2255
        %v3473 = vpop.f32.mrb[0].mxu0
        %v3474 = vadd.f32 %v714, %v3473
        %v3475 = vpop.f32.mrb[0].mxu0
        %v3476 = vpop.f32.mrb[0].mxu0
        %v3477 = vadd.f32 %v714, %v3476
        %v3478 = vpop.f32.mrb[0].mxu0
        %3479 = vmatprep.mubr.bf16.mxu0 0
        %3480 = vmatmul.mubr.bf16.gmra.mrb[0].mxu0 %v2258
        %v3481 = vpop.f32.mrb[0].mxu0
        %v3482 = vadd.f32 %v714, %v3481
        %v3483 = vpop.f32.mrb[0].mxu0
        %v3484 = vpop.f32.mrb[0].mxu0
        %v3485 = vadd.f32 %v714, %v3484
        %v3486 = vpop.f32.mrb[0].mxu0
        %3487 = vmatprep.mubr.bf16.mxu0 0
        %3488 = vmatmul.mubr.bf16.gmra.mrb[0].mxu0 %v2261
        %v3489 = vpop.f32.mrb[0].mxu0
        %v3490 = vadd.f32 %v714, %v3489
        %v3491 = vpop.f32.mrb[0].mxu0
        %v3492 = vpop.f32.mrb[0].mxu0
        %v3493 = vadd.f32 %v714, %v3492
        %v3494 = vpop.f32.mrb[0].mxu0
        %3495 = vmatprep.mubr.bf16.mxu0 0
        %3496 = vmatmul.mubr.bf16.gmra.mrb[0].mxu0 %v2264
        %v3497 = vpop.f32.mrb[0].mxu0
        %v3498 = vadd.f32 %v714, %v3497
        %v3499 = vpop.f32.mrb[0].mxu0
        %v3500 = vpop.f32.mrb[0].mxu0
        %v3501 = vadd.f32 %v714, %v3500
        %v3502 = vpop.f32.mrb[0].mxu0
        %3503 = vmatprep.mubr.bf16.mxu0 0
        %3504 = vmatmul.mubr.bf16.gmra.mrb[0].mxu0 %v2267
        %v3505 = vpop.f32.mrb[0].mxu0
        %v3506 = vadd.f32 %v714, %v3505
        %v3507 = vpop.f32.mrb[0].mxu0
        %v3508 = vpop.f32.mrb[0].mxu0
        %v3509 = vadd.f32 %v714, %v3508
        %v3510 = vpop.f32.mrb[0].mxu0
        %3511 = vmatprep.mubr.bf16.mxu0 0
        %3512 = vmatmul.mubr.bf16.gmra.mrb[0].mxu0 %v2270
        %v3513 = vpop.f32.mrb[0].mxu0
        %v3514 = vadd.f32 %v714, %v3513
        %v3515 = vpop.f32.mrb[0].mxu0
        %v3516 = vpop.f32.mrb[0].mxu0
        %v3517 = vadd.f32 %v714, %v3516
        %v3518 = vpop.f32.mrb[0].mxu0
        %3519 = vmatprep.mubr.bf16.mxu0 0
        %3520 = vmatmul.mubr.bf16.gmra.mrb[0].mxu0 %v2273
        %v3521 = vpop.f32.mrb[0].mxu0
        %v3522 = vadd.f32 %v714, %v3521
        %v3523 = vpop.f32.mrb[0].mxu0
        %v3524 = vpop.f32.mrb[0].mxu0
        %v3525 = vadd.f32 %v714, %v3524
        %v3526 = vpop.f32.mrb[0].mxu0
        %3527 = vmatprep.mubr.bf16.mxu0 0
        %3528 = vmatmul.mubr.bf16.gmra.mrb[0].mxu0 %v2276
        %v3529 = vpop.f32.mrb[0].mxu0
        %v3530 = vadd.f32 %v714, %v3529
        %v3531 = vpop.f32.mrb[0].mxu0
        %v3532 = vpop.f32.mrb[0].mxu0
        %v3533 = vadd.f32 %v714, %v3532
        %v3534 = vpop.f32.mrb[0].mxu0
        %3535 = vmatprep.mubr.bf16.mxu0 0
        %3536 = vmatmul.mubr.bf16.gmra.mrb[0].mxu0 %v2279
        %v3537 = vpop.f32.mrb[0].mxu0
        %v3538 = vadd.f32 %v714, %v3537
        %v3539 = vpop.f32.mrb[0].mxu0
        %v3540 = vpop.f32.mrb[0].mxu0
        %v3541 = vadd.f32 %v714, %v3540
        %v3542 = vpop.f32.mrb[0].mxu0
        %3543 = vmatprep.mubr.bf16.mxu0 0
        %3544 = vmatmul.mubr.bf16.gmra.mrb[0].mxu0 %v2282
        %v3545 = vpop.f32.mrb[0].mxu0
        %v3546 = vadd.f32 %v714, %v3545
        %v3547 = vpop.f32.mrb[0].mxu0
        %v3548 = vpop.f32.mrb[0].mxu0
        %v3549 = vadd.f32 %v714, %v3548
        %v3550 = vpop.f32.mrb[0].mxu0
        %3551 = vmatprep.mubr.bf16.mxu0 0
        %3552 = vmatmul.mubr.bf16.gmra.mrb[0].mxu0 %v2285
        %v3553 = vpop.f32.mrb[0].mxu0
        %v3554 = vadd.f32 %v714, %v3553
        %v3555 = vpop.f32.mrb[0].mxu0
        %v3556 = vpop.f32.mrb[0].mxu0
        %v3557 = vadd.f32 %v714, %v3556
        %v3558 = vpop.f32.mrb[0].mxu0
        %3559 = vmatprep.mubr.bf16.mxu0 0
        %3560 = vmatmul.mubr.bf16.gmra.mrb[0].mxu0 %v2288
        %v3561 = vpop.f32.mrb[0].mxu0
        %v3562 = vadd.f32 %v714, %v3561
        %v3563 = vpop.f32.mrb[0].mxu0
        %v3564 = vpop.f32.mrb[0].mxu0
        %v3565 = vadd.f32 %v714, %v3564
        %v3566 = vpop.f32.mrb[0].mxu0
        %3567 = vmatprep.mubr.bf16.mxu0 0
        %3568 = vmatmul.mubr.bf16.gmra.mrb[0].mxu0 %v2291
        %v3569 = vpop.f32.mrb[0].mxu0
        %v3570 = vadd.f32 %v714, %v3569
        %v3571 = vpop.f32.mrb[0].mxu0
        %v3572 = vpop.f32.mrb[0].mxu0
        %v3573 = vadd.f32 %v714, %v3572
        %v3574 = vpop.f32.mrb[0].mxu0
        %3575 = vmatprep.mubr.bf16.mxu0 0
        %3576 = vmatmul.mubr.bf16.gmra.mrb[0].mxu0 %v2294
        %v3577 = vpop.f32.mrb[0].mxu0
        %v3578 = vadd.f32 %v714, %v3577
        %v3579 = vpop.f32.mrb[0].mxu0
        %v3580 = vpop.f32.mrb[0].mxu0
        %v3581 = vadd.f32 %v714, %v3580
        %v3582 = vpop.f32.mrb[0].mxu0
        %3583 = vmatprep.mubr.bf16.mxu0 0
        %3584 = vmatmul.mubr.bf16.gmra.mrb[0].mxu0 %v2297
        %v3585 = vpop.f32.mrb[0].mxu0
        %v3586 = vadd.f32 %v714, %v3585
        %v3587 = vpop.f32.mrb[0].mxu0
        %v3588 = vpop.f32.mrb[0].mxu0
        %v3589 = vadd.f32 %v714, %v3588
        %v3590 = vpop.f32.mrb[0].mxu0
        %3591 = vmatprep.mubr.bf16.mxu0 0
        %3592 = vmatmul.mubr.bf16.gmra.mrb[0].mxu0 %v2300
        %v3593 = vpop.f32.mrb[0].mxu0
        %v3594 = vadd.f32 %v714, %v3593
        %v3595 = vpop.f32.mrb[0].mxu0
        %v3596 = vpop.f32.mrb[0].mxu0
        %v3597 = vadd.f32 %v714, %v3596
        %v3598 = vpop.f32.mrb[0].mxu0
        %3599 = vmatprep.mubr.bf16.mxu0 0
        %3600 = vmatmul.mubr.bf16.gmra.mrb[0].mxu0 %v2303
        %v3601 = vpop.f32.mrb[0].mxu0
        %v3602 = vadd.f32 %v714, %v3601
        %v3603 = vpop.f32.mrb[0].mxu0
        %v3604 = vpop.f32.mrb[0].mxu0
        %v3605 = vadd.f32 %v714, %v3604
        %v3606 = vpop.f32.mrb[0].mxu0
        %3607 = vmatprep.mubr.bf16.mxu0 0
        %3608 = vmatmul.mubr.bf16.gmra.mrb[0].mxu0 %v2306
        %v3609 = vpop.f32.mrb[0].mxu0
        %v3610 = vadd.f32 %v714, %v3609
        %v3611 = vpop.f32.mrb[0].mxu0
        %v3612 = vpop.f32.mrb[0].mxu0
        %v3613 = vadd.f32 %v714, %v3612
        %v3614 = vpop.f32.mrb[0].mxu0
        %3615 = vmatprep.mubr.bf16.mxu0 0
        %3616 = vmatmul.mubr.bf16.gmra.mrb[0].mxu0 %v2309
        %v3617 = vpop.f32.mrb[0].mxu0
        %v3618 = vadd.f32 %v714, %v3617
        %v3619 = vpop.f32.mrb[0].mxu0
        %v3620 = vpop.f32.mrb[0].mxu0
        %v3621 = vadd.f32 %v714, %v3620
        %v3622 = vpop.f32.mrb[0].mxu0
        %3623 = vmatprep.mubr.bf16.mxu0 0
        %3624 = vmatmul.mubr.bf16.gmra.mrb[0].mxu0 %v2312
        %v3625 = vpop.f32.mrb[0].mxu0
        %v3626 = vadd.f32 %v714, %v3625
        %v3627 = vpop.f32.mrb[0].mxu0
        %v3628 = vpop.f32.mrb[0].mxu0
        %v3629 = vadd.f32 %v714, %v3628
        %v3630 = vpop.f32.mrb[0].mxu0
        %3631 = vmatprep.mubr.bf16.mxu0 0
        %3632 = vmatmul.mubr.bf16.gmra.mrb[0].mxu0 %v2315
        %v3633 = vpop.f32.mrb[0].mxu0
        %v3634 = vadd.f32 %v714, %v3633
        %v3635 = vpop.f32.mrb[0].mxu0
        %v3636 = vpop.f32.mrb[0].mxu0
        %v3637 = vadd.f32 %v714, %v3636
        %v3638 = vpop.f32.mrb[0].mxu0
        %3639 = vmatprep.mubr.bf16.mxu0 0
        %3640 = vmatmul.mubr.bf16.gmra.mrb[0].mxu0 %v2318
        %v3641 = vpop.f32.mrb[0].mxu0
        %v3642 = vadd.f32 %v714, %v3641
        %v3643 = vpop.f32.mrb[0].mxu0
        %v3644 = vpop.f32.mrb[0].mxu0
        %v3645 = vadd.f32 %v714, %v3644
        %v3646 = vpop.f32.mrb[0].mxu0
        %3647 = vmatprep.mubr.bf16.mxu0 0
        %3648 = vmatmul.mubr.bf16.gmra.mrb[0].mxu0 %v2321
        %v3649 = vpop.f32.mrb[0].mxu0
        %v3650 = vadd.f32 %v714, %v3649
        %v3651 = vpop.f32.mrb[0].mxu0
        %v3652 = vpop.f32.mrb[0].mxu0
        %v3653 = vadd.f32 %v714, %v3652
        %v3654 = vpop.f32.mrb[0].mxu0
        %3655 = vmatprep.mubr.bf16.mxu0 0
        %3656 = vmatmul.mubr.bf16.gmra.mrb[0].mxu0 %v2324
        %v3657 = vpop.f32.mrb[0].mxu0
        %v3658 = vadd.f32 %v714, %v3657
        %v3659 = vpop.f32.mrb[0].mxu0
        %v3660 = vpop.f32.mrb[0].mxu0
        %v3661 = vadd.f32 %v714, %v3660
        %v3662 = vpop.f32.mrb[0].mxu0
        %3663 = vmatprep.mubr.bf16.mxu0 0
        %3664 = vmatmul.mubr.bf16.gmra.mrb[0].mxu0 %v2327
        %v3665 = vpop.f32.mrb[0].mxu0
        %v3666 = vadd.f32 %v714, %v3665
        %v3667 = vpop.f32.mrb[0].mxu0
        %v3668 = vpop.f32.mrb[0].mxu0
        %v3669 = vadd.f32 %v714, %v3668
        %v3670 = vpop.f32.mrb[0].mxu0
        %3671 = vmatprep.mubr.bf16.mxu0 0
        %3672 = vmatmul.mubr.bf16.gmra.mrb[0].mxu0 %v2330
        %v3673 = vpop.f32.mrb[0].mxu0
        %v3674 = vadd.f32 %v714, %v3673
        %v3675 = vpop.f32.mrb[0].mxu0
        %v3676 = vpop.f32.mrb[0].mxu0
        %v3677 = vadd.f32 %v714, %v3676
        %v3678 = vpop.f32.mrb[0].mxu0
        %3679 = vmatprep.mubr.bf16.mxu0 0
        %3680 = vmatmul.mubr.bf16.gmra.mrb[0].mxu0 %v2333
        %v3681 = vpop.f32.mrb[0].mxu0
        %v3682 = vadd.f32 %v714, %v3681
        %v3683 = vpop.f32.mrb[0].mxu0
        %v3684 = vpop.f32.mrb[0].mxu0
        %v3685 = vadd.f32 %v714, %v3684
        %v3686 = vpop.f32.mrb[0].mxu0
        %3687 = vmatprep.mubr.bf16.mxu0 0
        %3688 = vmatmul.mubr.bf16.gmra.mrb[0].mxu0 %v2336
        %v3689 = vpop.f32.mrb[0].mxu0
        %v3690 = vadd.f32 %v714, %v3689
        %v3691 = vpop.f32.mrb[0].mxu0
        %v3692 = vpop.f32.mrb[0].mxu0
        %v3693 = vadd.f32 %v714, %v3692
        %v3694 = vpop.f32.mrb[0].mxu0
        %3695 = vmatprep.mubr.bf16.mxu0 0
        %3696 = vmatmul.mubr.bf16.gmra.mrb[0].mxu0 %v2339
        %v3697 = vpop.f32.mrb[0].mxu0
        %v3698 = vadd.f32 %v714, %v3697
        %v3699 = vpop.f32.mrb[0].mxu0
        %v3700 = vpop.f32.mrb[0].mxu0
        %v3701 = vadd.f32 %v714, %v3700
        %v3702 = vpop.f32.mrb[0].mxu0
        %3703 = vmatprep.mubr.bf16.mxu0 0
        %3704 = vmatmul.mubr.bf16.gmra.mrb[0].mxu0 %v2342
        %v3705 = vpop.f32.mrb[0].mxu0
        %v3706 = vadd.f32 %v714, %v3705
        %v3707 = vpop.f32.mrb[0].mxu0
        %v3708 = vpop.f32.mrb[0].mxu0
        %v3709 = vadd.f32 %v714, %v3708
        %v3710 = vpop.f32.mrb[0].mxu0
        %3711 = vmatprep.mubr.bf16.mxu0 0
        %3712 = vmatmul.mubr.bf16.gmra.mrb[0].mxu0 %v2345
        %v3713 = vpop.f32.mrb[0].mxu0
        %v3714 = vadd.f32 %v714, %v3713
        %v3715 = vpop.f32.mrb[0].mxu0
        %v3716 = vpop.f32.mrb[0].mxu0
        %v3717 = vadd.f32 %v714, %v3716
        %v3718 = vpop.f32.mrb[0].mxu0
        %3719 = vmatprep.mubr.bf16.mxu0 0
        %3720 = vmatmul.mubr.bf16.gmra.mrb[0].mxu0 %v2348
        %v3721 = vpop.f32.mrb[0].mxu0
        %v3722 = vadd.f32 %v714, %v3721
        %v3723 = vpop.f32.mrb[0].mxu0
        %v3724 = vpop.f32.mrb[0].mxu0
        %v3725 = vadd.f32 %v714, %v3724
        %v3726 = vpop.f32.mrb[0].mxu0
        %3727 = vmatprep.mubr.bf16.mxu0 0
        %3728 = vmatmul.mubr.bf16.gmra.mrb[0].mxu0 %v2351
        %v3729 = vpop.f32.mrb[0].mxu0
        %v3730 = vadd.f32 %v714, %v3729
        %v3731 = vpop.f32.mrb[0].mxu0
        %v3732 = vpop.f32.mrb[0].mxu0
        %v3733 = vadd.f32 %v714, %v3732
        %v3734 = vpop.f32.mrb[0].mxu0
        %3735 = vmatprep.mubr.bf16.mxu0 0
        %3736 = vmatmul.mubr.bf16.gmra.mrb[0].mxu0 %v2354
        %v3737 = vpop.f32.mrb[0].mxu0
        %v3738 = vadd.f32 %v714, %v3737
        %v3739 = vpop.f32.mrb[0].mxu0
        %v3740 = vpop.f32.mrb[0].mxu0
        %v3741 = vadd.f32 %v714, %v3740
        %v3742 = vpop.f32.mrb[0].mxu0
        %3743 = vmatprep.mubr.bf16.mxu0 0
        %3744 = vmatmul.mubr.bf16.gmra.mrb[0].mxu0 %v2357
        %v3745 = vpop.f32.mrb[0].mxu0
        %v3746 = vadd.f32 %v714, %v3745
        %v3747 = vpop.f32.mrb[0].mxu0
        %v3748 = vpop.f32.mrb[0].mxu0
        %v3749 = vadd.f32 %v714, %v3748
        %v3750 = vpop.f32.mrb[0].mxu0
        %3751 = vmatprep.mubr.bf16.mxu0 0
        %3752 = vmatmul.mubr.bf16.gmra.mrb[0].mxu0 %v2360
        %v3753 = vpop.f32.mrb[0].mxu0
        %v3754 = vadd.f32 %v714, %v3753
        %v3755 = vpop.f32.mrb[0].mxu0
        %v3756 = vpop.f32.mrb[0].mxu0
        %v3757 = vadd.f32 %v714, %v3756
        %v3758 = vpop.f32.mrb[0].mxu0
        %3759 = vmatprep.mubr.bf16.mxu0 0
        %3760 = vmatmul.mubr.bf16.gmra.mrb[0].mxu0 %v2363
        %v3761 = vpop.f32.mrb[0].mxu0
        %v3762 = vadd.f32 %v714, %v3761
        %v3763 = vpop.f32.mrb[0].mxu0
        %v3764 = vpop.f32.mrb[0].mxu0
        %v3765 = vadd.f32 %v714, %v3764
        %v3766 = vpop.f32.mrb[0].mxu0
        %3767 = vmatprep.mubr.bf16.mxu0 0
        %3768 = vmatmul.mubr.bf16.gmra.mrb[0].mxu0 %v2366
        %v3769 = vpop.f32.mrb[0].mxu0
        %v3770 = vadd.f32 %v714, %v3769
        %v3771 = vpop.f32.mrb[0].mxu0
        %v3772 = vpop.f32.mrb[0].mxu0
        %v3773 = vadd.f32 %v714, %v3772
        %v3774 = vpop.f32.mrb[0].mxu0
        %3775 = vmatprep.mubr.bf16.mxu0 0
        %3776 = vmatmul.mubr.bf16.gmra.mrb[0].mxu0 %v2369
        %v3777 = vpop.f32.mrb[0].mxu0
        %v3778 = vadd.f32 %v714, %v3777
        %v3779 = vpop.f32.mrb[0].mxu0
        %v3780 = vpop.f32.mrb[0].mxu0
        %v3781 = vadd.f32 %v714, %v3780
        %v3782 = vpop.f32.mrb[0].mxu0
        %3783 = vmatprep.mubr.bf16.mxu0 0
        %3784 = vmatmul.mubr.bf16.gmra.mrb[0].mxu0 %v2372
        %v3785 = vpop.f32.mrb[0].mxu0
        %v3786 = vadd.f32 %v714, %v3785
        %v3787 = vpop.f32.mrb[0].mxu0
        %v3788 = vpop.f32.mrb[0].mxu0
        %v3789 = vadd.f32 %v714, %v3788
        %v3790 = vpop.f32.mrb[0].mxu0
        %3791 = vmatprep.mubr.bf16.mxu0 0
        %3792 = vmatmul.mubr.bf16.gmra.mrb[0].mxu0 %v2375
        %v3793 = vpop.f32.mrb[0].mxu0
        %v3794 = vadd.f32 %v714, %v3793
        %v3795 = vpop.f32.mrb[0].mxu0
        %v3796 = vpop.f32.mrb[0].mxu0
        %v3797 = vadd.f32 %v714, %v3796
        %v3798 = vpop.f32.mrb[0].mxu0
        %3799 = vmatprep.mubr.bf16.mxu0 0
        %3800 = vmatmul.mubr.bf16.gmra.mrb[0].mxu0 %v2378
        %v3801 = vpop.f32.mrb[0].mxu0
        %v3802 = vadd.f32 %v714, %v3801
        %v3803 = vpop.f32.mrb[0].mxu0
        %v3804 = vpop.f32.mrb[0].mxu0
        %v3805 = vadd.f32 %v714, %v3804
        %v3806 = vpop.f32.mrb[0].mxu0
        %3807 = vmatprep.mubr.bf16.mxu0 0
        %3808 = vmatmul.mubr.bf16.gmra.mrb[0].mxu0 %v2381
        %v3809 = vpop.f32.mrb[0].mxu0
        %v3810 = vadd.f32 %v714, %v3809
        %v3811 = vpop.f32.mrb[0].mxu0
        %v3812 = vpop.f32.mrb[0].mxu0
        %v3813 = vadd.f32 %v714, %v3812
        %v3814 = vpop.f32.mrb[0].mxu0
        %3815 = vmatprep.mubr.bf16.mxu0 0
        %3816 = vmatmul.mubr.bf16.gmra.mrb[0].mxu0 %v2384
        %v3817 = vpop.f32.mrb[0].mxu0
        %v3818 = vadd.f32 %v714, %v3817
        %v3819 = vpop.f32.mrb[0].mxu0
        %v3820 = vpop.f32.mrb[0].mxu0
        %v3821 = vadd.f32 %v714, %v3820
        %v3822 = vpop.f32.mrb[0].mxu0
        %3823 = vmatprep.mubr.bf16.mxu0 0
        %3824 = vmatmul.mubr.bf16.gmra.mrb[0].mxu0 %v2387
        %v3825 = vpop.f32.mrb[0].mxu0
        %v3826 = vadd.f32 %v714, %v3825
        %v3827 = vpop.f32.mrb[0].mxu0
        %v3828 = vpop.f32.mrb[0].mxu0
        %v3829 = vadd.f32 %v714, %v3828
        %v3830 = vpop.f32.mrb[0].mxu0
        %3831 = vmatprep.mubr.bf16.mxu0 0
        %3832 = vmatmul.mubr.bf16.gmra.mrb[0].mxu0 %v2390
        %v3833 = vpop.f32.mrb[0].mxu0
        %v3834 = vadd.f32 %v714, %v3833
        %v3835 = vpop.f32.mrb[0].mxu0
        %v3836 = vpop.f32.mrb[0].mxu0
        %v3837 = vadd.f32 %v714, %v3836
        %v3838 = vpop.f32.mrb[0].mxu0
        %3839 = vmatprep.mubr.bf16.mxu0 0
        %3840 = vmatmul.mubr.bf16.gmra.mrb[0].mxu0 %v2393
        %v3841 = vpop.f32.mrb[0].mxu0
        %v3842 = vadd.f32 %v714, %v3841
        %v3843 = vpop.f32.mrb[0].mxu0
        %v3844 = vpop.f32.mrb[0].mxu0
        %v3845 = vadd.f32 %v714, %v3844
        %v3846 = vpop.f32.mrb[0].mxu0
        %3847 = vmatprep.mubr.bf16.mxu0 0
        %3848 = vmatmul.mubr.bf16.gmra.mrb[0].mxu0 %v2396
        %v3849 = vpop.f32.mrb[0].mxu0
        %v3850 = vadd.f32 %v714, %v3849
        %v3851 = vpop.f32.mrb[0].mxu0
        %v3852 = vpop.f32.mrb[0].mxu0
        %v3853 = vadd.f32 %v714, %v3852
        %v3854 = vpop.f32.mrb[0].mxu0
        %3855 = vmatprep.mubr.bf16.mxu0 0
        %3856 = vmatmul.mubr.bf16.gmra.mrb[0].mxu0 %v2399
        %v3857 = vpop.f32.mrb[0].mxu0
        %v3858 = vadd.f32 %v714, %v3857
        %v3859 = vpop.f32.mrb[0].mxu0
        %v3860 = vpop.f32.mrb[0].mxu0
        %v3861 = vadd.f32 %v714, %v3860
        %v3862 = vpop.f32.mrb[0].mxu0
        %3863 = vmatprep.mubr.bf16.mxu0 0
        %3864 = vmatmul.mubr.bf16.gmra.mrb[0].mxu0 %v2402
        %v3865 = vpop.f32.mrb[0].mxu0
        %v3866 = vadd.f32 %v714, %v3865
        %v3867 = vpop.f32.mrb[0].mxu0
        %v3868 = vpop.f32.mrb[0].mxu0
        %v3869 = vadd.f32 %v714, %v3868
        %v3870 = vpop.f32.mrb[0].mxu0
        %3871 = vmatprep.mubr.bf16.mxu0 0
        %3872 = vmatmul.mubr.bf16.gmra.mrb[0].mxu0 %v2405
        %v3873 = vpop.f32.mrb[0].mxu0
        %v3874 = vadd.f32 %v714, %v3873
        %v3875 = vpop.f32.mrb[0].mxu0
        %v3876 = vpop.f32.mrb[0].mxu0
        %v3877 = vadd.f32 %v714, %v3876
        %v3878 = vpop.f32.mrb[0].mxu0
        %3879 = vmatprep.mubr.bf16.mxu0 0
        %3880 = vmatmul.mubr.bf16.gmra.mrb[0].mxu0 %v2408
        %v3881 = vpop.f32.mrb[0].mxu0
        %v3882 = vadd.f32 %v714, %v3881
        %v3883 = vpop.f32.mrb[0].mxu0
        %v3884 = vpop.f32.mrb[0].mxu0
        %v3885 = vadd.f32 %v714, %v3884
        %v3886 = vpop.f32.mrb[0].mxu0
        %3887 = vmatprep.mubr.bf16.mxu0 0
        %3888 = vmatmul.mubr.bf16.gmra.mrb[0].mxu0 %v2411
        %v3889 = vpop.f32.mrb[0].mxu0
        %v3890 = vadd.f32 %v714, %v3889
        %v3891 = vpop.f32.mrb[0].mxu0
        %v3892 = vpop.f32.mrb[0].mxu0
        %v3893 = vadd.f32 %v714, %v3892
        %v3894 = vpop.f32.mrb[0].mxu0
        %3895 = vmatprep.mubr.bf16.mxu0 0
        %3896 = vmatmul.mubr.bf16.gmra.mrb[0].mxu0 %v2414
        %v3897 = vpop.f32.mrb[0].mxu0
        %v3898 = vadd.f32 %v714, %v3897
        %v3899 = vpop.f32.mrb[0].mxu0
        %v3900 = vpop.f32.mrb[0].mxu0
        %v3901 = vadd.f32 %v714, %v3900
        %v3902 = vpop.f32.mrb[0].mxu0
        %3903 = vmatprep.mubr.bf16.mxu0 0
        %3904 = vmatmul.mubr.bf16.gmra.mrb[0].mxu0 %v2417
        %v3905 = vpop.f32.mrb[0].mxu0
        %v3906 = vadd.f32 %v714, %v3905
        %v3907 = vpop.f32.mrb[0].mxu0
        %v3908 = vpop.f32.mrb[0].mxu0
        %v3909 = vadd.f32 %v714, %v3908
        %v3910 = vpop.f32.mrb[0].mxu0
        %3911 = vmatprep.mubr.bf16.mxu0 0
        %3912 = vmatmul.mubr.bf16.gmra.mrb[0].mxu0 %v2420
        %v3913 = vpop.f32.mrb[0].mxu0
        %v3914 = vadd.f32 %v714, %v3913
        %v3915 = vpop.f32.mrb[0].mxu0
        %v3916 = vpop.f32.mrb[0].mxu0
        %v3917 = vadd.f32 %v714, %v3916
        %v3918 = vpop.f32.mrb[0].mxu0
        %3919 = vmatprep.mubr.bf16.mxu0 0
        %3920 = vmatmul.mubr.bf16.gmra.mrb[0].mxu0 %v2423
        %v3921 = vpop.f32.mrb[0].mxu0
        %v3922 = vadd.f32 %v714, %v3921
        %v3923 = vpop.f32.mrb[0].mxu0
        %v3924 = vpop.f32.mrb[0].mxu0
        %v3925 = vadd.f32 %v714, %v3924
        %v3926 = vpop.f32.mrb[0].mxu0
        %3927 = vmatprep.mubr.bf16.mxu0 0
        %3928 = vmatmul.mubr.bf16.gmra.mrb[0].mxu0 %v2426
        %v3929 = vpop.f32.mrb[0].mxu0
        %v3930 = vadd.f32 %v714, %v3929
        %v3931 = vpop.f32.mrb[0].mxu0
        %v3932 = vpop.f32.mrb[0].mxu0
        %v3933 = vadd.f32 %v714, %v3932
        %v3934 = vpop.f32.mrb[0].mxu0
        %3935 = vmatprep.mubr.bf16.mxu0 0
        %3936 = vmatmul.mubr.bf16.gmra.mrb[0].mxu0 %v2429
        %v3937 = vpop.f32.mrb[0].mxu0
        %v3938 = vadd.f32 %v714, %v3937
        %v3939 = vpop.f32.mrb[0].mxu0
        %v3940 = vpop.f32.mrb[0].mxu0
        %v3941 = vadd.f32 %v714, %v3940
        %v3942 = vpop.f32.mrb[0].mxu0
        %3943 = vmatprep.mubr.bf16.mxu0 0
        %3944 = vmatmul.mubr.bf16.gmra.mrb[0].mxu0 %v2432
        %v3945 = vpop.f32.mrb[0].mxu0
        %v3946 = vadd.f32 %v714, %v3945
        %v3947 = vpop.f32.mrb[0].mxu0
        %v3948 = vpop.f32.mrb[0].mxu0
        %v3949 = vadd.f32 %v714, %v3948
        %v3950 = vpop.f32.mrb[0].mxu0
        %3951 = vmatprep.mubr.bf16.mxu0 0
        %3952 = vmatmul.mubr.bf16.gmra.mrb[0].mxu0 %v2435
        %v3953 = vpop.f32.mrb[0].mxu0
        %v3954 = vadd.f32 %v714, %v3953
        %v3955 = vpop.f32.mrb[0].mxu0
        %v3956 = vpop.f32.mrb[0].mxu0
        %v3957 = vadd.f32 %v714, %v3956
        %v3958 = vpop.f32.mrb[0].mxu0
        %3959 = vmatprep.mubr.bf16.mxu0 0
        %3960 = vmatmul.mubr.bf16.gmra.mrb[0].mxu0 %v2438
        %v3961 = vpop.f32.mrb[0].mxu0
        %v3962 = vadd.f32 %v714, %v3961
        %v3963 = vpop.f32.mrb[0].mxu0
        %v3964 = vpop.f32.mrb[0].mxu0
        %v3965 = vadd.f32 %v714, %v3964
        %v3966 = vpop.f32.mrb[0].mxu0
        %3967 = vmatprep.mubr.bf16.mxu0 0
        %3968 = vmatmul.mubr.bf16.gmra.mrb[0].mxu0 %v2441
        %v3969 = vpop.f32.mrb[0].mxu0
        %v3970 = vadd.f32 %v714, %v3969
        %v3971 = vpop.f32.mrb[0].mxu0
        %v3972 = vpop.f32.mrb[0].mxu0
        %v3973 = vadd.f32 %v714, %v3972
        %v3974 = vpop.f32.mrb[0].mxu0
        %3975 = vmatprep.mubr.bf16.mxu0 0
        %3976 = vmatmul.mubr.bf16.gmra.mrb[0].mxu0 %v2444
        %v3977 = vpop.f32.mrb[0].mxu0
        %v3978 = vadd.f32 %v714, %v3977
        %v3979 = vpop.f32.mrb[0].mxu0
        %v3980 = vpop.f32.mrb[0].mxu0
        %v3981 = vadd.f32 %v714, %v3980
        %v3982 = vpop.f32.mrb[0].mxu0
        %3983 = vmatprep.mubr.bf16.mxu0 0
        %3984 = vmatmul.mubr.bf16.gmra.mrb[0].mxu0 %v2447
        %v3985 = vpop.f32.mrb[0].mxu0
        %v3986 = vadd.f32 %v714, %v3985
        %v3987 = vpop.f32.mrb[0].mxu0
        %v3988 = vpop.f32.mrb[0].mxu0
        %v3989 = vadd.f32 %v714, %v3988
        %v3990 = vpop.f32.mrb[0].mxu0
        %3991 = vmatprep.mubr.bf16.mxu0 0
        %3992 = vmatmul.mubr.bf16.gmra.mrb[0].mxu0 %v2450
        %v3993 = vpop.f32.mrb[0].mxu0
        %v3994 = vadd.f32 %v714, %v3993
        %v3995 = vpop.f32.mrb[0].mxu0
        %v3996 = vpop.f32.mrb[0].mxu0
        %v3997 = vadd.f32 %v714, %v3996
        %v3998 = vpop.f32.mrb[0].mxu0
        %3999 = vmatprep.mubr.bf16.mxu0 0
        %4000 = vmatmul.mubr.bf16.gmra.mrb[0].mxu0 %v2453
        %v4001 = vpop.f32.mrb[0].mxu0
        %v4002 = vadd.f32 %v714, %v4001
        %v4003 = vpop.f32.mrb[0].mxu0
        %v4004 = vpop.f32.mrb[0].mxu0
        %v4005 = vadd.f32 %v714, %v4004
        %v4006 = vpop.f32.mrb[0].mxu0
        %4007 = vmatprep.mubr.bf16.mxu0 0
        %4008 = vmatmul.mubr.bf16.gmra.mrb[0].mxu0 %v2456
        %v4009 = vpop.f32.mrb[0].mxu0
        %v4010 = vadd.f32 %v714, %v4009
        %v4011 = vpop.f32.mrb[0].mxu0
        %v4012 = vpop.f32.mrb[0].mxu0
        %v4013 = vadd.f32 %v714, %v4012
        %v4014 = vpop.f32.mrb[0].mxu0
        %4015 = vmatprep.mubr.bf16.mxu0 0
        %4016 = vmatmul.mubr.bf16.gmra.mrb[0].mxu0 %v2459
        %v4017 = vpop.f32.mrb[0].mxu0
        %v4018 = vadd.f32 %v714, %v4017
        %v4019 = vpop.f32.mrb[0].mxu0
        %v4020 = vpop.f32.mrb[0].mxu0
        %v4021 = vadd.f32 %v714, %v4020
        %v4022 = vpop.f32.mrb[0].mxu0
        %4023 = vmatprep.mubr.bf16.mxu0 0
        %4024 = vmatmul.mubr.bf16.gmra.mrb[0].mxu0 %v2462
        %v4025 = vpop.f32.mrb[0].mxu0
        %v4026 = vadd.f32 %v714, %v4025
        %v4027 = vpop.f32.mrb[0].mxu0
        %v4028 = vpop.f32.mrb[0].mxu0
        %v4029 = vadd.f32 %v714, %v4028
        %v4030 = vpop.f32.mrb[0].mxu0
        %4031 = vmatprep.mubr.bf16.mxu0 0
        %4032 = vmatmul.mubr.bf16.gmra.mrb[0].mxu0 %v2465
        %v4033 = vpop.f32.mrb[0].mxu0
        %v4034 = vadd.f32 %v714, %v4033
        %v4035 = vpop.f32.mrb[0].mxu0
        %v4036 = vpop.f32.mrb[0].mxu0
        %v4037 = vadd.f32 %v714, %v4036
        %v4038 = vpop.f32.mrb[0].mxu0
        %4039 = vmatprep.mubr.bf16.mxu0 0
        %4040 = vmatmul.mubr.bf16.gmra.mrb[0].mxu0 %v2468
        %v4041 = vpop.f32.mrb[0].mxu0
        %v4042 = vadd.f32 %v714, %v4041
        %v4043 = vpop.f32.mrb[0].mxu0
        %v4044 = vpop.f32.mrb[0].mxu0
        %v4045 = vadd.f32 %v714, %v4044
        %v4046 = vpop.f32.mrb[0].mxu0
        %4047 = vmatprep.mubr.bf16.mxu0 0
        %4048 = vmatmul.mubr.bf16.gmra.mrb[0].mxu0 %v2471
        %v4049 = vpop.f32.mrb[0].mxu0
        %v4050 = vadd.f32 %v714, %v4049
        %v4051 = vpop.f32.mrb[0].mxu0
        %v4052 = vpop.f32.mrb[0].mxu0
        %v4053 = vadd.f32 %v714, %v4052
        %v4054 = vpop.f32.mrb[0].mxu0
        %4055 = vmatprep.mubr.bf16.mxu0 0
        %4056 = vmatmul.mubr.bf16.gmra.mrb[0].mxu0 %v2474
        %v4057 = vpop.f32.mrb[0].mxu0
        %v4058 = vadd.f32 %v714, %v4057
        %v4059 = vpop.f32.mrb[0].mxu0
        %v4060 = vpop.f32.mrb[0].mxu0
        %v4061 = vadd.f32 %v714, %v4060
        %v4062 = vpop.f32.mrb[0].mxu0
        %4063 = vmatprep.mubr.bf16.mxu0 0
        %4064 = vmatmul.mubr.bf16.gmra.mrb[0].mxu0 %v2477
        %v4065 = vpop.f32.mrb[0].mxu0
        %v4066 = vadd.f32 %v714, %v4065
        %v4067 = vpop.f32.mrb[0].mxu0
        %v4068 = vpop.f32.mrb[0].mxu0
        %v4069 = vadd.f32 %v714, %v4068
        %v4070 = vpop.f32.mrb[0].mxu0
        %4071 = vmatprep.mubr.bf16.mxu0 0
        %4072 = vmatmul.mubr.bf16.gmra.mrb[0].mxu0 %v2480
        %v4073 = vpop.f32.mrb[0].mxu0
        %v4074 = vadd.f32 %v714, %v4073
        %v4075 = vpop.f32.mrb[0].mxu0
        %v4076 = vpop.f32.mrb[0].mxu0
        %v4077 = vadd.f32 %v714, %v4076
        %v4078 = vpop.f32.mrb[0].mxu0
        %4079 = vmatprep.mubr.bf16.mxu0 0
        %4080 = vmatmul.mubr.bf16.gmra.mrb[0].mxu0 %v2483
        %v4081 = vpop.f32.mrb[0].mxu0
        %v4082 = vadd.f32 %v714, %v4081
        %v4083 = vpop.f32.mrb[0].mxu0
        %v4084 = vpop.f32.mrb[0].mxu0
        %v4085 = vadd.f32 %v714, %v4084
        %v4086 = vpop.f32.mrb[0].mxu0
        %4087 = vmatprep.mubr.bf16.mxu0 0
        %4088 = vmatmul.mubr.bf16.gmra.mrb[0].mxu0 %v2486
        %v4089 = vpop.f32.mrb[0].mxu0
        %v4090 = vadd.f32 %v714, %v4089
        %v4091 = vpop.f32.mrb[0].mxu0
        %v4092 = vpop.f32.mrb[0].mxu0
        %v4093 = vadd.f32 %v714, %v4092
        %v4094 = vpop.f32.mrb[0].mxu0
        %4095 = vmatprep.mubr.bf16.mxu0 0
        %4096 = vmatmul.mubr.bf16.gmra.mrb[0].mxu0 %v2489
        %v4097 = vpop.f32.mrb[0].mxu0
        %v4098 = vadd.f32 %v714, %v4097
        %v4099 = vpop.f32.mrb[0].mxu0
        %v4100 = vpop.f32.mrb[0].mxu0
        %v4101 = vadd.f32 %v714, %v4100
        %v4102 = vpop.f32.mrb[0].mxu0
        %4103 = vmatprep.mubr.bf16.mxu0 0
        %4104 = vmatmul.mubr.bf16.gmra.mrb[0].mxu0 %v2492
        %v4105 = vpop.f32.mrb[0].mxu0
        %v4106 = vadd.f32 %v714, %v4105
        %v4107 = vpop.f32.mrb[0].mxu0
        %v4108 = vpop.f32.mrb[0].mxu0
        %v4109 = vadd.f32 %v714, %v4108
        %v4110 = vpop.f32.mrb[0].mxu0
        %4111 = vmatprep.mubr.bf16.mxu0 0
        %4112 = vmatmul.mubr.bf16.gmra.mrb[0].mxu0 %v2495
        %v4113 = vpop.f32.mrb[0].mxu0
        %v4114 = vadd.f32 %v714, %v4113
        %v4115 = vpop.f32.mrb[0].mxu0
        %v4116 = vpop.f32.mrb[0].mxu0
        %v4117 = vadd.f32 %v714, %v4116
        %v4118 = vpop.f32.mrb[0].mxu0
        %4119 = vmatprep.mubr.bf16.mxu0 0
        %4120 = vmatmul.mubr.bf16.gmra.mrb[0].mxu0 %v2498
        %v4121 = vpop.f32.mrb[0].mxu0
        %v4122 = vadd.f32 %v714, %v4121
        %v4123 = vpop.f32.mrb[0].mxu0
        %v4124 = vpop.f32.mrb[0].mxu0
        %v4125 = vadd.f32 %v714, %v4124
        %v4126 = vpop.f32.mrb[0].mxu0
        %4127 = vmatprep.mubr.bf16.mxu0 0
        %4128 = vmatmul.mubr.bf16.gmra.mrb[0].mxu0 %v2501
        %v4129 = vpop.f32.mrb[0].mxu0
        %v4130 = vadd.f32 %v714, %v4129
        %v4131 = vpop.f32.mrb[0].mxu0
        %v4132 = vpop.f32.mrb[0].mxu0
        %v4133 = vadd.f32 %v714, %v4132
        %v4134 = vpop.f32.mrb[0].mxu0
        %4135 = vmatprep.mubr.bf16.mxu0 0
        %4136 = vmatmul.mubr.bf16.gmra.mrb[0].mxu0 %v2504
        %v4137 = vpop.f32.mrb[0].mxu0
        %v4138 = vadd.f32 %v714, %v4137
        %v4139 = vpop.f32.mrb[0].mxu0
        %v4140 = vpop.f32.mrb[0].mxu0
        %v4141 = vadd.f32 %v714, %v4140
        %v4142 = vpop.f32.mrb[0].mxu0
        %4143 = vmatprep.mubr.bf16.mxu0 0
        %4144 = vmatmul.mubr.bf16.gmra.mrb[0].mxu0 %v2507
        %v4145 = vpop.f32.mrb[0].mxu0
        %v4146 = vadd.f32 %v714, %v4145
        %v4147 = vpop.f32.mrb[0].mxu0
        %v4148 = vpop.f32.mrb[0].mxu0
        %v4149 = vadd.f32 %v714, %v4148
        %v4150 = vpop.f32.mrb[0].mxu0
        %4151 = vmatprep.mubr.bf16.mxu0 0
        %4152 = vmatmul.mubr.bf16.gmra.mrb[0].mxu0 %v2510
        %v4153 = vpop.f32.mrb[0].mxu0
        %v4154 = vadd.f32 %v714, %v4153
        %v4155 = vpop.f32.mrb[0].mxu0
        %v4156 = vpop.f32.mrb[0].mxu0
        %v4157 = vadd.f32 %v714, %v4156
        %v4158 = vpop.f32.mrb[0].mxu0
        %4159 = vmatprep.mubr.bf16.mxu0 0
        %4160 = vmatmul.mubr.bf16.gmra.mrb[0].mxu0 %v2513
        %v4161 = vpop.f32.mrb[0].mxu0
        %v4162 = vadd.f32 %v714, %v4161
        %v4163 = vpop.f32.mrb[0].mxu0
        %v4164 = vpop.f32.mrb[0].mxu0
        %v4165 = vadd.f32 %v714, %v4164
        %v4166 = vpop.f32.mrb[0].mxu0
        %4167 = vmatprep.mubr.bf16.mxu0 0
        %4168 = vmatmul.mubr.bf16.gmra.mrb[0].mxu0 %v2516
        %v4169 = vpop.f32.mrb[0].mxu0
        %v4170 = vadd.f32 %v714, %v4169
        %v4171 = vpop.f32.mrb[0].mxu0
        %v4172 = vpop.f32.mrb[0].mxu0
        %v4173 = vadd.f32 %v714, %v4172
        %v4174 = vpop.f32.mrb[0].mxu0
        %4175 = vmatprep.mubr.bf16.mxu0 0
        %4176 = vmatmul.mubr.bf16.gmra.mrb[0].mxu0 %v2519
        %v4177 = vpop.f32.mrb[0].mxu0
        %v4178 = vadd.f32 %v714, %v4177
        %v4179 = vpop.f32.mrb[0].mxu0
        %v4180 = vpop.f32.mrb[0].mxu0
        %v4181 = vadd.f32 %v714, %v4180
        %v4182 = vpop.f32.mrb[0].mxu0
        %4183 = vmatprep.mubr.bf16.mxu0 0
        %4184 = vmatmul.mubr.bf16.gmra.mrb[0].mxu0 %v2522
        %v4185 = vpop.f32.mrb[0].mxu0
        %v4186 = vadd.f32 %v714, %v4185
        %v4187 = vpop.f32.mrb[0].mxu0
        %v4188 = vpop.f32.mrb[0].mxu0
        %v4189 = vadd.f32 %v714, %v4188
        %v4190 = vpop.f32.mrb[0].mxu0
        %4191 = vmatprep.mubr.bf16.mxu0 0
        %4192 = vmatmul.mubr.bf16.gmra.mrb[0].mxu0 %v2525
        %v4193 = vpop.f32.mrb[0].mxu0
        %v4194 = vadd.f32 %v714, %v4193
        %v4195 = vpop.f32.mrb[0].mxu0
        %v4196 = vpop.f32.mrb[0].mxu0
        %v4197 = vadd.f32 %v714, %v4196
        %v4198 = vpop.f32.mrb[0].mxu0
        %4199 = vmatprep.mubr.bf16.mxu0 0
        %4200 = vmatmul.mubr.bf16.gmra.mrb[0].mxu0 %v2528
        %v4201 = vpop.f32.mrb[0].mxu0
        %v4202 = vadd.f32 %v714, %v4201
        %v4203 = vpop.f32.mrb[0].mxu0
        %v4204 = vpop.f32.mrb[0].mxu0
        %v4205 = vadd.f32 %v714, %v4204
        %v4206 = vpop.f32.mrb[0].mxu0
        %4207 = vmatprep.mubr.bf16.mxu0 0
        %4208 = vmatmul.mubr.bf16.gmra.mrb[0].mxu0 %v2531
        %v4209 = vpop.f32.mrb[0].mxu0
        %v4210 = vadd.f32 %v714, %v4209
        %v4211 = vpop.f32.mrb[0].mxu0
        %v4212 = vpop.f32.mrb[0].mxu0
        %v4213 = vadd.f32 %v714, %v4212
        %v4214 = vpop.f32.mrb[0].mxu0
        %4215 = vmatprep.mubr.bf16.mxu0 0
        %4216 = vmatmul.mubr.bf16.gmra.mrb[0].mxu0 %v2534
        %v4217 = vpop.f32.mrb[0].mxu0
        %v4218 = vadd.f32 %v714, %v4217
        %v4219 = vpop.f32.mrb[0].mxu0
        %v4220 = vpop.f32.mrb[0].mxu0
        %v4221 = vadd.f32 %v714, %v4220
        %v4222 = vpop.f32.mrb[0].mxu0
        %4223 = vmatprep.mubr.bf16.mxu0 0
        %4224 = vmatmul.mubr.bf16.gmra.mrb[0].mxu0 %v2537
        %v4225 = vpop.f32.mrb[0].mxu0
        %v4226 = vadd.f32 %v714, %v4225
        %v4227 = vpop.f32.mrb[0].mxu0
        %v4228 = vpop.f32.mrb[0].mxu0
        %v4229 = vadd.f32 %v714, %v4228
        %v4230 = vpop.f32.mrb[0].mxu0
        %4231 = vmatprep.mubr.bf16.mxu0 0
        %4232 = vmatmul.mubr.bf16.gmra.mrb[0].mxu0 %v2540
        %v4233 = vpop.f32.mrb[0].mxu0
        %v4234 = vadd.f32 %v714, %v4233
        %v4235 = vpop.f32.mrb[0].mxu0
        %v4236 = vpop.f32.mrb[0].mxu0
        %v4237 = vadd.f32 %v714, %v4236
        %v4238 = vpop.f32.mrb[0].mxu0
        %4239 = vmatprep.mubr.bf16.mxu0 0
        %4240 = vmatmul.mubr.bf16.gmra.mrb[0].mxu0 %v2543
        %v4241 = vpop.f32.mrb[0].mxu0
        %v4242 = vadd.f32 %v714, %v4241
        %v4243 = vpop.f32.mrb[0].mxu0
        %v4244 = vpop.f32.mrb[0].mxu0
        %v4245 = vadd.f32 %v714, %v4244
        %v4246 = vpop.f32.mrb[0].mxu0
        %4247 = vmatprep.mubr.bf16.mxu0 0
        %4248 = vmatmul.mubr.bf16.gmra.mrb[0].mxu0 %v2546
        %v4249 = vpop.f32.mrb[0].mxu0
        %v4250 = vadd.f32 %v714, %v4249
        %v4251 = vpop.f32.mrb[0].mxu0
        %v4252 = vpop.f32.mrb[0].mxu0
        %v4253 = vadd.f32 %v714, %v4252
        %v4254 = vpop.f32.mrb[0].mxu0
        %4255 = vmatprep.mubr.bf16.mxu0 0
        %4256 = vmatmul.mubr.bf16.gmra.mrb[0].mxu0 %v2549
        %v4257 = vpop.f32.mrb[0].mxu0
        %v4258 = vadd.f32 %v714, %v4257
        %v4259 = vpop.f32.mrb[0].mxu0
        %v4260 = vpop.f32.mrb[0].mxu0
        %v4261 = vadd.f32 %v714, %v4260
        %v4262 = vpop.f32.mrb[0].mxu0
        %4263 = vmatprep.mubr.bf16.mxu0 0
        %4264 = vmatmul.mubr.bf16.gmra.mrb[0].mxu0 %v2552
        %v4265 = vpop.f32.mrb[0].mxu0
        %v4266 = vadd.f32 %v714, %v4265
        %v4267 = vpop.f32.mrb[0].mxu0
        %v4268 = vpop.f32.mrb[0].mxu0
        %v4269 = vadd.f32 %v714, %v4268
        %v4270 = vpop.f32.mrb[0].mxu0
        %4271 = vmatprep.mubr.bf16.mxu0 0
        %4272 = vmatmul.mubr.bf16.gmra.mrb[0].mxu0 %v2555
        %v4273 = vpop.f32.mrb[0].mxu0
        %v4274 = vadd.f32 %v714, %v4273
        %v4275 = vpop.f32.mrb[0].mxu0
        %v4276 = vpop.f32.mrb[0].mxu0
        %v4277 = vadd.f32 %v714, %v4276
        %v4278 = vpop.f32.mrb[0].mxu0
        %4279 = vmatprep.mubr.bf16.mxu0 0
        %4280 = vmatmul.mubr.bf16.gmra.mrb[0].mxu0 %v2558
        %v4281 = vpop.f32.mrb[0].mxu0
        %v4282 = vadd.f32 %v714, %v4281
        %v4283 = vpop.f32.mrb[0].mxu0
        %v4284 = vpop.f32.mrb[0].mxu0
        %v4285 = vadd.f32 %v714, %v4284
        %v4286 = vpop.f32.mrb[0].mxu0
        %4287 = vmatprep.mubr.bf16.mxu0 0
        %4288 = vmatmul.mubr.bf16.gmra.mrb[0].mxu0 %v2561
        %v4289 = vpop.f32.mrb[0].mxu0
        %v4290 = vadd.f32 %v714, %v4289
        %v4291 = vpop.f32.mrb[0].mxu0
        %v4292 = vpop.f32.mrb[0].mxu0
        %v4293 = vadd.f32 %v714, %v4292
        %v4294 = vpop.f32.mrb[0].mxu0
        %4295 = vmatprep.mubr.bf16.mxu0 0
        %4296 = vmatmul.mubr.bf16.gmra.mrb[0].mxu0 %v2564
        %v4297 = vpop.f32.mrb[0].mxu0
        %v4298 = vadd.f32 %v714, %v4297
        %v4299 = vpop.f32.mrb[0].mxu0
        %v4300 = vpop.f32.mrb[0].mxu0
        %v4301 = vadd.f32 %v714, %v4300
        %v4302 = vpop.f32.mrb[0].mxu0
        %4303 = vmatprep.mubr.bf16.mxu0 0
        %4304 = vmatmul.mubr.bf16.gmra.mrb[0].mxu0 %v2567
        %v4305 = vpop.f32.mrb[0].mxu0
        %v4306 = vadd.f32 %v714, %v4305
        %v4307 = vpop.f32.mrb[0].mxu0
        %v4308 = vpop.f32.mrb[0].mxu0
        %v4309 = vadd.f32 %v714, %v4308
        %v4310 = vpop.f32.mrb[0].mxu0
        %4311 = vmatprep.mubr.bf16.mxu0 0
        %4312 = vmatmul.mubr.bf16.gmra.mrb[0].mxu0 %v2570
        %v4313 = vpop.f32.mrb[0].mxu0
        %v4314 = vadd.f32 %v714, %v4313
        %v4315 = vpop.f32.mrb[0].mxu0
        %v4316 = vpop.f32.mrb[0].mxu0
        %v4317 = vadd.f32 %v714, %v4316
        %v4318 = vpop.f32.mrb[0].mxu0
        %4319 = vmatprep.mubr.bf16.mxu0 0
        %4320 = vmatmul.mubr.bf16.gmra.mrb[0].mxu0 %v2573
        %v4321 = vpop.f32.mrb[0].mxu0
        %v4322 = vadd.f32 %v714, %v4321
        %v4323 = vpop.f32.mrb[0].mxu0
        %v4324 = vpop.f32.mrb[0].mxu0
        %v4325 = vadd.f32 %v714, %v4324
        %v4326 = vpop.f32.mrb[0].mxu0
        %4327 = vmatprep.mubr.bf16.mxu0 0
        %4328 = vmatmul.mubr.bf16.gmra.mrb[0].mxu0 %v2576
        %v4329 = vpop.f32.mrb[0].mxu0
        %v4330 = vadd.f32 %v714, %v4329
        %v4331 = vpop.f32.mrb[0].mxu0
        %v4332 = vpop.f32.mrb[0].mxu0
        %v4333 = vadd.f32 %v714, %v4332
        %v4334 = vpop.f32.mrb[0].mxu0
        %4335 = vmatprep.mubr.bf16.mxu0 0
        %4336 = vmatmul.mubr.bf16.gmra.mrb[0].mxu0 %v2579
        %v4337 = vpop.f32.mrb[0].mxu0
        %v4338 = vadd.f32 %v714, %v4337
        %v4339 = vpop.f32.mrb[0].mxu0
        %v4340 = vpop.f32.mrb[0].mxu0
        %v4341 = vadd.f32 %v714, %v4340
        %v4342 = vpop.f32.mrb[0].mxu0
        %4343 = vmatprep.mubr.bf16.mxu0 0
        %4344 = vmatmul.mubr.bf16.gmra.mrb[0].mxu0 %v2582
        %v4345 = vpop.f32.mrb[0].mxu0
        %v4346 = vadd.f32 %v714, %v4345
        %v4347 = vpop.f32.mrb[0].mxu0
        %v4348 = vpop.f32.mrb[0].mxu0
        %v4349 = vadd.f32 %v714, %v4348
        %v4350 = vpop.f32.mrb[0].mxu0
        %4351 = vmatprep.mubr.bf16.mxu0 0
        %4352 = vmatmul.mubr.bf16.gmra.mrb[0].mxu0 %v2585
        %v4353 = vpop.f32.mrb[0].mxu0
        %v4354 = vadd.f32 %v714, %v4353
        %v4355 = vpop.f32.mrb[0].mxu0
        %v4356 = vpop.f32.mrb[0].mxu0
        %v4357 = vadd.f32 %v714, %v4356
        %v4358 = vpop.f32.mrb[0].mxu0
        %4359 = vmatprep.mubr.bf16.mxu0 0
        %4360 = vmatmul.mubr.bf16.gmra.mrb[0].mxu0 %v2588
        %v4361 = vpop.f32.mrb[0].mxu0
        %v4362 = vadd.f32 %v714, %v4361
        %v4363 = vpop.f32.mrb[0].mxu0
        %v4364 = vpop.f32.mrb[0].mxu0
        %v4365 = vadd.f32 %v714, %v4364
        %v4366 = vpop.f32.mrb[0].mxu0
        %4367 = vmatprep.mubr.bf16.mxu0 0
        %4368 = vmatmul.mubr.bf16.gmra.mrb[0].mxu0 %v2591
        %v4369 = vpop.f32.mrb[0].mxu0
        %v4370 = vadd.f32 %v714, %v4369
        %v4371 = vpop.f32.mrb[0].mxu0
        %v4372 = vpop.f32.mrb[0].mxu0
        %v4373 = vadd.f32 %v714, %v4372
        %v4374 = vpop.f32.mrb[0].mxu0
        %4375 = vmatprep.mubr.bf16.mxu0 0
        %4376 = vmatmul.mubr.bf16.gmra.mrb[0].mxu0 %v2594
        %v4377 = vpop.f32.mrb[0].mxu0
        %v4378 = vadd.f32 %v714, %v4377
        %v4379 = vpop.f32.mrb[0].mxu0
        %v4380 = vpop.f32.mrb[0].mxu0
        %v4381 = vadd.f32 %v714, %v4380
        %v4382 = vpop.f32.mrb[0].mxu0
        %4383 = vmatprep.mubr.bf16.mxu0 0
        %4384 = vmatmul.mubr.bf16.gmra.mrb[0].mxu0 %v2597
        %v4385 = vpop.f32.mrb[0].mxu0
        %v4386 = vadd.f32 %v714, %v4385
        %v4387 = vpop.f32.mrb[0].mxu0
        %v4388 = vpop.f32.mrb[0].mxu0
        %v4389 = vadd.f32 %v714, %v4388
        %v4390 = vpop.f32.mrb[0].mxu0
        %4391 = vmatprep.mubr.bf16.mxu0 0
        %4392 = vmatmul.mubr.bf16.gmra.mrb[0].mxu0 %v2600
        %v4393 = vpop.f32.mrb[0].mxu0
        %v4394 = vadd.f32 %v714, %v4393
        %v4395 = vpop.f32.mrb[0].mxu0
        %v4396 = vpop.f32.mrb[0].mxu0
        %v4397 = vadd.f32 %v714, %v4396
        %v4398 = vpop.f32.mrb[0].mxu0
        %4399 = vmatprep.mubr.bf16.mxu0 0
        %4400 = vmatmul.mubr.bf16.gmra.mrb[0].mxu0 %v2603
        %v4401 = vpop.f32.mrb[0].mxu0
        %v4402 = vadd.f32 %v714, %v4401
        %v4403 = vpop.f32.mrb[0].mxu0
        %v4404 = vpop.f32.mrb[0].mxu0
        %v4405 = vadd.f32 %v714, %v4404
        %v4406 = vpop.f32.mrb[0].mxu0
        %4407 = vmatprep.mubr.bf16.mxu0 0
        %4408 = vmatmul.mubr.bf16.gmra.mrb[0].mxu0 %v2606
        %v4409 = vpop.f32.mrb[0].mxu0
        %v4410 = vadd.f32 %v714, %v4409
        %v4411 = vpop.f32.mrb[0].mxu0
        %v4412 = vpop.f32.mrb[0].mxu0
        %v4413 = vadd.f32 %v714, %v4412
        %v4414 = vpop.f32.mrb[0].mxu0
        %4415 = vmatprep.mubr.bf16.mxu0 0
        %4416 = vmatmul.mubr.bf16.gmra.mrb[0].mxu0 %v2609
        %v4417 = vpop.f32.mrb[0].mxu0
        %v4418 = vadd.f32 %v714, %v4417
        %v4419 = vpop.f32.mrb[0].mxu0
        %v4420 = vpop.f32.mrb[0].mxu0
        %v4421 = vadd.f32 %v714, %v4420
        %v4422 = vpop.f32.mrb[0].mxu0
        %4423 = vmatprep.mubr.bf16.mxu0 0
        %4424 = vmatmul.mubr.bf16.gmra.mrb[0].mxu0 %v2612
        %v4425 = vpop.f32.mrb[0].mxu0
        %v4426 = vadd.f32 %v714, %v4425
        %v4427 = vpop.f32.mrb[0].mxu0
        %v4428 = vpop.f32.mrb[0].mxu0
        %v4429 = vadd.f32 %v714, %v4428
        %v4430 = vpop.f32.mrb[0].mxu0
        %4431 = vmatprep.mubr.bf16.mxu0 0
        %4432 = vmatmul.mubr.bf16.gmra.mrb[0].mxu0 %v2615
        %v4433 = vpop.f32.mrb[0].mxu0
        %v4434 = vadd.f32 %v714, %v4433
        %v4435 = vpop.f32.mrb[0].mxu0
        %v4436 = vpop.f32.mrb[0].mxu0
        %v4437 = vadd.f32 %v714, %v4436
        %v4438 = vpop.f32.mrb[0].mxu0
        %4439 = vmatprep.mubr.bf16.mxu0 0
        %4440 = vmatmul.mubr.bf16.gmra.mrb[0].mxu0 %v2618
        %v4441 = vpop.f32.mrb[0].mxu0
        %v4442 = vadd.f32 %v714, %v4441
        %v4443 = vpop.f32.mrb[0].mxu0
        %v4444 = vpop.f32.mrb[0].mxu0
        %v4445 = vadd.f32 %v714, %v4444
        %v4446 = vpop.f32.mrb[0].mxu0
        %4447 = vmatprep.mubr.bf16.mxu0 0
        %4448 = vmatmul.mubr.bf16.gmra.mrb[0].mxu0 %v2621
        %v4449 = vpop.f32.mrb[0].mxu0
        %v4450 = vadd.f32 %v714, %v4449
        %v4451 = vpop.f32.mrb[0].mxu0
        %v4452 = vpop.f32.mrb[0].mxu0
        %v4453 = vadd.f32 %v714, %v4452
        %v4454 = vpop.f32.mrb[0].mxu0
        %4455 = vmatprep.mubr.bf16.mxu0 0
        %4456 = vmatmul.mubr.bf16.gmra.mrb[0].mxu0 %v2624
        %v4457 = vpop.f32.mrb[0].mxu0
        %v4458 = vadd.f32 %v714, %v4457
        %v4459 = vpop.f32.mrb[0].mxu0
        %v4460 = vpop.f32.mrb[0].mxu0
        %v4461 = vadd.f32 %v714, %v4460
        %v4462 = vpop.f32.mrb[0].mxu0
        %4463 = vmatprep.mubr.bf16.mxu0 0
        %4464 = vmatmul.mubr.bf16.gmra.mrb[0].mxu0 %v2627
        %v4465 = vpop.f32.mrb[0].mxu0
        %v4466 = vadd.f32 %v714, %v4465
        %v4467 = vpop.f32.mrb[0].mxu0
        %v4468 = vpop.f32.mrb[0].mxu0
        %v4469 = vadd.f32 %v714, %v4468
        %v4470 = vpop.f32.mrb[0].mxu0
        %4471 = vmatprep.mubr.bf16.mxu0 0
        %4472 = vmatmul.mubr.bf16.gmra.mrb[0].mxu0 %v2630
        %v4473 = vpop.f32.mrb[0].mxu0
        %v4474 = vadd.f32 %v714, %v4473
        %v4475 = vpop.f32.mrb[0].mxu0
        %v4476 = vpop.f32.mrb[0].mxu0
        %v4477 = vadd.f32 %v714, %v4476
        %v4478 = vpop.f32.mrb[0].mxu0
        %4479 = vmatprep.mubr.bf16.mxu0 0
        %4480 = vmatmul.mubr.bf16.gmra.mrb[0].mxu0 %v2633
        %v4481 = vpop.f32.mrb[0].mxu0
        %v4482 = vadd.f32 %v714, %v4481
        %v4483 = vpop.f32.mrb[0].mxu0
        %v4484 = vpop.f32.mrb[0].mxu0
        %v4485 = vadd.f32 %v714, %v4484
        %v4486 = vpop.f32.mrb[0].mxu0
        %4487 = vmatprep.mubr.bf16.mxu0 0
        %4488 = vmatmul.mubr.bf16.gmra.mrb[0].mxu0 %v2636
        %v4489 = vpop.f32.mrb[0].mxu0
        %v4490 = vadd.f32 %v714, %v4489
        %v4491 = vpop.f32.mrb[0].mxu0
        %v4492 = vpop.f32.mrb[0].mxu0
        %v4493 = vadd.f32 %v714, %v4492
        %v4494 = vpop.f32.mrb[0].mxu0
        %4495 = vmatprep.mubr.bf16.mxu0 0
        %4496 = vmatmul.mubr.bf16.gmra.mrb[0].mxu0 %v2639
        %v4497 = vpop.f32.mrb[0].mxu0
        %v4498 = vadd.f32 %v714, %v4497
        %v4499 = vpop.f32.mrb[0].mxu0
        %v4500 = vpop.f32.mrb[0].mxu0
        %v4501 = vadd.f32 %v714, %v4500
        %v4502 = vpop.f32.mrb[0].mxu0
        %4503 = vmatprep.mubr.bf16.mxu0 0
        %4504 = vmatmul.mubr.bf16.gmra.mrb[0].mxu0 %v2642
        %v4505 = vpop.f32.mrb[0].mxu0
        %v4506 = vadd.f32 %v714, %v4505
        %v4507 = vpop.f32.mrb[0].mxu0
        %v4508 = vpop.f32.mrb[0].mxu0
        %v4509 = vadd.f32 %v714, %v4508
        %v4510 = vpop.f32.mrb[0].mxu0
        %4511 = vmatprep.mubr.bf16.mxu0 0
        %4512 = vmatmul.mubr.bf16.gmra.mrb[0].mxu0 %v2645
        %v4513 = vpop.f32.mrb[0].mxu0
        %v4514 = vadd.f32 %v714, %v4513
        %v4515 = vpop.f32.mrb[0].mxu0
        %v4516 = vpop.f32.mrb[0].mxu0
        %v4517 = vadd.f32 %v714, %v4516
        %v4518 = vpop.f32.mrb[0].mxu0
        %4519 = vmatprep.mubr.bf16.mxu0 0
        %4520 = vmatmul.mubr.bf16.gmra.mrb[0].mxu0 %v2648
        %v4521 = vpop.f32.mrb[0].mxu0
        %v4522 = vadd.f32 %v714, %v4521
        %v4523 = vpop.f32.mrb[0].mxu0
        %v4524 = vpop.f32.mrb[0].mxu0
        %v4525 = vadd.f32 %v714, %v4524
        %v4526 = vpop.f32.mrb[0].mxu0
        %4527 = vmatprep.mubr.bf16.mxu0 0
        %4528 = vmatmul.mubr.bf16.gmra.mrb[0].mxu0 %v2651
        %v4529 = vpop.f32.mrb[0].mxu0
        %v4530 = vadd.f32 %v714, %v4529
        %v4531 = vpop.f32.mrb[0].mxu0
        %v4532 = vpop.f32.mrb[0].mxu0
        %v4533 = vadd.f32 %v714, %v4532
        %v4534 = vpop.f32.mrb[0].mxu0
        %4535 = vmatprep.mubr.bf16.mxu0 0
        %4536 = vmatmul.mubr.bf16.gmra.mrb[0].mxu0 %v2654
        %v4537 = vpop.f32.mrb[0].mxu0
        %v4538 = vadd.f32 %v714, %v4537
        %v4539 = vpop.f32.mrb[0].mxu0
        %v4540 = vpop.f32.mrb[0].mxu0
        %v4541 = vadd.f32 %v714, %v4540
        %v4542 = vpop.f32.mrb[0].mxu0
        %4543 = vmatprep.mubr.bf16.mxu0 0
        %4544 = vmatmul.mubr.bf16.gmra.mrb[0].mxu0 %v2657
        %v4545 = vpop.f32.mrb[0].mxu0
        %v4546 = vadd.f32 %v714, %v4545
        %v4547 = vpop.f32.mrb[0].mxu0
        %v4548 = vpop.f32.mrb[0].mxu0
        %v4549 = vadd.f32 %v714, %v4548
        %v4550 = vpop.f32.mrb[0].mxu0
        %4551 = vmatprep.mubr.bf16.mxu0 0
        %4552 = vmatmul.mubr.bf16.gmra.mrb[0].mxu0 %v2660
        %v4553 = vpop.f32.mrb[0].mxu0
        %v4554 = vadd.f32 %v714, %v4553
        %v4555 = vpop.f32.mrb[0].mxu0
        %v4556 = vpop.f32.mrb[0].mxu0
        %v4557 = vadd.f32 %v714, %v4556
        %v4558 = vpop.f32.mrb[0].mxu0
        %4559 = vmatprep.mubr.bf16.mxu0 0
        %4560 = vmatmul.mubr.bf16.gmra.mrb[0].mxu0 %v2663
        %v4561 = vpop.f32.mrb[0].mxu0
        %v4562 = vadd.f32 %v714, %v4561
        %v4563 = vpop.f32.mrb[0].mxu0
        %v4564 = vpop.f32.mrb[0].mxu0
        %v4565 = vadd.f32 %v714, %v4564
        %v4566 = vpop.f32.mrb[0].mxu0
        %4567 = vmatprep.mubr.bf16.mxu0 0
        %4568 = vmatmul.mubr.bf16.gmra.mrb[0].mxu0 %v2666
        %v4569 = vpop.f32.mrb[0].mxu0
        %v4570 = vadd.f32 %v714, %v4569
        %v4571 = vpop.f32.mrb[0].mxu0
        %v4572 = vpop.f32.mrb[0].mxu0
        %v4573 = vadd.f32 %v714, %v4572
        %v4574 = vpop.f32.mrb[0].mxu0
        %4575 = vmatprep.mubr.bf16.mxu0 0
        %4576 = vmatmul.mubr.bf16.gmra.mrb[0].mxu0 %v2669
        %v4577 = vpop.f32.mrb[0].mxu0
        %v4578 = vadd.f32 %v714, %v4577
        %v4579 = vpop.f32.mrb[0].mxu0
        %v4580 = vpop.f32.mrb[0].mxu0
        %v4581 = vadd.f32 %v714, %v4580
        %v4582 = vpop.f32.mrb[0].mxu0
        %4583 = vmatprep.mubr.bf16.mxu0 0
        %4584 = vmatmul.mubr.bf16.gmra.mrb[0].mxu0 %v2672
        %v4585 = vpop.f32.mrb[0].mxu0
        %v4586 = vadd.f32 %v714, %v4585
        %v4587 = vpop.f32.mrb[0].mxu0
        %v4588 = vpop.f32.mrb[0].mxu0
        %v4589 = vadd.f32 %v714, %v4588
        %v4590 = vpop.f32.mrb[0].mxu0
        %4591 = vmatprep.mubr.bf16.mxu0 0
        %4592 = vmatmul.mubr.bf16.gmra.mrb[0].mxu0 %v2675
        %v4593 = vpop.f32.mrb[0].mxu0
        %v4594 = vadd.f32 %v714, %v4593
        %v4595 = vpop.f32.mrb[0].mxu0
        %v4596 = vpop.f32.mrb[0].mxu0
        %v4597 = vadd.f32 %v714, %v4596
        %v4598 = vpop.f32.mrb[0].mxu0
        %4599 = vmatprep.mubr.bf16.mxu0 0
        %4600 = vmatmul.mubr.bf16.gmra.mrb[0].mxu0 %v2678
        %v4601 = vpop.f32.mrb[0].mxu0
        %v4602 = vadd.f32 %v714, %v4601
        %v4603 = vpop.f32.mrb[0].mxu0
        %v4604 = vpop.f32.mrb[0].mxu0
        %v4605 = vadd.f32 %v714, %v4604
        %v4606 = vpop.f32.mrb[0].mxu0
        %4607 = vmatprep.mubr.bf16.mxu0 0
        %4608 = vmatmul.mubr.bf16.gmra.mrb[0].mxu0 %v2681
        %v4609 = vpop.f32.mrb[0].mxu0
        %v4610 = vadd.f32 %v714, %v4609
        %v4611 = vpop.f32.mrb[0].mxu0
        %v4612 = vpop.f32.mrb[0].mxu0
        %v4613 = vadd.f32 %v714, %v4612
        %v4614 = vpop.f32.mrb[0].mxu0
        %4615 = vmatprep.mubr.bf16.mxu0 0
        %4616 = vmatmul.mubr.bf16.gmra.mrb[0].mxu0 %v2684
        %v4617 = vpop.f32.mrb[0].mxu0
        %v4618 = vadd.f32 %v714, %v4617
        %v4619 = vpop.f32.mrb[0].mxu0
        %v4620 = vpop.f32.mrb[0].mxu0
        %v4621 = vadd.f32 %v714, %v4620
        %v4622 = vpop.f32.mrb[0].mxu0
        %4623 = vmatprep.mubr.bf16.mxu0 0
        %4624 = vmatmul.mubr.bf16.gmra.mrb[0].mxu0 %v2687
        %v4625 = vpop.f32.mrb[0].mxu0
        %v4626 = vadd.f32 %v714, %v4625
        %v4627 = vpop.f32.mrb[0].mxu0
        %v4628 = vpop.f32.mrb[0].mxu0
        %v4629 = vadd.f32 %v714, %v4628
        %v4630 = vpop.f32.mrb[0].mxu0
        %4631 = vmatprep.mubr.bf16.mxu0 0
        %4632 = vmatmul.mubr.bf16.gmra.mrb[0].mxu0 %v2690
        %v4633 = vpop.f32.mrb[0].mxu0
        %v4634 = vadd.f32 %v714, %v4633
        %v4635 = vpop.f32.mrb[0].mxu0
        %v4636 = vpop.f32.mrb[0].mxu0
        %v4637 = vadd.f32 %v714, %v4636
        %v4638 = vpop.f32.mrb[0].mxu0
        %4639 = vmatprep.mubr.bf16.mxu0 0
        %4640 = vmatmul.mubr.bf16.gmra.mrb[0].mxu0 %v2693
        %v4641 = vpop.f32.mrb[0].mxu0
        %v4642 = vadd.f32 %v714, %v4641
        %v4643 = vpop.f32.mrb[0].mxu0
        %v4644 = vpop.f32.mrb[0].mxu0
        %v4645 = vadd.f32 %v714, %v4644
        %v4646 = vpop.f32.mrb[0].mxu0
        %4647 = vmatprep.mubr.bf16.mxu0 0
        %4648 = vmatmul.mubr.bf16.gmra.mrb[0].mxu0 %v2696
        %v4649 = vpop.f32.mrb[0].mxu0
        %v4650 = vadd.f32 %v714, %v4649
        %v4651 = vpop.f32.mrb[0].mxu0
        %v4652 = vpop.f32.mrb[0].mxu0
        %v4653 = vadd.f32 %v714, %v4652
        %v4654 = vpop.f32.mrb[0].mxu0
        %4655 = vmatprep.mubr.bf16.mxu0 0
        %4656 = vmatmul.mubr.bf16.gmra.mrb[0].mxu0 %v2699
        %v4657 = vpop.f32.mrb[0].mxu0
        %v4658 = vadd.f32 %v714, %v4657
        %v4659 = vpop.f32.mrb[0].mxu0
        %v4660 = vpop.f32.mrb[0].mxu0
        %v4661 = vadd.f32 %v714, %v4660
        %v4662 = vpop.f32.mrb[0].mxu0
        %4663 = vmatprep.mubr.bf16.mxu0 0
        %4664 = vmatmul.mubr.bf16.gmra.mrb[0].mxu0 %v2702
        %v4665 = vpop.f32.mrb[0].mxu0
        %v4666 = vadd.f32 %v714, %v4665
        %v4667 = vpop.f32.mrb[0].mxu0
        %v4668 = vpop.f32.mrb[0].mxu0
        %v4669 = vadd.f32 %v714, %v4668
        %v4670 = vpop.f32.mrb[0].mxu0
        %4671 = vmatprep.mubr.bf16.mxu0 0
        %4672 = vmatmul.mubr.bf16.gmra.mrb[0].mxu0 %v2705
        %v4673 = vpop.f32.mrb[0].mxu0
        %v4674 = vadd.f32 %v714, %v4673
        %v4675 = vpop.f32.mrb[0].mxu0
        %v4676 = vpop.f32.mrb[0].mxu0
        %v4677 = vadd.f32 %v714, %v4676
        %v4678 = vpop.f32.mrb[0].mxu0
        %4679 = vmatprep.mubr.bf16.mxu0 0
        %4680 = vmatmul.mubr.bf16.gmra.mrb[0].mxu0 %v2708
        %v4681 = vpop.f32.mrb[0].mxu0
        %v4682 = vadd.f32 %v714, %v4681
        %v4683 = vpop.f32.mrb[0].mxu0
        %v4684 = vpop.f32.mrb[0].mxu0
        %v4685 = vadd.f32 %v714, %v4684
        %v4686 = vpop.f32.mrb[0].mxu0
        %4687 = vmatprep.mubr.bf16.mxu0 0
        %4688 = vmatmul.mubr.bf16.gmra.mrb[0].mxu0 %v2711
        %v4689 = vpop.f32.mrb[0].mxu0
        %v4690 = vadd.f32 %v714, %v4689
        %v4691 = vpop.f32.mrb[0].mxu0
        %v4692 = vpop.f32.mrb[0].mxu0
        %v4693 = vadd.f32 %v714, %v4692
        %v4694 = vpop.f32.mrb[0].mxu0
        %4695 = vmatprep.mubr.bf16.mxu0 0
        %4696 = vmatmul.mubr.bf16.gmra.mrb[0].mxu0 %v2714
        %v4697 = vpop.f32.mrb[0].mxu0
        %v4698 = vadd.f32 %v714, %v4697
        %v4699 = vpop.f32.mrb[0].mxu0
        %v4700 = vpop.f32.mrb[0].mxu0
        %v4701 = vadd.f32 %v714, %v4700
        %v4702 = vpop.f32.mrb[0].mxu0
        %4703 = vmatprep.mubr.bf16.mxu0 0
        %4704 = vmatmul.mubr.bf16.gmra.mrb[0].mxu0 %v2717
        %v4705 = vpop.f32.mrb[0].mxu0
        %v4706 = vadd.f32 %v714, %v4705
        %v4707 = vpop.f32.mrb[0].mxu0
        %v4708 = vpop.f32.mrb[0].mxu0
        %v4709 = vadd.f32 %v714, %v4708
        %v4710 = vpop.f32.mrb[0].mxu0
        %4711 = vmatprep.mubr.bf16.mxu0 0
        %4712 = vmatmul.mubr.bf16.gmra.mrb[0].mxu0 %v2720
        %v4713 = vpop.f32.mrb[0].mxu0
        %v4714 = vadd.f32 %v714, %v4713
        %v4715 = vpop.f32.mrb[0].mxu0
        %v4716 = vpop.f32.mrb[0].mxu0
        %v4717 = vadd.f32 %v714, %v4716
        %v4718 = vpop.f32.mrb[0].mxu0
        %4719 = vmatprep.mubr.bf16.mxu0 0
        %4720 = vmatmul.mubr.bf16.gmra.mrb[0].mxu0 %v2723
        %v4721 = vpop.f32.mrb[0].mxu0
        %v4722 = vadd.f32 %v714, %v4721
        %v4723 = vpop.f32.mrb[0].mxu0
        %v4724 = vpop.f32.mrb[0].mxu0
        %v4725 = vadd.f32 %v714, %v4724
        %v4726 = vpop.f32.mrb[0].mxu0
        %4727 = vmatprep.mubr.bf16.mxu0 0
        %4728 = vmatmul.mubr.bf16.gmra.mrb[0].mxu0 %v2726
        %v4729 = vpop.f32.mrb[0].mxu0
        %v4730 = vadd.f32 %v714, %v4729
        %v4731 = vpop.f32.mrb[0].mxu0
        %v4732 = vpop.f32.mrb[0].mxu0
        %v4733 = vadd.f32 %v714, %v4732
        %v4734 = vpop.f32.mrb[0].mxu0
        %4735 = vmatprep.mubr.bf16.mxu0 0
        %4736 = vmatmul.mubr.bf16.gmra.mrb[0].mxu0 %v2729
        %v4737 = vpop.f32.mrb[0].mxu0
        %v4738 = vadd.f32 %v714, %v4737
        %v4739 = vpop.f32.mrb[0].mxu0
        %v4740 = vpop.f32.mrb[0].mxu0
        %v4741 = vadd.f32 %v714, %v4740
        %v4742 = vpop.f32.mrb[0].mxu0
        %4743 = vmatprep.mubr.bf16.mxu0 0
        %4744 = vmatmul.mubr.bf16.gmra.mrb[0].mxu0 %v2732
        %v4745 = vpop.f32.mrb[0].mxu0
        %v4746 = vadd.f32 %v714, %v4745
        %v4747 = vpop.f32.mrb[0].mxu0
        %v4748 = vpop.f32.mrb[0].mxu0
        %v4749 = vadd.f32 %v714, %v4748
        %v4750 = vpop.f32.mrb[0].mxu0
        %4751 = vmatprep.mubr.bf16.mxu0 0
        %4752 = vmatmul.mubr.bf16.gmra.mrb[0].mxu0 %v2735
        %v4753 = vpop.f32.mrb[0].mxu0
        %v4754 = vadd.f32 %v714, %v4753
        %v4755 = vpop.f32.mrb[0].mxu0
        %v4756 = vpop.f32.mrb[0].mxu0
        %v4757 = vadd.f32 %v714, %v4756
        %v4758 = vpop.f32.mrb[0].mxu0
        %4759 = vmatprep.mubr.bf16.mxu0 0
        %4760 = vmatmul.mubr.bf16.gmra.mrb[0].mxu0 %v2738
        %v4761 = vpop.f32.mrb[0].mxu0
        %v4762 = vadd.f32 %v714, %v4761
        %v4763 = vpop.f32.mrb[0].mxu0
        %v4764 = vpop.f32.mrb[0].mxu0
        %v4765 = vadd.f32 %v714, %v4764
        %v4766 = vpop.f32.mrb[0].mxu0
        %4767 = vmatprep.mubr.bf16.mxu0 0
        %4768 = vmatmul.mubr.bf16.gmra.mrb[0].mxu0 %v2741
        %v4769 = vpop.f32.mrb[0].mxu0
        %v4770 = vadd.f32 %v714, %v4769
        %v4771 = vpop.f32.mrb[0].mxu0
        %v4772 = vpop.f32.mrb[0].mxu0
        %v4773 = vadd.f32 %v714, %v4772
        %v4774 = vpop.f32.mrb[0].mxu0
        %4775 = vmatprep.mubr.bf16.mxu0 0
        %4776 = vmatmul.mubr.bf16.gmra.mrb[0].mxu0 %v2744
        %v4777 = vpop.f32.mrb[0].mxu0
        %v4778 = vadd.f32 %v714, %v4777
        %v4779 = vpop.f32.mrb[0].mxu0
        %v4780 = vpop.f32.mrb[0].mxu0
        %v4781 = vadd.f32 %v714, %v4780
        %v4782 = vpop.f32.mrb[0].mxu0
        %4783 = vmatprep.mubr.bf16.mxu0 0
        %4784 = vmatmul.mubr.bf16.gmra.mrb[0].mxu0 %v2747
        %v4785 = vpop.f32.mrb[0].mxu0
        %v4786 = vadd.f32 %v714, %v4785
        %v4787 = vpop.f32.mrb[0].mxu0
        %v4788 = vpop.f32.mrb[0].mxu0
        %v4789 = vadd.f32 %v714, %v4788
        %v4790 = vpop.f32.mrb[0].mxu0
        %4791 = vmatprep.mubr.bf16.mxu0 0
        %4792 = vmatmul.mubr.bf16.gmra.mrb[0].mxu0 %v2750
        %v4793 = vpop.f32.mrb[0].mxu0
        %v4794 = vadd.f32 %v714, %v4793
        %v4795 = vpop.f32.mrb[0].mxu0
        %v4796 = vpop.f32.mrb[0].mxu0
        %v4797 = vadd.f32 %v714, %v4796
        %v4798 = vpop.f32.mrb[0].mxu0
        %4799 = vmatprep.mubr.bf16.mxu0 0
        %4800 = vmatmul.mubr.bf16.gmra.mrb[0].mxu0 %v2753
        %v4801 = vpop.f32.mrb[0].mxu0
        %v4802 = vadd.f32 %v714, %v4801
        %v4803 = vpop.f32.mrb[0].mxu0
        %v4804 = vpop.f32.mrb[0].mxu0
        %v4805 = vadd.f32 %v714, %v4804
        %v4806 = vpop.f32.mrb[0].mxu0
        %4807 = vmatprep.mubr.bf16.mxu0 0
        %4808 = vmatmul.mubr.bf16.gmra.mrb[0].mxu0 %v2756
        %v4809 = vpop.f32.mrb[0].mxu0
        %v4810 = vadd.f32 %v714, %v4809
        %v4811 = vpop.f32.mrb[0].mxu0
        %v4812 = vpop.f32.mrb[0].mxu0
        %v4813 = vadd.f32 %v714, %v4812
        %v4814 = vpop.f32.mrb[0].mxu0
        %4815 = vmatprep.mubr.bf16.mxu0 0
        %4816 = vmatmul.mubr.bf16.gmra.mrb[0].mxu0 %v2759
        %v4817 = vpop.f32.mrb[0].mxu0
        %v4818 = vadd.f32 %v714, %v4817
        %v4819 = vpop.f32.mrb[0].mxu0
        %v4820 = vpop.f32.mrb[0].mxu0
        %v4821 = vadd.f32 %v714, %v4820
        %v4822 = vpop.f32.mrb[0].mxu0
        %4823 = vmatprep.mubr.bf16.mxu0 0
        %4824 = vmatmul.mubr.bf16.gmra.mrb[0].mxu0 %v2762
        %v4825 = vpop.f32.mrb[0].mxu0
        %v4826 = vadd.f32 %v714, %v4825
        %v4827 = vpop.f32.mrb[0].mxu0
        %v4828 = vpop.f32.mrb[0].mxu0
        %v4829 = vadd.f32 %v714, %v4828
        %v4830 = vpop.f32.mrb[0].mxu0
        %4831 = vmatprep.mubr.bf16.mxu0 0
        %4832 = vmatmul.mubr.bf16.gmra.mrb[0].mxu0 %v2765
        %v4833 = vpop.f32.mrb[0].mxu0
        %v4834 = vadd.f32 %v714, %v4833
        %v4835 = vpop.f32.mrb[0].mxu0
        %v4836 = vpop.f32.mrb[0].mxu0
        %v4837 = vadd.f32 %v714, %v4836
        %v4838 = vpop.f32.mrb[0].mxu0
        %4839 = vmatprep.mubr.bf16.mxu0 0
        %4840 = vmatmul.mubr.bf16.gmra.mrb[0].mxu0 %v2768
        %v4841 = vpop.f32.mrb[0].mxu0
        %v4842 = vadd.f32 %v714, %v4841
        %v4843 = vpop.f32.mrb[0].mxu0
        %v4844 = vpop.f32.mrb[0].mxu0
        %v4845 = vadd.f32 %v714, %v4844
        %v4846 = vpop.f32.mrb[0].mxu0
        %4847 = vmatprep.mubr.bf16.mxu0 0
        %4848 = vmatmul.mubr.bf16.gmra.mrb[0].mxu0 %v2771
        %v4849 = vpop.f32.mrb[0].mxu0
        %v4850 = vadd.f32 %v714, %v4849
        %v4851 = vpop.f32.mrb[0].mxu0
        %v4852 = vpop.f32.mrb[0].mxu0
        %v4853 = vadd.f32 %v714, %v4852
        %v4854 = vpop.f32.mrb[0].mxu0
        %4855 = vmatprep.mubr.bf16.mxu0 0
        %4856 = vmatmul.mubr.bf16.gmra.mrb[0].mxu0 %v2774
        %v4857 = vpop.f32.mrb[0].mxu0
        %v4858 = vadd.f32 %v714, %v4857
        %v4859 = vpop.f32.mrb[0].mxu0
        %v4860 = vpop.f32.mrb[0].mxu0
        %v4861 = vadd.f32 %v714, %v4860
        %v4862 = vpop.f32.mrb[0].mxu0
        %4863 = vdwg.mxu0
        %v4864 = vmax.f32 %v2818, 0.0
        %v4865 = vmax.f32 %v2821, 0.0
        %v4866 = vmax.f32 %v2826, 0.0
        %v4867 = vmax.f32 %v2829, 0.0
        %v4868 = vmax.f32 %v2834, 0.0
        %v4869 = vmax.f32 %v2837, 0.0
        %v4870 = vmax.f32 %v2842, 0.0
        %v4871 = vmax.f32 %v2845, 0.0
        %v4872 = vmax.f32 %v2850, 0.0
        %v4873 = vmax.f32 %v2853, 0.0
        %v4874 = vmax.f32 %v2858, 0.0
        %v4875 = vmax.f32 %v2861, 0.0
        %v4876 = vmax.f32 %v2866, 0.0
        %v4877 = vmax.f32 %v2869, 0.0
        %v4878 = vmax.f32 %v2874, 0.0
        %v4879 = vmax.f32 %v2877, 0.0
        %v4880 = vmax.f32 %v2882, 0.0
        %v4881 = vmax.f32 %v2885, 0.0
        %v4882 = vmax.f32 %v2890, 0.0
        %v4883 = vmax.f32 %v2893, 0.0
        %v4884 = vmax.f32 %v2898, 0.0
        %v4885 = vmax.f32 %v2901, 0.0
        %v4886 = vmax.f32 %v2906, 0.0
        %v4887 = vmax.f32 %v2909, 0.0
        %v4888 = vmax.f32 %v2914, 0.0
        %v4889 = vmax.f32 %v2917, 0.0
        %v4890 = vmax.f32 %v2922, 0.0
        %v4891 = vmax.f32 %v2925, 0.0
        %v4892 = vmax.f32 %v2930, 0.0
        %v4893 = vmax.f32 %v2933, 0.0
        %v4894 = vmax.f32 %v2938, 0.0
        %v4895 = vmax.f32 %v2941, 0.0
        %v4896 = vmax.f32 %v2946, 0.0
        %v4897 = vmax.f32 %v2949, 0.0
        %v4898 = vmax.f32 %v2954, 0.0
        %v4899 = vmax.f32 %v2957, 0.0
        %v4900 = vmax.f32 %v2962, 0.0
        %v4901 = vmax.f32 %v2965, 0.0
        %v4902 = vmax.f32 %v2970, 0.0
        %v4903 = vmax.f32 %v2973, 0.0
        %v4904 = vmax.f32 %v2978, 0.0
        %v4905 = vmax.f32 %v2981, 0.0
        %v4906 = vmax.f32 %v2986, 0.0
        %v4907 = vmax.f32 %v2989, 0.0
        %v4908 = vmax.f32 %v2994, 0.0
        %v4909 = vmax.f32 %v2997, 0.0
        %v4910 = vmax.f32 %v3002, 0.0
        %v4911 = vmax.f32 %v3005, 0.0
        %v4912 = vmax.f32 %v3010, 0.0
        %v4913 = vmax.f32 %v3013, 0.0
        %v4914 = vmax.f32 %v3018, 0.0
        %v4915 = vmax.f32 %v3021, 0.0
        %v4916 = vmax.f32 %v3026, 0.0
        %v4917 = vmax.f32 %v3029, 0.0
        %v4918 = vmax.f32 %v3034, 0.0
        %v4919 = vmax.f32 %v3037, 0.0
        %v4920 = vmax.f32 %v3042, 0.0
        %v4921 = vmax.f32 %v3045, 0.0
        %v4922 = vmax.f32 %v3050, 0.0
        %v4923 = vmax.f32 %v3053, 0.0
        %v4924 = vmax.f32 %v3058, 0.0
        %v4925 = vmax.f32 %v3061, 0.0
        %v4926 = vmax.f32 %v3066, 0.0
        %v4927 = vmax.f32 %v3069, 0.0
        %v4928 = vmax.f32 %v3074, 0.0
        %v4929 = vmax.f32 %v3077, 0.0
        %v4930 = vmax.f32 %v3082, 0.0
        %v4931 = vmax.f32 %v3085, 0.0
        %v4932 = vmax.f32 %v3090, 0.0
        %v4933 = vmax.f32 %v3093, 0.0
        %v4934 = vmax.f32 %v3098, 0.0
        %v4935 = vmax.f32 %v3101, 0.0
        %v4936 = vmax.f32 %v3106, 0.0
        %v4937 = vmax.f32 %v3109, 0.0
        %v4938 = vmax.f32 %v3114, 0.0
        %v4939 = vmax.f32 %v3117, 0.0
        %v4940 = vmax.f32 %v3122, 0.0
        %v4941 = vmax.f32 %v3125, 0.0
        %v4942 = vmax.f32 %v3130, 0.0
        %v4943 = vmax.f32 %v3133, 0.0
        %v4944 = vmax.f32 %v3138, 0.0
        %v4945 = vmax.f32 %v3141, 0.0
        %v4946 = vmax.f32 %v3146, 0.0
        %v4947 = vmax.f32 %v3149, 0.0
        %v4948 = vmax.f32 %v3154, 0.0
        %v4949 = vmax.f32 %v3157, 0.0
        %v4950 = vmax.f32 %v3162, 0.0
        %v4951 = vmax.f32 %v3165, 0.0
        %v4952 = vmax.f32 %v3170, 0.0
        %v4953 = vmax.f32 %v3173, 0.0
        %v4954 = vmax.f32 %v3178, 0.0
        %v4955 = vmax.f32 %v3181, 0.0
        %v4956 = vmax.f32 %v3186, 0.0
        %v4957 = vmax.f32 %v3189, 0.0
        %v4958 = vmax.f32 %v3194, 0.0
        %v4959 = vmax.f32 %v3197, 0.0
        %v4960 = vmax.f32 %v3202, 0.0
        %v4961 = vmax.f32 %v3205, 0.0
        %v4962 = vmax.f32 %v3210, 0.0
        %v4963 = vmax.f32 %v3213, 0.0
        %v4964 = vmax.f32 %v3218, 0.0
        %v4965 = vmax.f32 %v3221, 0.0
        %v4966 = vmax.f32 %v3226, 0.0
        %v4967 = vmax.f32 %v3229, 0.0
        %v4968 = vmax.f32 %v3234, 0.0
        %v4969 = vmax.f32 %v3237, 0.0
        %v4970 = vmax.f32 %v3242, 0.0
        %v4971 = vmax.f32 %v3245, 0.0
        %v4972 = vmax.f32 %v3250, 0.0
        %v4973 = vmax.f32 %v3253, 0.0
        %v4974 = vmax.f32 %v3258, 0.0
        %v4975 = vmax.f32 %v3261, 0.0
        %v4976 = vmax.f32 %v3266, 0.0
        %v4977 = vmax.f32 %v3269, 0.0
        %v4978 = vmax.f32 %v3274, 0.0
        %v4979 = vmax.f32 %v3277, 0.0
        %v4980 = vmax.f32 %v3282, 0.0
        %v4981 = vmax.f32 %v3285, 0.0
        %v4982 = vmax.f32 %v3290, 0.0
        %v4983 = vmax.f32 %v3293, 0.0
        %v4984 = vmax.f32 %v3298, 0.0
        %v4985 = vmax.f32 %v3301, 0.0
        %v4986 = vmax.f32 %v3306, 0.0
        %v4987 = vmax.f32 %v3309, 0.0
        %v4988 = vmax.f32 %v3314, 0.0
        %v4989 = vmax.f32 %v3317, 0.0
        %v4990 = vmax.f32 %v3322, 0.0
        %v4991 = vmax.f32 %v3325, 0.0
        %v4992 = vmax.f32 %v3330, 0.0
        %v4993 = vmax.f32 %v3333, 0.0
        %v4994 = vmax.f32 %v3338, 0.0
        %v4995 = vmax.f32 %v3341, 0.0
        %v4996 = vmax.f32 %v3346, 0.0
        %v4997 = vmax.f32 %v3349, 0.0
        %v4998 = vmax.f32 %v3354, 0.0
        %v4999 = vmax.f32 %v3357, 0.0
        %v5000 = vmax.f32 %v3362, 0.0
        %v5001 = vmax.f32 %v3365, 0.0
        %v5002 = vmax.f32 %v3370, 0.0
        %v5003 = vmax.f32 %v3373, 0.0
        %v5004 = vmax.f32 %v3378, 0.0
        %v5005 = vmax.f32 %v3381, 0.0
        %v5006 = vmax.f32 %v3386, 0.0
        %v5007 = vmax.f32 %v3389, 0.0
        %v5008 = vmax.f32 %v3394, 0.0
        %v5009 = vmax.f32 %v3397, 0.0
        %v5010 = vmax.f32 %v3402, 0.0
        %v5011 = vmax.f32 %v3405, 0.0
        %v5012 = vmax.f32 %v3410, 0.0
        %v5013 = vmax.f32 %v3413, 0.0
        %v5014 = vmax.f32 %v3418, 0.0
        %v5015 = vmax.f32 %v3421, 0.0
        %v5016 = vmax.f32 %v3426, 0.0
        %v5017 = vmax.f32 %v3429, 0.0
        %v5018 = vmax.f32 %v3434, 0.0
        %v5019 = vmax.f32 %v3437, 0.0
        %v5020 = vmax.f32 %v3442, 0.0
        %v5021 = vmax.f32 %v3445, 0.0
        %v5022 = vmax.f32 %v3450, 0.0
        %v5023 = vmax.f32 %v3453, 0.0
        %v5024 = vmax.f32 %v3458, 0.0
        %v5025 = vmax.f32 %v3461, 0.0
        %v5026 = vmax.f32 %v3466, 0.0
        %v5027 = vmax.f32 %v3469, 0.0
        %v5028 = vmax.f32 %v3474, 0.0
        %v5029 = vmax.f32 %v3477, 0.0
        %v5030 = vmax.f32 %v3482, 0.0
        %v5031 = vmax.f32 %v3485, 0.0
        %v5032 = vmax.f32 %v3490, 0.0
        %v5033 = vmax.f32 %v3493, 0.0
        %v5034 = vmax.f32 %v3498, 0.0
        %v5035 = vmax.f32 %v3501, 0.0
        %v5036 = vmax.f32 %v3506, 0.0
        %v5037 = vmax.f32 %v3509, 0.0
        %v5038 = vmax.f32 %v3514, 0.0
        %v5039 = vmax.f32 %v3517, 0.0
        %v5040 = vmax.f32 %v3522, 0.0
        %v5041 = vmax.f32 %v3525, 0.0
        %v5042 = vmax.f32 %v3530, 0.0
        %v5043 = vmax.f32 %v3533, 0.0
        %v5044 = vmax.f32 %v3538, 0.0
        %v5045 = vmax.f32 %v3541, 0.0
        %v5046 = vmax.f32 %v3546, 0.0
        %v5047 = vmax.f32 %v3549, 0.0
        %v5048 = vmax.f32 %v3554, 0.0
        %v5049 = vmax.f32 %v3557, 0.0
        %v5050 = vmax.f32 %v3562, 0.0
        %v5051 = vmax.f32 %v3565, 0.0
        %v5052 = vmax.f32 %v3570, 0.0
        %v5053 = vmax.f32 %v3573, 0.0
        %v5054 = vmax.f32 %v3578, 0.0
        %v5055 = vmax.f32 %v3581, 0.0
        %v5056 = vmax.f32 %v3586, 0.0
        %v5057 = vmax.f32 %v3589, 0.0
        %v5058 = vmax.f32 %v3594, 0.0
        %v5059 = vmax.f32 %v3597, 0.0
        %v5060 = vmax.f32 %v3602, 0.0
        %v5061 = vmax.f32 %v3605, 0.0
        %v5062 = vmax.f32 %v3610, 0.0
        %v5063 = vmax.f32 %v3613, 0.0
        %v5064 = vmax.f32 %v3618, 0.0
        %v5065 = vmax.f32 %v3621, 0.0
        %v5066 = vmax.f32 %v3626, 0.0
        %v5067 = vmax.f32 %v3629, 0.0
        %v5068 = vmax.f32 %v3634, 0.0
        %v5069 = vmax.f32 %v3637, 0.0
        %v5070 = vmax.f32 %v3642, 0.0
        %v5071 = vmax.f32 %v3645, 0.0
        %v5072 = vmax.f32 %v3650, 0.0
        %v5073 = vmax.f32 %v3653, 0.0
        %v5074 = vmax.f32 %v3658, 0.0
        %v5075 = vmax.f32 %v3661, 0.0
        %v5076 = vmax.f32 %v3666, 0.0
        %v5077 = vmax.f32 %v3669, 0.0
        %v5078 = vmax.f32 %v3674, 0.0
        %v5079 = vmax.f32 %v3677, 0.0
        %v5080 = vmax.f32 %v3682, 0.0
        %v5081 = vmax.f32 %v3685, 0.0
        %v5082 = vmax.f32 %v3690, 0.0
        %v5083 = vmax.f32 %v3693, 0.0
        %v5084 = vmax.f32 %v3698, 0.0
        %v5085 = vmax.f32 %v3701, 0.0
        %v5086 = vmax.f32 %v3706, 0.0
        %v5087 = vmax.f32 %v3709, 0.0
        %v5088 = vmax.f32 %v3714, 0.0
        %v5089 = vmax.f32 %v3717, 0.0
        %v5090 = vmax.f32 %v3722, 0.0
        %v5091 = vmax.f32 %v3725, 0.0
        %v5092 = vmax.f32 %v3730, 0.0
        %v5093 = vmax.f32 %v3733, 0.0
        %v5094 = vmax.f32 %v3738, 0.0
        %v5095 = vmax.f32 %v3741, 0.0
        %v5096 = vmax.f32 %v3746, 0.0
        %v5097 = vmax.f32 %v3749, 0.0
        %v5098 = vmax.f32 %v3754, 0.0
        %v5099 = vmax.f32 %v3757, 0.0
        %v5100 = vmax.f32 %v3762, 0.0
        %v5101 = vmax.f32 %v3765, 0.0
        %v5102 = vmax.f32 %v3770, 0.0
        %v5103 = vmax.f32 %v3773, 0.0
        %v5104 = vmax.f32 %v3778, 0.0
        %v5105 = vmax.f32 %v3781, 0.0
        %v5106 = vmax.f32 %v3786, 0.0
        %v5107 = vmax.f32 %v3789, 0.0
        %v5108 = vmax.f32 %v3794, 0.0
        %v5109 = vmax.f32 %v3797, 0.0
        %v5110 = vmax.f32 %v3802, 0.0
        %v5111 = vmax.f32 %v3805, 0.0
        %v5112 = vmax.f32 %v3810, 0.0
        %v5113 = vmax.f32 %v3813, 0.0
        %v5114 = vmax.f32 %v3818, 0.0
        %v5115 = vmax.f32 %v3821, 0.0
        %v5116 = vmax.f32 %v3826, 0.0
        %v5117 = vmax.f32 %v3829, 0.0
        %v5118 = vmax.f32 %v3834, 0.0
        %v5119 = vmax.f32 %v3837, 0.0
        %v5120 = vmax.f32 %v3842, 0.0
        %v5121 = vmax.f32 %v3845, 0.0
        %v5122 = vmax.f32 %v3850, 0.0
        %v5123 = vmax.f32 %v3853, 0.0
        %v5124 = vmax.f32 %v3858, 0.0
        %v5125 = vmax.f32 %v3861, 0.0
        %v5126 = vmax.f32 %v3866, 0.0
        %v5127 = vmax.f32 %v3869, 0.0
        %v5128 = vmax.f32 %v3874, 0.0
        %v5129 = vmax.f32 %v3877, 0.0
        %v5130 = vmax.f32 %v3882, 0.0
        %v5131 = vmax.f32 %v3885, 0.0
        %v5132 = vmax.f32 %v3890, 0.0
        %v5133 = vmax.f32 %v3893, 0.0
        %v5134 = vmax.f32 %v3898, 0.0
        %v5135 = vmax.f32 %v3901, 0.0
        %v5136 = vmax.f32 %v3906, 0.0
        %v5137 = vmax.f32 %v3909, 0.0
        %v5138 = vmax.f32 %v3914, 0.0
        %v5139 = vmax.f32 %v3917, 0.0
        %v5140 = vmax.f32 %v3922, 0.0
        %v5141 = vmax.f32 %v3925, 0.0
        %v5142 = vmax.f32 %v3930, 0.0
        %v5143 = vmax.f32 %v3933, 0.0
        %v5144 = vmax.f32 %v3938, 0.0
        %v5145 = vmax.f32 %v3941, 0.0
        %v5146 = vmax.f32 %v3946, 0.0
        %v5147 = vmax.f32 %v3949, 0.0
        %v5148 = vmax.f32 %v3954, 0.0
        %v5149 = vmax.f32 %v3957, 0.0
        %v5150 = vmax.f32 %v3962, 0.0
        %v5151 = vmax.f32 %v3965, 0.0
        %v5152 = vmax.f32 %v3970, 0.0
        %v5153 = vmax.f32 %v3973, 0.0
        %v5154 = vmax.f32 %v3978, 0.0
        %v5155 = vmax.f32 %v3981, 0.0
        %v5156 = vmax.f32 %v3986, 0.0
        %v5157 = vmax.f32 %v3989, 0.0
        %v5158 = vmax.f32 %v3994, 0.0
        %v5159 = vmax.f32 %v3997, 0.0
        %v5160 = vmax.f32 %v4002, 0.0
        %v5161 = vmax.f32 %v4005, 0.0
        %v5162 = vmax.f32 %v4010, 0.0
        %v5163 = vmax.f32 %v4013, 0.0
        %v5164 = vmax.f32 %v4018, 0.0
        %v5165 = vmax.f32 %v4021, 0.0
        %v5166 = vmax.f32 %v4026, 0.0
        %v5167 = vmax.f32 %v4029, 0.0
        %v5168 = vmax.f32 %v4034, 0.0
        %v5169 = vmax.f32 %v4037, 0.0
        %v5170 = vmax.f32 %v4042, 0.0
        %v5171 = vmax.f32 %v4045, 0.0
        %v5172 = vmax.f32 %v4050, 0.0
        %v5173 = vmax.f32 %v4053, 0.0
        %v5174 = vmax.f32 %v4058, 0.0
        %v5175 = vmax.f32 %v4061, 0.0
        %v5176 = vmax.f32 %v4066, 0.0
        %v5177 = vmax.f32 %v4069, 0.0
        %v5178 = vmax.f32 %v4074, 0.0
        %v5179 = vmax.f32 %v4077, 0.0
        %v5180 = vmax.f32 %v4082, 0.0
        %v5181 = vmax.f32 %v4085, 0.0
        %v5182 = vmax.f32 %v4090, 0.0
        %v5183 = vmax.f32 %v4093, 0.0
        %v5184 = vmax.f32 %v4098, 0.0
        %v5185 = vmax.f32 %v4101, 0.0
        %v5186 = vmax.f32 %v4106, 0.0
        %v5187 = vmax.f32 %v4109, 0.0
        %v5188 = vmax.f32 %v4114, 0.0
        %v5189 = vmax.f32 %v4117, 0.0
        %v5190 = vmax.f32 %v4122, 0.0
        %v5191 = vmax.f32 %v4125, 0.0
        %v5192 = vmax.f32 %v4130, 0.0
        %v5193 = vmax.f32 %v4133, 0.0
        %v5194 = vmax.f32 %v4138, 0.0
        %v5195 = vmax.f32 %v4141, 0.0
        %v5196 = vmax.f32 %v4146, 0.0
        %v5197 = vmax.f32 %v4149, 0.0
        %v5198 = vmax.f32 %v4154, 0.0
        %v5199 = vmax.f32 %v4157, 0.0
        %v5200 = vmax.f32 %v4162, 0.0
        %v5201 = vmax.f32 %v4165, 0.0
        %v5202 = vmax.f32 %v4170, 0.0
        %v5203 = vmax.f32 %v4173, 0.0
        %v5204 = vmax.f32 %v4178, 0.0
        %v5205 = vmax.f32 %v4181, 0.0
        %v5206 = vmax.f32 %v4186, 0.0
        %v5207 = vmax.f32 %v4189, 0.0
        %v5208 = vmax.f32 %v4194, 0.0
        %v5209 = vmax.f32 %v4197, 0.0
        %v5210 = vmax.f32 %v4202, 0.0
        %v5211 = vmax.f32 %v4205, 0.0
        %v5212 = vmax.f32 %v4210, 0.0
        %v5213 = vmax.f32 %v4213, 0.0
        %v5214 = vmax.f32 %v4218, 0.0
        %v5215 = vmax.f32 %v4221, 0.0
        %v5216 = vmax.f32 %v4226, 0.0
        %v5217 = vmax.f32 %v4229, 0.0
        %v5218 = vmax.f32 %v4234, 0.0
        %v5219 = vmax.f32 %v4237, 0.0
        %v5220 = vmax.f32 %v4242, 0.0
        %v5221 = vmax.f32 %v4245, 0.0
        %v5222 = vmax.f32 %v4250, 0.0
        %v5223 = vmax.f32 %v4253, 0.0
        %v5224 = vmax.f32 %v4258, 0.0
        %v5225 = vmax.f32 %v4261, 0.0
        %v5226 = vmax.f32 %v4266, 0.0
        %v5227 = vmax.f32 %v4269, 0.0
        %v5228 = vmax.f32 %v4274, 0.0
        %v5229 = vmax.f32 %v4277, 0.0
        %v5230 = vmax.f32 %v4282, 0.0
        %v5231 = vmax.f32 %v4285, 0.0
        %v5232 = vmax.f32 %v4290, 0.0
        %v5233 = vmax.f32 %v4293, 0.0
        %v5234 = vmax.f32 %v4298, 0.0
        %v5235 = vmax.f32 %v4301, 0.0
        %v5236 = vmax.f32 %v4306, 0.0
        %v5237 = vmax.f32 %v4309, 0.0
        %v5238 = vmax.f32 %v4314, 0.0
        %v5239 = vmax.f32 %v4317, 0.0
        %v5240 = vmax.f32 %v4322, 0.0
        %v5241 = vmax.f32 %v4325, 0.0
        %v5242 = vmax.f32 %v4330, 0.0
        %v5243 = vmax.f32 %v4333, 0.0
        %v5244 = vmax.f32 %v4338, 0.0
        %v5245 = vmax.f32 %v4341, 0.0
        %v5246 = vmax.f32 %v4346, 0.0
        %v5247 = vmax.f32 %v4349, 0.0
        %v5248 = vmax.f32 %v4354, 0.0
        %v5249 = vmax.f32 %v4357, 0.0
        %v5250 = vmax.f32 %v4362, 0.0
        %v5251 = vmax.f32 %v4365, 0.0
        %v5252 = vmax.f32 %v4370, 0.0
        %v5253 = vmax.f32 %v4373, 0.0
        %v5254 = vmax.f32 %v4378, 0.0
        %v5255 = vmax.f32 %v4381, 0.0
        %v5256 = vmax.f32 %v4386, 0.0
        %v5257 = vmax.f32 %v4389, 0.0
        %v5258 = vmax.f32 %v4394, 0.0
        %v5259 = vmax.f32 %v4397, 0.0
        %v5260 = vmax.f32 %v4402, 0.0
        %v5261 = vmax.f32 %v4405, 0.0
        %v5262 = vmax.f32 %v4410, 0.0
        %v5263 = vmax.f32 %v4413, 0.0
        %v5264 = vmax.f32 %v4418, 0.0
        %v5265 = vmax.f32 %v4421, 0.0
        %v5266 = vmax.f32 %v4426, 0.0
        %v5267 = vmax.f32 %v4429, 0.0
        %v5268 = vmax.f32 %v4434, 0.0
        %v5269 = vmax.f32 %v4437, 0.0
        %v5270 = vmax.f32 %v4442, 0.0
        %v5271 = vmax.f32 %v4445, 0.0
        %v5272 = vmax.f32 %v4450, 0.0
        %v5273 = vmax.f32 %v4453, 0.0
        %v5274 = vmax.f32 %v4458, 0.0
        %v5275 = vmax.f32 %v4461, 0.0
        %v5276 = vmax.f32 %v4466, 0.0
        %v5277 = vmax.f32 %v4469, 0.0
        %v5278 = vmax.f32 %v4474, 0.0
        %v5279 = vmax.f32 %v4477, 0.0
        %v5280 = vmax.f32 %v4482, 0.0
        %v5281 = vmax.f32 %v4485, 0.0
        %v5282 = vmax.f32 %v4490, 0.0
        %v5283 = vmax.f32 %v4493, 0.0
        %v5284 = vmax.f32 %v4498, 0.0
        %v5285 = vmax.f32 %v4501, 0.0
        %v5286 = vmax.f32 %v4506, 0.0
        %v5287 = vmax.f32 %v4509, 0.0
        %v5288 = vmax.f32 %v4514, 0.0
        %v5289 = vmax.f32 %v4517, 0.0
        %v5290 = vmax.f32 %v4522, 0.0
        %v5291 = vmax.f32 %v4525, 0.0
        %v5292 = vmax.f32 %v4530, 0.0
        %v5293 = vmax.f32 %v4533, 0.0
        %v5294 = vmax.f32 %v4538, 0.0
        %v5295 = vmax.f32 %v4541, 0.0
        %v5296 = vmax.f32 %v4546, 0.0
        %v5297 = vmax.f32 %v4549, 0.0
        %v5298 = vmax.f32 %v4554, 0.0
        %v5299 = vmax.f32 %v4557, 0.0
        %v5300 = vmax.f32 %v4562, 0.0
        %v5301 = vmax.f32 %v4565, 0.0
        %v5302 = vmax.f32 %v4570, 0.0
        %v5303 = vmax.f32 %v4573, 0.0
        %v5304 = vmax.f32 %v4578, 0.0
        %v5305 = vmax.f32 %v4581, 0.0
        %v5306 = vmax.f32 %v4586, 0.0
        %v5307 = vmax.f32 %v4589, 0.0
        %v5308 = vmax.f32 %v4594, 0.0
        %v5309 = vmax.f32 %v4597, 0.0
        %v5310 = vmax.f32 %v4602, 0.0
        %v5311 = vmax.f32 %v4605, 0.0
        %v5312 = vmax.f32 %v4610, 0.0
        %v5313 = vmax.f32 %v4613, 0.0
        %v5314 = vmax.f32 %v4618, 0.0
        %v5315 = vmax.f32 %v4621, 0.0
        %v5316 = vmax.f32 %v4626, 0.0
        %v5317 = vmax.f32 %v4629, 0.0
        %v5318 = vmax.f32 %v4634, 0.0
        %v5319 = vmax.f32 %v4637, 0.0
        %v5320 = vmax.f32 %v4642, 0.0
        %v5321 = vmax.f32 %v4645, 0.0
        %v5322 = vmax.f32 %v4650, 0.0
        %v5323 = vmax.f32 %v4653, 0.0
        %v5324 = vmax.f32 %v4658, 0.0
        %v5325 = vmax.f32 %v4661, 0.0
        %v5326 = vmax.f32 %v4666, 0.0
        %v5327 = vmax.f32 %v4669, 0.0
        %v5328 = vmax.f32 %v4674, 0.0
        %v5329 = vmax.f32 %v4677, 0.0
        %v5330 = vmax.f32 %v4682, 0.0
        %v5331 = vmax.f32 %v4685, 0.0
        %v5332 = vmax.f32 %v4690, 0.0
        %v5333 = vmax.f32 %v4693, 0.0
        %v5334 = vmax.f32 %v4698, 0.0
        %v5335 = vmax.f32 %v4701, 0.0
        %v5336 = vmax.f32 %v4706, 0.0
        %v5337 = vmax.f32 %v4709, 0.0
        %v5338 = vmax.f32 %v4714, 0.0
        %v5339 = vmax.f32 %v4717, 0.0
        %v5340 = vmax.f32 %v4722, 0.0
        %v5341 = vmax.f32 %v4725, 0.0
        %v5342 = vmax.f32 %v4730, 0.0
        %v5343 = vmax.f32 %v4733, 0.0
        %v5344 = vmax.f32 %v4738, 0.0
        %v5345 = vmax.f32 %v4741, 0.0
        %v5346 = vmax.f32 %v4746, 0.0
        %v5347 = vmax.f32 %v4749, 0.0
        %v5348 = vmax.f32 %v4754, 0.0
        %v5349 = vmax.f32 %v4757, 0.0
        %v5350 = vmax.f32 %v4762, 0.0
        %v5351 = vmax.f32 %v4765, 0.0
        %v5352 = vmax.f32 %v4770, 0.0
        %v5353 = vmax.f32 %v4773, 0.0
        %v5354 = vmax.f32 %v4778, 0.0
        %v5355 = vmax.f32 %v4781, 0.0
        %v5356 = vmax.f32 %v4786, 0.0
        %v5357 = vmax.f32 %v4789, 0.0
        %v5358 = vmax.f32 %v4794, 0.0
        %v5359 = vmax.f32 %v4797, 0.0
        %v5360 = vmax.f32 %v4802, 0.0
        %v5361 = vmax.f32 %v4805, 0.0
        %v5362 = vmax.f32 %v4810, 0.0
        %v5363 = vmax.f32 %v4813, 0.0
        %v5364 = vmax.f32 %v4818, 0.0
        %v5365 = vmax.f32 %v4821, 0.0
        %v5366 = vmax.f32 %v4826, 0.0
        %v5367 = vmax.f32 %v4829, 0.0
        %v5368 = vmax.f32 %v4834, 0.0
        %v5369 = vmax.f32 %v4837, 0.0
        %v5370 = vmax.f32 %v4842, 0.0
        %v5371 = vmax.f32 %v4845, 0.0
        %v5372 = vmax.f32 %v4850, 0.0
        %v5373 = vmax.f32 %v4853, 0.0
        %v5374 = vmax.f32 %v4858, 0.0
        %v5375 = vmax.f32 %v4861, 0.0
        %v5376 = vpack.c.bf16 %v4865, %v4864
        %v5377 = vpack.c.bf16 %v4867, %v4866
        %v5378 = vpack.c.bf16 %v4869, %v4868
        %v5379 = vpack.c.bf16 %v4871, %v4870
        %v5380 = vpack.c.bf16 %v4873, %v4872
        %v5381 = vpack.c.bf16 %v4875, %v4874
        %v5382 = vpack.c.bf16 %v4877, %v4876
        %v5383 = vpack.c.bf16 %v4879, %v4878
        %v5384 = vpack.c.bf16 %v4881, %v4880
        %v5385 = vpack.c.bf16 %v4883, %v4882
        %v5386 = vpack.c.bf16 %v4885, %v4884
        %v5387 = vpack.c.bf16 %v4887, %v4886
        %v5388 = vpack.c.bf16 %v4889, %v4888
        %v5389 = vpack.c.bf16 %v4891, %v4890
        %v5390 = vpack.c.bf16 %v4893, %v4892
        %v5391 = vpack.c.bf16 %v4895, %v4894
        %v5392 = vpack.c.bf16 %v4897, %v4896
        %v5393 = vpack.c.bf16 %v4899, %v4898
        %v5394 = vpack.c.bf16 %v4901, %v4900
        %v5395 = vpack.c.bf16 %v4903, %v4902
        %v5396 = vpack.c.bf16 %v4905, %v4904
        %v5397 = vpack.c.bf16 %v4907, %v4906
        %v5398 = vpack.c.bf16 %v4909, %v4908
        %v5399 = vpack.c.bf16 %v4911, %v4910
        %v5400 = vpack.c.bf16 %v4913, %v4912
        %v5401 = vpack.c.bf16 %v4915, %v4914
        %v5402 = vpack.c.bf16 %v4917, %v4916
        %v5403 = vpack.c.bf16 %v4919, %v4918
        %v5404 = vpack.c.bf16 %v4921, %v4920
        %v5405 = vpack.c.bf16 %v4923, %v4922
        %v5406 = vpack.c.bf16 %v4925, %v4924
        %v5407 = vpack.c.bf16 %v4927, %v4926
        %v5408 = vpack.c.bf16 %v4929, %v4928
        %v5409 = vpack.c.bf16 %v4931, %v4930
        %v5410 = vpack.c.bf16 %v4933, %v4932
        %v5411 = vpack.c.bf16 %v4935, %v4934
        %v5412 = vpack.c.bf16 %v4937, %v4936
        %v5413 = vpack.c.bf16 %v4939, %v4938
        %v5414 = vpack.c.bf16 %v4941, %v4940
        %v5415 = vpack.c.bf16 %v4943, %v4942
        %v5416 = vpack.c.bf16 %v4945, %v4944
        %v5417 = vpack.c.bf16 %v4947, %v4946
        %v5418 = vpack.c.bf16 %v4949, %v4948
        %v5419 = vpack.c.bf16 %v4951, %v4950
        %v5420 = vpack.c.bf16 %v4953, %v4952
        %v5421 = vpack.c.bf16 %v4955, %v4954
        %v5422 = vpack.c.bf16 %v4957, %v4956
        %v5423 = vpack.c.bf16 %v4959, %v4958
        %v5424 = vpack.c.bf16 %v4961, %v4960
        %v5425 = vpack.c.bf16 %v4963, %v4962
        %v5426 = vpack.c.bf16 %v4965, %v4964
        %v5427 = vpack.c.bf16 %v4967, %v4966
        %v5428 = vpack.c.bf16 %v4969, %v4968
        %v5429 = vpack.c.bf16 %v4971, %v4970
        %v5430 = vpack.c.bf16 %v4973, %v4972
        %v5431 = vpack.c.bf16 %v4975, %v4974
        %v5432 = vpack.c.bf16 %v4977, %v4976
        %v5433 = vpack.c.bf16 %v4979, %v4978
        %v5434 = vpack.c.bf16 %v4981, %v4980
        %v5435 = vpack.c.bf16 %v4983, %v4982
        %v5436 = vpack.c.bf16 %v4985, %v4984
        %v5437 = vpack.c.bf16 %v4987, %v4986
        %v5438 = vpack.c.bf16 %v4989, %v4988
        %v5439 = vpack.c.bf16 %v4991, %v4990
        %v5440 = vpack.c.bf16 %v4993, %v4992
        %v5441 = vpack.c.bf16 %v4995, %v4994
        %v5442 = vpack.c.bf16 %v4997, %v4996
        %v5443 = vpack.c.bf16 %v4999, %v4998
        %v5444 = vpack.c.bf16 %v5001, %v5000
        %v5445 = vpack.c.bf16 %v5003, %v5002
        %v5446 = vpack.c.bf16 %v5005, %v5004
        %v5447 = vpack.c.bf16 %v5007, %v5006
        %v5448 = vpack.c.bf16 %v5009, %v5008
        %v5449 = vpack.c.bf16 %v5011, %v5010
        %v5450 = vpack.c.bf16 %v5013, %v5012
        %v5451 = vpack.c.bf16 %v5015, %v5014
        %v5452 = vpack.c.bf16 %v5017, %v5016
        %v5453 = vpack.c.bf16 %v5019, %v5018
        %v5454 = vpack.c.bf16 %v5021, %v5020
        %v5455 = vpack.c.bf16 %v5023, %v5022
        %v5456 = vpack.c.bf16 %v5025, %v5024
        %v5457 = vpack.c.bf16 %v5027, %v5026
        %v5458 = vpack.c.bf16 %v5029, %v5028
        %v5459 = vpack.c.bf16 %v5031, %v5030
        %v5460 = vpack.c.bf16 %v5033, %v5032
        %v5461 = vpack.c.bf16 %v5035, %v5034
        %v5462 = vpack.c.bf16 %v5037, %v5036
        %v5463 = vpack.c.bf16 %v5039, %v5038
        %v5464 = vpack.c.bf16 %v5041, %v5040
        %v5465 = vpack.c.bf16 %v5043, %v5042
        %v5466 = vpack.c.bf16 %v5045, %v5044
        %v5467 = vpack.c.bf16 %v5047, %v5046
        %v5468 = vpack.c.bf16 %v5049, %v5048
        %v5469 = vpack.c.bf16 %v5051, %v5050
        %v5470 = vpack.c.bf16 %v5053, %v5052
        %v5471 = vpack.c.bf16 %v5055, %v5054
        %v5472 = vpack.c.bf16 %v5057, %v5056
        %v5473 = vpack.c.bf16 %v5059, %v5058
        %v5474 = vpack.c.bf16 %v5061, %v5060
        %v5475 = vpack.c.bf16 %v5063, %v5062
        %v5476 = vpack.c.bf16 %v5065, %v5064
        %v5477 = vpack.c.bf16 %v5067, %v5066
        %v5478 = vpack.c.bf16 %v5069, %v5068
        %v5479 = vpack.c.bf16 %v5071, %v5070
        %v5480 = vpack.c.bf16 %v5073, %v5072
        %v5481 = vpack.c.bf16 %v5075, %v5074
        %v5482 = vpack.c.bf16 %v5077, %v5076
        %v5483 = vpack.c.bf16 %v5079, %v5078
        %v5484 = vpack.c.bf16 %v5081, %v5080
        %v5485 = vpack.c.bf16 %v5083, %v5082
        %v5486 = vpack.c.bf16 %v5085, %v5084
        %v5487 = vpack.c.bf16 %v5087, %v5086
        %v5488 = vpack.c.bf16 %v5089, %v5088
        %v5489 = vpack.c.bf16 %v5091, %v5090
        %v5490 = vpack.c.bf16 %v5093, %v5092
        %v5491 = vpack.c.bf16 %v5095, %v5094
        %v5492 = vpack.c.bf16 %v5097, %v5096
        %v5493 = vpack.c.bf16 %v5099, %v5098
        %v5494 = vpack.c.bf16 %v5101, %v5100
        %v5495 = vpack.c.bf16 %v5103, %v5102
        %v5496 = vpack.c.bf16 %v5105, %v5104
        %v5497 = vpack.c.bf16 %v5107, %v5106
        %v5498 = vpack.c.bf16 %v5109, %v5108
        %v5499 = vpack.c.bf16 %v5111, %v5110
        %v5500 = vpack.c.bf16 %v5113, %v5112
        %v5501 = vpack.c.bf16 %v5115, %v5114
        %v5502 = vpack.c.bf16 %v5117, %v5116
        %v5503 = vpack.c.bf16 %v5119, %v5118
        %v5504 = vpack.c.bf16 %v5121, %v5120
        %v5505 = vpack.c.bf16 %v5123, %v5122
        %v5506 = vpack.c.bf16 %v5125, %v5124
        %v5507 = vpack.c.bf16 %v5127, %v5126
        %v5508 = vpack.c.bf16 %v5129, %v5128
        %v5509 = vpack.c.bf16 %v5131, %v5130
        %v5510 = vpack.c.bf16 %v5133, %v5132
        %v5511 = vpack.c.bf16 %v5135, %v5134
        %v5512 = vpack.c.bf16 %v5137, %v5136
        %v5513 = vpack.c.bf16 %v5139, %v5138
        %v5514 = vpack.c.bf16 %v5141, %v5140
        %v5515 = vpack.c.bf16 %v5143, %v5142
        %v5516 = vpack.c.bf16 %v5145, %v5144
        %v5517 = vpack.c.bf16 %v5147, %v5146
        %v5518 = vpack.c.bf16 %v5149, %v5148
        %v5519 = vpack.c.bf16 %v5151, %v5150
        %v5520 = vpack.c.bf16 %v5153, %v5152
        %v5521 = vpack.c.bf16 %v5155, %v5154
        %v5522 = vpack.c.bf16 %v5157, %v5156
        %v5523 = vpack.c.bf16 %v5159, %v5158
        %v5524 = vpack.c.bf16 %v5161, %v5160
        %v5525 = vpack.c.bf16 %v5163, %v5162
        %v5526 = vpack.c.bf16 %v5165, %v5164
        %v5527 = vpack.c.bf16 %v5167, %v5166
        %v5528 = vpack.c.bf16 %v5169, %v5168
        %v5529 = vpack.c.bf16 %v5171, %v5170
        %v5530 = vpack.c.bf16 %v5173, %v5172
        %v5531 = vpack.c.bf16 %v5175, %v5174
        %v5532 = vpack.c.bf16 %v5177, %v5176
        %v5533 = vpack.c.bf16 %v5179, %v5178
        %v5534 = vpack.c.bf16 %v5181, %v5180
        %v5535 = vpack.c.bf16 %v5183, %v5182
        %v5536 = vpack.c.bf16 %v5185, %v5184
        %v5537 = vpack.c.bf16 %v5187, %v5186
        %v5538 = vpack.c.bf16 %v5189, %v5188
        %v5539 = vpack.c.bf16 %v5191, %v5190
        %v5540 = vpack.c.bf16 %v5193, %v5192
        %v5541 = vpack.c.bf16 %v5195, %v5194
        %v5542 = vpack.c.bf16 %v5197, %v5196
        %v5543 = vpack.c.bf16 %v5199, %v5198
        %v5544 = vpack.c.bf16 %v5201, %v5200
        %v5545 = vpack.c.bf16 %v5203, %v5202
        %v5546 = vpack.c.bf16 %v5205, %v5204
        %v5547 = vpack.c.bf16 %v5207, %v5206
        %v5548 = vpack.c.bf16 %v5209, %v5208
        %v5549 = vpack.c.bf16 %v5211, %v5210
        %v5550 = vpack.c.bf16 %v5213, %v5212
        %v5551 = vpack.c.bf16 %v5215, %v5214
        %v5552 = vpack.c.bf16 %v5217, %v5216
        %v5553 = vpack.c.bf16 %v5219, %v5218
        %v5554 = vpack.c.bf16 %v5221, %v5220
        %v5555 = vpack.c.bf16 %v5223, %v5222
        %v5556 = vpack.c.bf16 %v5225, %v5224
        %v5557 = vpack.c.bf16 %v5227, %v5226
        %v5558 = vpack.c.bf16 %v5229, %v5228
        %v5559 = vpack.c.bf16 %v5231, %v5230
        %v5560 = vpack.c.bf16 %v5233, %v5232
        %v5561 = vpack.c.bf16 %v5235, %v5234
        %v5562 = vpack.c.bf16 %v5237, %v5236
        %v5563 = vpack.c.bf16 %v5239, %v5238
        %v5564 = vpack.c.bf16 %v5241, %v5240
        %v5565 = vpack.c.bf16 %v5243, %v5242
        %v5566 = vpack.c.bf16 %v5245, %v5244
        %v5567 = vpack.c.bf16 %v5247, %v5246
        %v5568 = vpack.c.bf16 %v5249, %v5248
        %v5569 = vpack.c.bf16 %v5251, %v5250
        %v5570 = vpack.c.bf16 %v5253, %v5252
        %v5571 = vpack.c.bf16 %v5255, %v5254
        %v5572 = vpack.c.bf16 %v5257, %v5256
        %v5573 = vpack.c.bf16 %v5259, %v5258
        %v5574 = vpack.c.bf16 %v5261, %v5260
        %v5575 = vpack.c.bf16 %v5263, %v5262
        %v5576 = vpack.c.bf16 %v5265, %v5264
        %v5577 = vpack.c.bf16 %v5267, %v5266
        %v5578 = vpack.c.bf16 %v5269, %v5268
        %v5579 = vpack.c.bf16 %v5271, %v5270
        %v5580 = vpack.c.bf16 %v5273, %v5272
        %v5581 = vpack.c.bf16 %v5275, %v5274
        %v5582 = vpack.c.bf16 %v5277, %v5276
        %v5583 = vpack.c.bf16 %v5279, %v5278
        %v5584 = vpack.c.bf16 %v5281, %v5280
        %v5585 = vpack.c.bf16 %v5283, %v5282
        %v5586 = vpack.c.bf16 %v5285, %v5284
        %v5587 = vpack.c.bf16 %v5287, %v5286
        %v5588 = vpack.c.bf16 %v5289, %v5288
        %v5589 = vpack.c.bf16 %v5291, %v5290
        %v5590 = vpack.c.bf16 %v5293, %v5292
        %v5591 = vpack.c.bf16 %v5295, %v5294
        %v5592 = vpack.c.bf16 %v5297, %v5296
        %v5593 = vpack.c.bf16 %v5299, %v5298
        %v5594 = vpack.c.bf16 %v5301, %v5300
        %v5595 = vpack.c.bf16 %v5303, %v5302
        %v5596 = vpack.c.bf16 %v5305, %v5304
        %v5597 = vpack.c.bf16 %v5307, %v5306
        %v5598 = vpack.c.bf16 %v5309, %v5308
        %v5599 = vpack.c.bf16 %v5311, %v5310
        %v5600 = vpack.c.bf16 %v5313, %v5312
        %v5601 = vpack.c.bf16 %v5315, %v5314
        %v5602 = vpack.c.bf16 %v5317, %v5316
        %v5603 = vpack.c.bf16 %v5319, %v5318
        %v5604 = vpack.c.bf16 %v5321, %v5320
        %v5605 = vpack.c.bf16 %v5323, %v5322
        %v5606 = vpack.c.bf16 %v5325, %v5324
        %v5607 = vpack.c.bf16 %v5327, %v5326
        %v5608 = vpack.c.bf16 %v5329, %v5328
        %v5609 = vpack.c.bf16 %v5331, %v5330
        %v5610 = vpack.c.bf16 %v5333, %v5332
        %v5611 = vpack.c.bf16 %v5335, %v5334
        %v5612 = vpack.c.bf16 %v5337, %v5336
        %v5613 = vpack.c.bf16 %v5339, %v5338
        %v5614 = vpack.c.bf16 %v5341, %v5340
        %v5615 = vpack.c.bf16 %v5343, %v5342
        %v5616 = vpack.c.bf16 %v5345, %v5344
        %v5617 = vpack.c.bf16 %v5347, %v5346
        %v5618 = vpack.c.bf16 %v5349, %v5348
        %v5619 = vpack.c.bf16 %v5351, %v5350
        %v5620 = vpack.c.bf16 %v5353, %v5352
        %v5621 = vpack.c.bf16 %v5355, %v5354
        %v5622 = vpack.c.bf16 %v5357, %v5356
        %v5623 = vpack.c.bf16 %v5359, %v5358
        %v5624 = vpack.c.bf16 %v5361, %v5360
        %v5625 = vpack.c.bf16 %v5363, %v5362
        %v5626 = vpack.c.bf16 %v5365, %v5364
        %v5627 = vpack.c.bf16 %v5367, %v5366
        %v5628 = vpack.c.bf16 %v5369, %v5368
        %v5629 = vpack.c.bf16 %v5371, %v5370
        %v5630 = vpack.c.bf16 %v5373, %v5372
        %v5631 = vpack.c.bf16 %v5375, %v5374
        %v5888 = vunpack.c.l.b16 %v5376
        %v5889 = vunpack.c.h.b16 %v5376
        %v5890 = vunpack.c.l.b16 %v5377
        %v5891 = vunpack.c.h.b16 %v5377
        %v5892 = vunpack.c.l.b16 %v5378
        %v5893 = vunpack.c.h.b16 %v5378
        %v5894 = vunpack.c.l.b16 %v5379
        %v5895 = vunpack.c.h.b16 %v5379
        %v5896 = vunpack.c.l.b16 %v5380
        %v5897 = vunpack.c.h.b16 %v5380
        %v5898 = vunpack.c.l.b16 %v5381
        %v5899 = vunpack.c.h.b16 %v5381
        %v5900 = vunpack.c.l.b16 %v5382
        %v5901 = vunpack.c.h.b16 %v5382
        %v5902 = vunpack.c.l.b16 %v5383
        %v5903 = vunpack.c.h.b16 %v5383
        %v5904 = vunpack.c.l.b16 %v5384
        %v5905 = vunpack.c.h.b16 %v5384
        %v5906 = vunpack.c.l.b16 %v5385
        %v5907 = vunpack.c.h.b16 %v5385
        %v5908 = vunpack.c.l.b16 %v5386
        %v5909 = vunpack.c.h.b16 %v5386
        %v5910 = vunpack.c.l.b16 %v5387
        %v5911 = vunpack.c.h.b16 %v5387
        %v5912 = vunpack.c.l.b16 %v5388
        %v5913 = vunpack.c.h.b16 %v5388
        %v5914 = vunpack.c.l.b16 %v5389
        %v5915 = vunpack.c.h.b16 %v5389
        %v5916 = vunpack.c.l.b16 %v5390
        %v5917 = vunpack.c.h.b16 %v5390
        %v5918 = vunpack.c.l.b16 %v5391
        %v5919 = vunpack.c.h.b16 %v5391
        %v5920 = vunpack.c.l.b16 %v5392
        %v5921 = vunpack.c.h.b16 %v5392
        %v5922 = vunpack.c.l.b16 %v5393
        %v5923 = vunpack.c.h.b16 %v5393
        %v5924 = vunpack.c.l.b16 %v5394
        %v5925 = vunpack.c.h.b16 %v5394
        %v5926 = vunpack.c.l.b16 %v5395
        %v5927 = vunpack.c.h.b16 %v5395
        %v5928 = vunpack.c.l.b16 %v5396
        %v5929 = vunpack.c.h.b16 %v5396
        %v5930 = vunpack.c.l.b16 %v5397
        %v5931 = vunpack.c.h.b16 %v5397
        %v5932 = vunpack.c.l.b16 %v5398
        %v5933 = vunpack.c.h.b16 %v5398
        %v5934 = vunpack.c.l.b16 %v5399
        %v5935 = vunpack.c.h.b16 %v5399
        %v5936 = vunpack.c.l.b16 %v5400
        %v5937 = vunpack.c.h.b16 %v5400
        %v5938 = vunpack.c.l.b16 %v5401
        %v5939 = vunpack.c.h.b16 %v5401
        %v5940 = vunpack.c.l.b16 %v5402
        %v5941 = vunpack.c.h.b16 %v5402
        %v5942 = vunpack.c.l.b16 %v5403
        %v5943 = vunpack.c.h.b16 %v5403
        %v5944 = vunpack.c.l.b16 %v5404
        %v5945 = vunpack.c.h.b16 %v5404
        %v5946 = vunpack.c.l.b16 %v5405
        %v5947 = vunpack.c.h.b16 %v5405
        %v5948 = vunpack.c.l.b16 %v5406
        %v5949 = vunpack.c.h.b16 %v5406
        %v5950 = vunpack.c.l.b16 %v5407
        %v5951 = vunpack.c.h.b16 %v5407
        %v5952 = vunpack.c.l.b16 %v5408
        %v5953 = vunpack.c.h.b16 %v5408
        %v5954 = vunpack.c.l.b16 %v5409
        %v5955 = vunpack.c.h.b16 %v5409
        %v5956 = vunpack.c.l.b16 %v5410
        %v5957 = vunpack.c.h.b16 %v5410
        %v5958 = vunpack.c.l.b16 %v5411
        %v5959 = vunpack.c.h.b16 %v5411
        %v5960 = vunpack.c.l.b16 %v5412
        %v5961 = vunpack.c.h.b16 %v5412
        %v5962 = vunpack.c.l.b16 %v5413
        %v5963 = vunpack.c.h.b16 %v5413
        %v5964 = vunpack.c.l.b16 %v5414
        %v5965 = vunpack.c.h.b16 %v5414
        %v5966 = vunpack.c.l.b16 %v5415
        %v5967 = vunpack.c.h.b16 %v5415
        %v5968 = vunpack.c.l.b16 %v5416
        %v5969 = vunpack.c.h.b16 %v5416
        %v5970 = vunpack.c.l.b16 %v5417
        %v5971 = vunpack.c.h.b16 %v5417
        %v5972 = vunpack.c.l.b16 %v5418
        %v5973 = vunpack.c.h.b16 %v5418
        %v5974 = vunpack.c.l.b16 %v5419
        %v5975 = vunpack.c.h.b16 %v5419
        %v5976 = vunpack.c.l.b16 %v5420
        %v5977 = vunpack.c.h.b16 %v5420
        %v5978 = vunpack.c.l.b16 %v5421
        %v5979 = vunpack.c.h.b16 %v5421
        %v5980 = vunpack.c.l.b16 %v5422
        %v5981 = vunpack.c.h.b16 %v5422
        %v5982 = vunpack.c.l.b16 %v5423
        %v5983 = vunpack.c.h.b16 %v5423
        %v5984 = vunpack.c.l.b16 %v5424
        %v5985 = vunpack.c.h.b16 %v5424
        %v5986 = vunpack.c.l.b16 %v5425
        %v5987 = vunpack.c.h.b16 %v5425
        %v5988 = vunpack.c.l.b16 %v5426
        %v5989 = vunpack.c.h.b16 %v5426
        %v5990 = vunpack.c.l.b16 %v5427
        %v5991 = vunpack.c.h.b16 %v5427
        %v5992 = vunpack.c.l.b16 %v5428
        %v5993 = vunpack.c.h.b16 %v5428
        %v5994 = vunpack.c.l.b16 %v5429
        %v5995 = vunpack.c.h.b16 %v5429
        %v5996 = vunpack.c.l.b16 %v5430
        %v5997 = vunpack.c.h.b16 %v5430
        %v5998 = vunpack.c.l.b16 %v5431
        %v5999 = vunpack.c.h.b16 %v5431
        %v6000 = vunpack.c.l.b16 %v5432
        %v6001 = vunpack.c.h.b16 %v5432
        %v6002 = vunpack.c.l.b16 %v5433
        %v6003 = vunpack.c.h.b16 %v5433
        %v6004 = vunpack.c.l.b16 %v5434
        %v6005 = vunpack.c.h.b16 %v5434
        %v6006 = vunpack.c.l.b16 %v5435
        %v6007 = vunpack.c.h.b16 %v5435
        %v6008 = vunpack.c.l.b16 %v5436
        %v6009 = vunpack.c.h.b16 %v5436
        %v6010 = vunpack.c.l.b16 %v5437
        %v6011 = vunpack.c.h.b16 %v5437
        %v6012 = vunpack.c.l.b16 %v5438
        %v6013 = vunpack.c.h.b16 %v5438
        %v6014 = vunpack.c.l.b16 %v5439
        %v6015 = vunpack.c.h.b16 %v5439
        %v6016 = vunpack.c.l.b16 %v5440
        %v6017 = vunpack.c.h.b16 %v5440
        %v6018 = vunpack.c.l.b16 %v5441
        %v6019 = vunpack.c.h.b16 %v5441
        %v6020 = vunpack.c.l.b16 %v5442
        %v6021 = vunpack.c.h.b16 %v5442
        %v6022 = vunpack.c.l.b16 %v5443
        %v6023 = vunpack.c.h.b16 %v5443
        %v6024 = vunpack.c.l.b16 %v5444
        %v6025 = vunpack.c.h.b16 %v5444
        %v6026 = vunpack.c.l.b16 %v5445
        %v6027 = vunpack.c.h.b16 %v5445
        %v6028 = vunpack.c.l.b16 %v5446
        %v6029 = vunpack.c.h.b16 %v5446
        %v6030 = vunpack.c.l.b16 %v5447
        %v6031 = vunpack.c.h.b16 %v5447
        %v6032 = vunpack.c.l.b16 %v5448
        %v6033 = vunpack.c.h.b16 %v5448
        %v6034 = vunpack.c.l.b16 %v5449
        %v6035 = vunpack.c.h.b16 %v5449
        %v6036 = vunpack.c.l.b16 %v5450
        %v6037 = vunpack.c.h.b16 %v5450
        %v6038 = vunpack.c.l.b16 %v5451
        %v6039 = vunpack.c.h.b16 %v5451
        %v6040 = vunpack.c.l.b16 %v5452
        %v6041 = vunpack.c.h.b16 %v5452
        %v6042 = vunpack.c.l.b16 %v5453
        %v6043 = vunpack.c.h.b16 %v5453
        %v6044 = vunpack.c.l.b16 %v5454
        %v6045 = vunpack.c.h.b16 %v5454
        %v6046 = vunpack.c.l.b16 %v5455
        %v6047 = vunpack.c.h.b16 %v5455
        %v6048 = vunpack.c.l.b16 %v5456
        %v6049 = vunpack.c.h.b16 %v5456
        %v6050 = vunpack.c.l.b16 %v5457
        %v6051 = vunpack.c.h.b16 %v5457
        %v6052 = vunpack.c.l.b16 %v5458
        %v6053 = vunpack.c.h.b16 %v5458
        %v6054 = vunpack.c.l.b16 %v5459
        %v6055 = vunpack.c.h.b16 %v5459
        %v6056 = vunpack.c.l.b16 %v5460
        %v6057 = vunpack.c.h.b16 %v5460
        %v6058 = vunpack.c.l.b16 %v5461
        %v6059 = vunpack.c.h.b16 %v5461
        %v6060 = vunpack.c.l.b16 %v5462
        %v6061 = vunpack.c.h.b16 %v5462
        %v6062 = vunpack.c.l.b16 %v5463
        %v6063 = vunpack.c.h.b16 %v5463
        %v6064 = vunpack.c.l.b16 %v5464
        %v6065 = vunpack.c.h.b16 %v5464
        %v6066 = vunpack.c.l.b16 %v5465
        %v6067 = vunpack.c.h.b16 %v5465
        %v6068 = vunpack.c.l.b16 %v5466
        %v6069 = vunpack.c.h.b16 %v5466
        %v6070 = vunpack.c.l.b16 %v5467
        %v6071 = vunpack.c.h.b16 %v5467
        %v6072 = vunpack.c.l.b16 %v5468
        %v6073 = vunpack.c.h.b16 %v5468
        %v6074 = vunpack.c.l.b16 %v5469
        %v6075 = vunpack.c.h.b16 %v5469
        %v6076 = vunpack.c.l.b16 %v5470
        %v6077 = vunpack.c.h.b16 %v5470
        %v6078 = vunpack.c.l.b16 %v5471
        %v6079 = vunpack.c.h.b16 %v5471
        %v6080 = vunpack.c.l.b16 %v5472
        %v6081 = vunpack.c.h.b16 %v5472
        %v6082 = vunpack.c.l.b16 %v5473
        %v6083 = vunpack.c.h.b16 %v5473
        %v6084 = vunpack.c.l.b16 %v5474
        %v6085 = vunpack.c.h.b16 %v5474
        %v6086 = vunpack.c.l.b16 %v5475
        %v6087 = vunpack.c.h.b16 %v5475
        %v6088 = vunpack.c.l.b16 %v5476
        %v6089 = vunpack.c.h.b16 %v5476
        %v6090 = vunpack.c.l.b16 %v5477
        %v6091 = vunpack.c.h.b16 %v5477
        %v6092 = vunpack.c.l.b16 %v5478
        %v6093 = vunpack.c.h.b16 %v5478
        %v6094 = vunpack.c.l.b16 %v5479
        %v6095 = vunpack.c.h.b16 %v5479
        %v6096 = vunpack.c.l.b16 %v5480
        %v6097 = vunpack.c.h.b16 %v5480
        %v6098 = vunpack.c.l.b16 %v5481
        %v6099 = vunpack.c.h.b16 %v5481
        %v6100 = vunpack.c.l.b16 %v5482
        %v6101 = vunpack.c.h.b16 %v5482
        %v6102 = vunpack.c.l.b16 %v5483
        %v6103 = vunpack.c.h.b16 %v5483
        %v6104 = vunpack.c.l.b16 %v5484
        %v6105 = vunpack.c.h.b16 %v5484
        %v6106 = vunpack.c.l.b16 %v5485
        %v6107 = vunpack.c.h.b16 %v5485
        %v6108 = vunpack.c.l.b16 %v5486
        %v6109 = vunpack.c.h.b16 %v5486
        %v6110 = vunpack.c.l.b16 %v5487
        %v6111 = vunpack.c.h.b16 %v5487
        %v6112 = vunpack.c.l.b16 %v5488
        %v6113 = vunpack.c.h.b16 %v5488
        %v6114 = vunpack.c.l.b16 %v5489
        %v6115 = vunpack.c.h.b16 %v5489
        %v6116 = vunpack.c.l.b16 %v5490
        %v6117 = vunpack.c.h.b16 %v5490
        %v6118 = vunpack.c.l.b16 %v5491
        %v6119 = vunpack.c.h.b16 %v5491
        %v6120 = vunpack.c.l.b16 %v5492
        %v6121 = vunpack.c.h.b16 %v5492
        %v6122 = vunpack.c.l.b16 %v5493
        %v6123 = vunpack.c.h.b16 %v5493
        %v6124 = vunpack.c.l.b16 %v5494
        %v6125 = vunpack.c.h.b16 %v5494
        %v6126 = vunpack.c.l.b16 %v5495
        %v6127 = vunpack.c.h.b16 %v5495
        %v6128 = vunpack.c.l.b16 %v5496
        %v6129 = vunpack.c.h.b16 %v5496
        %v6130 = vunpack.c.l.b16 %v5497
        %v6131 = vunpack.c.h.b16 %v5497
        %v6132 = vunpack.c.l.b16 %v5498
        %v6133 = vunpack.c.h.b16 %v5498
        %v6134 = vunpack.c.l.b16 %v5499
        %v6135 = vunpack.c.h.b16 %v5499
        %v6136 = vunpack.c.l.b16 %v5500
        %v6137 = vunpack.c.h.b16 %v5500
        %v6138 = vunpack.c.l.b16 %v5501
        %v6139 = vunpack.c.h.b16 %v5501
        %v6140 = vunpack.c.l.b16 %v5502
        %v6141 = vunpack.c.h.b16 %v5502
        %v6142 = vunpack.c.l.b16 %v5503
        %v6143 = vunpack.c.h.b16 %v5503
        %v6144 = vunpack.c.l.b16 %v5504
        %v6145 = vunpack.c.h.b16 %v5504
        %v6146 = vunpack.c.l.b16 %v5505
        %v6147 = vunpack.c.h.b16 %v5505
        %v6148 = vunpack.c.l.b16 %v5506
        %v6149 = vunpack.c.h.b16 %v5506
        %v6150 = vunpack.c.l.b16 %v5507
        %v6151 = vunpack.c.h.b16 %v5507
        %v6152 = vunpack.c.l.b16 %v5508
        %v6153 = vunpack.c.h.b16 %v5508
        %v6154 = vunpack.c.l.b16 %v5509
        %v6155 = vunpack.c.h.b16 %v5509
        %v6156 = vunpack.c.l.b16 %v5510
        %v6157 = vunpack.c.h.b16 %v5510
        %v6158 = vunpack.c.l.b16 %v5511
        %v6159 = vunpack.c.h.b16 %v5511
        %v6160 = vunpack.c.l.b16 %v5512
        %v6161 = vunpack.c.h.b16 %v5512
        %v6162 = vunpack.c.l.b16 %v5513
        %v6163 = vunpack.c.h.b16 %v5513
        %v6164 = vunpack.c.l.b16 %v5514
        %v6165 = vunpack.c.h.b16 %v5514
        %v6166 = vunpack.c.l.b16 %v5515
        %v6167 = vunpack.c.h.b16 %v5515
        %v6168 = vunpack.c.l.b16 %v5516
        %v6169 = vunpack.c.h.b16 %v5516
        %v6170 = vunpack.c.l.b16 %v5517
        %v6171 = vunpack.c.h.b16 %v5517
        %v6172 = vunpack.c.l.b16 %v5518
        %v6173 = vunpack.c.h.b16 %v5518
        %v6174 = vunpack.c.l.b16 %v5519
        %v6175 = vunpack.c.h.b16 %v5519
        %v6176 = vunpack.c.l.b16 %v5520
        %v6177 = vunpack.c.h.b16 %v5520
        %v6178 = vunpack.c.l.b16 %v5521
        %v6179 = vunpack.c.h.b16 %v5521
        %v6180 = vunpack.c.l.b16 %v5522
        %v6181 = vunpack.c.h.b16 %v5522
        %v6182 = vunpack.c.l.b16 %v5523
        %v6183 = vunpack.c.h.b16 %v5523
        %v6184 = vunpack.c.l.b16 %v5524
        %v6185 = vunpack.c.h.b16 %v5524
        %v6186 = vunpack.c.l.b16 %v5525
        %v6187 = vunpack.c.h.b16 %v5525
        %v6188 = vunpack.c.l.b16 %v5526
        %v6189 = vunpack.c.h.b16 %v5526
        %v6190 = vunpack.c.l.b16 %v5527
        %v6191 = vunpack.c.h.b16 %v5527
        %v6192 = vunpack.c.l.b16 %v5528
        %v6193 = vunpack.c.h.b16 %v5528
        %v6194 = vunpack.c.l.b16 %v5529
        %v6195 = vunpack.c.h.b16 %v5529
        %v6196 = vunpack.c.l.b16 %v5530
        %v6197 = vunpack.c.h.b16 %v5530
        %v6198 = vunpack.c.l.b16 %v5531
        %v6199 = vunpack.c.h.b16 %v5531
        %v6200 = vunpack.c.l.b16 %v5532
        %v6201 = vunpack.c.h.b16 %v5532
        %v6202 = vunpack.c.l.b16 %v5533
        %v6203 = vunpack.c.h.b16 %v5533
        %v6204 = vunpack.c.l.b16 %v5534
        %v6205 = vunpack.c.h.b16 %v5534
        %v6206 = vunpack.c.l.b16 %v5535
        %v6207 = vunpack.c.h.b16 %v5535
        %v6208 = vunpack.c.l.b16 %v5536
        %v6209 = vunpack.c.h.b16 %v5536
        %v6210 = vunpack.c.l.b16 %v5537
        %v6211 = vunpack.c.h.b16 %v5537
        %v6212 = vunpack.c.l.b16 %v5538
        %v6213 = vunpack.c.h.b16 %v5538
        %v6214 = vunpack.c.l.b16 %v5539
        %v6215 = vunpack.c.h.b16 %v5539
        %v6216 = vunpack.c.l.b16 %v5540
        %v6217 = vunpack.c.h.b16 %v5540
        %v6218 = vunpack.c.l.b16 %v5541
        %v6219 = vunpack.c.h.b16 %v5541
        %v6220 = vunpack.c.l.b16 %v5542
        %v6221 = vunpack.c.h.b16 %v5542
        %v6222 = vunpack.c.l.b16 %v5543
        %v6223 = vunpack.c.h.b16 %v5543
        %v6224 = vunpack.c.l.b16 %v5544
        %v6225 = vunpack.c.h.b16 %v5544
        %v6226 = vunpack.c.l.b16 %v5545
        %v6227 = vunpack.c.h.b16 %v5545
        %v6228 = vunpack.c.l.b16 %v5546
        %v6229 = vunpack.c.h.b16 %v5546
        %v6230 = vunpack.c.l.b16 %v5547
        %v6231 = vunpack.c.h.b16 %v5547
        %v6232 = vunpack.c.l.b16 %v5548
        %v6233 = vunpack.c.h.b16 %v5548
        %v6234 = vunpack.c.l.b16 %v5549
        %v6235 = vunpack.c.h.b16 %v5549
        %v6236 = vunpack.c.l.b16 %v5550
        %v6237 = vunpack.c.h.b16 %v5550
        %v6238 = vunpack.c.l.b16 %v5551
        %v6239 = vunpack.c.h.b16 %v5551
        %v6240 = vunpack.c.l.b16 %v5552
        %v6241 = vunpack.c.h.b16 %v5552
        %v6242 = vunpack.c.l.b16 %v5553
        %v6243 = vunpack.c.h.b16 %v5553
        %v6244 = vunpack.c.l.b16 %v5554
        %v6245 = vunpack.c.h.b16 %v5554
        %v6246 = vunpack.c.l.b16 %v5555
        %v6247 = vunpack.c.h.b16 %v5555
        %v6248 = vunpack.c.l.b16 %v5556
        %v6249 = vunpack.c.h.b16 %v5556
        %v6250 = vunpack.c.l.b16 %v5557
        %v6251 = vunpack.c.h.b16 %v5557
        %v6252 = vunpack.c.l.b16 %v5558
        %v6253 = vunpack.c.h.b16 %v5558
        %v6254 = vunpack.c.l.b16 %v5559
        %v6255 = vunpack.c.h.b16 %v5559
        %v6256 = vunpack.c.l.b16 %v5560
        %v6257 = vunpack.c.h.b16 %v5560
        %v6258 = vunpack.c.l.b16 %v5561
        %v6259 = vunpack.c.h.b16 %v5561
        %v6260 = vunpack.c.l.b16 %v5562
        %v6261 = vunpack.c.h.b16 %v5562
        %v6262 = vunpack.c.l.b16 %v5563
        %v6263 = vunpack.c.h.b16 %v5563
        %v6264 = vunpack.c.l.b16 %v5564
        %v6265 = vunpack.c.h.b16 %v5564
        %v6266 = vunpack.c.l.b16 %v5565
        %v6267 = vunpack.c.h.b16 %v5565
        %v6268 = vunpack.c.l.b16 %v5566
        %v6269 = vunpack.c.h.b16 %v5566
        %v6270 = vunpack.c.l.b16 %v5567
        %v6271 = vunpack.c.h.b16 %v5567
        %v6272 = vunpack.c.l.b16 %v5568
        %v6273 = vunpack.c.h.b16 %v5568
        %v6274 = vunpack.c.l.b16 %v5569
        %v6275 = vunpack.c.h.b16 %v5569
        %v6276 = vunpack.c.l.b16 %v5570
        %v6277 = vunpack.c.h.b16 %v5570
        %v6278 = vunpack.c.l.b16 %v5571
        %v6279 = vunpack.c.h.b16 %v5571
        %v6280 = vunpack.c.l.b16 %v5572
        %v6281 = vunpack.c.h.b16 %v5572
        %v6282 = vunpack.c.l.b16 %v5573
        %v6283 = vunpack.c.h.b16 %v5573
        %v6284 = vunpack.c.l.b16 %v5574
        %v6285 = vunpack.c.h.b16 %v5574
        %v6286 = vunpack.c.l.b16 %v5575
        %v6287 = vunpack.c.h.b16 %v5575
        %v6288 = vunpack.c.l.b16 %v5576
        %v6289 = vunpack.c.h.b16 %v5576
        %v6290 = vunpack.c.l.b16 %v5577
        %v6291 = vunpack.c.h.b16 %v5577
        %v6292 = vunpack.c.l.b16 %v5578
        %v6293 = vunpack.c.h.b16 %v5578
        %v6294 = vunpack.c.l.b16 %v5579
        %v6295 = vunpack.c.h.b16 %v5579
        %v6296 = vunpack.c.l.b16 %v5580
        %v6297 = vunpack.c.h.b16 %v5580
        %v6298 = vunpack.c.l.b16 %v5581
        %v6299 = vunpack.c.h.b16 %v5581
        %v6300 = vunpack.c.l.b16 %v5582
        %v6301 = vunpack.c.h.b16 %v5582
        %v6302 = vunpack.c.l.b16 %v5583
        %v6303 = vunpack.c.h.b16 %v5583
        %v6304 = vunpack.c.l.b16 %v5584
        %v6305 = vunpack.c.h.b16 %v5584
        %v6306 = vunpack.c.l.b16 %v5585
        %v6307 = vunpack.c.h.b16 %v5585
        %v6308 = vunpack.c.l.b16 %v5586
        %v6309 = vunpack.c.h.b16 %v5586
        %v6310 = vunpack.c.l.b16 %v5587
        %v6311 = vunpack.c.h.b16 %v5587
        %v6312 = vunpack.c.l.b16 %v5588
        %v6313 = vunpack.c.h.b16 %v5588
        %v6314 = vunpack.c.l.b16 %v5589
        %v6315 = vunpack.c.h.b16 %v5589
        %v6316 = vunpack.c.l.b16 %v5590
        %v6317 = vunpack.c.h.b16 %v5590
        %v6318 = vunpack.c.l.b16 %v5591
        %v6319 = vunpack.c.h.b16 %v5591
        %v6320 = vunpack.c.l.b16 %v5592
        %v6321 = vunpack.c.h.b16 %v5592
        %v6322 = vunpack.c.l.b16 %v5593
        %v6323 = vunpack.c.h.b16 %v5593
        %v6324 = vunpack.c.l.b16 %v5594
        %v6325 = vunpack.c.h.b16 %v5594
        %v6326 = vunpack.c.l.b16 %v5595
        %v6327 = vunpack.c.h.b16 %v5595
        %v6328 = vunpack.c.l.b16 %v5596
        %v6329 = vunpack.c.h.b16 %v5596
        %v6330 = vunpack.c.l.b16 %v5597
        %v6331 = vunpack.c.h.b16 %v5597
        %v6332 = vunpack.c.l.b16 %v5598
        %v6333 = vunpack.c.h.b16 %v5598
        %v6334 = vunpack.c.l.b16 %v5599
        %v6335 = vunpack.c.h.b16 %v5599
        %v6336 = vunpack.c.l.b16 %v5600
        %v6337 = vunpack.c.h.b16 %v5600
        %v6338 = vunpack.c.l.b16 %v5601
        %v6339 = vunpack.c.h.b16 %v5601
        %v6340 = vunpack.c.l.b16 %v5602
        %v6341 = vunpack.c.h.b16 %v5602
        %v6342 = vunpack.c.l.b16 %v5603
        %v6343 = vunpack.c.h.b16 %v5603
        %v6344 = vunpack.c.l.b16 %v5604
        %v6345 = vunpack.c.h.b16 %v5604
        %v6346 = vunpack.c.l.b16 %v5605
        %v6347 = vunpack.c.h.b16 %v5605
        %v6348 = vunpack.c.l.b16 %v5606
        %v6349 = vunpack.c.h.b16 %v5606
        %v6350 = vunpack.c.l.b16 %v5607
        %v6351 = vunpack.c.h.b16 %v5607
        %v6352 = vunpack.c.l.b16 %v5608
        %v6353 = vunpack.c.h.b16 %v5608
        %v6354 = vunpack.c.l.b16 %v5609
        %v6355 = vunpack.c.h.b16 %v5609
        %v6356 = vunpack.c.l.b16 %v5610
        %v6357 = vunpack.c.h.b16 %v5610
        %v6358 = vunpack.c.l.b16 %v5611
        %v6359 = vunpack.c.h.b16 %v5611
        %v6360 = vunpack.c.l.b16 %v5612
        %v6361 = vunpack.c.h.b16 %v5612
        %v6362 = vunpack.c.l.b16 %v5613
        %v6363 = vunpack.c.h.b16 %v5613
        %v6364 = vunpack.c.l.b16 %v5614
        %v6365 = vunpack.c.h.b16 %v5614
        %v6366 = vunpack.c.l.b16 %v5615
        %v6367 = vunpack.c.h.b16 %v5615
        %v6368 = vunpack.c.l.b16 %v5616
        %v6369 = vunpack.c.h.b16 %v5616
        %v6370 = vunpack.c.l.b16 %v5617
        %v6371 = vunpack.c.h.b16 %v5617
        %v6372 = vunpack.c.l.b16 %v5618
        %v6373 = vunpack.c.h.b16 %v5618
        %v6374 = vunpack.c.l.b16 %v5619
        %v6375 = vunpack.c.h.b16 %v5619
        %v6376 = vunpack.c.l.b16 %v5620
        %v6377 = vunpack.c.h.b16 %v5620
        %v6378 = vunpack.c.l.b16 %v5621
        %v6379 = vunpack.c.h.b16 %v5621
        %v6380 = vunpack.c.l.b16 %v5622
        %v6381 = vunpack.c.h.b16 %v5622
        %v6382 = vunpack.c.l.b16 %v5623
        %v6383 = vunpack.c.h.b16 %v5623
        %v6384 = vunpack.c.l.b16 %v5624
        %v6385 = vunpack.c.h.b16 %v5624
        %v6386 = vunpack.c.l.b16 %v5625
        %v6387 = vunpack.c.h.b16 %v5625
        %v6388 = vunpack.c.l.b16 %v5626
        %v6389 = vunpack.c.h.b16 %v5626
        %v6390 = vunpack.c.l.b16 %v5627
        %v6391 = vunpack.c.h.b16 %v5627
        %v6392 = vunpack.c.l.b16 %v5628
        %v6393 = vunpack.c.h.b16 %v5628
        %v6394 = vunpack.c.l.b16 %v5629
        %v6395 = vunpack.c.h.b16 %v5629
        %v6396 = vunpack.c.l.b16 %v5630
        %v6397 = vunpack.c.h.b16 %v5630
        %v6398 = vunpack.c.l.b16 %v5631
        %v6399 = vunpack.c.h.b16 %v5631
        %v6400 = vpack.c.b16 %v5888, %v5888
        %v6401 = vpack.c.b16 %v5889, %v5889
        %v6402 = vpack.c.b16 %v5890, %v5890
        %v6403 = vpack.c.b16 %v5891, %v5891
        %v6404 = vpack.c.b16 %v5892, %v5892
        %v6405 = vpack.c.b16 %v5893, %v5893
        %v6406 = vpack.c.b16 %v5894, %v5894
        %v6407 = vpack.c.b16 %v5895, %v5895
        %v6408 = vpack.c.b16 %v5896, %v5896
        %v6409 = vpack.c.b16 %v5897, %v5897
        %v6410 = vpack.c.b16 %v5898, %v5898
        %v6411 = vpack.c.b16 %v5899, %v5899
        %v6412 = vpack.c.b16 %v5900, %v5900
        %v6413 = vpack.c.b16 %v5901, %v5901
        %v6414 = vpack.c.b16 %v5902, %v5902
        %v6415 = vpack.c.b16 %v5903, %v5903
        %v6416 = vpack.c.b16 %v5904, %v5904
        %v6417 = vpack.c.b16 %v5905, %v5905
        %v6418 = vpack.c.b16 %v5906, %v5906
        %v6419 = vpack.c.b16 %v5907, %v5907
        %v6420 = vpack.c.b16 %v5908, %v5908
        %v6421 = vpack.c.b16 %v5909, %v5909
        %v6422 = vpack.c.b16 %v5910, %v5910
        %v6423 = vpack.c.b16 %v5911, %v5911
        %v6424 = vpack.c.b16 %v5912, %v5912
        %v6425 = vpack.c.b16 %v5913, %v5913
        %v6426 = vpack.c.b16 %v5914, %v5914
        %v6427 = vpack.c.b16 %v5915, %v5915
        %v6428 = vpack.c.b16 %v5916, %v5916
        %v6429 = vpack.c.b16 %v5917, %v5917
        %v6430 = vpack.c.b16 %v5918, %v5918
        %v6431 = vpack.c.b16 %v5919, %v5919
        %v6432 = vpack.c.b16 %v5920, %v5920
        %v6433 = vpack.c.b16 %v5921, %v5921
        %v6434 = vpack.c.b16 %v5922, %v5922
        %v6435 = vpack.c.b16 %v5923, %v5923
        %v6436 = vpack.c.b16 %v5924, %v5924
        %v6437 = vpack.c.b16 %v5925, %v5925
        %v6438 = vpack.c.b16 %v5926, %v5926
        %v6439 = vpack.c.b16 %v5927, %v5927
        %v6440 = vpack.c.b16 %v5928, %v5928
        %v6441 = vpack.c.b16 %v5929, %v5929
        %v6442 = vpack.c.b16 %v5930, %v5930
        %v6443 = vpack.c.b16 %v5931, %v5931
        %v6444 = vpack.c.b16 %v5932, %v5932
        %v6445 = vpack.c.b16 %v5933, %v5933
        %v6446 = vpack.c.b16 %v5934, %v5934
        %v6447 = vpack.c.b16 %v5935, %v5935
        %v6448 = vpack.c.b16 %v5936, %v5936
        %v6449 = vpack.c.b16 %v5937, %v5937
        %v6450 = vpack.c.b16 %v5938, %v5938
        %v6451 = vpack.c.b16 %v5939, %v5939
        %v6452 = vpack.c.b16 %v5940, %v5940
        %v6453 = vpack.c.b16 %v5941, %v5941
        %v6454 = vpack.c.b16 %v5942, %v5942
        %v6455 = vpack.c.b16 %v5943, %v5943
        %v6456 = vpack.c.b16 %v5944, %v5944
        %v6457 = vpack.c.b16 %v5945, %v5945
        %v6458 = vpack.c.b16 %v5946, %v5946
        %v6459 = vpack.c.b16 %v5947, %v5947
        %v6460 = vpack.c.b16 %v5948, %v5948
        %v6461 = vpack.c.b16 %v5949, %v5949
        %v6462 = vpack.c.b16 %v5950, %v5950
        %v6463 = vpack.c.b16 %v5951, %v5951
        %v6464 = vpack.c.b16 %v5952, %v5952
        %v6465 = vpack.c.b16 %v5953, %v5953
        %v6466 = vpack.c.b16 %v5954, %v5954
        %v6467 = vpack.c.b16 %v5955, %v5955
        %v6468 = vpack.c.b16 %v5956, %v5956
        %v6469 = vpack.c.b16 %v5957, %v5957
        %v6470 = vpack.c.b16 %v5958, %v5958
        %v6471 = vpack.c.b16 %v5959, %v5959
        %v6472 = vpack.c.b16 %v5960, %v5960
        %v6473 = vpack.c.b16 %v5961, %v5961
        %v6474 = vpack.c.b16 %v5962, %v5962
        %v6475 = vpack.c.b16 %v5963, %v5963
        %v6476 = vpack.c.b16 %v5964, %v5964
        %v6477 = vpack.c.b16 %v5965, %v5965
        %v6478 = vpack.c.b16 %v5966, %v5966
        %v6479 = vpack.c.b16 %v5967, %v5967
        %v6480 = vpack.c.b16 %v5968, %v5968
        %v6481 = vpack.c.b16 %v5969, %v5969
        %v6482 = vpack.c.b16 %v5970, %v5970
        %v6483 = vpack.c.b16 %v5971, %v5971
        %v6484 = vpack.c.b16 %v5972, %v5972
        %v6485 = vpack.c.b16 %v5973, %v5973
        %v6486 = vpack.c.b16 %v5974, %v5974
        %v6487 = vpack.c.b16 %v5975, %v5975
        %v6488 = vpack.c.b16 %v5976, %v5976
        %v6489 = vpack.c.b16 %v5977, %v5977
        %v6490 = vpack.c.b16 %v5978, %v5978
        %v6491 = vpack.c.b16 %v5979, %v5979
        %v6492 = vpack.c.b16 %v5980, %v5980
        %v6493 = vpack.c.b16 %v5981, %v5981
        %v6494 = vpack.c.b16 %v5982, %v5982
        %v6495 = vpack.c.b16 %v5983, %v5983
        %v6496 = vpack.c.b16 %v5984, %v5984
        %v6497 = vpack.c.b16 %v5985, %v5985
        %v6498 = vpack.c.b16 %v5986, %v5986
        %v6499 = vpack.c.b16 %v5987, %v5987
        %v6500 = vpack.c.b16 %v5988, %v5988
        %v6501 = vpack.c.b16 %v5989, %v5989
        %v6502 = vpack.c.b16 %v5990, %v5990
        %v6503 = vpack.c.b16 %v5991, %v5991
        %v6504 = vpack.c.b16 %v5992, %v5992
        %v6505 = vpack.c.b16 %v5993, %v5993
        %v6506 = vpack.c.b16 %v5994, %v5994
        %v6507 = vpack.c.b16 %v5995, %v5995
        %v6508 = vpack.c.b16 %v5996, %v5996
        %v6509 = vpack.c.b16 %v5997, %v5997
        %v6510 = vpack.c.b16 %v5998, %v5998
        %v6511 = vpack.c.b16 %v5999, %v5999
        %v6512 = vpack.c.b16 %v6000, %v6000
        %v6513 = vpack.c.b16 %v6001, %v6001
        %v6514 = vpack.c.b16 %v6002, %v6002
        %v6515 = vpack.c.b16 %v6003, %v6003
        %v6516 = vpack.c.b16 %v6004, %v6004
        %v6517 = vpack.c.b16 %v6005, %v6005
        %v6518 = vpack.c.b16 %v6006, %v6006
        %v6519 = vpack.c.b16 %v6007, %v6007
        %v6520 = vpack.c.b16 %v6008, %v6008
        %v6521 = vpack.c.b16 %v6009, %v6009
        %v6522 = vpack.c.b16 %v6010, %v6010
        %v6523 = vpack.c.b16 %v6011, %v6011
        %v6524 = vpack.c.b16 %v6012, %v6012
        %v6525 = vpack.c.b16 %v6013, %v6013
        %v6526 = vpack.c.b16 %v6014, %v6014
        %v6527 = vpack.c.b16 %v6015, %v6015
        %v6528 = vpack.c.b16 %v6016, %v6016
        %v6529 = vpack.c.b16 %v6017, %v6017
        %v6530 = vpack.c.b16 %v6018, %v6018
        %v6531 = vpack.c.b16 %v6019, %v6019
        %v6532 = vpack.c.b16 %v6020, %v6020
        %v6533 = vpack.c.b16 %v6021, %v6021
        %v6534 = vpack.c.b16 %v6022, %v6022
        %v6535 = vpack.c.b16 %v6023, %v6023
        %v6536 = vpack.c.b16 %v6024, %v6024
        %v6537 = vpack.c.b16 %v6025, %v6025
        %v6538 = vpack.c.b16 %v6026, %v6026
        %v6539 = vpack.c.b16 %v6027, %v6027
        %v6540 = vpack.c.b16 %v6028, %v6028
        %v6541 = vpack.c.b16 %v6029, %v6029
        %v6542 = vpack.c.b16 %v6030, %v6030
        %v6543 = vpack.c.b16 %v6031, %v6031
        %v6544 = vpack.c.b16 %v6032, %v6032
        %v6545 = vpack.c.b16 %v6033, %v6033
        %v6546 = vpack.c.b16 %v6034, %v6034
        %v6547 = vpack.c.b16 %v6035, %v6035
        %v6548 = vpack.c.b16 %v6036, %v6036
        %v6549 = vpack.c.b16 %v6037, %v6037
        %v6550 = vpack.c.b16 %v6038, %v6038
        %v6551 = vpack.c.b16 %v6039, %v6039
        %v6552 = vpack.c.b16 %v6040, %v6040
        %v6553 = vpack.c.b16 %v6041, %v6041
        %v6554 = vpack.c.b16 %v6042, %v6042
        %v6555 = vpack.c.b16 %v6043, %v6043
        %v6556 = vpack.c.b16 %v6044, %v6044
        %v6557 = vpack.c.b16 %v6045, %v6045
        %v6558 = vpack.c.b16 %v6046, %v6046
        %v6559 = vpack.c.b16 %v6047, %v6047
        %v6560 = vpack.c.b16 %v6048, %v6048
        %v6561 = vpack.c.b16 %v6049, %v6049
        %v6562 = vpack.c.b16 %v6050, %v6050
        %v6563 = vpack.c.b16 %v6051, %v6051
        %v6564 = vpack.c.b16 %v6052, %v6052
        %v6565 = vpack.c.b16 %v6053, %v6053
        %v6566 = vpack.c.b16 %v6054, %v6054
        %v6567 = vpack.c.b16 %v6055, %v6055
        %v6568 = vpack.c.b16 %v6056, %v6056
        %v6569 = vpack.c.b16 %v6057, %v6057
        %v6570 = vpack.c.b16 %v6058, %v6058
        %v6571 = vpack.c.b16 %v6059, %v6059
        %v6572 = vpack.c.b16 %v6060, %v6060
        %v6573 = vpack.c.b16 %v6061, %v6061
        %v6574 = vpack.c.b16 %v6062, %v6062
        %v6575 = vpack.c.b16 %v6063, %v6063
        %v6576 = vpack.c.b16 %v6064, %v6064
        %v6577 = vpack.c.b16 %v6065, %v6065
        %v6578 = vpack.c.b16 %v6066, %v6066
        %v6579 = vpack.c.b16 %v6067, %v6067
        %v6580 = vpack.c.b16 %v6068, %v6068
        %v6581 = vpack.c.b16 %v6069, %v6069
        %v6582 = vpack.c.b16 %v6070, %v6070
        %v6583 = vpack.c.b16 %v6071, %v6071
        %v6584 = vpack.c.b16 %v6072, %v6072
        %v6585 = vpack.c.b16 %v6073, %v6073
        %v6586 = vpack.c.b16 %v6074, %v6074
        %v6587 = vpack.c.b16 %v6075, %v6075
        %v6588 = vpack.c.b16 %v6076, %v6076
        %v6589 = vpack.c.b16 %v6077, %v6077
        %v6590 = vpack.c.b16 %v6078, %v6078
        %v6591 = vpack.c.b16 %v6079, %v6079
        %v6592 = vpack.c.b16 %v6080, %v6080
        %v6593 = vpack.c.b16 %v6081, %v6081
        %v6594 = vpack.c.b16 %v6082, %v6082
        %v6595 = vpack.c.b16 %v6083, %v6083
        %v6596 = vpack.c.b16 %v6084, %v6084
        %v6597 = vpack.c.b16 %v6085, %v6085
        %v6598 = vpack.c.b16 %v6086, %v6086
        %v6599 = vpack.c.b16 %v6087, %v6087
        %v6600 = vpack.c.b16 %v6088, %v6088
        %v6601 = vpack.c.b16 %v6089, %v6089
        %v6602 = vpack.c.b16 %v6090, %v6090
        %v6603 = vpack.c.b16 %v6091, %v6091
        %v6604 = vpack.c.b16 %v6092, %v6092
        %v6605 = vpack.c.b16 %v6093, %v6093
        %v6606 = vpack.c.b16 %v6094, %v6094
        %v6607 = vpack.c.b16 %v6095, %v6095
        %v6608 = vpack.c.b16 %v6096, %v6096
        %v6609 = vpack.c.b16 %v6097, %v6097
        %v6610 = vpack.c.b16 %v6098, %v6098
        %v6611 = vpack.c.b16 %v6099, %v6099
        %v6612 = vpack.c.b16 %v6100, %v6100
        %v6613 = vpack.c.b16 %v6101, %v6101
        %v6614 = vpack.c.b16 %v6102, %v6102
        %v6615 = vpack.c.b16 %v6103, %v6103
        %v6616 = vpack.c.b16 %v6104, %v6104
        %v6617 = vpack.c.b16 %v6105, %v6105
        %v6618 = vpack.c.b16 %v6106, %v6106
        %v6619 = vpack.c.b16 %v6107, %v6107
        %v6620 = vpack.c.b16 %v6108, %v6108
        %v6621 = vpack.c.b16 %v6109, %v6109
        %v6622 = vpack.c.b16 %v6110, %v6110
        %v6623 = vpack.c.b16 %v6111, %v6111
        %v6624 = vpack.c.b16 %v6112, %v6112
        %v6625 = vpack.c.b16 %v6113, %v6113
        %v6626 = vpack.c.b16 %v6114, %v6114
        %v6627 = vpack.c.b16 %v6115, %v6115
        %v6628 = vpack.c.b16 %v6116, %v6116
        %v6629 = vpack.c.b16 %v6117, %v6117
        %v6630 = vpack.c.b16 %v6118, %v6118
        %v6631 = vpack.c.b16 %v6119, %v6119
        %v6632 = vpack.c.b16 %v6120, %v6120
        %v6633 = vpack.c.b16 %v6121, %v6121
        %v6634 = vpack.c.b16 %v6122, %v6122
        %v6635 = vpack.c.b16 %v6123, %v6123
        %v6636 = vpack.c.b16 %v6124, %v6124
        %v6637 = vpack.c.b16 %v6125, %v6125
        %v6638 = vpack.c.b16 %v6126, %v6126
        %v6639 = vpack.c.b16 %v6127, %v6127
        %v6640 = vpack.c.b16 %v6128, %v6128
        %v6641 = vpack.c.b16 %v6129, %v6129
        %v6642 = vpack.c.b16 %v6130, %v6130
        %v6643 = vpack.c.b16 %v6131, %v6131
        %v6644 = vpack.c.b16 %v6132, %v6132
        %v6645 = vpack.c.b16 %v6133, %v6133
        %v6646 = vpack.c.b16 %v6134, %v6134
        %v6647 = vpack.c.b16 %v6135, %v6135
        %v6648 = vpack.c.b16 %v6136, %v6136
        %v6649 = vpack.c.b16 %v6137, %v6137
        %v6650 = vpack.c.b16 %v6138, %v6138
        %v6651 = vpack.c.b16 %v6139, %v6139
        %v6652 = vpack.c.b16 %v6140, %v6140
        %v6653 = vpack.c.b16 %v6141, %v6141
        %v6654 = vpack.c.b16 %v6142, %v6142
        %v6655 = vpack.c.b16 %v6143, %v6143
        %v6656 = vpack.c.b16 %v6144, %v6144
        %v6657 = vpack.c.b16 %v6145, %v6145
        %v6658 = vpack.c.b16 %v6146, %v6146
        %v6659 = vpack.c.b16 %v6147, %v6147
        %v6660 = vpack.c.b16 %v6148, %v6148
        %v6661 = vpack.c.b16 %v6149, %v6149
        %v6662 = vpack.c.b16 %v6150, %v6150
        %v6663 = vpack.c.b16 %v6151, %v6151
        %v6664 = vpack.c.b16 %v6152, %v6152
        %v6665 = vpack.c.b16 %v6153, %v6153
        %v6666 = vpack.c.b16 %v6154, %v6154
        %v6667 = vpack.c.b16 %v6155, %v6155
        %v6668 = vpack.c.b16 %v6156, %v6156
        %v6669 = vpack.c.b16 %v6157, %v6157
        %v6670 = vpack.c.b16 %v6158, %v6158
        %v6671 = vpack.c.b16 %v6159, %v6159
        %v6672 = vpack.c.b16 %v6160, %v6160
        %v6673 = vpack.c.b16 %v6161, %v6161
        %v6674 = vpack.c.b16 %v6162, %v6162
        %v6675 = vpack.c.b16 %v6163, %v6163
        %v6676 = vpack.c.b16 %v6164, %v6164
        %v6677 = vpack.c.b16 %v6165, %v6165
        %v6678 = vpack.c.b16 %v6166, %v6166
        %v6679 = vpack.c.b16 %v6167, %v6167
        %v6680 = vpack.c.b16 %v6168, %v6168
        %v6681 = vpack.c.b16 %v6169, %v6169
        %v6682 = vpack.c.b16 %v6170, %v6170
        %v6683 = vpack.c.b16 %v6171, %v6171
        %v6684 = vpack.c.b16 %v6172, %v6172
        %v6685 = vpack.c.b16 %v6173, %v6173
        %v6686 = vpack.c.b16 %v6174, %v6174
        %v6687 = vpack.c.b16 %v6175, %v6175
        %v6688 = vpack.c.b16 %v6176, %v6176
        %v6689 = vpack.c.b16 %v6177, %v6177
        %v6690 = vpack.c.b16 %v6178, %v6178
        %v6691 = vpack.c.b16 %v6179, %v6179
        %v6692 = vpack.c.b16 %v6180, %v6180
        %v6693 = vpack.c.b16 %v6181, %v6181
        %v6694 = vpack.c.b16 %v6182, %v6182
        %v6695 = vpack.c.b16 %v6183, %v6183
        %v6696 = vpack.c.b16 %v6184, %v6184
        %v6697 = vpack.c.b16 %v6185, %v6185
        %v6698 = vpack.c.b16 %v6186, %v6186
        %v6699 = vpack.c.b16 %v6187, %v6187
        %v6700 = vpack.c.b16 %v6188, %v6188
        %v6701 = vpack.c.b16 %v6189, %v6189
        %v6702 = vpack.c.b16 %v6190, %v6190
        %v6703 = vpack.c.b16 %v6191, %v6191
        %v6704 = vpack.c.b16 %v6192, %v6192
        %v6705 = vpack.c.b16 %v6193, %v6193
        %v6706 = vpack.c.b16 %v6194, %v6194
        %v6707 = vpack.c.b16 %v6195, %v6195
        %v6708 = vpack.c.b16 %v6196, %v6196
        %v6709 = vpack.c.b16 %v6197, %v6197
        %v6710 = vpack.c.b16 %v6198, %v6198
        %v6711 = vpack.c.b16 %v6199, %v6199
        %v6712 = vpack.c.b16 %v6200, %v6200
        %v6713 = vpack.c.b16 %v6201, %v6201
        %v6714 = vpack.c.b16 %v6202, %v6202
        %v6715 = vpack.c.b16 %v6203, %v6203
        %v6716 = vpack.c.b16 %v6204, %v6204
        %v6717 = vpack.c.b16 %v6205, %v6205
        %v6718 = vpack.c.b16 %v6206, %v6206
        %v6719 = vpack.c.b16 %v6207, %v6207
        %v6720 = vpack.c.b16 %v6208, %v6208
        %v6721 = vpack.c.b16 %v6209, %v6209
        %v6722 = vpack.c.b16 %v6210, %v6210
        %v6723 = vpack.c.b16 %v6211, %v6211
        %v6724 = vpack.c.b16 %v6212, %v6212
        %v6725 = vpack.c.b16 %v6213, %v6213
        %v6726 = vpack.c.b16 %v6214, %v6214
        %v6727 = vpack.c.b16 %v6215, %v6215
        %v6728 = vpack.c.b16 %v6216, %v6216
        %v6729 = vpack.c.b16 %v6217, %v6217
        %v6730 = vpack.c.b16 %v6218, %v6218
        %v6731 = vpack.c.b16 %v6219, %v6219
        %v6732 = vpack.c.b16 %v6220, %v6220
        %v6733 = vpack.c.b16 %v6221, %v6221
        %v6734 = vpack.c.b16 %v6222, %v6222
        %v6735 = vpack.c.b16 %v6223, %v6223
        %v6736 = vpack.c.b16 %v6224, %v6224
        %v6737 = vpack.c.b16 %v6225, %v6225
        %v6738 = vpack.c.b16 %v6226, %v6226
        %v6739 = vpack.c.b16 %v6227, %v6227
        %v6740 = vpack.c.b16 %v6228, %v6228
        %v6741 = vpack.c.b16 %v6229, %v6229
        %v6742 = vpack.c.b16 %v6230, %v6230
        %v6743 = vpack.c.b16 %v6231, %v6231
        %v6744 = vpack.c.b16 %v6232, %v6232
        %v6745 = vpack.c.b16 %v6233, %v6233
        %v6746 = vpack.c.b16 %v6234, %v6234
        %v6747 = vpack.c.b16 %v6235, %v6235
        %v6748 = vpack.c.b16 %v6236, %v6236
        %v6749 = vpack.c.b16 %v6237, %v6237
        %v6750 = vpack.c.b16 %v6238, %v6238
        %v6751 = vpack.c.b16 %v6239, %v6239
        %v6752 = vpack.c.b16 %v6240, %v6240
        %v6753 = vpack.c.b16 %v6241, %v6241
        %v6754 = vpack.c.b16 %v6242, %v6242
        %v6755 = vpack.c.b16 %v6243, %v6243
        %v6756 = vpack.c.b16 %v6244, %v6244
        %v6757 = vpack.c.b16 %v6245, %v6245
        %v6758 = vpack.c.b16 %v6246, %v6246
        %v6759 = vpack.c.b16 %v6247, %v6247
        %v6760 = vpack.c.b16 %v6248, %v6248
        %v6761 = vpack.c.b16 %v6249, %v6249
        %v6762 = vpack.c.b16 %v6250, %v6250
        %v6763 = vpack.c.b16 %v6251, %v6251
        %v6764 = vpack.c.b16 %v6252, %v6252
        %v6765 = vpack.c.b16 %v6253, %v6253
        %v6766 = vpack.c.b16 %v6254, %v6254
        %v6767 = vpack.c.b16 %v6255, %v6255
        %v6768 = vpack.c.b16 %v6256, %v6256
        %v6769 = vpack.c.b16 %v6257, %v6257
        %v6770 = vpack.c.b16 %v6258, %v6258
        %v6771 = vpack.c.b16 %v6259, %v6259
        %v6772 = vpack.c.b16 %v6260, %v6260
        %v6773 = vpack.c.b16 %v6261, %v6261
        %v6774 = vpack.c.b16 %v6262, %v6262
        %v6775 = vpack.c.b16 %v6263, %v6263
        %v6776 = vpack.c.b16 %v6264, %v6264
        %v6777 = vpack.c.b16 %v6265, %v6265
        %v6778 = vpack.c.b16 %v6266, %v6266
        %v6779 = vpack.c.b16 %v6267, %v6267
        %v6780 = vpack.c.b16 %v6268, %v6268
        %v6781 = vpack.c.b16 %v6269, %v6269
        %v6782 = vpack.c.b16 %v6270, %v6270
        %v6783 = vpack.c.b16 %v6271, %v6271
        %v6784 = vpack.c.b16 %v6272, %v6272
        %v6785 = vpack.c.b16 %v6273, %v6273
        %v6786 = vpack.c.b16 %v6274, %v6274
        %v6787 = vpack.c.b16 %v6275, %v6275
        %v6788 = vpack.c.b16 %v6276, %v6276
        %v6789 = vpack.c.b16 %v6277, %v6277
        %v6790 = vpack.c.b16 %v6278, %v6278
        %v6791 = vpack.c.b16 %v6279, %v6279
        %v6792 = vpack.c.b16 %v6280, %v6280
        %v6793 = vpack.c.b16 %v6281, %v6281
        %v6794 = vpack.c.b16 %v6282, %v6282
        %v6795 = vpack.c.b16 %v6283, %v6283
        %v6796 = vpack.c.b16 %v6284, %v6284
        %v6797 = vpack.c.b16 %v6285, %v6285
        %v6798 = vpack.c.b16 %v6286, %v6286
        %v6799 = vpack.c.b16 %v6287, %v6287
        %v6800 = vpack.c.b16 %v6288, %v6288
        %v6801 = vpack.c.b16 %v6289, %v6289
        %v6802 = vpack.c.b16 %v6290, %v6290
        %v6803 = vpack.c.b16 %v6291, %v6291
        %v6804 = vpack.c.b16 %v6292, %v6292
        %v6805 = vpack.c.b16 %v6293, %v6293
        %v6806 = vpack.c.b16 %v6294, %v6294
        %v6807 = vpack.c.b16 %v6295, %v6295
        %v6808 = vpack.c.b16 %v6296, %v6296
        %v6809 = vpack.c.b16 %v6297, %v6297
        %v6810 = vpack.c.b16 %v6298, %v6298
        %v6811 = vpack.c.b16 %v6299, %v6299
        %v6812 = vpack.c.b16 %v6300, %v6300
        %v6813 = vpack.c.b16 %v6301, %v6301
        %v6814 = vpack.c.b16 %v6302, %v6302
        %v6815 = vpack.c.b16 %v6303, %v6303
        %v6816 = vpack.c.b16 %v6304, %v6304
        %v6817 = vpack.c.b16 %v6305, %v6305
        %v6818 = vpack.c.b16 %v6306, %v6306
        %v6819 = vpack.c.b16 %v6307, %v6307
        %v6820 = vpack.c.b16 %v6308, %v6308
        %v6821 = vpack.c.b16 %v6309, %v6309
        %v6822 = vpack.c.b16 %v6310, %v6310
        %v6823 = vpack.c.b16 %v6311, %v6311
        %v6824 = vpack.c.b16 %v6312, %v6312
        %v6825 = vpack.c.b16 %v6313, %v6313
        %v6826 = vpack.c.b16 %v6314, %v6314
        %v6827 = vpack.c.b16 %v6315, %v6315
        %v6828 = vpack.c.b16 %v6316, %v6316
        %v6829 = vpack.c.b16 %v6317, %v6317
        %v6830 = vpack.c.b16 %v6318, %v6318
        %v6831 = vpack.c.b16 %v6319, %v6319
        %v6832 = vpack.c.b16 %v6320, %v6320
        %v6833 = vpack.c.b16 %v6321, %v6321
        %v6834 = vpack.c.b16 %v6322, %v6322
        %v6835 = vpack.c.b16 %v6323, %v6323
        %v6836 = vpack.c.b16 %v6324, %v6324
        %v6837 = vpack.c.b16 %v6325, %v6325
        %v6838 = vpack.c.b16 %v6326, %v6326
        %v6839 = vpack.c.b16 %v6327, %v6327
        %v6840 = vpack.c.b16 %v6328, %v6328
        %v6841 = vpack.c.b16 %v6329, %v6329
        %v6842 = vpack.c.b16 %v6330, %v6330
        %v6843 = vpack.c.b16 %v6331, %v6331
        %v6844 = vpack.c.b16 %v6332, %v6332
        %v6845 = vpack.c.b16 %v6333, %v6333
        %v6846 = vpack.c.b16 %v6334, %v6334
        %v6847 = vpack.c.b16 %v6335, %v6335
        %v6848 = vpack.c.b16 %v6336, %v6336
        %v6849 = vpack.c.b16 %v6337, %v6337
        %v6850 = vpack.c.b16 %v6338, %v6338
        %v6851 = vpack.c.b16 %v6339, %v6339
        %v6852 = vpack.c.b16 %v6340, %v6340
        %v6853 = vpack.c.b16 %v6341, %v6341
        %v6854 = vpack.c.b16 %v6342, %v6342
        %v6855 = vpack.c.b16 %v6343, %v6343
        %v6856 = vpack.c.b16 %v6344, %v6344
        %v6857 = vpack.c.b16 %v6345, %v6345
        %v6858 = vpack.c.b16 %v6346, %v6346
        %v6859 = vpack.c.b16 %v6347, %v6347
        %v6860 = vpack.c.b16 %v6348, %v6348
        %v6861 = vpack.c.b16 %v6349, %v6349
        %v6862 = vpack.c.b16 %v6350, %v6350
        %v6863 = vpack.c.b16 %v6351, %v6351
        %v6864 = vpack.c.b16 %v6352, %v6352
        %v6865 = vpack.c.b16 %v6353, %v6353
        %v6866 = vpack.c.b16 %v6354, %v6354
        %v6867 = vpack.c.b16 %v6355, %v6355
        %v6868 = vpack.c.b16 %v6356, %v6356
        %v6869 = vpack.c.b16 %v6357, %v6357
        %v6870 = vpack.c.b16 %v6358, %v6358
        %v6871 = vpack.c.b16 %v6359, %v6359
        %v6872 = vpack.c.b16 %v6360, %v6360
        %v6873 = vpack.c.b16 %v6361, %v6361
        %v6874 = vpack.c.b16 %v6362, %v6362
        %v6875 = vpack.c.b16 %v6363, %v6363
        %v6876 = vpack.c.b16 %v6364, %v6364
        %v6877 = vpack.c.b16 %v6365, %v6365
        %v6878 = vpack.c.b16 %v6366, %v6366
        %v6879 = vpack.c.b16 %v6367, %v6367
        %v6880 = vpack.c.b16 %v6368, %v6368
        %v6881 = vpack.c.b16 %v6369, %v6369
        %v6882 = vpack.c.b16 %v6370, %v6370
        %v6883 = vpack.c.b16 %v6371, %v6371
        %v6884 = vpack.c.b16 %v6372, %v6372
        %v6885 = vpack.c.b16 %v6373, %v6373
        %v6886 = vpack.c.b16 %v6374, %v6374
        %v6887 = vpack.c.b16 %v6375, %v6375
        %v6888 = vpack.c.b16 %v6376, %v6376
        %v6889 = vpack.c.b16 %v6377, %v6377
        %v6890 = vpack.c.b16 %v6378, %v6378
        %v6891 = vpack.c.b16 %v6379, %v6379
        %v6892 = vpack.c.b16 %v6380, %v6380
        %v6893 = vpack.c.b16 %v6381, %v6381
        %v6894 = vpack.c.b16 %v6382, %v6382
        %v6895 = vpack.c.b16 %v6383, %v6383
        %v6896 = vpack.c.b16 %v6384, %v6384
        %v6897 = vpack.c.b16 %v6385, %v6385
        %v6898 = vpack.c.b16 %v6386, %v6386
        %v6899 = vpack.c.b16 %v6387, %v6387
        %v6900 = vpack.c.b16 %v6388, %v6388
        %v6901 = vpack.c.b16 %v6389, %v6389
        %v6902 = vpack.c.b16 %v6390, %v6390
        %v6903 = vpack.c.b16 %v6391, %v6391
        %v6904 = vpack.c.b16 %v6392, %v6392
        %v6905 = vpack.c.b16 %v6393, %v6393
        %v6906 = vpack.c.b16 %v6394, %v6394
        %v6907 = vpack.c.b16 %v6395, %v6395
        %v6908 = vpack.c.b16 %v6396, %v6396
        %v6909 = vpack.c.b16 %v6397, %v6397
        %v6910 = vpack.c.b16 %v6398, %v6398
        %v6911 = vpack.c.b16 %v6399, %v6399
        %vm7424 = vcmask 257024
        %7425 = vst.msk [vmem:[%s172] sm:$0xf] %vm7424, %v6400
        %7426 = vst.msk [vmem:[%s172 + $0x4] sm:$0xf] %vm7424, %v6401
        %7427 = vst.msk [vmem:[%s172 + $0x8] sm:$0xf] %vm7424, %v6402
        %7428 = vst.msk [vmem:[%s172 + $0xc] sm:$0xf] %vm7424, %v6403
        %7429 = vst.msk [vmem:[%s172 + $0x10] sm:$0xf] %vm7424, %v6404
        %7430 = vst.msk [vmem:[%s172 + $0x14] sm:$0xf] %vm7424, %v6405
        %7431 = vst.msk [vmem:[%s172 + $0x18] sm:$0xf] %vm7424, %v6406
        %7432 = vst.msk [vmem:[%s172 + $0x1c] sm:$0xf] %vm7424, %v6407
        %7433 = vst.msk [vmem:[%s172 + $0x20] sm:$0xf] %vm7424, %v6408
        %7434 = vst.msk [vmem:[%s172 + $0x24] sm:$0xf] %vm7424, %v6409
        %7435 = vst.msk [vmem:[%s172 + $0x28] sm:$0xf] %vm7424, %v6410
        %7436 = vst.msk [vmem:[%s172 + $0x2c] sm:$0xf] %vm7424, %v6411
        %7437 = vst.msk [vmem:[%s172 + $0x30] sm:$0xf] %vm7424, %v6412
        %7438 = vst.msk [vmem:[%s172 + $0x34] sm:$0xf] %vm7424, %v6413
        %7439 = vst.msk [vmem:[%s172 + $0x38] sm:$0xf] %vm7424, %v6414
        %7440 = vst.msk [vmem:[%s172 + $0x3c] sm:$0xf] %vm7424, %v6415
        %7441 = vst.msk [vmem:[%s172 + $0x40] sm:$0xf] %vm7424, %v6416
        %7442 = vst.msk [vmem:[%s172 + $0x44] sm:$0xf] %vm7424, %v6417
        %7443 = vst.msk [vmem:[%s172 + $0x48] sm:$0xf] %vm7424, %v6418
        %7444 = vst.msk [vmem:[%s172 + $0x4c] sm:$0xf] %vm7424, %v6419
        %7445 = vst.msk [vmem:[%s172 + $0x50] sm:$0xf] %vm7424, %v6420
        %7446 = vst.msk [vmem:[%s172 + $0x54] sm:$0xf] %vm7424, %v6421
        %7447 = vst.msk [vmem:[%s172 + $0x58] sm:$0xf] %vm7424, %v6422
        %7448 = vst.msk [vmem:[%s172 + $0x5c] sm:$0xf] %vm7424, %v6423
        %7449 = vst.msk [vmem:[%s172 + $0x60] sm:$0xf] %vm7424, %v6424
        %7450 = vst.msk [vmem:[%s172 + $0x64] sm:$0xf] %vm7424, %v6425
        %7451 = vst.msk [vmem:[%s172 + $0x68] sm:$0xf] %vm7424, %v6426
        %7452 = vst.msk [vmem:[%s172 + $0x6c] sm:$0xf] %vm7424, %v6427
        %7453 = vst.msk [vmem:[%s172 + $0x70] sm:$0xf] %vm7424, %v6428
        %7454 = vst.msk [vmem:[%s172 + $0x74] sm:$0xf] %vm7424, %v6429
        %7455 = vst.msk [vmem:[%s172 + $0x78] sm:$0xf] %vm7424, %v6430
        %7456 = vst.msk [vmem:[%s172 + $0x7c] sm:$0xf] %vm7424, %v6431
        %7457 = vst.msk [vmem:[%s172 + $0x80] sm:$0xf] %vm7424, %v6432
        %7458 = vst.msk [vmem:[%s172 + $0x84] sm:$0xf] %vm7424, %v6433
        %7459 = vst.msk [vmem:[%s172 + $0x88] sm:$0xf] %vm7424, %v6434
        %7460 = vst.msk [vmem:[%s172 + $0x8c] sm:$0xf] %vm7424, %v6435
        %7461 = vst.msk [vmem:[%s172 + $0x90] sm:$0xf] %vm7424, %v6436
        %7462 = vst.msk [vmem:[%s172 + $0x94] sm:$0xf] %vm7424, %v6437
        %7463 = vst.msk [vmem:[%s172 + $0x98] sm:$0xf] %vm7424, %v6438
        %7464 = vst.msk [vmem:[%s172 + $0x9c] sm:$0xf] %vm7424, %v6439
        %7465 = vst.msk [vmem:[%s172 + $0xa0] sm:$0xf] %vm7424, %v6440
        %7466 = vst.msk [vmem:[%s172 + $0xa4] sm:$0xf] %vm7424, %v6441
        %7467 = vst.msk [vmem:[%s172 + $0xa8] sm:$0xf] %vm7424, %v6442
        %7468 = vst.msk [vmem:[%s172 + $0xac] sm:$0xf] %vm7424, %v6443
        %7469 = vst.msk [vmem:[%s172 + $0xb0] sm:$0xf] %vm7424, %v6444
        %7470 = vst.msk [vmem:[%s172 + $0xb4] sm:$0xf] %vm7424, %v6445
        %7471 = vst.msk [vmem:[%s172 + $0xb8] sm:$0xf] %vm7424, %v6446
        %7472 = vst.msk [vmem:[%s172 + $0xbc] sm:$0xf] %vm7424, %v6447
        %7473 = vst.msk [vmem:[%s172 + $0xc0] sm:$0xf] %vm7424, %v6448
        %7474 = vst.msk [vmem:[%s172 + $0xc4] sm:$0xf] %vm7424, %v6449
        %7475 = vst.msk [vmem:[%s172 + $0xc8] sm:$0xf] %vm7424, %v6450
        %7476 = vst.msk [vmem:[%s172 + $0xcc] sm:$0xf] %vm7424, %v6451
        %7477 = vst.msk [vmem:[%s172 + $0xd0] sm:$0xf] %vm7424, %v6452
        %7478 = vst.msk [vmem:[%s172 + $0xd4] sm:$0xf] %vm7424, %v6453
        %7479 = vst.msk [vmem:[%s172 + $0xd8] sm:$0xf] %vm7424, %v6454
        %7480 = vst.msk [vmem:[%s172 + $0xdc] sm:$0xf] %vm7424, %v6455
        %7481 = vst.msk [vmem:[%s172 + $0xe0] sm:$0xf] %vm7424, %v6456
        %7482 = vst.msk [vmem:[%s172 + $0xe4] sm:$0xf] %vm7424, %v6457
        %7483 = vst.msk [vmem:[%s172 + $0xe8] sm:$0xf] %vm7424, %v6458
        %7484 = vst.msk [vmem:[%s172 + $0xec] sm:$0xf] %vm7424, %v6459
        %7485 = vst.msk [vmem:[%s172 + $0xf0] sm:$0xf] %vm7424, %v6460
        %7486 = vst.msk [vmem:[%s172 + $0xf4] sm:$0xf] %vm7424, %v6461
        %7487 = vst.msk [vmem:[%s172 + $0xf8] sm:$0xf] %vm7424, %v6462
        %7488 = vst.msk [vmem:[%s172 + $0xfc] sm:$0xf] %vm7424, %v6463
        %7489 = vst.msk [vmem:[%s172 + $0x100] sm:$0xf] %vm7424, %v6464
        %7490 = vst.msk [vmem:[%s172 + $0x104] sm:$0xf] %vm7424, %v6465
        %7491 = vst.msk [vmem:[%s172 + $0x108] sm:$0xf] %vm7424, %v6466
        %7492 = vst.msk [vmem:[%s172 + $0x10c] sm:$0xf] %vm7424, %v6467
        %7493 = vst.msk [vmem:[%s172 + $0x110] sm:$0xf] %vm7424, %v6468
        %7494 = vst.msk [vmem:[%s172 + $0x114] sm:$0xf] %vm7424, %v6469
        %7495 = vst.msk [vmem:[%s172 + $0x118] sm:$0xf] %vm7424, %v6470
        %7496 = vst.msk [vmem:[%s172 + $0x11c] sm:$0xf] %vm7424, %v6471
        %7497 = vst.msk [vmem:[%s172 + $0x120] sm:$0xf] %vm7424, %v6472
        %7498 = vst.msk [vmem:[%s172 + $0x124] sm:$0xf] %vm7424, %v6473
        %7499 = vst.msk [vmem:[%s172 + $0x128] sm:$0xf] %vm7424, %v6474
        %7500 = vst.msk [vmem:[%s172 + $0x12c] sm:$0xf] %vm7424, %v6475
        %7501 = vst.msk [vmem:[%s172 + $0x130] sm:$0xf] %vm7424, %v6476
        %7502 = vst.msk [vmem:[%s172 + $0x134] sm:$0xf] %vm7424, %v6477
        %7503 = vst.msk [vmem:[%s172 + $0x138] sm:$0xf] %vm7424, %v6478
        %7504 = vst.msk [vmem:[%s172 + $0x13c] sm:$0xf] %vm7424, %v6479
        %7505 = vst.msk [vmem:[%s172 + $0x140] sm:$0xf] %vm7424, %v6480
        %7506 = vst.msk [vmem:[%s172 + $0x144] sm:$0xf] %vm7424, %v6481
        %7507 = vst.msk [vmem:[%s172 + $0x148] sm:$0xf] %vm7424, %v6482
        %7508 = vst.msk [vmem:[%s172 + $0x14c] sm:$0xf] %vm7424, %v6483
        %7509 = vst.msk [vmem:[%s172 + $0x150] sm:$0xf] %vm7424, %v6484
        %7510 = vst.msk [vmem:[%s172 + $0x154] sm:$0xf] %vm7424, %v6485
        %7511 = vst.msk [vmem:[%s172 + $0x158] sm:$0xf] %vm7424, %v6486
        %7512 = vst.msk [vmem:[%s172 + $0x15c] sm:$0xf] %vm7424, %v6487
        %7513 = vst.msk [vmem:[%s172 + $0x160] sm:$0xf] %vm7424, %v6488
        %7514 = vst.msk [vmem:[%s172 + $0x164] sm:$0xf] %vm7424, %v6489
        %7515 = vst.msk [vmem:[%s172 + $0x168] sm:$0xf] %vm7424, %v6490
        %7516 = vst.msk [vmem:[%s172 + $0x16c] sm:$0xf] %vm7424, %v6491
        %7517 = vst.msk [vmem:[%s172 + $0x170] sm:$0xf] %vm7424, %v6492
        %7518 = vst.msk [vmem:[%s172 + $0x174] sm:$0xf] %vm7424, %v6493
        %7519 = vst.msk [vmem:[%s172 + $0x178] sm:$0xf] %vm7424, %v6494
        %7520 = vst.msk [vmem:[%s172 + $0x17c] sm:$0xf] %vm7424, %v6495
        %7521 = vst.msk [vmem:[%s172 + $0x180] sm:$0xf] %vm7424, %v6496
        %7522 = vst.msk [vmem:[%s172 + $0x184] sm:$0xf] %vm7424, %v6497
        %7523 = vst.msk [vmem:[%s172 + $0x188] sm:$0xf] %vm7424, %v6498
        %7524 = vst.msk [vmem:[%s172 + $0x18c] sm:$0xf] %vm7424, %v6499
        %7525 = vst.msk [vmem:[%s172 + $0x190] sm:$0xf] %vm7424, %v6500
        %7526 = vst.msk [vmem:[%s172 + $0x194] sm:$0xf] %vm7424, %v6501
        %7527 = vst.msk [vmem:[%s172 + $0x198] sm:$0xf] %vm7424, %v6502
        %7528 = vst.msk [vmem:[%s172 + $0x19c] sm:$0xf] %vm7424, %v6503
        %7529 = vst.msk [vmem:[%s172 + $0x1a0] sm:$0xf] %vm7424, %v6504
        %7530 = vst.msk [vmem:[%s172 + $0x1a4] sm:$0xf] %vm7424, %v6505
        %7531 = vst.msk [vmem:[%s172 + $0x1a8] sm:$0xf] %vm7424, %v6506
        %7532 = vst.msk [vmem:[%s172 + $0x1ac] sm:$0xf] %vm7424, %v6507
        %7533 = vst.msk [vmem:[%s172 + $0x1b0] sm:$0xf] %vm7424, %v6508
        %7534 = vst.msk [vmem:[%s172 + $0x1b4] sm:$0xf] %vm7424, %v6509
        %7535 = vst.msk [vmem:[%s172 + $0x1b8] sm:$0xf] %vm7424, %v6510
        %7536 = vst.msk [vmem:[%s172 + $0x1bc] sm:$0xf] %vm7424, %v6511
        %7537 = vst.msk [vmem:[%s172 + $0x1c0] sm:$0xf] %vm7424, %v6512
        %7538 = vst.msk [vmem:[%s172 + $0x1c4] sm:$0xf] %vm7424, %v6513
        %7539 = vst.msk [vmem:[%s172 + $0x1c8] sm:$0xf] %vm7424, %v6514
        %7540 = vst.msk [vmem:[%s172 + $0x1cc] sm:$0xf] %vm7424, %v6515
        %7541 = vst.msk [vmem:[%s172 + $0x1d0] sm:$0xf] %vm7424, %v6516
        %7542 = vst.msk [vmem:[%s172 + $0x1d4] sm:$0xf] %vm7424, %v6517
        %7543 = vst.msk [vmem:[%s172 + $0x1d8] sm:$0xf] %vm7424, %v6518
        %7544 = vst.msk [vmem:[%s172 + $0x1dc] sm:$0xf] %vm7424, %v6519
        %7545 = vst.msk [vmem:[%s172 + $0x1e0] sm:$0xf] %vm7424, %v6520
        %7546 = vst.msk [vmem:[%s172 + $0x1e4] sm:$0xf] %vm7424, %v6521
        %7547 = vst.msk [vmem:[%s172 + $0x1e8] sm:$0xf] %vm7424, %v6522
        %7548 = vst.msk [vmem:[%s172 + $0x1ec] sm:$0xf] %vm7424, %v6523
        %7549 = vst.msk [vmem:[%s172 + $0x1f0] sm:$0xf] %vm7424, %v6524
        %7550 = vst.msk [vmem:[%s172 + $0x1f4] sm:$0xf] %vm7424, %v6525
        %7551 = vst.msk [vmem:[%s172 + $0x1f8] sm:$0xf] %vm7424, %v6526
        %7552 = vst.msk [vmem:[%s172 + $0x1fc] sm:$0xf] %vm7424, %v6527
        %7553 = vst.msk [vmem:[%s172 + $0x200] sm:$0xf] %vm7424, %v6528
        %7554 = vst.msk [vmem:[%s172 + $0x204] sm:$0xf] %vm7424, %v6529
        %7555 = vst.msk [vmem:[%s172 + $0x208] sm:$0xf] %vm7424, %v6530
        %7556 = vst.msk [vmem:[%s172 + $0x20c] sm:$0xf] %vm7424, %v6531
        %7557 = vst.msk [vmem:[%s172 + $0x210] sm:$0xf] %vm7424, %v6532
        %7558 = vst.msk [vmem:[%s172 + $0x214] sm:$0xf] %vm7424, %v6533
        %7559 = vst.msk [vmem:[%s172 + $0x218] sm:$0xf] %vm7424, %v6534
        %7560 = vst.msk [vmem:[%s172 + $0x21c] sm:$0xf] %vm7424, %v6535
        %7561 = vst.msk [vmem:[%s172 + $0x220] sm:$0xf] %vm7424, %v6536
        %7562 = vst.msk [vmem:[%s172 + $0x224] sm:$0xf] %vm7424, %v6537
        %7563 = vst.msk [vmem:[%s172 + $0x228] sm:$0xf] %vm7424, %v6538
        %7564 = vst.msk [vmem:[%s172 + $0x22c] sm:$0xf] %vm7424, %v6539
        %7565 = vst.msk [vmem:[%s172 + $0x230] sm:$0xf] %vm7424, %v6540
        %7566 = vst.msk [vmem:[%s172 + $0x234] sm:$0xf] %vm7424, %v6541
        %7567 = vst.msk [vmem:[%s172 + $0x238] sm:$0xf] %vm7424, %v6542
        %7568 = vst.msk [vmem:[%s172 + $0x23c] sm:$0xf] %vm7424, %v6543
        %7569 = vst.msk [vmem:[%s172 + $0x240] sm:$0xf] %vm7424, %v6544
        %7570 = vst.msk [vmem:[%s172 + $0x244] sm:$0xf] %vm7424, %v6545
        %7571 = vst.msk [vmem:[%s172 + $0x248] sm:$0xf] %vm7424, %v6546
        %7572 = vst.msk [vmem:[%s172 + $0x24c] sm:$0xf] %vm7424, %v6547
        %7573 = vst.msk [vmem:[%s172 + $0x250] sm:$0xf] %vm7424, %v6548
        %7574 = vst.msk [vmem:[%s172 + $0x254] sm:$0xf] %vm7424, %v6549
        %7575 = vst.msk [vmem:[%s172 + $0x258] sm:$0xf] %vm7424, %v6550
        %7576 = vst.msk [vmem:[%s172 + $0x25c] sm:$0xf] %vm7424, %v6551
        %7577 = vst.msk [vmem:[%s172 + $0x260] sm:$0xf] %vm7424, %v6552
        %7578 = vst.msk [vmem:[%s172 + $0x264] sm:$0xf] %vm7424, %v6553
        %7579 = vst.msk [vmem:[%s172 + $0x268] sm:$0xf] %vm7424, %v6554
        %7580 = vst.msk [vmem:[%s172 + $0x26c] sm:$0xf] %vm7424, %v6555
        %7581 = vst.msk [vmem:[%s172 + $0x270] sm:$0xf] %vm7424, %v6556
        %7582 = vst.msk [vmem:[%s172 + $0x274] sm:$0xf] %vm7424, %v6557
        %7583 = vst.msk [vmem:[%s172 + $0x278] sm:$0xf] %vm7424, %v6558
        %7584 = vst.msk [vmem:[%s172 + $0x27c] sm:$0xf] %vm7424, %v6559
        %7585 = vst.msk [vmem:[%s172 + $0x280] sm:$0xf] %vm7424, %v6560
        %7586 = vst.msk [vmem:[%s172 + $0x284] sm:$0xf] %vm7424, %v6561
        %7587 = vst.msk [vmem:[%s172 + $0x288] sm:$0xf] %vm7424, %v6562
        %7588 = vst.msk [vmem:[%s172 + $0x28c] sm:$0xf] %vm7424, %v6563
        %7589 = vst.msk [vmem:[%s172 + $0x290] sm:$0xf] %vm7424, %v6564
        %7590 = vst.msk [vmem:[%s172 + $0x294] sm:$0xf] %vm7424, %v6565
        %7591 = vst.msk [vmem:[%s172 + $0x298] sm:$0xf] %vm7424, %v6566
        %7592 = vst.msk [vmem:[%s172 + $0x29c] sm:$0xf] %vm7424, %v6567
        %7593 = vst.msk [vmem:[%s172 + $0x2a0] sm:$0xf] %vm7424, %v6568
        %7594 = vst.msk [vmem:[%s172 + $0x2a4] sm:$0xf] %vm7424, %v6569
        %7595 = vst.msk [vmem:[%s172 + $0x2a8] sm:$0xf] %vm7424, %v6570
        %7596 = vst.msk [vmem:[%s172 + $0x2ac] sm:$0xf] %vm7424, %v6571
        %7597 = vst.msk [vmem:[%s172 + $0x2b0] sm:$0xf] %vm7424, %v6572
        %7598 = vst.msk [vmem:[%s172 + $0x2b4] sm:$0xf] %vm7424, %v6573
        %7599 = vst.msk [vmem:[%s172 + $0x2b8] sm:$0xf] %vm7424, %v6574
        %7600 = vst.msk [vmem:[%s172 + $0x2bc] sm:$0xf] %vm7424, %v6575
        %7601 = vst.msk [vmem:[%s172 + $0x2c0] sm:$0xf] %vm7424, %v6576
        %7602 = vst.msk [vmem:[%s172 + $0x2c4] sm:$0xf] %vm7424, %v6577
        %7603 = vst.msk [vmem:[%s172 + $0x2c8] sm:$0xf] %vm7424, %v6578
        %7604 = vst.msk [vmem:[%s172 + $0x2cc] sm:$0xf] %vm7424, %v6579
        %7605 = vst.msk [vmem:[%s172 + $0x2d0] sm:$0xf] %vm7424, %v6580
        %7606 = vst.msk [vmem:[%s172 + $0x2d4] sm:$0xf] %vm7424, %v6581
        %7607 = vst.msk [vmem:[%s172 + $0x2d8] sm:$0xf] %vm7424, %v6582
        %7608 = vst.msk [vmem:[%s172 + $0x2dc] sm:$0xf] %vm7424, %v6583
        %7609 = vst.msk [vmem:[%s172 + $0x2e0] sm:$0xf] %vm7424, %v6584
        %7610 = vst.msk [vmem:[%s172 + $0x2e4] sm:$0xf] %vm7424, %v6585
        %7611 = vst.msk [vmem:[%s172 + $0x2e8] sm:$0xf] %vm7424, %v6586
        %7612 = vst.msk [vmem:[%s172 + $0x2ec] sm:$0xf] %vm7424, %v6587
        %7613 = vst.msk [vmem:[%s172 + $0x2f0] sm:$0xf] %vm7424, %v6588
        %7614 = vst.msk [vmem:[%s172 + $0x2f4] sm:$0xf] %vm7424, %v6589
        %7615 = vst.msk [vmem:[%s172 + $0x2f8] sm:$0xf] %vm7424, %v6590
        %7616 = vst.msk [vmem:[%s172 + $0x2fc] sm:$0xf] %vm7424, %v6591
        %7617 = vst.msk [vmem:[%s172 + $0x300] sm:$0xf] %vm7424, %v6592
        %7618 = vst.msk [vmem:[%s172 + $0x304] sm:$0xf] %vm7424, %v6593
        %7619 = vst.msk [vmem:[%s172 + $0x308] sm:$0xf] %vm7424, %v6594
        %7620 = vst.msk [vmem:[%s172 + $0x30c] sm:$0xf] %vm7424, %v6595
        %7621 = vst.msk [vmem:[%s172 + $0x310] sm:$0xf] %vm7424, %v6596
        %7622 = vst.msk [vmem:[%s172 + $0x314] sm:$0xf] %vm7424, %v6597
        %7623 = vst.msk [vmem:[%s172 + $0x318] sm:$0xf] %vm7424, %v6598
        %7624 = vst.msk [vmem:[%s172 + $0x31c] sm:$0xf] %vm7424, %v6599
        %7625 = vst.msk [vmem:[%s172 + $0x320] sm:$0xf] %vm7424, %v6600
        %7626 = vst.msk [vmem:[%s172 + $0x324] sm:$0xf] %vm7424, %v6601
        %7627 = vst.msk [vmem:[%s172 + $0x328] sm:$0xf] %vm7424, %v6602
        %7628 = vst.msk [vmem:[%s172 + $0x32c] sm:$0xf] %vm7424, %v6603
        %7629 = vst.msk [vmem:[%s172 + $0x330] sm:$0xf] %vm7424, %v6604
        %7630 = vst.msk [vmem:[%s172 + $0x334] sm:$0xf] %vm7424, %v6605
        %7631 = vst.msk [vmem:[%s172 + $0x338] sm:$0xf] %vm7424, %v6606
        %7632 = vst.msk [vmem:[%s172 + $0x33c] sm:$0xf] %vm7424, %v6607
        %7633 = vst.msk [vmem:[%s172 + $0x340] sm:$0xf] %vm7424, %v6608
        %7634 = vst.msk [vmem:[%s172 + $0x344] sm:$0xf] %vm7424, %v6609
        %7635 = vst.msk [vmem:[%s172 + $0x348] sm:$0xf] %vm7424, %v6610
        %7636 = vst.msk [vmem:[%s172 + $0x34c] sm:$0xf] %vm7424, %v6611
        %7637 = vst.msk [vmem:[%s172 + $0x350] sm:$0xf] %vm7424, %v6612
        %7638 = vst.msk [vmem:[%s172 + $0x354] sm:$0xf] %vm7424, %v6613
        %7639 = vst.msk [vmem:[%s172 + $0x358] sm:$0xf] %vm7424, %v6614
        %7640 = vst.msk [vmem:[%s172 + $0x35c] sm:$0xf] %vm7424, %v6615
        %7641 = vst.msk [vmem:[%s172 + $0x360] sm:$0xf] %vm7424, %v6616
        %7642 = vst.msk [vmem:[%s172 + $0x364] sm:$0xf] %vm7424, %v6617
        %7643 = vst.msk [vmem:[%s172 + $0x368] sm:$0xf] %vm7424, %v6618
        %7644 = vst.msk [vmem:[%s172 + $0x36c] sm:$0xf] %vm7424, %v6619
        %7645 = vst.msk [vmem:[%s172 + $0x370] sm:$0xf] %vm7424, %v6620
        %7646 = vst.msk [vmem:[%s172 + $0x374] sm:$0xf] %vm7424, %v6621
        %7647 = vst.msk [vmem:[%s172 + $0x378] sm:$0xf] %vm7424, %v6622
        %7648 = vst.msk [vmem:[%s172 + $0x37c] sm:$0xf] %vm7424, %v6623
        %7649 = vst.msk [vmem:[%s172 + $0x380] sm:$0xf] %vm7424, %v6624
        %7650 = vst.msk [vmem:[%s172 + $0x384] sm:$0xf] %vm7424, %v6625
        %7651 = vst.msk [vmem:[%s172 + $0x388] sm:$0xf] %vm7424, %v6626
        %7652 = vst.msk [vmem:[%s172 + $0x38c] sm:$0xf] %vm7424, %v6627
        %7653 = vst.msk [vmem:[%s172 + $0x390] sm:$0xf] %vm7424, %v6628
        %7654 = vst.msk [vmem:[%s172 + $0x394] sm:$0xf] %vm7424, %v6629
        %7655 = vst.msk [vmem:[%s172 + $0x398] sm:$0xf] %vm7424, %v6630
        %7656 = vst.msk [vmem:[%s172 + $0x39c] sm:$0xf] %vm7424, %v6631
        %7657 = vst.msk [vmem:[%s172 + $0x3a0] sm:$0xf] %vm7424, %v6632
        %7658 = vst.msk [vmem:[%s172 + $0x3a4] sm:$0xf] %vm7424, %v6633
        %7659 = vst.msk [vmem:[%s172 + $0x3a8] sm:$0xf] %vm7424, %v6634
        %7660 = vst.msk [vmem:[%s172 + $0x3ac] sm:$0xf] %vm7424, %v6635
        %7661 = vst.msk [vmem:[%s172 + $0x3b0] sm:$0xf] %vm7424, %v6636
        %7662 = vst.msk [vmem:[%s172 + $0x3b4] sm:$0xf] %vm7424, %v6637
        %7663 = vst.msk [vmem:[%s172 + $0x3b8] sm:$0xf] %vm7424, %v6638
        %7664 = vst.msk [vmem:[%s172 + $0x3bc] sm:$0xf] %vm7424, %v6639
        %7665 = vst.msk [vmem:[%s172 + $0x3c0] sm:$0xf] %vm7424, %v6640
        %7666 = vst.msk [vmem:[%s172 + $0x3c4] sm:$0xf] %vm7424, %v6641
        %7667 = vst.msk [vmem:[%s172 + $0x3c8] sm:$0xf] %vm7424, %v6642
        %7668 = vst.msk [vmem:[%s172 + $0x3cc] sm:$0xf] %vm7424, %v6643
        %7669 = vst.msk [vmem:[%s172 + $0x3d0] sm:$0xf] %vm7424, %v6644
        %7670 = vst.msk [vmem:[%s172 + $0x3d4] sm:$0xf] %vm7424, %v6645
        %7671 = vst.msk [vmem:[%s172 + $0x3d8] sm:$0xf] %vm7424, %v6646
        %7672 = vst.msk [vmem:[%s172 + $0x3dc] sm:$0xf] %vm7424, %v6647
        %7673 = vst.msk [vmem:[%s172 + $0x3e0] sm:$0xf] %vm7424, %v6648
        %7674 = vst.msk [vmem:[%s172 + $0x3e4] sm:$0xf] %vm7424, %v6649
        %7675 = vst.msk [vmem:[%s172 + $0x3e8] sm:$0xf] %vm7424, %v6650
        %7676 = vst.msk [vmem:[%s172 + $0x3ec] sm:$0xf] %vm7424, %v6651
        %7677 = vst.msk [vmem:[%s172 + $0x3f0] sm:$0xf] %vm7424, %v6652
        %7678 = vst.msk [vmem:[%s172 + $0x3f4] sm:$0xf] %vm7424, %v6653
        %7679 = vst.msk [vmem:[%s172 + $0x3f8] sm:$0xf] %vm7424, %v6654
        %7680 = vst.msk [vmem:[%s172 + $0x3fc] sm:$0xf] %vm7424, %v6655
        %7681 = vst.msk [vmem:[%s172 + $0x400] sm:$0xf] %vm7424, %v6656
        %7682 = vst.msk [vmem:[%s172 + $0x404] sm:$0xf] %vm7424, %v6657
        %7683 = vst.msk [vmem:[%s172 + $0x408] sm:$0xf] %vm7424, %v6658
        %7684 = vst.msk [vmem:[%s172 + $0x40c] sm:$0xf] %vm7424, %v6659
        %7685 = vst.msk [vmem:[%s172 + $0x410] sm:$0xf] %vm7424, %v6660
        %7686 = vst.msk [vmem:[%s172 + $0x414] sm:$0xf] %vm7424, %v6661
        %7687 = vst.msk [vmem:[%s172 + $0x418] sm:$0xf] %vm7424, %v6662
        %7688 = vst.msk [vmem:[%s172 + $0x41c] sm:$0xf] %vm7424, %v6663
        %7689 = vst.msk [vmem:[%s172 + $0x420] sm:$0xf] %vm7424, %v6664
        %7690 = vst.msk [vmem:[%s172 + $0x424] sm:$0xf] %vm7424, %v6665
        %7691 = vst.msk [vmem:[%s172 + $0x428] sm:$0xf] %vm7424, %v6666
        %7692 = vst.msk [vmem:[%s172 + $0x42c] sm:$0xf] %vm7424, %v6667
        %7693 = vst.msk [vmem:[%s172 + $0x430] sm:$0xf] %vm7424, %v6668
        %7694 = vst.msk [vmem:[%s172 + $0x434] sm:$0xf] %vm7424, %v6669
        %7695 = vst.msk [vmem:[%s172 + $0x438] sm:$0xf] %vm7424, %v6670
        %7696 = vst.msk [vmem:[%s172 + $0x43c] sm:$0xf] %vm7424, %v6671
        %7697 = vst.msk [vmem:[%s172 + $0x440] sm:$0xf] %vm7424, %v6672
        %7698 = vst.msk [vmem:[%s172 + $0x444] sm:$0xf] %vm7424, %v6673
        %7699 = vst.msk [vmem:[%s172 + $0x448] sm:$0xf] %vm7424, %v6674
        %7700 = vst.msk [vmem:[%s172 + $0x44c] sm:$0xf] %vm7424, %v6675
        %7701 = vst.msk [vmem:[%s172 + $0x450] sm:$0xf] %vm7424, %v6676
        %7702 = vst.msk [vmem:[%s172 + $0x454] sm:$0xf] %vm7424, %v6677
        %7703 = vst.msk [vmem:[%s172 + $0x458] sm:$0xf] %vm7424, %v6678
        %7704 = vst.msk [vmem:[%s172 + $0x45c] sm:$0xf] %vm7424, %v6679
        %7705 = vst.msk [vmem:[%s172 + $0x460] sm:$0xf] %vm7424, %v6680
        %7706 = vst.msk [vmem:[%s172 + $0x464] sm:$0xf] %vm7424, %v6681
        %7707 = vst.msk [vmem:[%s172 + $0x468] sm:$0xf] %vm7424, %v6682
        %7708 = vst.msk [vmem:[%s172 + $0x46c] sm:$0xf] %vm7424, %v6683
        %7709 = vst.msk [vmem:[%s172 + $0x470] sm:$0xf] %vm7424, %v6684
        %7710 = vst.msk [vmem:[%s172 + $0x474] sm:$0xf] %vm7424, %v6685
        %7711 = vst.msk [vmem:[%s172 + $0x478] sm:$0xf] %vm7424, %v6686
        %7712 = vst.msk [vmem:[%s172 + $0x47c] sm:$0xf] %vm7424, %v6687
        %7713 = vst.msk [vmem:[%s172 + $0x480] sm:$0xf] %vm7424, %v6688
        %7714 = vst.msk [vmem:[%s172 + $0x484] sm:$0xf] %vm7424, %v6689
        %7715 = vst.msk [vmem:[%s172 + $0x488] sm:$0xf] %vm7424, %v6690
        %7716 = vst.msk [vmem:[%s172 + $0x48c] sm:$0xf] %vm7424, %v6691
        %7717 = vst.msk [vmem:[%s172 + $0x490] sm:$0xf] %vm7424, %v6692
        %7718 = vst.msk [vmem:[%s172 + $0x494] sm:$0xf] %vm7424, %v6693
        %7719 = vst.msk [vmem:[%s172 + $0x498] sm:$0xf] %vm7424, %v6694
        %7720 = vst.msk [vmem:[%s172 + $0x49c] sm:$0xf] %vm7424, %v6695
        %7721 = vst.msk [vmem:[%s172 + $0x4a0] sm:$0xf] %vm7424, %v6696
        %7722 = vst.msk [vmem:[%s172 + $0x4a4] sm:$0xf] %vm7424, %v6697
        %7723 = vst.msk [vmem:[%s172 + $0x4a8] sm:$0xf] %vm7424, %v6698
        %7724 = vst.msk [vmem:[%s172 + $0x4ac] sm:$0xf] %vm7424, %v6699
        %7725 = vst.msk [vmem:[%s172 + $0x4b0] sm:$0xf] %vm7424, %v6700
        %7726 = vst.msk [vmem:[%s172 + $0x4b4] sm:$0xf] %vm7424, %v6701
        %7727 = vst.msk [vmem:[%s172 + $0x4b8] sm:$0xf] %vm7424, %v6702
        %7728 = vst.msk [vmem:[%s172 + $0x4bc] sm:$0xf] %vm7424, %v6703
        %7729 = vst.msk [vmem:[%s172 + $0x4c0] sm:$0xf] %vm7424, %v6704
        %7730 = vst.msk [vmem:[%s172 + $0x4c4] sm:$0xf] %vm7424, %v6705
        %7731 = vst.msk [vmem:[%s172 + $0x4c8] sm:$0xf] %vm7424, %v6706
        %7732 = vst.msk [vmem:[%s172 + $0x4cc] sm:$0xf] %vm7424, %v6707
        %7733 = vst.msk [vmem:[%s172 + $0x4d0] sm:$0xf] %vm7424, %v6708
        %7734 = vst.msk [vmem:[%s172 + $0x4d4] sm:$0xf] %vm7424, %v6709
        %7735 = vst.msk [vmem:[%s172 + $0x4d8] sm:$0xf] %vm7424, %v6710
        %7736 = vst.msk [vmem:[%s172 + $0x4dc] sm:$0xf] %vm7424, %v6711
        %7737 = vst.msk [vmem:[%s172 + $0x4e0] sm:$0xf] %vm7424, %v6712
        %7738 = vst.msk [vmem:[%s172 + $0x4e4] sm:$0xf] %vm7424, %v6713
        %7739 = vst.msk [vmem:[%s172 + $0x4e8] sm:$0xf] %vm7424, %v6714
        %7740 = vst.msk [vmem:[%s172 + $0x4ec] sm:$0xf] %vm7424, %v6715
        %7741 = vst.msk [vmem:[%s172 + $0x4f0] sm:$0xf] %vm7424, %v6716
        %7742 = vst.msk [vmem:[%s172 + $0x4f4] sm:$0xf] %vm7424, %v6717
        %7743 = vst.msk [vmem:[%s172 + $0x4f8] sm:$0xf] %vm7424, %v6718
        %7744 = vst.msk [vmem:[%s172 + $0x4fc] sm:$0xf] %vm7424, %v6719
        %7745 = vst.msk [vmem:[%s172 + $0x500] sm:$0xf] %vm7424, %v6720
        %7746 = vst.msk [vmem:[%s172 + $0x504] sm:$0xf] %vm7424, %v6721
        %7747 = vst.msk [vmem:[%s172 + $0x508] sm:$0xf] %vm7424, %v6722
        %7748 = vst.msk [vmem:[%s172 + $0x50c] sm:$0xf] %vm7424, %v6723
        %7749 = vst.msk [vmem:[%s172 + $0x510] sm:$0xf] %vm7424, %v6724
        %7750 = vst.msk [vmem:[%s172 + $0x514] sm:$0xf] %vm7424, %v6725
        %7751 = vst.msk [vmem:[%s172 + $0x518] sm:$0xf] %vm7424, %v6726
        %7752 = vst.msk [vmem:[%s172 + $0x51c] sm:$0xf] %vm7424, %v6727
        %7753 = vst.msk [vmem:[%s172 + $0x520] sm:$0xf] %vm7424, %v6728
        %7754 = vst.msk [vmem:[%s172 + $0x524] sm:$0xf] %vm7424, %v6729
        %7755 = vst.msk [vmem:[%s172 + $0x528] sm:$0xf] %vm7424, %v6730
        %7756 = vst.msk [vmem:[%s172 + $0x52c] sm:$0xf] %vm7424, %v6731
        %7757 = vst.msk [vmem:[%s172 + $0x530] sm:$0xf] %vm7424, %v6732
        %7758 = vst.msk [vmem:[%s172 + $0x534] sm:$0xf] %vm7424, %v6733
        %7759 = vst.msk [vmem:[%s172 + $0x538] sm:$0xf] %vm7424, %v6734
        %7760 = vst.msk [vmem:[%s172 + $0x53c] sm:$0xf] %vm7424, %v6735
        %7761 = vst.msk [vmem:[%s172 + $0x540] sm:$0xf] %vm7424, %v6736
        %7762 = vst.msk [vmem:[%s172 + $0x544] sm:$0xf] %vm7424, %v6737
        %7763 = vst.msk [vmem:[%s172 + $0x548] sm:$0xf] %vm7424, %v6738
        %7764 = vst.msk [vmem:[%s172 + $0x54c] sm:$0xf] %vm7424, %v6739
        %7765 = vst.msk [vmem:[%s172 + $0x550] sm:$0xf] %vm7424, %v6740
        %7766 = vst.msk [vmem:[%s172 + $0x554] sm:$0xf] %vm7424, %v6741
        %7767 = vst.msk [vmem:[%s172 + $0x558] sm:$0xf] %vm7424, %v6742
        %7768 = vst.msk [vmem:[%s172 + $0x55c] sm:$0xf] %vm7424, %v6743
        %7769 = vst.msk [vmem:[%s172 + $0x560] sm:$0xf] %vm7424, %v6744
        %7770 = vst.msk [vmem:[%s172 + $0x564] sm:$0xf] %vm7424, %v6745
        %7771 = vst.msk [vmem:[%s172 + $0x568] sm:$0xf] %vm7424, %v6746
        %7772 = vst.msk [vmem:[%s172 + $0x56c] sm:$0xf] %vm7424, %v6747
        %7773 = vst.msk [vmem:[%s172 + $0x570] sm:$0xf] %vm7424, %v6748
        %7774 = vst.msk [vmem:[%s172 + $0x574] sm:$0xf] %vm7424, %v6749
        %7775 = vst.msk [vmem:[%s172 + $0x578] sm:$0xf] %vm7424, %v6750
        %7776 = vst.msk [vmem:[%s172 + $0x57c] sm:$0xf] %vm7424, %v6751
        %7777 = vst.msk [vmem:[%s172 + $0x580] sm:$0xf] %vm7424, %v6752
        %7778 = vst.msk [vmem:[%s172 + $0x584] sm:$0xf] %vm7424, %v6753
        %7779 = vst.msk [vmem:[%s172 + $0x588] sm:$0xf] %vm7424, %v6754
        %7780 = vst.msk [vmem:[%s172 + $0x58c] sm:$0xf] %vm7424, %v6755
        %7781 = vst.msk [vmem:[%s172 + $0x590] sm:$0xf] %vm7424, %v6756
        %7782 = vst.msk [vmem:[%s172 + $0x594] sm:$0xf] %vm7424, %v6757
        %7783 = vst.msk [vmem:[%s172 + $0x598] sm:$0xf] %vm7424, %v6758
        %7784 = vst.msk [vmem:[%s172 + $0x59c] sm:$0xf] %vm7424, %v6759
        %7785 = vst.msk [vmem:[%s172 + $0x5a0] sm:$0xf] %vm7424, %v6760
        %7786 = vst.msk [vmem:[%s172 + $0x5a4] sm:$0xf] %vm7424, %v6761
        %7787 = vst.msk [vmem:[%s172 + $0x5a8] sm:$0xf] %vm7424, %v6762
        %7788 = vst.msk [vmem:[%s172 + $0x5ac] sm:$0xf] %vm7424, %v6763
        %7789 = vst.msk [vmem:[%s172 + $0x5b0] sm:$0xf] %vm7424, %v6764
        %7790 = vst.msk [vmem:[%s172 + $0x5b4] sm:$0xf] %vm7424, %v6765
        %7791 = vst.msk [vmem:[%s172 + $0x5b8] sm:$0xf] %vm7424, %v6766
        %7792 = vst.msk [vmem:[%s172 + $0x5bc] sm:$0xf] %vm7424, %v6767
        %7793 = vst.msk [vmem:[%s172 + $0x5c0] sm:$0xf] %vm7424, %v6768
        %7794 = vst.msk [vmem:[%s172 + $0x5c4] sm:$0xf] %vm7424, %v6769
        %7795 = vst.msk [vmem:[%s172 + $0x5c8] sm:$0xf] %vm7424, %v6770
        %7796 = vst.msk [vmem:[%s172 + $0x5cc] sm:$0xf] %vm7424, %v6771
        %7797 = vst.msk [vmem:[%s172 + $0x5d0] sm:$0xf] %vm7424, %v6772
        %7798 = vst.msk [vmem:[%s172 + $0x5d4] sm:$0xf] %vm7424, %v6773
        %7799 = vst.msk [vmem:[%s172 + $0x5d8] sm:$0xf] %vm7424, %v6774
        %7800 = vst.msk [vmem:[%s172 + $0x5dc] sm:$0xf] %vm7424, %v6775
        %7801 = vst.msk [vmem:[%s172 + $0x5e0] sm:$0xf] %vm7424, %v6776
        %7802 = vst.msk [vmem:[%s172 + $0x5e4] sm:$0xf] %vm7424, %v6777
        %7803 = vst.msk [vmem:[%s172 + $0x5e8] sm:$0xf] %vm7424, %v6778
        %7804 = vst.msk [vmem:[%s172 + $0x5ec] sm:$0xf] %vm7424, %v6779
        %7805 = vst.msk [vmem:[%s172 + $0x5f0] sm:$0xf] %vm7424, %v6780
        %7806 = vst.msk [vmem:[%s172 + $0x5f4] sm:$0xf] %vm7424, %v6781
        %7807 = vst.msk [vmem:[%s172 + $0x5f8] sm:$0xf] %vm7424, %v6782
        %7808 = vst.msk [vmem:[%s172 + $0x5fc] sm:$0xf] %vm7424, %v6783
        %7809 = vst.msk [vmem:[%s172 + $0x600] sm:$0xf] %vm7424, %v6784
        %7810 = vst.msk [vmem:[%s172 + $0x604] sm:$0xf] %vm7424, %v6785
        %7811 = vst.msk [vmem:[%s172 + $0x608] sm:$0xf] %vm7424, %v6786
        %7812 = vst.msk [vmem:[%s172 + $0x60c] sm:$0xf] %vm7424, %v6787
        %7813 = vst.msk [vmem:[%s172 + $0x610] sm:$0xf] %vm7424, %v6788
        %7814 = vst.msk [vmem:[%s172 + $0x614] sm:$0xf] %vm7424, %v6789
        %7815 = vst.msk [vmem:[%s172 + $0x618] sm:$0xf] %vm7424, %v6790
        %7816 = vst.msk [vmem:[%s172 + $0x61c] sm:$0xf] %vm7424, %v6791
        %7817 = vst.msk [vmem:[%s172 + $0x620] sm:$0xf] %vm7424, %v6792
        %7818 = vst.msk [vmem:[%s172 + $0x624] sm:$0xf] %vm7424, %v6793
        %7819 = vst.msk [vmem:[%s172 + $0x628] sm:$0xf] %vm7424, %v6794
        %7820 = vst.msk [vmem:[%s172 + $0x62c] sm:$0xf] %vm7424, %v6795
        %7821 = vst.msk [vmem:[%s172 + $0x630] sm:$0xf] %vm7424, %v6796
        %7822 = vst.msk [vmem:[%s172 + $0x634] sm:$0xf] %vm7424, %v6797
        %7823 = vst.msk [vmem:[%s172 + $0x638] sm:$0xf] %vm7424, %v6798
        %7824 = vst.msk [vmem:[%s172 + $0x63c] sm:$0xf] %vm7424, %v6799
        %7825 = vst.msk [vmem:[%s172 + $0x640] sm:$0xf] %vm7424, %v6800
        %7826 = vst.msk [vmem:[%s172 + $0x644] sm:$0xf] %vm7424, %v6801
        %7827 = vst.msk [vmem:[%s172 + $0x648] sm:$0xf] %vm7424, %v6802
        %7828 = vst.msk [vmem:[%s172 + $0x64c] sm:$0xf] %vm7424, %v6803
        %7829 = vst.msk [vmem:[%s172 + $0x650] sm:$0xf] %vm7424, %v6804
        %7830 = vst.msk [vmem:[%s172 + $0x654] sm:$0xf] %vm7424, %v6805
        %7831 = vst.msk [vmem:[%s172 + $0x658] sm:$0xf] %vm7424, %v6806
        %7832 = vst.msk [vmem:[%s172 + $0x65c] sm:$0xf] %vm7424, %v6807
        %7833 = vst.msk [vmem:[%s172 + $0x660] sm:$0xf] %vm7424, %v6808
        %7834 = vst.msk [vmem:[%s172 + $0x664] sm:$0xf] %vm7424, %v6809
        %7835 = vst.msk [vmem:[%s172 + $0x668] sm:$0xf] %vm7424, %v6810
        %7836 = vst.msk [vmem:[%s172 + $0x66c] sm:$0xf] %vm7424, %v6811
        %7837 = vst.msk [vmem:[%s172 + $0x670] sm:$0xf] %vm7424, %v6812
        %7838 = vst.msk [vmem:[%s172 + $0x674] sm:$0xf] %vm7424, %v6813
        %7839 = vst.msk [vmem:[%s172 + $0x678] sm:$0xf] %vm7424, %v6814
        %7840 = vst.msk [vmem:[%s172 + $0x67c] sm:$0xf] %vm7424, %v6815
        %7841 = vst.msk [vmem:[%s172 + $0x680] sm:$0xf] %vm7424, %v6816
        %7842 = vst.msk [vmem:[%s172 + $0x684] sm:$0xf] %vm7424, %v6817
        %7843 = vst.msk [vmem:[%s172 + $0x688] sm:$0xf] %vm7424, %v6818
        %7844 = vst.msk [vmem:[%s172 + $0x68c] sm:$0xf] %vm7424, %v6819
        %7845 = vst.msk [vmem:[%s172 + $0x690] sm:$0xf] %vm7424, %v6820
        %7846 = vst.msk [vmem:[%s172 + $0x694] sm:$0xf] %vm7424, %v6821
        %7847 = vst.msk [vmem:[%s172 + $0x698] sm:$0xf] %vm7424, %v6822
        %7848 = vst.msk [vmem:[%s172 + $0x69c] sm:$0xf] %vm7424, %v6823
        %7849 = vst.msk [vmem:[%s172 + $0x6a0] sm:$0xf] %vm7424, %v6824
        %7850 = vst.msk [vmem:[%s172 + $0x6a4] sm:$0xf] %vm7424, %v6825
        %7851 = vst.msk [vmem:[%s172 + $0x6a8] sm:$0xf] %vm7424, %v6826
        %7852 = vst.msk [vmem:[%s172 + $0x6ac] sm:$0xf] %vm7424, %v6827
        %7853 = vst.msk [vmem:[%s172 + $0x6b0] sm:$0xf] %vm7424, %v6828
        %7854 = vst.msk [vmem:[%s172 + $0x6b4] sm:$0xf] %vm7424, %v6829
        %7855 = vst.msk [vmem:[%s172 + $0x6b8] sm:$0xf] %vm7424, %v6830
        %7856 = vst.msk [vmem:[%s172 + $0x6bc] sm:$0xf] %vm7424, %v6831
        %7857 = vst.msk [vmem:[%s172 + $0x6c0] sm:$0xf] %vm7424, %v6832
        %7858 = vst.msk [vmem:[%s172 + $0x6c4] sm:$0xf] %vm7424, %v6833
        %7859 = vst.msk [vmem:[%s172 + $0x6c8] sm:$0xf] %vm7424, %v6834
        %7860 = vst.msk [vmem:[%s172 + $0x6cc] sm:$0xf] %vm7424, %v6835
        %7861 = vst.msk [vmem:[%s172 + $0x6d0] sm:$0xf] %vm7424, %v6836
        %7862 = vst.msk [vmem:[%s172 + $0x6d4] sm:$0xf] %vm7424, %v6837
        %7863 = vst.msk [vmem:[%s172 + $0x6d8] sm:$0xf] %vm7424, %v6838
        %7864 = vst.msk [vmem:[%s172 + $0x6dc] sm:$0xf] %vm7424, %v6839
        %7865 = vst.msk [vmem:[%s172 + $0x6e0] sm:$0xf] %vm7424, %v6840
        %7866 = vst.msk [vmem:[%s172 + $0x6e4] sm:$0xf] %vm7424, %v6841
        %7867 = vst.msk [vmem:[%s172 + $0x6e8] sm:$0xf] %vm7424, %v6842
        %7868 = vst.msk [vmem:[%s172 + $0x6ec] sm:$0xf] %vm7424, %v6843
        %7869 = vst.msk [vmem:[%s172 + $0x6f0] sm:$0xf] %vm7424, %v6844
        %7870 = vst.msk [vmem:[%s172 + $0x6f4] sm:$0xf] %vm7424, %v6845
        %7871 = vst.msk [vmem:[%s172 + $0x6f8] sm:$0xf] %vm7424, %v6846
        %7872 = vst.msk [vmem:[%s172 + $0x6fc] sm:$0xf] %vm7424, %v6847
        %7873 = vst.msk [vmem:[%s172 + $0x700] sm:$0xf] %vm7424, %v6848
        %7874 = vst.msk [vmem:[%s172 + $0x704] sm:$0xf] %vm7424, %v6849
        %7875 = vst.msk [vmem:[%s172 + $0x708] sm:$0xf] %vm7424, %v6850
        %7876 = vst.msk [vmem:[%s172 + $0x70c] sm:$0xf] %vm7424, %v6851
        %7877 = vst.msk [vmem:[%s172 + $0x710] sm:$0xf] %vm7424, %v6852
        %7878 = vst.msk [vmem:[%s172 + $0x714] sm:$0xf] %vm7424, %v6853
        %7879 = vst.msk [vmem:[%s172 + $0x718] sm:$0xf] %vm7424, %v6854
        %7880 = vst.msk [vmem:[%s172 + $0x71c] sm:$0xf] %vm7424, %v6855
        %7881 = vst.msk [vmem:[%s172 + $0x720] sm:$0xf] %vm7424, %v6856
        %7882 = vst.msk [vmem:[%s172 + $0x724] sm:$0xf] %vm7424, %v6857
        %7883 = vst.msk [vmem:[%s172 + $0x728] sm:$0xf] %vm7424, %v6858
        %7884 = vst.msk [vmem:[%s172 + $0x72c] sm:$0xf] %vm7424, %v6859
        %7885 = vst.msk [vmem:[%s172 + $0x730] sm:$0xf] %vm7424, %v6860
        %7886 = vst.msk [vmem:[%s172 + $0x734] sm:$0xf] %vm7424, %v6861
        %7887 = vst.msk [vmem:[%s172 + $0x738] sm:$0xf] %vm7424, %v6862
        %7888 = vst.msk [vmem:[%s172 + $0x73c] sm:$0xf] %vm7424, %v6863
        %7889 = vst.msk [vmem:[%s172 + $0x740] sm:$0xf] %vm7424, %v6864
        %7890 = vst.msk [vmem:[%s172 + $0x744] sm:$0xf] %vm7424, %v6865
        %7891 = vst.msk [vmem:[%s172 + $0x748] sm:$0xf] %vm7424, %v6866
        %7892 = vst.msk [vmem:[%s172 + $0x74c] sm:$0xf] %vm7424, %v6867
        %7893 = vst.msk [vmem:[%s172 + $0x750] sm:$0xf] %vm7424, %v6868
        %7894 = vst.msk [vmem:[%s172 + $0x754] sm:$0xf] %vm7424, %v6869
        %7895 = vst.msk [vmem:[%s172 + $0x758] sm:$0xf] %vm7424, %v6870
        %7896 = vst.msk [vmem:[%s172 + $0x75c] sm:$0xf] %vm7424, %v6871
        %7897 = vst.msk [vmem:[%s172 + $0x760] sm:$0xf] %vm7424, %v6872
        %7898 = vst.msk [vmem:[%s172 + $0x764] sm:$0xf] %vm7424, %v6873
        %7899 = vst.msk [vmem:[%s172 + $0x768] sm:$0xf] %vm7424, %v6874
        %7900 = vst.msk [vmem:[%s172 + $0x76c] sm:$0xf] %vm7424, %v6875
        %7901 = vst.msk [vmem:[%s172 + $0x770] sm:$0xf] %vm7424, %v6876
        %7902 = vst.msk [vmem:[%s172 + $0x774] sm:$0xf] %vm7424, %v6877
        %7903 = vst.msk [vmem:[%s172 + $0x778] sm:$0xf] %vm7424, %v6878
        %7904 = vst.msk [vmem:[%s172 + $0x77c] sm:$0xf] %vm7424, %v6879
        %7905 = vst.msk [vmem:[%s172 + $0x780] sm:$0xf] %vm7424, %v6880
        %7906 = vst.msk [vmem:[%s172 + $0x784] sm:$0xf] %vm7424, %v6881
        %7907 = vst.msk [vmem:[%s172 + $0x788] sm:$0xf] %vm7424, %v6882
        %7908 = vst.msk [vmem:[%s172 + $0x78c] sm:$0xf] %vm7424, %v6883
        %7909 = vst.msk [vmem:[%s172 + $0x790] sm:$0xf] %vm7424, %v6884
        %7910 = vst.msk [vmem:[%s172 + $0x794] sm:$0xf] %vm7424, %v6885
        %7911 = vst.msk [vmem:[%s172 + $0x798] sm:$0xf] %vm7424, %v6886
        %7912 = vst.msk [vmem:[%s172 + $0x79c] sm:$0xf] %vm7424, %v6887
        %7913 = vst.msk [vmem:[%s172 + $0x7a0] sm:$0xf] %vm7424, %v6888
        %7914 = vst.msk [vmem:[%s172 + $0x7a4] sm:$0xf] %vm7424, %v6889
        %7915 = vst.msk [vmem:[%s172 + $0x7a8] sm:$0xf] %vm7424, %v6890
        %7916 = vst.msk [vmem:[%s172 + $0x7ac] sm:$0xf] %vm7424, %v6891
        %7917 = vst.msk [vmem:[%s172 + $0x7b0] sm:$0xf] %vm7424, %v6892
        %7918 = vst.msk [vmem:[%s172 + $0x7b4] sm:$0xf] %vm7424, %v6893
        %7919 = vst.msk [vmem:[%s172 + $0x7b8] sm:$0xf] %vm7424, %v6894
        %7920 = vst.msk [vmem:[%s172 + $0x7bc] sm:$0xf] %vm7424, %v6895
        %7921 = vst.msk [vmem:[%s172 + $0x7c0] sm:$0xf] %vm7424, %v6896
        %7922 = vst.msk [vmem:[%s172 + $0x7c4] sm:$0xf] %vm7424, %v6897
        %7923 = vst.msk [vmem:[%s172 + $0x7c8] sm:$0xf] %vm7424, %v6898
        %7924 = vst.msk [vmem:[%s172 + $0x7cc] sm:$0xf] %vm7424, %v6899
        %7925 = vst.msk [vmem:[%s172 + $0x7d0] sm:$0xf] %vm7424, %v6900
        %7926 = vst.msk [vmem:[%s172 + $0x7d4] sm:$0xf] %vm7424, %v6901
        %7927 = vst.msk [vmem:[%s172 + $0x7d8] sm:$0xf] %vm7424, %v6902
        %7928 = vst.msk [vmem:[%s172 + $0x7dc] sm:$0xf] %vm7424, %v6903
        %7929 = vst.msk [vmem:[%s172 + $0x7e0] sm:$0xf] %vm7424, %v6904
        %7930 = vst.msk [vmem:[%s172 + $0x7e4] sm:$0xf] %vm7424, %v6905
        %7931 = vst.msk [vmem:[%s172 + $0x7e8] sm:$0xf] %vm7424, %v6906
        %7932 = vst.msk [vmem:[%s172 + $0x7ec] sm:$0xf] %vm7424, %v6907
        %7933 = vst.msk [vmem:[%s172 + $0x7f0] sm:$0xf] %vm7424, %v6908
        %7934 = vst.msk [vmem:[%s172 + $0x7f4] sm:$0xf] %vm7424, %v6909
        %7935 = vst.msk [vmem:[%s172 + $0x7f8] sm:$0xf] %vm7424, %v6910
        %7936 = vst.msk [vmem:[%s172 + $0x7fc] sm:$0xf] %vm7424, %v6911
        %s7937 = sand.u32 %s90, 1
        %s7938 = sand.u32 %s90, 1
        %s7939 = smul.addr %s7938, 2048
        %s7940 = scalar_lea.vmem [#allocation2], %s7939
        // Predicated region
        $region33: #{_matmul_bias_relu.1} parent=31 // pred_check
          %p7941 = pneg %p100
        $region34: #{_matmul_bias_relu.1} parent=31 // pred_check_branch
          %7943 = sbr.rel (%p7941) target = $region36
        $region35: #{_matmul_bias_relu.1} parent=31 // pred_region
          %s7944 = smul.u32 512, %s14
          %s7945 = ssub.s32 5551, %s7944
          %p7946 = scmp.lt.s32.totalorder %s7945, 512
          %s7947 = scalar_select %p7946, %s7945, 512
          %s7948 = smul.u32 64, %s7947
          %p7949 = scmp.ne.s32.totalorder 0, %s7948
          %s7950 = smul.addr %s7944, 4
          %s7951 = scalar_lea.vmem %s3, %s7950
          // Predicated region
          $region37: #{_matmul_bias_relu.1} parent=35 // pred_check
            %p7952 = pneg %p7949
          $region38: #{_matmul_bias_relu.1} parent=35 // pred_check_branch
            %7954 = sbr.rel (%p7952) target = $region40
          $region39: #{_matmul_bias_relu.1} parent=35 // pred_region
            // Predicated region
            $region41: #{_matmul_bias_relu.1} parent=39 // pred_check
              _
            $region42: #{_matmul_bias_relu.1} parent=39 // pred_check_branch
              %7956 = sbr.rel target = $region44
            $region43: #{_matmul_bias_relu.1} parent=39 // pred_region
              // Predicated region
              $region63: #{_matmul_bias_relu.1} parent=43 // pred_check
                _
              $region64: #{_matmul_bias_relu.1} parent=43 // pred_check_branch
                %8131 = sbr.rel (0) target = $region66
              $region65: #{_matmul_bias_relu.1} parent=43 // pred_region
                %s8133 = sshrl.u32 %s7947, 6
                // While loop
                $region67: #{_matmul_bias_relu.1} parent=65 // loop_pre_header
                  _
                $region68: #{_matmul_bias_relu.1} parent=65 // loop_header
                  %s8135 = sphi 0, %s8137
                  %p8136 = scmp.ge.s32.totalorder %s8135, %s8133
                  %s8140 = sphi 0, %s8273
                  %s8141 = sphi %s7940, %s8276
                  %s8142 = sphi %s7951, %s8277
                $region69: #{_matmul_bias_relu.1} parent=65 // loop_header_branch
                  %8139 = sbr.rel (%p8136) target = $region73
                $region70: #{_matmul_bias_relu.1} parent=65 // loop_body
                  %v8143 = vld [vmem:[%s8141] sm:$0xf]
                  %8144 = vst [vmem:[%s8142] sm:$0xf] %v8143
                  %v8145 = vld [vmem:[%s8141 + $0x4] sm:$0xf]
                  %8146 = vst [vmem:[%s8142 + $0x4] sm:$0xf] %v8145
                  %v8147 = vld [vmem:[%s8141 + $0x8] sm:$0xf]
                  %8148 = vst [vmem:[%s8142 + $0x8] sm:$0xf] %v8147
                  %v8149 = vld [vmem:[%s8141 + $0xc] sm:$0xf]
                  %8150 = vst [vmem:[%s8142 + $0xc] sm:$0xf] %v8149
                  %v8151 = vld [vmem:[%s8141 + $0x10] sm:$0xf]
                  %8152 = vst [vmem:[%s8142 + $0x10] sm:$0xf] %v8151
                  %v8153 = vld [vmem:[%s8141 + $0x14] sm:$0xf]
                  %8154 = vst [vmem:[%s8142 + $0x14] sm:$0xf] %v8153
                  %v8155 = vld [vmem:[%s8141 + $0x18] sm:$0xf]
                  %8156 = vst [vmem:[%s8142 + $0x18] sm:$0xf] %v8155
                  %v8157 = vld [vmem:[%s8141 + $0x1c] sm:$0xf]
                  %8158 = vst [vmem:[%s8142 + $0x1c] sm:$0xf] %v8157
                  %v8159 = vld [vmem:[%s8141 + $0x20] sm:$0xf]
                  %8160 = vst [vmem:[%s8142 + $0x20] sm:$0xf] %v8159
                  %v8161 = vld [vmem:[%s8141 + $0x24] sm:$0xf]
                  %8162 = vst [vmem:[%s8142 + $0x24] sm:$0xf] %v8161
                  %v8163 = vld [vmem:[%s8141 + $0x28] sm:$0xf]
                  %8164 = vst [vmem:[%s8142 + $0x28] sm:$0xf] %v8163
                  %v8165 = vld [vmem:[%s8141 + $0x2c] sm:$0xf]
                  %8166 = vst [vmem:[%s8142 + $0x2c] sm:$0xf] %v8165
                  %v8167 = vld [vmem:[%s8141 + $0x30] sm:$0xf]
                  %8168 = vst [vmem:[%s8142 + $0x30] sm:$0xf] %v8167
                  %v8169 = vld [vmem:[%s8141 + $0x34] sm:$0xf]
                  %8170 = vst [vmem:[%s8142 + $0x34] sm:$0xf] %v8169
                  %v8171 = vld [vmem:[%s8141 + $0x38] sm:$0xf]
                  %8172 = vst [vmem:[%s8142 + $0x38] sm:$0xf] %v8171
                  %v8173 = vld [vmem:[%s8141 + $0x3c] sm:$0xf]
                  %8174 = vst [vmem:[%s8142 + $0x3c] sm:$0xf] %v8173
                  %v8175 = vld [vmem:[%s8141 + $0x40] sm:$0xf]
                  %8176 = vst [vmem:[%s8142 + $0x40] sm:$0xf] %v8175
                  %v8177 = vld [vmem:[%s8141 + $0x44] sm:$0xf]
                  %8178 = vst [vmem:[%s8142 + $0x44] sm:$0xf] %v8177
                  %v8179 = vld [vmem:[%s8141 + $0x48] sm:$0xf]
                  %8180 = vst [vmem:[%s8142 + $0x48] sm:$0xf] %v8179
                  %v8181 = vld [vmem:[%s8141 + $0x4c] sm:$0xf]
                  %8182 = vst [vmem:[%s8142 + $0x4c] sm:$0xf] %v8181
                  %v8183 = vld [vmem:[%s8141 + $0x50] sm:$0xf]
                  %8184 = vst [vmem:[%s8142 + $0x50] sm:$0xf] %v8183
                  %v8185 = vld [vmem:[%s8141 + $0x54] sm:$0xf]
                  %8186 = vst [vmem:[%s8142 + $0x54] sm:$0xf] %v8185
                  %v8187 = vld [vmem:[%s8141 + $0x58] sm:$0xf]
                  %8188 = vst [vmem:[%s8142 + $0x58] sm:$0xf] %v8187
                  %v8189 = vld [vmem:[%s8141 + $0x5c] sm:$0xf]
                  %8190 = vst [vmem:[%s8142 + $0x5c] sm:$0xf] %v8189
                  %v8191 = vld [vmem:[%s8141 + $0x60] sm:$0xf]
                  %8192 = vst [vmem:[%s8142 + $0x60] sm:$0xf] %v8191
                  %v8193 = vld [vmem:[%s8141 + $0x64] sm:$0xf]
                  %8194 = vst [vmem:[%s8142 + $0x64] sm:$0xf] %v8193
                  %v8195 = vld [vmem:[%s8141 + $0x68] sm:$0xf]
                  %8196 = vst [vmem:[%s8142 + $0x68] sm:$0xf] %v8195
                  %v8197 = vld [vmem:[%s8141 + $0x6c] sm:$0xf]
                  %8198 = vst [vmem:[%s8142 + $0x6c] sm:$0xf] %v8197
                  %v8199 = vld [vmem:[%s8141 + $0x70] sm:$0xf]
                  %8200 = vst [vmem:[%s8142 + $0x70] sm:$0xf] %v8199
                  %v8201 = vld [vmem:[%s8141 + $0x74] sm:$0xf]
                  %8202 = vst [vmem:[%s8142 + $0x74] sm:$0xf] %v8201
                  %v8203 = vld [vmem:[%s8141 + $0x78] sm:$0xf]
                  %8204 = vst [vmem:[%s8142 + $0x78] sm:$0xf] %v8203
                  %v8205 = vld [vmem:[%s8141 + $0x7c] sm:$0xf]
                  %8206 = vst [vmem:[%s8142 + $0x7c] sm:$0xf] %v8205
                  %v8207 = vld [vmem:[%s8141 + $0x80] sm:$0xf]
                  %8208 = vst [vmem:[%s8142 + $0x80] sm:$0xf] %v8207
                  %v8209 = vld [vmem:[%s8141 + $0x84] sm:$0xf]
                  %8210 = vst [vmem:[%s8142 + $0x84] sm:$0xf] %v8209
                  %v8211 = vld [vmem:[%s8141 + $0x88] sm:$0xf]
                  %8212 = vst [vmem:[%s8142 + $0x88] sm:$0xf] %v8211
                  %v8213 = vld [vmem:[%s8141 + $0x8c] sm:$0xf]
                  %8214 = vst [vmem:[%s8142 + $0x8c] sm:$0xf] %v8213
                  %v8215 = vld [vmem:[%s8141 + $0x90] sm:$0xf]
                  %8216 = vst [vmem:[%s8142 + $0x90] sm:$0xf] %v8215
                  %v8217 = vld [vmem:[%s8141 + $0x94] sm:$0xf]
                  %8218 = vst [vmem:[%s8142 + $0x94] sm:$0xf] %v8217
                  %v8219 = vld [vmem:[%s8141 + $0x98] sm:$0xf]
                  %8220 = vst [vmem:[%s8142 + $0x98] sm:$0xf] %v8219
                  %v8221 = vld [vmem:[%s8141 + $0x9c] sm:$0xf]
                  %8222 = vst [vmem:[%s8142 + $0x9c] sm:$0xf] %v8221
                  %v8223 = vld [vmem:[%s8141 + $0xa0] sm:$0xf]
                  %8224 = vst [vmem:[%s8142 + $0xa0] sm:$0xf] %v8223
                  %v8225 = vld [vmem:[%s8141 + $0xa4] sm:$0xf]
                  %8226 = vst [vmem:[%s8142 + $0xa4] sm:$0xf] %v8225
                  %v8227 = vld [vmem:[%s8141 + $0xa8] sm:$0xf]
                  %8228 = vst [vmem:[%s8142 + $0xa8] sm:$0xf] %v8227
                  %v8229 = vld [vmem:[%s8141 + $0xac] sm:$0xf]
                  %8230 = vst [vmem:[%s8142 + $0xac] sm:$0xf] %v8229
                  %v8231 = vld [vmem:[%s8141 + $0xb0] sm:$0xf]
                  %8232 = vst [vmem:[%s8142 + $0xb0] sm:$0xf] %v8231
                  %v8233 = vld [vmem:[%s8141 + $0xb4] sm:$0xf]
                  %8234 = vst [vmem:[%s8142 + $0xb4] sm:$0xf] %v8233
                  %v8235 = vld [vmem:[%s8141 + $0xb8] sm:$0xf]
                  %8236 = vst [vmem:[%s8142 + $0xb8] sm:$0xf] %v8235
                  %v8237 = vld [vmem:[%s8141 + $0xbc] sm:$0xf]
                  %8238 = vst [vmem:[%s8142 + $0xbc] sm:$0xf] %v8237
                  %v8239 = vld [vmem:[%s8141 + $0xc0] sm:$0xf]
                  %8240 = vst [vmem:[%s8142 + $0xc0] sm:$0xf] %v8239
                  %v8241 = vld [vmem:[%s8141 + $0xc4] sm:$0xf]
                  %8242 = vst [vmem:[%s8142 + $0xc4] sm:$0xf] %v8241
                  %v8243 = vld [vmem:[%s8141 + $0xc8] sm:$0xf]
                  %8244 = vst [vmem:[%s8142 + $0xc8] sm:$0xf] %v8243
                  %v8245 = vld [vmem:[%s8141 + $0xcc] sm:$0xf]
                  %8246 = vst [vmem:[%s8142 + $0xcc] sm:$0xf] %v8245
                  %v8247 = vld [vmem:[%s8141 + $0xd0] sm:$0xf]
                  %8248 = vst [vmem:[%s8142 + $0xd0] sm:$0xf] %v8247
                  %v8249 = vld [vmem:[%s8141 + $0xd4] sm:$0xf]
                  %8250 = vst [vmem:[%s8142 + $0xd4] sm:$0xf] %v8249
                  %v8251 = vld [vmem:[%s8141 + $0xd8] sm:$0xf]
                  %8252 = vst [vmem:[%s8142 + $0xd8] sm:$0xf] %v8251
                  %v8253 = vld [vmem:[%s8141 + $0xdc] sm:$0xf]
                  %8254 = vst [vmem:[%s8142 + $0xdc] sm:$0xf] %v8253
                  %v8255 = vld [vmem:[%s8141 + $0xe0] sm:$0xf]
                  %8256 = vst [vmem:[%s8142 + $0xe0] sm:$0xf] %v8255
                  %v8257 = vld [vmem:[%s8141 + $0xe4] sm:$0xf]
                  %8258 = vst [vmem:[%s8142 + $0xe4] sm:$0xf] %v8257
                  %v8259 = vld [vmem:[%s8141 + $0xe8] sm:$0xf]
                  %8260 = vst [vmem:[%s8142 + $0xe8] sm:$0xf] %v8259
                  %v8261 = vld [vmem:[%s8141 + $0xec] sm:$0xf]
                  %8262 = vst [vmem:[%s8142 + $0xec] sm:$0xf] %v8261
                  %v8263 = vld [vmem:[%s8141 + $0xf0] sm:$0xf]
                  %8264 = vst [vmem:[%s8142 + $0xf0] sm:$0xf] %v8263
                  %v8265 = vld [vmem:[%s8141 + $0xf4] sm:$0xf]
                  %8266 = vst [vmem:[%s8142 + $0xf4] sm:$0xf] %v8265
                  %v8267 = vld [vmem:[%s8141 + $0xf8] sm:$0xf]
                  %8268 = vst [vmem:[%s8142 + $0xf8] sm:$0xf] %v8267
                  %v8269 = vld [vmem:[%s8141 + $0xfc] sm:$0xf]
                  %8270 = vst [vmem:[%s8142 + $0xfc] sm:$0xf] %v8269
                  %s8271 = sadd.s32 1, %s8140
                  %p8272 = scmp.ge.s32.totalorder %s8271, %s8133
                  %s8273 = scalar_select %p8272, 0, %s8271
                  %s8274 = smul.u32 %s8273, 256
                  %s8275 = smul.u32 %s8273, 256
                  %s8276 = scalar_lea.vmem %s7940, %s8274 [#allocation2]
                  %s8277 = scalar_lea.vmem %s7951, %s8275
                $region71: #{_matmul_bias_relu.1} parent=65 // loop_footer
                  %s8137 = sadd.s32 %s8135, 1
                $region72: #{_matmul_bias_relu.1} parent=65 // loop_footer_branch
                  %8134 = sbr.rel target = $region68
                $region73: #{_matmul_bias_relu.1} parent=65 // loop_exit
                  _
                %s8278 = sshrl.u32 %s7947, 6
                %s8279 = sand.u32 %s7947, 63
                %s8280 = smul.u32 %s8278, 64
                %s8281 = smul.u32 4, %s8280
                %s8282 = scalar_lea.vmem %s7940, %s8281 [#allocation2]
                %s8283 = smul.u32 4, %s8280
                %s8284 = scalar_lea.vmem %s7951, %s8283
                // While loop
                $region74: #{_matmul_bias_relu.1} parent=65 // loop_pre_header
                  _
                $region75: #{_matmul_bias_relu.1} parent=65 // loop_header
                  %s8286 = sphi 0, %s8288
                  %p8287 = scmp.ge.s32.totalorder %s8286, %s8279
                  %s8291 = sphi 0, %s8298
                  %s8292 = sphi %s8282, %s8301
                  %s8293 = sphi %s8284, %s8302
                $region76: #{_matmul_bias_relu.1} parent=65 // loop_header_branch
                  %8290 = sbr.rel (%p8287) target = $region80
                $region77: #{_matmul_bias_relu.1} parent=65 // loop_body
                  %v8294 = vld [vmem:[%s8292] sm:$0xf]
                  %8295 = vst [vmem:[%s8293] sm:$0xf] %v8294
                  %s8296 = sadd.s32 1, %s8291
                  %p8297 = scmp.ge.s32.totalorder %s8296, %s8279
                  %s8298 = scalar_select %p8297, 0, %s8296
                  %s8299 = smul.u32 %s8298, 4
                  %s8300 = smul.u32 %s8298, 4
                  %s8301 = scalar_lea.vmem %s8282, %s8299 [#allocation2]
                  %s8302 = scalar_lea.vmem %s8284, %s8300
                $region78: #{_matmul_bias_relu.1} parent=65 // loop_footer
                  %s8288 = sadd.s32 %s8286, 1
                $region79: #{_matmul_bias_relu.1} parent=65 // loop_footer_branch
                  %8285 = sbr.rel target = $region75
                $region80: #{_matmul_bias_relu.1} parent=65 // loop_exit
                  _
              $region66: #{_matmul_bias_relu.1} parent=43 // pred_fallthru
                _
            $region44: #{_matmul_bias_relu.1} parent=39 // pred_fallthru
              _
            // Predicated region
            $region45: #{_matmul_bias_relu.1} parent=39 // pred_check
              _
            $region46: #{_matmul_bias_relu.1} parent=39 // pred_check_branch
              %7958 = sbr.rel (0) target = $region48
            $region47: #{_matmul_bias_relu.1} parent=39 // pred_region
              %s7960 = sshrl.u32 %s7947, 6
              // While loop
              $region49: #{_matmul_bias_relu.1} parent=47 // loop_pre_header
                _
              $region50: #{_matmul_bias_relu.1} parent=47 // loop_header
                %s7962 = sphi 0, %s7964
                %p7963 = scmp.ge.s32.totalorder %s7962, %s7960
                %s7967 = sphi 0, %s8100
                %s7968 = sphi %s7940, %s8103
                %s7969 = sphi %s7951, %s8104
              $region51: #{_matmul_bias_relu.1} parent=47 // loop_header_branch
                %7966 = sbr.rel (%p7963) target = $region55
              $region52: #{_matmul_bias_relu.1} parent=47 // loop_body
                %v7970 = vld [vmem:[%s7968] sm:$0xf]
                %7971 = vst [vmem:[%s7969] sm:$0xf] %v7970
                %v7972 = vld [vmem:[%s7968 + $0x4] sm:$0xf]
                %7973 = vst [vmem:[%s7969 + $0x4] sm:$0xf] %v7972
                %v7974 = vld [vmem:[%s7968 + $0x8] sm:$0xf]
                %7975 = vst [vmem:[%s7969 + $0x8] sm:$0xf] %v7974
                %v7976 = vld [vmem:[%s7968 + $0xc] sm:$0xf]
                %7977 = vst [vmem:[%s7969 + $0xc] sm:$0xf] %v7976
                %v7978 = vld [vmem:[%s7968 + $0x10] sm:$0xf]
                %7979 = vst [vmem:[%s7969 + $0x10] sm:$0xf] %v7978
                %v7980 = vld [vmem:[%s7968 + $0x14] sm:$0xf]
                %7981 = vst [vmem:[%s7969 + $0x14] sm:$0xf] %v7980
                %v7982 = vld [vmem:[%s7968 + $0x18] sm:$0xf]
                %7983 = vst [vmem:[%s7969 + $0x18] sm:$0xf] %v7982
                %v7984 = vld [vmem:[%s7968 + $0x1c] sm:$0xf]
                %7985 = vst [vmem:[%s7969 + $0x1c] sm:$0xf] %v7984
                %v7986 = vld [vmem:[%s7968 + $0x20] sm:$0xf]
                %7987 = vst [vmem:[%s7969 + $0x20] sm:$0xf] %v7986
                %v7988 = vld [vmem:[%s7968 + $0x24] sm:$0xf]
                %7989 = vst [vmem:[%s7969 + $0x24] sm:$0xf] %v7988
                %v7990 = vld [vmem:[%s7968 + $0x28] sm:$0xf]
                %7991 = vst [vmem:[%s7969 + $0x28] sm:$0xf] %v7990
                %v7992 = vld [vmem:[%s7968 + $0x2c] sm:$0xf]
                %7993 = vst [vmem:[%s7969 + $0x2c] sm:$0xf] %v7992
                %v7994 = vld [vmem:[%s7968 + $0x30] sm:$0xf]
                %7995 = vst [vmem:[%s7969 + $0x30] sm:$0xf] %v7994
                %v7996 = vld [vmem:[%s7968 + $0x34] sm:$0xf]
                %7997 = vst [vmem:[%s7969 + $0x34] sm:$0xf] %v7996
                %v7998 = vld [vmem:[%s7968 + $0x38] sm:$0xf]
                %7999 = vst [vmem:[%s7969 + $0x38] sm:$0xf] %v7998
                %v8000 = vld [vmem:[%s7968 + $0x3c] sm:$0xf]
                %8001 = vst [vmem:[%s7969 + $0x3c] sm:$0xf] %v8000
                %v8002 = vld [vmem:[%s7968 + $0x40] sm:$0xf]
                %8003 = vst [vmem:[%s7969 + $0x40] sm:$0xf] %v8002
                %v8004 = vld [vmem:[%s7968 + $0x44] sm:$0xf]
                %8005 = vst [vmem:[%s7969 + $0x44] sm:$0xf] %v8004
                %v8006 = vld [vmem:[%s7968 + $0x48] sm:$0xf]
                %8007 = vst [vmem:[%s7969 + $0x48] sm:$0xf] %v8006
                %v8008 = vld [vmem:[%s7968 + $0x4c] sm:$0xf]
                %8009 = vst [vmem:[%s7969 + $0x4c] sm:$0xf] %v8008
                %v8010 = vld [vmem:[%s7968 + $0x50] sm:$0xf]
                %8011 = vst [vmem:[%s7969 + $0x50] sm:$0xf] %v8010
                %v8012 = vld [vmem:[%s7968 + $0x54] sm:$0xf]
                %8013 = vst [vmem:[%s7969 + $0x54] sm:$0xf] %v8012
                %v8014 = vld [vmem:[%s7968 + $0x58] sm:$0xf]
                %8015 = vst [vmem:[%s7969 + $0x58] sm:$0xf] %v8014
                %v8016 = vld [vmem:[%s7968 + $0x5c] sm:$0xf]
                %8017 = vst [vmem:[%s7969 + $0x5c] sm:$0xf] %v8016
                %v8018 = vld [vmem:[%s7968 + $0x60] sm:$0xf]
                %8019 = vst [vmem:[%s7969 + $0x60] sm:$0xf] %v8018
                %v8020 = vld [vmem:[%s7968 + $0x64] sm:$0xf]
                %8021 = vst [vmem:[%s7969 + $0x64] sm:$0xf] %v8020
                %v8022 = vld [vmem:[%s7968 + $0x68] sm:$0xf]
                %8023 = vst [vmem:[%s7969 + $0x68] sm:$0xf] %v8022
                %v8024 = vld [vmem:[%s7968 + $0x6c] sm:$0xf]
                %8025 = vst [vmem:[%s7969 + $0x6c] sm:$0xf] %v8024
                %v8026 = vld [vmem:[%s7968 + $0x70] sm:$0xf]
                %8027 = vst [vmem:[%s7969 + $0x70] sm:$0xf] %v8026
                %v8028 = vld [vmem:[%s7968 + $0x74] sm:$0xf]
                %8029 = vst [vmem:[%s7969 + $0x74] sm:$0xf] %v8028
                %v8030 = vld [vmem:[%s7968 + $0x78] sm:$0xf]
                %8031 = vst [vmem:[%s7969 + $0x78] sm:$0xf] %v8030
                %v8032 = vld [vmem:[%s7968 + $0x7c] sm:$0xf]
                %8033 = vst [vmem:[%s7969 + $0x7c] sm:$0xf] %v8032
                %v8034 = vld [vmem:[%s7968 + $0x80] sm:$0xf]
                %8035 = vst [vmem:[%s7969 + $0x80] sm:$0xf] %v8034
                %v8036 = vld [vmem:[%s7968 + $0x84] sm:$0xf]
                %8037 = vst [vmem:[%s7969 + $0x84] sm:$0xf] %v8036
                %v8038 = vld [vmem:[%s7968 + $0x88] sm:$0xf]
                %8039 = vst [vmem:[%s7969 + $0x88] sm:$0xf] %v8038
                %v8040 = vld [vmem:[%s7968 + $0x8c] sm:$0xf]
                %8041 = vst [vmem:[%s7969 + $0x8c] sm:$0xf] %v8040
                %v8042 = vld [vmem:[%s7968 + $0x90] sm:$0xf]
                %8043 = vst [vmem:[%s7969 + $0x90] sm:$0xf] %v8042
                %v8044 = vld [vmem:[%s7968 + $0x94] sm:$0xf]
                %8045 = vst [vmem:[%s7969 + $0x94] sm:$0xf] %v8044
                %v8046 = vld [vmem:[%s7968 + $0x98] sm:$0xf]
                %8047 = vst [vmem:[%s7969 + $0x98] sm:$0xf] %v8046
                %v8048 = vld [vmem:[%s7968 + $0x9c] sm:$0xf]
                %8049 = vst [vmem:[%s7969 + $0x9c] sm:$0xf] %v8048
                %v8050 = vld [vmem:[%s7968 + $0xa0] sm:$0xf]
                %8051 = vst [vmem:[%s7969 + $0xa0] sm:$0xf] %v8050
                %v8052 = vld [vmem:[%s7968 + $0xa4] sm:$0xf]
                %8053 = vst [vmem:[%s7969 + $0xa4] sm:$0xf] %v8052
                %v8054 = vld [vmem:[%s7968 + $0xa8] sm:$0xf]
                %8055 = vst [vmem:[%s7969 + $0xa8] sm:$0xf] %v8054
                %v8056 = vld [vmem:[%s7968 + $0xac] sm:$0xf]
                %8057 = vst [vmem:[%s7969 + $0xac] sm:$0xf] %v8056
                %v8058 = vld [vmem:[%s7968 + $0xb0] sm:$0xf]
                %8059 = vst [vmem:[%s7969 + $0xb0] sm:$0xf] %v8058
                %v8060 = vld [vmem:[%s7968 + $0xb4] sm:$0xf]
                %8061 = vst [vmem:[%s7969 + $0xb4] sm:$0xf] %v8060
                %v8062 = vld [vmem:[%s7968 + $0xb8] sm:$0xf]
                %8063 = vst [vmem:[%s7969 + $0xb8] sm:$0xf] %v8062
                %v8064 = vld [vmem:[%s7968 + $0xbc] sm:$0xf]
                %8065 = vst [vmem:[%s7969 + $0xbc] sm:$0xf] %v8064
                %v8066 = vld [vmem:[%s7968 + $0xc0] sm:$0xf]
                %8067 = vst [vmem:[%s7969 + $0xc0] sm:$0xf] %v8066
                %v8068 = vld [vmem:[%s7968 + $0xc4] sm:$0xf]
                %8069 = vst [vmem:[%s7969 + $0xc4] sm:$0xf] %v8068
                %v8070 = vld [vmem:[%s7968 + $0xc8] sm:$0xf]
                %8071 = vst [vmem:[%s7969 + $0xc8] sm:$0xf] %v8070
                %v8072 = vld [vmem:[%s7968 + $0xcc] sm:$0xf]
                %8073 = vst [vmem:[%s7969 + $0xcc] sm:$0xf] %v8072
                %v8074 = vld [vmem:[%s7968 + $0xd0] sm:$0xf]
                %8075 = vst [vmem:[%s7969 + $0xd0] sm:$0xf] %v8074
                %v8076 = vld [vmem:[%s7968 + $0xd4] sm:$0xf]
                %8077 = vst [vmem:[%s7969 + $0xd4] sm:$0xf] %v8076
                %v8078 = vld [vmem:[%s7968 + $0xd8] sm:$0xf]
                %8079 = vst [vmem:[%s7969 + $0xd8] sm:$0xf] %v8078
                %v8080 = vld [vmem:[%s7968 + $0xdc] sm:$0xf]
                %8081 = vst [vmem:[%s7969 + $0xdc] sm:$0xf] %v8080
                %v8082 = vld [vmem:[%s7968 + $0xe0] sm:$0xf]
                %8083 = vst [vmem:[%s7969 + $0xe0] sm:$0xf] %v8082
                %v8084 = vld [vmem:[%s7968 + $0xe4] sm:$0xf]
                %8085 = vst [vmem:[%s7969 + $0xe4] sm:$0xf] %v8084
                %v8086 = vld [vmem:[%s7968 + $0xe8] sm:$0xf]
                %8087 = vst [vmem:[%s7969 + $0xe8] sm:$0xf] %v8086
                %v8088 = vld [vmem:[%s7968 + $0xec] sm:$0xf]
                %8089 = vst [vmem:[%s7969 + $0xec] sm:$0xf] %v8088
                %v8090 = vld [vmem:[%s7968 + $0xf0] sm:$0xf]
                %8091 = vst [vmem:[%s7969 + $0xf0] sm:$0xf] %v8090
                %v8092 = vld [vmem:[%s7968 + $0xf4] sm:$0xf]
                %8093 = vst [vmem:[%s7969 + $0xf4] sm:$0xf] %v8092
                %v8094 = vld [vmem:[%s7968 + $0xf8] sm:$0xf]
                %8095 = vst [vmem:[%s7969 + $0xf8] sm:$0xf] %v8094
                %v8096 = vld [vmem:[%s7968 + $0xfc] sm:$0xf]
                %8097 = vst [vmem:[%s7969 + $0xfc] sm:$0xf] %v8096
                %s8098 = sadd.s32 1, %s7967
                %p8099 = scmp.ge.s32.totalorder %s8098, %s7960
                %s8100 = scalar_select %p8099, 0, %s8098
                %s8101 = smul.u32 %s8100, 256
                %s8102 = smul.u32 %s8100, 256
                %s8103 = scalar_lea.vmem %s7940, %s8101 [#allocation2]
                %s8104 = scalar_lea.vmem %s7951, %s8102
              $region53: #{_matmul_bias_relu.1} parent=47 // loop_footer
                %s7964 = sadd.s32 %s7962, 1
              $region54: #{_matmul_bias_relu.1} parent=47 // loop_footer_branch
                %7961 = sbr.rel target = $region50
              $region55: #{_matmul_bias_relu.1} parent=47 // loop_exit
                _
              %s8105 = sshrl.u32 %s7947, 6
              %s8106 = sand.u32 %s7947, 63
              %s8107 = smul.u32 %s8105, 64
              %s8108 = smul.u32 4, %s8107
              %s8109 = scalar_lea.vmem %s7940, %s8108 [#allocation2]
              %s8110 = smul.u32 4, %s8107
              %s8111 = scalar_lea.vmem %s7951, %s8110
              // While loop
              $region56: #{_matmul_bias_relu.1} parent=47 // loop_pre_header
                _
              $region57: #{_matmul_bias_relu.1} parent=47 // loop_header
                %s8113 = sphi 0, %s8115
                %p8114 = scmp.ge.s32.totalorder %s8113, %s8106
                %s8118 = sphi 0, %s8125
                %s8119 = sphi %s8109, %s8128
                %s8120 = sphi %s8111, %s8129
              $region58: #{_matmul_bias_relu.1} parent=47 // loop_header_branch
                %8117 = sbr.rel (%p8114) target = $region62
              $region59: #{_matmul_bias_relu.1} parent=47 // loop_body
                %v8121 = vld [vmem:[%s8119] sm:$0xf]
                %8122 = vst [vmem:[%s8120] sm:$0xf] %v8121
                %s8123 = sadd.s32 1, %s8118
                %p8124 = scmp.ge.s32.totalorder %s8123, %s8106
                %s8125 = scalar_select %p8124, 0, %s8123
                %s8126 = smul.u32 %s8125, 4
                %s8127 = smul.u32 %s8125, 4
                %s8128 = scalar_lea.vmem %s8109, %s8126 [#allocation2]
                %s8129 = scalar_lea.vmem %s8111, %s8127
              $region60: #{_matmul_bias_relu.1} parent=47 // loop_footer
                %s8115 = sadd.s32 %s8113, 1
              $region61: #{_matmul_bias_relu.1} parent=47 // loop_footer_branch
                %8112 = sbr.rel target = $region57
              $region62: #{_matmul_bias_relu.1} parent=47 // loop_exit
                _
            $region48: #{_matmul_bias_relu.1} parent=39 // pred_fallthru
              _
          $region40: #{_matmul_bias_relu.1} parent=35 // pred_fallthru
            _
          %8303 = vnop
        $region36: #{_matmul_bias_relu.1} parent=31 // pred_fallthru
          _
      $region32: #{_matmul_bias_relu.1} parent=5 // pred_fallthru
        _
      %p8304 = scmp.le.s32.totalorder 2, %s9
      // Predicated region
      $region81: #{_matmul_bias_relu.1} parent=5 // pred_check
        %p8305 = pneg %p8304
      $region82: #{_matmul_bias_relu.1} parent=5 // pred_check_branch
        %8307 = sbr.rel (%p8305) target = $region84
      $region83: #{_matmul_bias_relu.1} parent=5 // pred_region
        %s8308 = ssub.s32 %s9, 2
        // Predicated region
        $region85: #{_matmul_bias_relu.1} parent=83 // pred_check
          %p8309 = pneg %p106
        $region86: #{_matmul_bias_relu.1} parent=83 // pred_check_branch
          %8311 = sbr.rel (%p8309) target = $region88
        $region87: #{_matmul_bias_relu.1} parent=83 // pred_region
          %s8312 = sand.u32 %s91, 1
          %s8313 = sand.u32 %s91, 1
          %s8314 = smul.addr %s8313, 2048
          %s8315 = scalar_lea.vmem [#allocation2], %s8314
        $region88: #{_matmul_bias_relu.1} parent=83 // pred_fallthru
          _
      $region84: #{_matmul_bias_relu.1} parent=5 // pred_fallthru
        _
    $region6: #{_matmul_bias_relu.1} parent=1 // loop_footer
      %s13 = sadd.s32 1, %s9
    $region7: #{_matmul_bias_relu.1} parent=1 // loop_footer_branch
      %8 = sbr.rel target = $region3
    $region8: #{_matmul_bias_relu.1} parent=1 // loop_exit
      _

</llo_original>
